<compile_context>
chip_gen: v5e
topology: v5e:2x2
jax: 0.10.0
libtpu: 0.0.40
codegen_flags: <defaults>
</compile_context>

<pallas_src>
import functools
import math

import jax
import jax.numpy as jnp
from jax.experimental import pallas as pl
from jax.experimental.pallas import tpu as pltpu


# ----------------------------------------------------------------------------
# small in-kernel helpers (values, not refs)
# ----------------------------------------------------------------------------
def _gelu(x):                      # torch.nn.GELU (exact erf form)
    return 0.5 * x * (1.0 + jax.lax.erf(x / math.sqrt(2.0)))


def _quick_gelu(x):                # CLIP QuickGELU
    return x * jax.nn.sigmoid(1.702 * x)


def _layernorm(x, g, b, eps=1e-5):
    mu = jnp.mean(x, axis=-1, keepdims=True)
    var = jnp.mean(jnp.square(x - mu), axis=-1, keepdims=True)
    return (x - mu) * jax.lax.rsqrt(var + eps) * g + b


PARAM_NAMES = (
    # tokenizer mini-PointNet
    "tok_w1", "tok_b1", "tok_w2", "tok_b2",
    # pos_embed: Linear(3,128) -> GELU -> Linear(128, D)
    "pos_w1", "pos_b1", "pos_w2", "pos_b2",
    # CLIP visual class embedding / positional_embedding[0]
    "cls_token", "cls_pos",
    # TaskEmbEncoder
    "te_table", "te_w1", "te_b1", "te_w2", "te_b2",
    # residual attention blocks (stacked over DEPTH)
    "ln1_g", "ln1_b", "wqkv", "bqkv", "wo", "bo",
    "ln2_g", "ln2_b", "mlp_w1", "mlp_b1", "mlp_w2", "mlp_b2",
    # PointNetFeaturePropagation MLP: ENC_DIM -> TOKENIZER_DIM
    "fp_w", "fp_b",
)


# ----------------------------------------------------------------------------
# the fused per-batch kernel
# ----------------------------------------------------------------------------
def _epcl_kernel(xyz_ref, gxyz_ref, gfeat_ref, feats_ref, *rest, cfg):
    *param_refs, out_ref, xs = rest
    p = dict(zip(PARAM_NAMES, param_refs))

    G = cfg["NUM_GROUP"]
    Sg = cfg["GROUP_SIZE"]
    D = cfg["ENC_DIM"]
    Cin = cfg["TOKENIZER_DIM"]
    H = cfg["NUM_HEADS"]
    hd = D // H
    depth = cfg["DEPTH"]
    S_real = 1 + G + cfg["NUM_TOKENS"]
    S_pad = xs.shape[0]
    f32 = jnp.float32

    # -------- tokenizer: mini-PointNet over each group (all in VMEM) --------
    # TODO(synk): SparseGroup (FPS+KNN) / EmbeddingEncoder sources unavailable;
    # contiguous grouping + Linear->GELU->maxpool->Linear stand in.
    pooled = None
    for s in range(Sg):
        fs = gfeat_ref[:, s * Cin:(s + 1) * Cin]                     # [G, Cin]
        hs = _gelu(jnp.dot(fs, p["tok_w1"][...],
                           preferred_element_type=f32) + p["tok_b1"][...])
        pooled = hs if pooled is None else jnp.maximum(pooled, hs)
    tokens = jnp.dot(pooled, p["tok_w2"][...],
                     preferred_element_type=f32) + p["tok_b2"][...]  # [G, D]

    # -------- group centers + pc_norm(center * voxel_size) --------
    center = None
    for s in range(Sg):
        cs = gxyz_ref[:, s * 3:(s + 1) * 3]                          # [G, 3]
        center = cs if center is None else center + cs
    center = center * (cfg["VOXEL_SIZE"] / Sg)                       # mean*vox
    centroid = jnp.mean(center, axis=0, keepdims=True)
    pc = center - centroid
    m = jnp.max(jnp.sqrt(jnp.sum(pc * pc, axis=1, keepdims=True)),
                axis=0, keepdims=True)
    pos_xyz = pc / m                                                 # [G, 3]

    # -------- positional embedding MLP --------
    pe = _gelu(jnp.dot(pos_xyz, p["pos_w1"][...],
                       preferred_element_type=f32) + p["pos_b1"][...])
    pos = jnp.dot(pe, p["pos_w2"][...],
                  preferred_element_type=f32) + p["pos_b2"][...]     # [G, D]

    # -------- task-embedding encoder --------
    te = _gelu(jnp.dot(p["te_table"][...], p["te_w1"][...],
                       preferred_element_type=f32) + p["te_b1"][...])
    task_emb = jnp.dot(te, p["te_w2"][...],
                       preferred_element_type=f32) + p["te_b2"][...]  # [NT, D]

    # -------- assemble padded sequence in VMEM scratch --------
    xs[0:1, :] = p["cls_token"][...] + p["cls_pos"][...]
    xs[1:1 + G, :] = tokens + pos
    xs[1 + G:S_real, :] = task_emb
    if S_pad > S_real:
        xs[S_real:S_pad, :] = jnp.zeros((S_pad - S_real, D), f32)
    x = xs[...]

    # additive key-padding mask for the softmax (pad keys masked out)
    col = jax.lax.broadcasted_iota(jnp.int32, (S_pad, S_pad), 1)
    kbias = jnp.where(col < S_real, 0.0, -1e30).astype(f32)
    scale = 1.0 / math.sqrt(hd)

    # -------- CLIP-style residual attention blocks (whole stack fused) ------
    # TODO(synk): frozen pretrained CLIP ViT-B/32 weights cannot be loaded
    # here; structurally identical blocks with deterministic init are used.
    for l in range(depth):
        y = _layernorm(x, p["ln1_g"][l:l + 1, :], p["ln1_b"][l:l + 1, :])
        qkv = jnp.dot(y, p["wqkv"][l],
                      preferred_element_type=f32) + p["bqkv"][l:l + 1, :]
        wo = p["wo"][l]
        attn = jnp.zeros((S_pad, D), f32)
        for h in range(H):                      # in-kernel head split (lanes)
            q = qkv[:, h * hd:(h + 1) * hd]
            k = qkv[:, D + h * hd:D + (h + 1) * hd]
            v = qkv[:, 2 * D + h * hd:2 * D + (h + 1) * hd]
            logits = jax.lax.dot_general(
                q, k, (((1,), (1,)), ((), ())),
                preferred_element_type=f32) * scale + kbias
            mx = jnp.max(logits, axis=-1, keepdims=True)
            pr = jnp.exp(logits - mx)
            pr = pr * pl.reciprocal(jnp.sum(pr, axis=-1, keepdims=True),
                                    approx=True)
            ctx = jnp.dot(pr, v, preferred_element_type=f32)         # [S, hd]
            # fuse PV with its W_o row block -> no head concat needed
            attn = attn + jnp.dot(ctx, wo[h * hd:(h + 1) * hd, :],
                                  preferred_element_type=f32)
        x = x + attn + p["bo"][l:l + 1, :]

        y = _layernorm(x, p["ln2_g"][l:l + 1, :], p["ln2_b"][l:l + 1, :])
        h1 = _quick_gelu(jnp.dot(y, p["mlp_w1"][l],
                                 preferred_element_type=f32)
                         + p["mlp_b1"][l:l + 1, :])
        x = x + jnp.dot(h1, p["mlp_w2"][l],
                        preferred_element_type=f32) + p["mlp_b2"][l:l + 1, :]

    enc_features = x[1:1 + G, :]                                     # [G, D]

    # -------- PointNet++ 3-NN IDW feature propagation + residual --------
    # TODO(synk): PointNetFeaturePropagation source unavailable; standard 3-NN
    # inverse-distance interpolation + Linear (eval-mode BN==identity) + ReLU.
    x1 = xyz_ref[...]                                                # [N, 3]
    d = (jnp.sum(x1 * x1, axis=1, keepdims=True)
         + jnp.sum(pos_xyz * pos_xyz, axis=1)[None, :]
         - 2.0 * jax.lax.dot_general(x1, pos_xyz, (((1,), (1,)), ((), ())),
                                     preferred_element_type=f32))    # [N, G]
    big = jnp.float32(1e10)
    m1 = jnp.min(d, axis=1, keepdims=True)
    d2 = jnp.where(d <= m1, big, d)
    m2 = jnp.min(d2, axis=1, keepdims=True)
    d3 = jnp.where(d2 <= m2, big, d2)
    m3 = jnp.min(d3, axis=1, keepdims=True)          # 3rd-smallest distance
    sel = (d <= m3).astype(f32)                      # 3-NN selection mask
    w3 = sel * pl.reciprocal(d + 1e-8, approx=True)
    w3 = w3 * pl.reciprocal(jnp.sum(w3, axis=1, keepdims=True), approx=True)
    interp = jnp.dot(w3, enc_features, preferred_element_type=f32)   # [N, D]
    yfp = jnp.dot(interp, p["fp_w"][...],
                  preferred_element_type=f32) + p["fp_b"][...]
    yfp = jnp.maximum(yfp, 0.0)

    out_ref[...] = yfp + feats_ref[...]              # residual with input feats


# ----------------------------------------------------------------------------
# Parameters (deterministic synthetic init — no checkpoint load)
# ----------------------------------------------------------------------------
def init_params(key, cfg):
    D = cfg["ENC_DIM"]
    Cin = cfg["TOKENIZER_DIM"]
    Ht = cfg["TOK_HIDDEN"]
    L = cfg["DEPTH"]
    NT = cfg["NUM_TOKENS"]
    keys = jax.random.split(key, 32)
    it = iter(keys)

    def w(shape):
        return (0.02 * jax.random.normal(next(it), shape)).astype(jnp.float32)

    def z(shape):
        return jnp.zeros(shape, jnp.float32)

    return {
        "tok_w1": w((Cin, Ht)), "tok_b1": z((1, Ht)),
        "tok_w2": w((Ht, D)), "tok_b2": z((1, D)),
        "pos_w1": w((3, 128)), "pos_b1": z((1, 128)),
        "pos_w2": w((128, D)), "pos_b2": z((1, D)),
        "cls_token": w((1, D)), "cls_pos": w((1, D)),
        "te_table": w((NT, D)),
        "te_w1": w((D, D)), "te_b1": z((1, D)),
        "te_w2": w((D, D)), "te_b2": z((1, D)),
        "ln1_g": jnp.ones((L, D), jnp.float32), "ln1_b": z((L, D)),
        "wqkv": w((L, D, 3 * D)), "bqkv": z((L, 3 * D)),
        "wo": w((L, D, D)), "bo": z((L, D)),
        "ln2_g": jnp.ones((L, D), jnp.float32), "ln2_b": z((L, D)),
        "mlp_w1": w((L, D, 4 * D)), "mlp_b1": z((L, 4 * D)),
        "mlp_w2": w((L, 4 * D, D)), "mlp_b2": z((L, D)),
        "fp_w": w((D, Cin)), "fp_b": z((1, Cin)),
    }


# ----------------------------------------------------------------------------
# EPCLEncoder forward: one pallas_call, grid over batch
# ----------------------------------------------------------------------------
def epcl_encoder_forward(xyz, feats, params, cfg):
    B, N, _ = xyz.shape
    G = cfg["NUM_GROUP"]
    Sg = cfg["GROUP_SIZE"]
    D = cfg["ENC_DIM"]
    Cin = cfg["TOKENIZER_DIM"]
    S_real = 1 + G + cfg["NUM_TOKENS"]
    S_pad = ((S_real + 7) // 8) * 8          # sublane-aligned padded sequence

    # layout plumbing only (contiguous grouping: N == G * Sg)
    gxyz = xyz.reshape(B, G, Sg * 3)         # group points packed along lanes
    gfeat = feats.reshape(B, G, Sg * Cin)
    feats_b = feats.reshape(B, N, Cin)

    data = [xyz, gxyz, gfeat, feats_b]
    plist = [params[n] for n in PARAM_NAMES]

    def const_index(nd):
        return lambda b: (0,) * nd

    in_specs = (
        [pl.BlockSpec((None, N, 3), lambda b: (b, 0, 0)),
         pl.BlockSpec((None, G, Sg * 3), lambda b: (b, 0, 0)),
         pl.BlockSpec((None, G, Sg * Cin), lambda b: (b, 0, 0)),
         pl.BlockSpec((None, N, Cin), lambda b: (b, 0, 0))]
        + [pl.BlockSpec(a.shape, const_index(a.ndim)) for a in plist]
    )
    out_spec = pl.BlockSpec((None, N, Cin), lambda b: (b, 0, 0))

    out = pl.pallas_call(
        functools.partial(_epcl_kernel, cfg=dict(cfg)),
        grid=(B,),
        in_specs=in_specs,
        out_specs=out_spec,
        out_shape=jax.ShapeDtypeStruct((B, N, Cin), jnp.float32),
        scratch_shapes=[pltpu.VMEM((S_pad, D), jnp.float32)],
        compiler_params=pltpu.CompilerParams(
            dimension_semantics=("parallel",)),
    )(*data, *plist)

    return out.reshape(B * N, Cin)


# ----------------------------------------------------------------------------
if __name__ == "__main__":
    cfg = dict(
        NUM_GROUP=8,        # args.NUM_GROUP
        GROUP_SIZE=4,       # args.GROUP_SIZE
        ENC_DIM=128,        # args.ENC_DIM   (CLIP-style width, heads=4)
        TOKENIZER_DIM=16,   # args.TOKENIZER_DIM
        VOXEL_SIZE=0.05,    # args.VOXEL_SIZE
        NUM_TOKENS=20,
        NUM_HEADS=4,
        DEPTH=2,
        TOK_HIDDEN=64,
    )
    B = 2
    N = cfg["NUM_GROUP"] * cfg["GROUP_SIZE"]          # 32 points per batch

    key = jax.random.PRNGKey(0)
    k_xyz, k_feat, k_par = jax.random.split(key, 3)
    xyz = jax.random.uniform(k_xyz, (B, N, 3), jnp.float32, 0.0, 10.0)
    feats = jax.random.normal(k_feat, (B * N, cfg["TOKENIZER_DIM"]),
                              jnp.float32)
    params = init_params(k_par, cfg)

    out = epcl_encoder_forward(xyz, feats, params, cfg)
    out = jax.block_until_ready(out)
    assert out.shape == (B * N, cfg["TOKENIZER_DIM"])
    assert out.dtype == jnp.float32
    print("KERNEL_OK")
</pallas_src>

<mosaic_0001>
module attributes {stable_mosaic.version = 11 : i64} {
  func.func @_epcl_kernel(%arg0: i32, %arg1: memref<1x32x3xf32, #tpu.memory_space<vmem>>, %arg2: memref<1x8x12xf32, #tpu.memory_space<vmem>>, %arg3: memref<1x8x64xf32, #tpu.memory_space<vmem>>, %arg4: memref<1x32x16xf32, #tpu.memory_space<vmem>>, %arg5: memref<16x64xf32, #tpu.memory_space<vmem>>, %arg6: memref<1x64xf32, #tpu.memory_space<vmem>>, %arg7: memref<64x128xf32, #tpu.memory_space<vmem>>, %arg8: memref<1x128xf32, #tpu.memory_space<vmem>>, %arg9: memref<3x128xf32, #tpu.memory_space<vmem>>, %arg10: memref<1x128xf32, #tpu.memory_space<vmem>>, %arg11: memref<128x128xf32, #tpu.memory_space<vmem>>, %arg12: memref<1x128xf32, #tpu.memory_space<vmem>>, %arg13: memref<1x128xf32, #tpu.memory_space<vmem>>, %arg14: memref<1x128xf32, #tpu.memory_space<vmem>>, %arg15: memref<20x128xf32, #tpu.memory_space<vmem>>, %arg16: memref<128x128xf32, #tpu.memory_space<vmem>>, %arg17: memref<1x128xf32, #tpu.memory_space<vmem>>, %arg18: memref<128x128xf32, #tpu.memory_space<vmem>>, %arg19: memref<1x128xf32, #tpu.memory_space<vmem>>, %arg20: memref<2x128xf32, #tpu.memory_space<vmem>>, %arg21: memref<2x128xf32, #tpu.memory_space<vmem>>, %arg22: memref<2x128x384xf32, #tpu.memory_space<vmem>>, %arg23: memref<2x384xf32, #tpu.memory_space<vmem>>, %arg24: memref<2x128x128xf32, #tpu.memory_space<vmem>>, %arg25: memref<2x128xf32, #tpu.memory_space<vmem>>, %arg26: memref<2x128xf32, #tpu.memory_space<vmem>>, %arg27: memref<2x128xf32, #tpu.memory_space<vmem>>, %arg28: memref<2x128x512xf32, #tpu.memory_space<vmem>>, %arg29: memref<2x512xf32, #tpu.memory_space<vmem>>, %arg30: memref<2x512x128xf32, #tpu.memory_space<vmem>>, %arg31: memref<2x128xf32, #tpu.memory_space<vmem>>, %arg32: memref<128x16xf32, #tpu.memory_space<vmem>>, %arg33: memref<1x16xf32, #tpu.memory_space<vmem>>, %arg34: memref<1x32x16xf32, #tpu.memory_space<vmem>>, %arg35: memref<32x128xf32, #tpu.memory_space<vmem>>) attributes {dimension_semantics = [#tpu.dimension_semantics<parallel>], iteration_bounds = array<i64: 2>, scalar_prefetch = 0 : i64, scratch_operands = 1 : i64, tpu.core_type = #tpu.core_type<tc>, window_params = [{transform_indices = @transform_0, window_bounds = array<i64: 1, 32, 3>}, {transform_indices = @transform_1, window_bounds = array<i64: 1, 8, 12>}, {transform_indices = @transform_2, window_bounds = array<i64: 1, 8, 64>}, {transform_indices = @transform_3, window_bounds = array<i64: 1, 32, 16>}, {pipeline_mode = #tpu.pipeline_mode<synchronous>, transform_indices = @transform_4, window_bounds = array<i64: 16, 64>}, {pipeline_mode = #tpu.pipeline_mode<synchronous>, transform_indices = @transform_5, window_bounds = array<i64: 1, 64>}, {pipeline_mode = #tpu.pipeline_mode<synchronous>, transform_indices = @transform_6, window_bounds = array<i64: 64, 128>}, {pipeline_mode = #tpu.pipeline_mode<synchronous>, transform_indices = @transform_7, window_bounds = array<i64: 1, 128>}, {pipeline_mode = #tpu.pipeline_mode<synchronous>, transform_indices = @transform_8, window_bounds = array<i64: 3, 128>}, {pipeline_mode = #tpu.pipeline_mode<synchronous>, transform_indices = @transform_9, window_bounds = array<i64: 1, 128>}, {pipeline_mode = #tpu.pipeline_mode<synchronous>, transform_indices = @transform_10, window_bounds = array<i64: 128, 128>}, {pipeline_mode = #tpu.pipeline_mode<synchronous>, transform_indices = @transform_11, window_bounds = array<i64: 1, 128>}, {pipeline_mode = #tpu.pipeline_mode<synchronous>, transform_indices = @transform_12, window_bounds = array<i64: 1, 128>}, {pipeline_mode = #tpu.pipeline_mode<synchronous>, transform_indices = @transform_13, window_bounds = array<i64: 1, 128>}, {pipeline_mode = #tpu.pipeline_mode<synchronous>, transform_indices = @transform_14, window_bounds = array<i64: 20, 128>}, {pipeline_mode = #tpu.pipeline_mode<synchronous>, transform_indices = @transform_15, window_bounds = array<i64: 128, 128>}, {pipeline_mode = #tpu.pipeline_mode<synchronous>, transform_indices = @transform_16, window_bounds = array<i64: 1, 128>}, {pipeline_mode = #tpu.pipeline_mode<synchronous>, transform_indices = @transform_17, window_bounds = array<i64: 128, 128>}, {pipeline_mode = #tpu.pipeline_mode<synchronous>, transform_indices = @transform_18, window_bounds = array<i64: 1, 128>}, {pipeline_mode = #tpu.pipeline_mode<synchronous>, transform_indices = @transform_19, window_bounds = array<i64: 2, 128>}, {pipeline_mode = #tpu.pipeline_mode<synchronous>, transform_indices = @transform_20, window_bounds = array<i64: 2, 128>}, {pipeline_mode = #tpu.pipeline_mode<synchronous>, transform_indices = @transform_21, window_bounds = array<i64: 2, 128, 384>}, {pipeline_mode = #tpu.pipeline_mode<synchronous>, transform_indices = @transform_22, window_bounds = array<i64: 2, 384>}, {pipeline_mode = #tpu.pipeline_mode<synchronous>, transform_indices = @transform_23, window_bounds = array<i64: 2, 128, 128>}, {pipeline_mode = #tpu.pipeline_mode<synchronous>, transform_indices = @transform_24, window_bounds = array<i64: 2, 128>}, {pipeline_mode = #tpu.pipeline_mode<synchronous>, transform_indices = @transform_25, window_bounds = array<i64: 2, 128>}, {pipeline_mode = #tpu.pipeline_mode<synchronous>, transform_indices = @transform_26, window_bounds = array<i64: 2, 128>}, {pipeline_mode = #tpu.pipeline_mode<synchronous>, transform_indices = @transform_27, window_bounds = array<i64: 2, 128, 512>}, {pipeline_mode = #tpu.pipeline_mode<synchronous>, transform_indices = @transform_28, window_bounds = array<i64: 2, 512>}, {pipeline_mode = #tpu.pipeline_mode<synchronous>, transform_indices = @transform_29, window_bounds = array<i64: 2, 512, 128>}, {pipeline_mode = #tpu.pipeline_mode<synchronous>, transform_indices = @transform_30, window_bounds = array<i64: 2, 128>}, {pipeline_mode = #tpu.pipeline_mode<synchronous>, transform_indices = @transform_31, window_bounds = array<i64: 128, 16>}, {pipeline_mode = #tpu.pipeline_mode<synchronous>, transform_indices = @transform_32, window_bounds = array<i64: 1, 16>}, {transform_indices = @transform_33, window_bounds = array<i64: 1, 32, 16>}]} {
    %c0 = arith.constant 0 : index
    %c0_0 = arith.constant 0 : index
    %c0_1 = arith.constant 0 : index
    %0 = vector.load %arg3[%c0, %c0_0, %c0_1] : memref<1x8x64xf32, #tpu.memory_space<vmem>>, vector<1x8x16xf32>
    %1 = vector.shape_cast %0 : vector<1x8x16xf32> to vector<8x16xf32>
    %c0_2 = arith.constant 0 : index
    %c0_3 = arith.constant 0 : index
    %2 = vector.load %arg5[%c0_2, %c0_3] : memref<16x64xf32, #tpu.memory_space<vmem>>, vector<16x64xf32>
    %cst = arith.constant dense<0.000000e+00> : vector<8x64xf32>
    %3 = tpu.matmul %1, %2, %cst {dimension_numbers = #tpu.dot_dimension_numbers<[1], [0], [0], [1], [0, 0, 1, 1], [], []>} : vector<8x16xf32>, vector<16x64xf32>, vector<8x64xf32> -> vector<8x64xf32>
    %c0_4 = arith.constant 0 : index
    %c0_5 = arith.constant 0 : index
    %4 = vector.load %arg6[%c0_4, %c0_5] : memref<1x64xf32, #tpu.memory_space<vmem>>, vector<1x64xf32>
    %5 = vector.broadcast %4 : vector<1x64xf32> to vector<8x64xf32>
    %6 = arith.addf %3, %5 : vector<8x64xf32>
    %cst_6 = arith.constant 5.000000e-01 : f32
    %7 = vector.broadcast %cst_6 : f32 to vector<8x64xf32>
    %8 = arith.mulf %7, %6 : vector<8x64xf32>
    %cst_7 = arith.constant 1.41421354 : f32
    %9 = vector.broadcast %cst_7 : f32 to vector<8x64xf32>
    %10 = arith.divf %6, %9 : vector<8x64xf32>
    %11 = math.erf %10 : vector<8x64xf32>
    %cst_8 = arith.constant 1.000000e+00 : f32
    %12 = vector.broadcast %cst_8 : f32 to vector<8x64xf32>
    %13 = arith.addf %12, %11 : vector<8x64xf32>
    %14 = arith.mulf %8, %13 : vector<8x64xf32>
    %c0_9 = arith.constant 0 : index
    %c0_10 = arith.constant 0 : index
    %c16 = arith.constant 16 : index
    %15 = vector.load %arg3[%c0_9, %c0_10, %c16] : memref<1x8x64xf32, #tpu.memory_space<vmem>>, vector<1x8x16xf32>
    %16 = vector.shape_cast %15 : vector<1x8x16xf32> to vector<8x16xf32>
    %c0_11 = arith.constant 0 : index
    %c0_12 = arith.constant 0 : index
    %17 = vector.load %arg5[%c0_11, %c0_12] : memref<16x64xf32, #tpu.memory_space<vmem>>, vector<16x64xf32>
    %cst_13 = arith.constant dense<0.000000e+00> : vector<8x64xf32>
    %18 = tpu.matmul %16, %17, %cst_13 {dimension_numbers = #tpu.dot_dimension_numbers<[1], [0], [0], [1], [0, 0, 1, 1], [], []>} : vector<8x16xf32>, vector<16x64xf32>, vector<8x64xf32> -> vector<8x64xf32>
    %c0_14 = arith.constant 0 : index
    %c0_15 = arith.constant 0 : index
    %19 = vector.load %arg6[%c0_14, %c0_15] : memref<1x64xf32, #tpu.memory_space<vmem>>, vector<1x64xf32>
    %20 = vector.broadcast %19 : vector<1x64xf32> to vector<8x64xf32>
    %21 = arith.addf %18, %20 : vector<8x64xf32>
    %cst_16 = arith.constant 5.000000e-01 : f32
    %22 = vector.broadcast %cst_16 : f32 to vector<8x64xf32>
    %23 = arith.mulf %22, %21 : vector<8x64xf32>
    %cst_17 = arith.constant 1.41421354 : f32
    %24 = vector.broadcast %cst_17 : f32 to vector<8x64xf32>
    %25 = arith.divf %21, %24 : vector<8x64xf32>
    %26 = math.erf %25 : vector<8x64xf32>
    %cst_18 = arith.constant 1.000000e+00 : f32
    %27 = vector.broadcast %cst_18 : f32 to vector<8x64xf32>
    %28 = arith.addf %27, %26 : vector<8x64xf32>
    %29 = arith.mulf %23, %28 : vector<8x64xf32>
    %30 = arith.maximumf %14, %29 : vector<8x64xf32>
    %c0_19 = arith.constant 0 : index
    %c0_20 = arith.constant 0 : index
    %c32 = arith.constant 32 : index
    %31 = vector.load %arg3[%c0_19, %c0_20, %c32] : memref<1x8x64xf32, #tpu.memory_space<vmem>>, vector<1x8x16xf32>
    %32 = vector.shape_cast %31 : vector<1x8x16xf32> to vector<8x16xf32>
    %c0_21 = arith.constant 0 : index
    %c0_22 = arith.constant 0 : index
    %33 = vector.load %arg5[%c0_21, %c0_22] : memref<16x64xf32, #tpu.memory_space<vmem>>, vector<16x64xf32>
    %cst_23 = arith.constant dense<0.000000e+00> : vector<8x64xf32>
    %34 = tpu.matmul %32, %33, %cst_23 {dimension_numbers = #tpu.dot_dimension_numbers<[1], [0], [0], [1], [0, 0, 1, 1], [], []>} : vector<8x16xf32>, vector<16x64xf32>, vector<8x64xf32> -> vector<8x64xf32>
    %c0_24 = arith.constant 0 : index
    %c0_25 = arith.constant 0 : index
    %35 = vector.load %arg6[%c0_24, %c0_25] : memref<1x64xf32, #tpu.memory_space<vmem>>, vector<1x64xf32>
    %36 = vector.broadcast %35 : vector<1x64xf32> to vector<8x64xf32>
    %37 = arith.addf %34, %36 : vector<8x64xf32>
    %cst_26 = arith.constant 5.000000e-01 : f32
    %38 = vector.broadcast %cst_26 : f32 to vector<8x64xf32>
    %39 = arith.mulf %38, %37 : vector<8x64xf32>
    %cst_27 = arith.constant 1.41421354 : f32
    %40 = vector.broadcast %cst_27 : f32 to vector<8x64xf32>
    %41 = arith.divf %37, %40 : vector<8x64xf32>
    %42 = math.erf %41 : vector<8x64xf32>
    %cst_28 = arith.constant 1.000000e+00 : f32
    %43 = vector.broadcast %cst_28 : f32 to vector<8x64xf32>
    %44 = arith.addf %43, %42 : vector<8x64xf32>
    %45 = arith.mulf %39, %44 : vector<8x64xf32>
    %46 = arith.maximumf %30, %45 : vector<8x64xf32>
    %c0_29 = arith.constant 0 : index
    %c0_30 = arith.constant 0 : index
    %c48 = arith.constant 48 : index
    %47 = vector.load %arg3[%c0_29, %c0_30, %c48] : memref<1x8x64xf32, #tpu.memory_space<vmem>>, vector<1x8x16xf32>
    %48 = vector.shape_cast %47 : vector<1x8x16xf32> to vector<8x16xf32>
    %c0_31 = arith.constant 0 : index
    %c0_32 = arith.constant 0 : index
    %49 = vector.load %arg5[%c0_31, %c0_32] : memref<16x64xf32, #tpu.memory_space<vmem>>, vector<16x64xf32>
    %cst_33 = arith.constant dense<0.000000e+00> : vector<8x64xf32>
    %50 = tpu.matmul %48, %49, %cst_33 {dimension_numbers = #tpu.dot_dimension_numbers<[1], [0], [0], [1], [0, 0, 1, 1], [], []>} : vector<8x16xf32>, vector<16x64xf32>, vector<8x64xf32> -> vector<8x64xf32>
    %c0_34 = arith.constant 0 : index
    %c0_35 = arith.constant 0 : index
    %51 = vector.load %arg6[%c0_34, %c0_35] : memref<1x64xf32, #tpu.memory_space<vmem>>, vector<1x64xf32>
    %52 = vector.broadcast %51 : vector<1x64xf32> to vector<8x64xf32>
    %53 = arith.addf %50, %52 : vector<8x64xf32>
    %cst_36 = arith.constant 5.000000e-01 : f32
    %54 = vector.broadcast %cst_36 : f32 to vector<8x64xf32>
    %55 = arith.mulf %54, %53 : vector<8x64xf32>
    %cst_37 = arith.constant 1.41421354 : f32
    %56 = vector.broadcast %cst_37 : f32 to vector<8x64xf32>
    %57 = arith.divf %53, %56 : vector<8x64xf32>
    %58 = math.erf %57 : vector<8x64xf32>
    %cst_38 = arith.constant 1.000000e+00 : f32
    %59 = vector.broadcast %cst_38 : f32 to vector<8x64xf32>
    %60 = arith.addf %59, %58 : vector<8x64xf32>
    %61 = arith.mulf %55, %60 : vector<8x64xf32>
    %62 = arith.maximumf %46, %61 : vector<8x64xf32>
    %c0_39 = arith.constant 0 : index
    %c0_40 = arith.constant 0 : index
    %63 = vector.load %arg7[%c0_39, %c0_40] : memref<64x128xf32, #tpu.memory_space<vmem>>, vector<64x128xf32>
    %cst_41 = arith.constant dense<0.000000e+00> : vector<8x128xf32>
    %64 = tpu.matmul %62, %63, %cst_41 {dimension_numbers = #tpu.dot_dimension_numbers<[1], [0], [0], [1], [0, 0, 1, 1], [], []>} : vector<8x64xf32>, vector<64x128xf32>, vector<8x128xf32> -> vector<8x128xf32>
    %c0_42 = arith.constant 0 : index
    %c0_43 = arith.constant 0 : index
    %65 = vector.load %arg8[%c0_42, %c0_43] : memref<1x128xf32, #tpu.memory_space<vmem>>, vector<1x128xf32>
    %66 = vector.broadcast %65 : vector<1x128xf32> to vector<8x128xf32>
    %67 = arith.addf %64, %66 : vector<8x128xf32>
    %c0_44 = arith.constant 0 : index
    %c0_45 = arith.constant 0 : index
    %c0_46 = arith.constant 0 : index
    %68 = vector.load %arg2[%c0_44, %c0_45, %c0_46] : memref<1x8x12xf32, #tpu.memory_space<vmem>>, vector<1x8x3xf32>
    %69 = vector.shape_cast %68 : vector<1x8x3xf32> to vector<8x3xf32>
    %c0_47 = arith.constant 0 : index
    %c0_48 = arith.constant 0 : index
    %c3 = arith.constant 3 : index
    %70 = vector.load %arg2[%c0_47, %c0_48, %c3] : memref<1x8x12xf32, #tpu.memory_space<vmem>>, vector<1x8x3xf32>
    %71 = vector.shape_cast %70 : vector<1x8x3xf32> to vector<8x3xf32>
    %72 = arith.addf %69, %71 : vector<8x3xf32>
    %c0_49 = arith.constant 0 : index
    %c0_50 = arith.constant 0 : index
    %c6 = arith.constant 6 : index
    %73 = vector.load %arg2[%c0_49, %c0_50, %c6] : memref<1x8x12xf32, #tpu.memory_space<vmem>>, vector<1x8x3xf32>
    %74 = vector.shape_cast %73 : vector<1x8x3xf32> to vector<8x3xf32>
    %75 = arith.addf %72, %74 : vector<8x3xf32>
    %c0_51 = arith.constant 0 : index
    %c0_52 = arith.constant 0 : index
    %c9 = arith.constant 9 : index
    %76 = vector.load %arg2[%c0_51, %c0_52, %c9] : memref<1x8x12xf32, #tpu.memory_space<vmem>>, vector<1x8x3xf32>
    %77 = vector.shape_cast %76 : vector<1x8x3xf32> to vector<8x3xf32>
    %78 = arith.addf %75, %77 : vector<8x3xf32>
    %cst_53 = arith.constant 1.250000e-02 : f32
    %79 = vector.broadcast %cst_53 : f32 to vector<8x3xf32>
    %80 = arith.mulf %78, %79 : vector<8x3xf32>
    %cst_54 = arith.constant dense<0.000000e+00> : vector<3xf32>
    %81 = vector.multi_reduction <add>, %80, %cst_54 [0] : vector<8x3xf32> to vector<3xf32>
    %82 = vector.shape_cast %81 : vector<3xf32> to vector<1x3xf32>
    %cst_55 = arith.constant 8.000000e+00 : f32
    %83 = vector.broadcast %cst_55 : f32 to vector<1x3xf32>
    %84 = arith.divf %82, %83 : vector<1x3xf32>
    %85 = vector.broadcast %84 : vector<1x3xf32> to vector<8x3xf32>
    %86 = arith.subf %80, %85 : vector<8x3xf32>
    %87 = arith.mulf %86, %86 : vector<8x3xf32>
    %cst_56 = arith.constant dense<0.000000e+00> : vector<8xf32>
    %88 = vector.multi_reduction <add>, %87, %cst_56 [1] : vector<8x3xf32> to vector<8xf32>
    %89 = vector.shape_cast %88 : vector<8xf32> to vector<8x1xf32>
    %90 = math.sqrt %89 : vector<8x1xf32>
    %cst_57 = arith.constant dense<0xFF800000> : vector<1xf32>
    %91 = vector.multi_reduction <maximumf>, %90, %cst_57 [0] : vector<8x1xf32> to vector<1xf32>
    %92 = vector.shape_cast %91 : vector<1xf32> to vector<1x1xf32>
    %93 = vector.broadcast %92 : vector<1x1xf32> to vector<8x3xf32>
    %94 = arith.divf %86, %93 : vector<8x3xf32>
    %c0_58 = arith.constant 0 : index
    %c0_59 = arith.constant 0 : index
    %95 = vector.load %arg9[%c0_58, %c0_59] : memref<3x128xf32, #tpu.memory_space<vmem>>, vector<3x128xf32>
    %cst_60 = arith.constant dense<0.000000e+00> : vector<8x128xf32>
    %96 = tpu.matmul %94, %95, %cst_60 {dimension_numbers = #tpu.dot_dimension_numbers<[1], [0], [0], [1], [0, 0, 1, 1], [], []>} : vector<8x3xf32>, vector<3x128xf32>, vector<8x128xf32> -> vector<8x128xf32>
    %c0_61 = arith.constant 0 : index
    %c0_62 = arith.constant 0 : index
    %97 = vector.load %arg10[%c0_61, %c0_62] : memref<1x128xf32, #tpu.memory_space<vmem>>, vector<1x128xf32>
    %98 = vector.broadcast %97 : vector<1x128xf32> to vector<8x128xf32>
    %99 = arith.addf %96, %98 : vector<8x128xf32>
    %cst_63 = arith.constant 5.000000e-01 : f32
    %100 = vector.broadcast %cst_63 : f32 to vector<8x128xf32>
    %101 = arith.mulf %100, %99 : vector<8x128xf32>
    %cst_64 = arith.constant 1.41421354 : f32
    %102 = vector.broadcast %cst_64 : f32 to vector<8x128xf32>
    %103 = arith.divf %99, %102 : vector<8x128xf32>
    %104 = math.erf %103 : vector<8x128xf32>
    %cst_65 = arith.constant 1.000000e+00 : f32
    %105 = vector.broadcast %cst_65 : f32 to vector<8x128xf32>
    %106 = arith.addf %105, %104 : vector<8x128xf32>
    %107 = arith.mulf %101, %106 : vector<8x128xf32>
    %c0_66 = arith.constant 0 : index
    %c0_67 = arith.constant 0 : index
    %108 = vector.load %arg11[%c0_66, %c0_67] : memref<128x128xf32, #tpu.memory_space<vmem>>, vector<128x128xf32>
    %cst_68 = arith.constant dense<0.000000e+00> : vector<8x128xf32>
    %109 = tpu.matmul %107, %108, %cst_68 {dimension_numbers = #tpu.dot_dimension_numbers<[1], [0], [0], [1], [0, 0, 1, 1], [], []>} : vector<8x128xf32>, vector<128x128xf32>, vector<8x128xf32> -> vector<8x128xf32>
    %c0_69 = arith.constant 0 : index
    %c0_70 = arith.constant 0 : index
    %110 = vector.load %arg12[%c0_69, %c0_70] : memref<1x128xf32, #tpu.memory_space<vmem>>, vector<1x128xf32>
    %111 = vector.broadcast %110 : vector<1x128xf32> to vector<8x128xf32>
    %112 = arith.addf %109, %111 : vector<8x128xf32>
    %c0_71 = arith.constant 0 : index
    %c0_72 = arith.constant 0 : index
    %113 = vector.load %arg15[%c0_71, %c0_72] : memref<20x128xf32, #tpu.memory_space<vmem>>, vector<20x128xf32>
    %c0_73 = arith.constant 0 : index
    %c0_74 = arith.constant 0 : index
    %114 = vector.load %arg16[%c0_73, %c0_74] : memref<128x128xf32, #tpu.memory_space<vmem>>, vector<128x128xf32>
    %cst_75 = arith.constant dense<0.000000e+00> : vector<20x128xf32>
    %115 = tpu.matmul %113, %114, %cst_75 {dimension_numbers = #tpu.dot_dimension_numbers<[1], [0], [0], [1], [0, 0, 1, 1], [], []>} : vector<20x128xf32>, vector<128x128xf32>, vector<20x128xf32> -> vector<20x128xf32>
    %c0_76 = arith.constant 0 : index
    %c0_77 = arith.constant 0 : index
    %116 = vector.load %arg17[%c0_76, %c0_77] : memref<1x128xf32, #tpu.memory_space<vmem>>, vector<1x128xf32>
    %117 = vector.broadcast %116 : vector<1x128xf32> to vector<20x128xf32>
    %118 = arith.addf %115, %117 : vector<20x128xf32>
    %cst_78 = arith.constant 5.000000e-01 : f32
    %119 = vector.broadcast %cst_78 : f32 to vector<20x128xf32>
    %120 = arith.mulf %119, %118 : vector<20x128xf32>
    %cst_79 = arith.constant 1.41421354 : f32
    %121 = vector.broadcast %cst_79 : f32 to vector<20x128xf32>
    %122 = arith.divf %118, %121 : vector<20x128xf32>
    %123 = math.erf %122 : vector<20x128xf32>
    %cst_80 = arith.constant 1.000000e+00 : f32
    %124 = vector.broadcast %cst_80 : f32 to vector<20x128xf32>
    %125 = arith.addf %124, %123 : vector<20x128xf32>
    %126 = arith.mulf %120, %125 : vector<20x128xf32>
    %c0_81 = arith.constant 0 : index
    %c0_82 = arith.constant 0 : index
    %127 = vector.load %arg18[%c0_81, %c0_82] : memref<128x128xf32, #tpu.memory_space<vmem>>, vector<128x128xf32>
    %cst_83 = arith.constant dense<0.000000e+00> : vector<20x128xf32>
    %128 = tpu.matmul %126, %127, %cst_83 {dimension_numbers = #tpu.dot_dimension_numbers<[1], [0], [0], [1], [0, 0, 1, 1], [], []>} : vector<20x128xf32>, vector<128x128xf32>, vector<20x128xf32> -> vector<20x128xf32>
    %c0_84 = arith.constant 0 : index
    %c0_85 = arith.constant 0 : index
    %129 = vector.load %arg19[%c0_84, %c0_85] : memref<1x128xf32, #tpu.memory_space<vmem>>, vector<1x128xf32>
    %130 = vector.broadcast %129 : vector<1x128xf32> to vector<20x128xf32>
    %131 = arith.addf %128, %130 : vector<20x128xf32>
    %c0_86 = arith.constant 0 : index
    %c0_87 = arith.constant 0 : index
    %132 = vector.load %arg13[%c0_86, %c0_87] : memref<1x128xf32, #tpu.memory_space<vmem>>, vector<1x128xf32>
    %c0_88 = arith.constant 0 : index
    %c0_89 = arith.constant 0 : index
    %133 = vector.load %arg14[%c0_88, %c0_89] : memref<1x128xf32, #tpu.memory_space<vmem>>, vector<1x128xf32>
    %134 = arith.addf %132, %133 : vector<1x128xf32>
    %c0_90 = arith.constant 0 : index
    %c0_91 = arith.constant 0 : index
    %135 = vector.load %arg35[%c0_90, %c0_91] : memref<32x128xf32, #tpu.memory_space<vmem>>, vector<1x128xf32>
    tpu.vector_store %arg35[%c0_90, %c0_91], %134 {strides = array<i32>} : memref<32x128xf32, #tpu.memory_space<vmem>>, vector<1x128xf32>,
    %136 = arith.addf %67, %112 : vector<8x128xf32>
    %c1 = arith.constant 1 : index
    %c0_92 = arith.constant 0 : index
    %137 = vector.load %arg35[%c1, %c0_92] : memref<32x128xf32, #tpu.memory_space<vmem>>, vector<8x128xf32>
    tpu.vector_store %arg35[%c1, %c0_92], %136 {strides = array<i32>} : memref<32x128xf32, #tpu.memory_space<vmem>>, vector<8x128xf32>,
    %c9_93 = arith.constant 9 : index
    %c0_94 = arith.constant 0 : index
    %138 = vector.load %arg35[%c9_93, %c0_94] : memref<32x128xf32, #tpu.memory_space<vmem>>, vector<20x128xf32>
    tpu.vector_store %arg35[%c9_93, %c0_94], %131 {strides = array<i32>} : memref<32x128xf32, #tpu.memory_space<vmem>>, vector<20x128xf32>,
    %cst_95 = arith.constant 0.000000e+00 : f32
    %139 = vector.broadcast %cst_95 : f32 to vector<3x128xf32>
    %c29 = arith.constant 29 : index
    %c0_96 = arith.constant 0 : index
    %140 = vector.load %arg35[%c29, %c0_96] : memref<32x128xf32, #tpu.memory_space<vmem>>, vector<3x128xf32>
    tpu.vector_store %arg35[%c29, %c0_96], %139 {strides = array<i32>} : memref<32x128xf32, #tpu.memory_space<vmem>>, vector<3x128xf32>,
    %c0_97 = arith.constant 0 : index
    %c0_98 = arith.constant 0 : index
    %141 = vector.load %arg35[%c0_97, %c0_98] : memref<32x128xf32, #tpu.memory_space<vmem>>, vector<32x128xf32>
    %142 = tpu.iota {dimensions = array<i32: 1>} : vector<32x32xi32>
    %c29_i32 = arith.constant 29 : i32
    %143 = vector.broadcast %c29_i32 : i32 to vector<32x32xi32>
    %144 = arith.cmpi slt, %142, %143 : vector<32x32xi32>
    %cst_99 = arith.constant 0.000000e+00 : f32
    %cst_100 = arith.constant -1.000000e+30 : f32
    %145 = vector.broadcast %cst_99 : f32 to vector<32x32xf32>
    %146 = vector.broadcast %cst_100 : f32 to vector<32x32xf32>
    %147 = arith.select %144, %145, %146 : vector<32x32xi1>, vector<32x32xf32>
    %c0_101 = arith.constant 0 : index
    %c0_102 = arith.constant 0 : index
    %148 = vector.load %arg20[%c0_101, %c0_102] : memref<2x128xf32, #tpu.memory_space<vmem>>, vector<1x128xf32>
    %c0_103 = arith.constant 0 : index
    %c0_104 = arith.constant 0 : index
    %149 = vector.load %arg21[%c0_103, %c0_104] : memref<2x128xf32, #tpu.memory_space<vmem>>, vector<1x128xf32>
    %cst_105 = arith.constant dense<0.000000e+00> : vector<32xf32>
    %150 = vector.multi_reduction <add>, %141, %cst_105 [1] : vector<32x128xf32> to vector<32xf32>
    %151 = vector.shape_cast %150 : vector<32xf32> to vector<32x1xf32>
    %cst_106 = arith.constant 1.280000e+02 : f32
    %152 = vector.broadcast %cst_106 : f32 to vector<32x1xf32>
    %153 = arith.divf %151, %152 : vector<32x1xf32>
    %154 = vector.broadcast %153 : vector<32x1xf32> to vector<32x128xf32>
    %155 = arith.subf %141, %154 : vector<32x128xf32>
    %156 = arith.mulf %155, %155 : vector<32x128xf32>
    %cst_107 = arith.constant dense<0.000000e+00> : vector<32xf32>
    %157 = vector.multi_reduction <add>, %156, %cst_107 [1] : vector<32x128xf32> to vector<32xf32>
    %158 = vector.shape_cast %157 : vector<32xf32> to vector<32x1xf32>
    %cst_108 = arith.constant 1.280000e+02 : f32
    %159 = vector.broadcast %cst_108 : f32 to vector<32x1xf32>
    %160 = arith.divf %158, %159 : vector<32x1xf32>
    %161 = vector.broadcast %153 : vector<32x1xf32> to vector<32x128xf32>
    %162 = arith.subf %141, %161 : vector<32x128xf32>
    %cst_109 = arith.constant 9.99999974E-6 : f32
    %163 = vector.broadcast %cst_109 : f32 to vector<32x1xf32>
    %164 = arith.addf %160, %163 : vector<32x1xf32>
    %165 = math.rsqrt %164 : vector<32x1xf32>
    %166 = vector.broadcast %165 : vector<32x1xf32> to vector<32x128xf32>
    %167 = arith.mulf %162, %166 : vector<32x128xf32>
    %168 = vector.broadcast %148 : vector<1x128xf32> to vector<32x128xf32>
    %169 = arith.mulf %167, %168 : vector<32x128xf32>
    %170 = vector.broadcast %149 : vector<1x128xf32> to vector<32x128xf32>
    %171 = arith.addf %169, %170 : vector<32x128xf32>
    %c0_110 = arith.constant 0 : index
    %c0_111 = arith.constant 0 : index
    %c0_112 = arith.constant 0 : index
    %172 = vector.load %arg22[%c0_110, %c0_111, %c0_112] : memref<2x128x384xf32, #tpu.memory_space<vmem>>, vector<1x128x384xf32>
    %173 = vector.shape_cast %172 : vector<1x128x384xf32> to vector<128x384xf32>
    %cst_113 = arith.constant dense<0.000000e+00> : vector<32x384xf32>
    %174 = tpu.matmul %171, %173, %cst_113 {dimension_numbers = #tpu.dot_dimension_numbers<[1], [0], [0], [1], [0, 0, 1, 1], [], []>} : vector<32x128xf32>, vector<128x384xf32>, vector<32x384xf32> -> vector<32x384xf32>
    %c0_114 = arith.constant 0 : index
    %c0_115 = arith.constant 0 : index
    %175 = vector.load %arg23[%c0_114, %c0_115] : memref<2x384xf32, #tpu.memory_space<vmem>>, vector<1x384xf32>
    %176 = vector.broadcast %175 : vector<1x384xf32> to vector<32x384xf32>
    %177 = arith.addf %174, %176 : vector<32x384xf32>
    %c0_116 = arith.constant 0 : index
    %c0_117 = arith.constant 0 : index
    %c0_118 = arith.constant 0 : index
    %178 = vector.load %arg24[%c0_116, %c0_117, %c0_118] : memref<2x128x128xf32, #tpu.memory_space<vmem>>, vector<1x128x128xf32>
    %179 = vector.shape_cast %178 : vector<1x128x128xf32> to vector<128x128xf32>
    %cst_119 = arith.constant 0.000000e+00 : f32
    %180 = vector.broadcast %cst_119 : f32 to vector<32x128xf32>
    %181 = vector.extract_strided_slice %177 {offsets = [0, 0], sizes = [32, 32], strides = [1, 1]} : vector<32x384xf32> to vector<32x32xf32>
    %182 = vector.extract_strided_slice %177 {offsets = [0, 128], sizes = [32, 32], strides = [1, 1]} : vector<32x384xf32> to vector<32x32xf32>
    %183 = vector.extract_strided_slice %177 {offsets = [0, 256], sizes = [32, 32], strides = [1, 1]} : vector<32x384xf32> to vector<32x32xf32>
    %cst_120 = arith.constant dense<0.000000e+00> : vector<32x32xf32>
    %184 = tpu.matmul %181, %182, %cst_120 {dimension_numbers = #tpu.dot_dimension_numbers<[1], [1], [0], [0], [0, 0, 1, 0], [], []>} : vector<32x32xf32>, vector<32x32xf32>, vector<32x32xf32> -> vector<32x32xf32>
    %cst_121 = arith.constant 0.176776692 : f32
    %185 = vector.broadcast %cst_121 : f32 to vector<32x32xf32>
    %186 = arith.mulf %184, %185 : vector<32x32xf32>
    %187 = arith.addf %186, %147 : vector<32x32xf32>
    %cst_122 = arith.constant dense<0xFF800000> : vector<32xf32>
    %188 = vector.multi_reduction <maximumf>, %187, %cst_122 [1] : vector<32x32xf32> to vector<32xf32>
    %189 = vector.shape_cast %188 : vector<32xf32> to vector<32x1xf32>
    %190 = vector.broadcast %189 : vector<32x1xf32> to vector<32x32xf32>
    %191 = arith.subf %187, %190 : vector<32x32xf32>
    %192 = math.exp %191 : vector<32x32xf32>
    %cst_123 = arith.constant dense<0.000000e+00> : vector<32xf32>
    %193 = vector.multi_reduction <add>, %192, %cst_123 [1] : vector<32x32xf32> to vector<32xf32>
    %194 = vector.shape_cast %193 : vector<32xf32> to vector<32x1xf32>
    %195 = tpu.reciprocal %194 {approx = true} : vector<32x1xf32> -> vector<32x1xf32>
    %196 = vector.broadcast %195 : vector<32x1xf32> to vector<32x32xf32>
    %197 = arith.mulf %192, %196 : vector<32x32xf32>
    %cst_124 = arith.constant dense<0.000000e+00> : vector<32x32xf32>
    %198 = tpu.matmul %197, %183, %cst_124 {dimension_numbers = #tpu.dot_dimension_numbers<[1], [0], [0], [1], [0, 0, 1, 1], [], []>} : vector<32x32xf32>, vector<32x32xf32>, vector<32x32xf32> -> vector<32x32xf32>
    %199 = vector.extract_strided_slice %179 {offsets = [0, 0], sizes = [32, 128], strides = [1, 1]} : vector<128x128xf32> to vector<32x128xf32>
    %cst_125 = arith.constant dense<0.000000e+00> : vector<32x128xf32>
    %200 = tpu.matmul %198, %199, %cst_125 {dimension_numbers = #tpu.dot_dimension_numbers<[1], [0], [0], [1], [0, 0, 1, 1], [], []>} : vector<32x32xf32>, vector<32x128xf32>, vector<32x128xf32> -> vector<32x128xf32>
    %201 = arith.addf %180, %200 : vector<32x128xf32>
    %202 = vector.extract_strided_slice %177 {offsets = [0, 32], sizes = [32, 32], strides = [1, 1]} : vector<32x384xf32> to vector<32x32xf32>
    %203 = vector.extract_strided_slice %177 {offsets = [0, 160], sizes = [32, 32], strides = [1, 1]} : vector<32x384xf32> to vector<32x32xf32>
    %204 = vector.extract_strided_slice %177 {offsets = [0, 288], sizes = [32, 32], strides = [1, 1]} : vector<32x384xf32> to vector<32x32xf32>
    %cst_126 = arith.constant dense<0.000000e+00> : vector<32x32xf32>
    %205 = tpu.matmul %202, %203, %cst_126 {dimension_numbers = #tpu.dot_dimension_numbers<[1], [1], [0], [0], [0, 0, 1, 0], [], []>} : vector<32x32xf32>, vector<32x32xf32>, vector<32x32xf32> -> vector<32x32xf32>
    %cst_127 = arith.constant 0.176776692 : f32
    %206 = vector.broadcast %cst_127 : f32 to vector<32x32xf32>
    %207 = arith.mulf %205, %206 : vector<32x32xf32>
    %208 = arith.addf %207, %147 : vector<32x32xf32>
    %cst_128 = arith.constant dense<0xFF800000> : vector<32xf32>
    %209 = vector.multi_reduction <maximumf>, %208, %cst_128 [1] : vector<32x32xf32> to vector<32xf32>
    %210 = vector.shape_cast %209 : vector<32xf32> to vector<32x1xf32>
    %211 = vector.broadcast %210 : vector<32x1xf32> to vector<32x32xf32>
    %212 = arith.subf %208, %211 : vector<32x32xf32>
    %213 = math.exp %212 : vector<32x32xf32>
    %cst_129 = arith.constant dense<0.000000e+00> : vector<32xf32>
    %214 = vector.multi_reduction <add>, %213, %cst_129 [1] : vector<32x32xf32> to vector<32xf32>
    %215 = vector.shape_cast %214 : vector<32xf32> to vector<32x1xf32>
    %216 = tpu.reciprocal %215 {approx = true} : vector<32x1xf32> -> vector<32x1xf32>
    %217 = vector.broadcast %216 : vector<32x1xf32> to vector<32x32xf32>
    %218 = arith.mulf %213, %217 : vector<32x32xf32>
    %cst_130 = arith.constant dense<0.000000e+00> : vector<32x32xf32>
    %219 = tpu.matmul %218, %204, %cst_130 {dimension_numbers = #tpu.dot_dimension_numbers<[1], [0], [0], [1], [0, 0, 1, 1], [], []>} : vector<32x32xf32>, vector<32x32xf32>, vector<32x32xf32> -> vector<32x32xf32>
    %220 = vector.extract_strided_slice %179 {offsets = [32, 0], sizes = [32, 128], strides = [1, 1]} : vector<128x128xf32> to vector<32x128xf32>
    %cst_131 = arith.constant dense<0.000000e+00> : vector<32x128xf32>
    %221 = tpu.matmul %219, %220, %cst_131 {dimension_numbers = #tpu.dot_dimension_numbers<[1], [0], [0], [1], [0, 0, 1, 1], [], []>} : vector<32x32xf32>, vector<32x128xf32>, vector<32x128xf32> -> vector<32x128xf32>
    %222 = arith.addf %201, %221 : vector<32x128xf32>
    %223 = vector.extract_strided_slice %177 {offsets = [0, 64], sizes = [32, 32], strides = [1, 1]} : vector<32x384xf32> to vector<32x32xf32>
    %224 = vector.extract_strided_slice %177 {offsets = [0, 192], sizes = [32, 32], strides = [1, 1]} : vector<32x384xf32> to vector<32x32xf32>
    %225 = vector.extract_strided_slice %177 {offsets = [0, 320], sizes = [32, 32], strides = [1, 1]} : vector<32x384xf32> to vector<32x32xf32>
    %cst_132 = arith.constant dense<0.000000e+00> : vector<32x32xf32>
    %226 = tpu.matmul %223, %224, %cst_132 {dimension_numbers = #tpu.dot_dimension_numbers<[1], [1], [0], [0], [0, 0, 1, 0], [], []>} : vector<32x32xf32>, vector<32x32xf32>, vector<32x32xf32> -> vector<32x32xf32>
    %cst_133 = arith.constant 0.176776692 : f32
    %227 = vector.broadcast %cst_133 : f32 to vector<32x32xf32>
    %228 = arith.mulf %226, %227 : vector<32x32xf32>
    %229 = arith.addf %228, %147 : vector<32x32xf32>
    %cst_134 = arith.constant dense<0xFF800000> : vector<32xf32>
    %230 = vector.multi_reduction <maximumf>, %229, %cst_134 [1] : vector<32x32xf32> to vector<32xf32>
    %231 = vector.shape_cast %230 : vector<32xf32> to vector<32x1xf32>
    %232 = vector.broadcast %231 : vector<32x1xf32> to vector<32x32xf32>
    %233 = arith.subf %229, %232 : vector<32x32xf32>
    %234 = math.exp %233 : vector<32x32xf32>
    %cst_135 = arith.constant dense<0.000000e+00> : vector<32xf32>
    %235 = vector.multi_reduction <add>, %234, %cst_135 [1] : vector<32x32xf32> to vector<32xf32>
    %236 = vector.shape_cast %235 : vector<32xf32> to vector<32x1xf32>
    %237 = tpu.reciprocal %236 {approx = true} : vector<32x1xf32> -> vector<32x1xf32>
    %238 = vector.broadcast %237 : vector<32x1xf32> to vector<32x32xf32>
    %239 = arith.mulf %234, %238 : vector<32x32xf32>
    %cst_136 = arith.constant dense<0.000000e+00> : vector<32x32xf32>
    %240 = tpu.matmul %239, %225, %cst_136 {dimension_numbers = #tpu.dot_dimension_numbers<[1], [0], [0], [1], [0, 0, 1, 1], [], []>} : vector<32x32xf32>, vector<32x32xf32>, vector<32x32xf32> -> vector<32x32xf32>
    %241 = vector.extract_strided_slice %179 {offsets = [64, 0], sizes = [32, 128], strides = [1, 1]} : vector<128x128xf32> to vector<32x128xf32>
    %cst_137 = arith.constant dense<0.000000e+00> : vector<32x128xf32>
    %242 = tpu.matmul %240, %241, %cst_137 {dimension_numbers = #tpu.dot_dimension_numbers<[1], [0], [0], [1], [0, 0, 1, 1], [], []>} : vector<32x32xf32>, vector<32x128xf32>, vector<32x128xf32> -> vector<32x128xf32>
    %243 = arith.addf %222, %242 : vector<32x128xf32>
    %244 = vector.extract_strided_slice %177 {offsets = [0, 96], sizes = [32, 32], strides = [1, 1]} : vector<32x384xf32> to vector<32x32xf32>
    %245 = vector.extract_strided_slice %177 {offsets = [0, 224], sizes = [32, 32], strides = [1, 1]} : vector<32x384xf32> to vector<32x32xf32>
    %246 = vector.extract_strided_slice %177 {offsets = [0, 352], sizes = [32, 32], strides = [1, 1]} : vector<32x384xf32> to vector<32x32xf32>
    %cst_138 = arith.constant dense<0.000000e+00> : vector<32x32xf32>
    %247 = tpu.matmul %244, %245, %cst_138 {dimension_numbers = #tpu.dot_dimension_numbers<[1], [1], [0], [0], [0, 0, 1, 0], [], []>} : vector<32x32xf32>, vector<32x32xf32>, vector<32x32xf32> -> vector<32x32xf32>
    %cst_139 = arith.constant 0.176776692 : f32
    %248 = vector.broadcast %cst_139 : f32 to vector<32x32xf32>
    %249 = arith.mulf %247, %248 : vector<32x32xf32>
    %250 = arith.addf %249, %147 : vector<32x32xf32>
    %cst_140 = arith.constant dense<0xFF800000> : vector<32xf32>
    %251 = vector.multi_reduction <maximumf>, %250, %cst_140 [1] : vector<32x32xf32> to vector<32xf32>
    %252 = vector.shape_cast %251 : vector<32xf32> to vector<32x1xf32>
    %253 = vector.broadcast %252 : vector<32x1xf32> to vector<32x32xf32>
    %254 = arith.subf %250, %253 : vector<32x32xf32>
    %255 = math.exp %254 : vector<32x32xf32>
    %cst_141 = arith.constant dense<0.000000e+00> : vector<32xf32>
    %256 = vector.multi_reduction <add>, %255, %cst_141 [1] : vector<32x32xf32> to vector<32xf32>
    %257 = vector.shape_cast %256 : vector<32xf32> to vector<32x1xf32>
    %258 = tpu.reciprocal %257 {approx = true} : vector<32x1xf32> -> vector<32x1xf32>
    %259 = vector.broadcast %258 : vector<32x1xf32> to vector<32x32xf32>
    %260 = arith.mulf %255, %259 : vector<32x32xf32>
    %cst_142 = arith.constant dense<0.000000e+00> : vector<32x32xf32>
    %261 = tpu.matmul %260, %246, %cst_142 {dimension_numbers = #tpu.dot_dimension_numbers<[1], [0], [0], [1], [0, 0, 1, 1], [], []>} : vector<32x32xf32>, vector<32x32xf32>, vector<32x32xf32> -> vector<32x32xf32>
    %262 = vector.extract_strided_slice %179 {offsets = [96, 0], sizes = [32, 128], strides = [1, 1]} : vector<128x128xf32> to vector<32x128xf32>
    %cst_143 = arith.constant dense<0.000000e+00> : vector<32x128xf32>
    %263 = tpu.matmul %261, %262, %cst_143 {dimension_numbers = #tpu.dot_dimension_numbers<[1], [0], [0], [1], [0, 0, 1, 1], [], []>} : vector<32x32xf32>, vector<32x128xf32>, vector<32x128xf32> -> vector<32x128xf32>
    %264 = arith.addf %243, %263 : vector<32x128xf32>
    %265 = arith.addf %141, %264 : vector<32x128xf32>
    %c0_144 = arith.constant 0 : index
    %c0_145 = arith.constant 0 : index
    %266 = vector.load %arg25[%c0_144, %c0_145] : memref<2x128xf32, #tpu.memory_space<vmem>>, vector<1x128xf32>
    %267 = vector.broadcast %266 : vector<1x128xf32> to vector<32x128xf32>
    %268 = arith.addf %265, %267 : vector<32x128xf32>
    %c0_146 = arith.constant 0 : index
    %c0_147 = arith.constant 0 : index
    %269 = vector.load %arg26[%c0_146, %c0_147] : memref<2x128xf32, #tpu.memory_space<vmem>>, vector<1x128xf32>
    %c0_148 = arith.constant 0 : index
    %c0_149 = arith.constant 0 : index
    %270 = vector.load %arg27[%c0_148, %c0_149] : memref<2x128xf32, #tpu.memory_space<vmem>>, vector<1x128xf32>
    %cst_150 = arith.constant dense<0.000000e+00> : vector<32xf32>
    %271 = vector.multi_reduction <add>, %268, %cst_150 [1] : vector<32x128xf32> to vector<32xf32>
    %272 = vector.shape_cast %271 : vector<32xf32> to vector<32x1xf32>
    %cst_151 = arith.constant 1.280000e+02 : f32
    %273 = vector.broadcast %cst_151 : f32 to vector<32x1xf32>
    %274 = arith.divf %272, %273 : vector<32x1xf32>
    %275 = vector.broadcast %274 : vector<32x1xf32> to vector<32x128xf32>
    %276 = arith.subf %268, %275 : vector<32x128xf32>
    %277 = arith.mulf %276, %276 : vector<32x128xf32>
    %cst_152 = arith.constant dense<0.000000e+00> : vector<32xf32>
    %278 = vector.multi_reduction <add>, %277, %cst_152 [1] : vector<32x128xf32> to vector<32xf32>
    %279 = vector.shape_cast %278 : vector<32xf32> to vector<32x1xf32>
    %cst_153 = arith.constant 1.280000e+02 : f32
    %280 = vector.broadcast %cst_153 : f32 to vector<32x1xf32>
    %281 = arith.divf %279, %280 : vector<32x1xf32>
    %282 = vector.broadcast %274 : vector<32x1xf32> to vector<32x128xf32>
    %283 = arith.subf %268, %282 : vector<32x128xf32>
    %cst_154 = arith.constant 9.99999974E-6 : f32
    %284 = vector.broadcast %cst_154 : f32 to vector<32x1xf32>
    %285 = arith.addf %281, %284 : vector<32x1xf32>
    %286 = math.rsqrt %285 : vector<32x1xf32>
    %287 = vector.broadcast %286 : vector<32x1xf32> to vector<32x128xf32>
    %288 = arith.mulf %283, %287 : vector<32x128xf32>
    %289 = vector.broadcast %269 : vector<1x128xf32> to vector<32x128xf32>
    %290 = arith.mulf %288, %289 : vector<32x128xf32>
    %291 = vector.broadcast %270 : vector<1x128xf32> to vector<32x128xf32>
    %292 = arith.addf %290, %291 : vector<32x128xf32>
    %c0_155 = arith.constant 0 : index
    %c0_156 = arith.constant 0 : index
    %c0_157 = arith.constant 0 : index
    %293 = vector.load %arg28[%c0_155, %c0_156, %c0_157] : memref<2x128x512xf32, #tpu.memory_space<vmem>>, vector<1x128x512xf32>
    %294 = vector.shape_cast %293 : vector<1x128x512xf32> to vector<128x512xf32>
    %cst_158 = arith.constant dense<0.000000e+00> : vector<32x512xf32>
    %295 = tpu.matmul %292, %294, %cst_158 {dimension_numbers = #tpu.dot_dimension_numbers<[1], [0], [0], [1], [0, 0, 1, 1], [], []>} : vector<32x128xf32>, vector<128x512xf32>, vector<32x512xf32> -> vector<32x512xf32>
    %c0_159 = arith.constant 0 : index
    %c0_160 = arith.constant 0 : index
    %296 = vector.load %arg29[%c0_159, %c0_160] : memref<2x512xf32, #tpu.memory_space<vmem>>, vector<1x512xf32>
    %297 = vector.broadcast %296 : vector<1x512xf32> to vector<32x512xf32>
    %298 = arith.addf %295, %297 : vector<32x512xf32>
    %cst_161 = arith.constant 1.702000e+00 : f32
    %299 = vector.broadcast %cst_161 : f32 to vector<32x512xf32>
    %300 = arith.mulf %299, %298 : vector<32x512xf32>
    %301 = arith.negf %300 : vector<32x512xf32>
    %302 = math.exp %301 : vector<32x512xf32>
    %cst_162 = arith.constant 1.000000e+00 : f32
    %303 = vector.broadcast %cst_162 : f32 to vector<32x512xf32>
    %304 = arith.addf %303, %302 : vector<32x512xf32>
    %305 = arith.divf %303, %304 : vector<32x512xf32>
    %306 = arith.mulf %298, %305 : vector<32x512xf32>
    %c0_163 = arith.constant 0 : index
    %c0_164 = arith.constant 0 : index
    %c0_165 = arith.constant 0 : index
    %307 = vector.load %arg30[%c0_163, %c0_164, %c0_165] : memref<2x512x128xf32, #tpu.memory_space<vmem>>, vector<1x512x128xf32>
    %308 = vector.shape_cast %307 : vector<1x512x128xf32> to vector<512x128xf32>
    %cst_166 = arith.constant dense<0.000000e+00> : vector<32x128xf32>
    %309 = tpu.matmul %306, %308, %cst_166 {dimension_numbers = #tpu.dot_dimension_numbers<[1], [0], [0], [1], [0, 0, 1, 1], [], []>} : vector<32x512xf32>, vector<512x128xf32>, vector<32x128xf32> -> vector<32x128xf32>
    %310 = arith.addf %268, %309 : vector<32x128xf32>
    %c0_167 = arith.constant 0 : index
    %c0_168 = arith.constant 0 : index
    %311 = vector.load %arg31[%c0_167, %c0_168] : memref<2x128xf32, #tpu.memory_space<vmem>>, vector<1x128xf32>
    %312 = vector.broadcast %311 : vector<1x128xf32> to vector<32x128xf32>
    %313 = arith.addf %310, %312 : vector<32x128xf32>
    %c1_169 = arith.constant 1 : index
    %c0_170 = arith.constant 0 : index
    %314 = vector.load %arg20[%c1_169, %c0_170] : memref<2x128xf32, #tpu.memory_space<vmem>>, vector<1x128xf32>
    %c1_171 = arith.constant 1 : index
    %c0_172 = arith.constant 0 : index
    %315 = vector.load %arg21[%c1_171, %c0_172] : memref<2x128xf32, #tpu.memory_space<vmem>>, vector<1x128xf32>
    %cst_173 = arith.constant dense<0.000000e+00> : vector<32xf32>
    %316 = vector.multi_reduction <add>, %313, %cst_173 [1] : vector<32x128xf32> to vector<32xf32>
    %317 = vector.shape_cast %316 : vector<32xf32> to vector<32x1xf32>
    %cst_174 = arith.constant 1.280000e+02 : f32
    %318 = vector.broadcast %cst_174 : f32 to vector<32x1xf32>
    %319 = arith.divf %317, %318 : vector<32x1xf32>
    %320 = vector.broadcast %319 : vector<32x1xf32> to vector<32x128xf32>
    %321 = arith.subf %313, %320 : vector<32x128xf32>
    %322 = arith.mulf %321, %321 : vector<32x128xf32>
    %cst_175 = arith.constant dense<0.000000e+00> : vector<32xf32>
    %323 = vector.multi_reduction <add>, %322, %cst_175 [1] : vector<32x128xf32> to vector<32xf32>
    %324 = vector.shape_cast %323 : vector<32xf32> to vector<32x1xf32>
    %cst_176 = arith.constant 1.280000e+02 : f32
    %325 = vector.broadcast %cst_176 : f32 to vector<32x1xf32>
    %326 = arith.divf %324, %325 : vector<32x1xf32>
    %327 = vector.broadcast %319 : vector<32x1xf32> to vector<32x128xf32>
    %328 = arith.subf %313, %327 : vector<32x128xf32>
    %cst_177 = arith.constant 9.99999974E-6 : f32
    %329 = vector.broadcast %cst_177 : f32 to vector<32x1xf32>
    %330 = arith.addf %326, %329 : vector<32x1xf32>
    %331 = math.rsqrt %330 : vector<32x1xf32>
    %332 = vector.broadcast %331 : vector<32x1xf32> to vector<32x128xf32>
    %333 = arith.mulf %328, %332 : vector<32x128xf32>
    %334 = vector.broadcast %314 : vector<1x128xf32> to vector<32x128xf32>
    %335 = arith.mulf %333, %334 : vector<32x128xf32>
    %336 = vector.broadcast %315 : vector<1x128xf32> to vector<32x128xf32>
    %337 = arith.addf %335, %336 : vector<32x128xf32>
    %c1_178 = arith.constant 1 : index
    %c0_179 = arith.constant 0 : index
    %c0_180 = arith.constant 0 : index
    %338 = vector.load %arg22[%c1_178, %c0_179, %c0_180] : memref<2x128x384xf32, #tpu.memory_space<vmem>>, vector<1x128x384xf32>
    %339 = vector.shape_cast %338 : vector<1x128x384xf32> to vector<128x384xf32>
    %cst_181 = arith.constant dense<0.000000e+00> : vector<32x384xf32>
    %340 = tpu.matmul %337, %339, %cst_181 {dimension_numbers = #tpu.dot_dimension_numbers<[1], [0], [0], [1], [0, 0, 1, 1], [], []>} : vector<32x128xf32>, vector<128x384xf32>, vector<32x384xf32> -> vector<32x384xf32>
    %c1_182 = arith.constant 1 : index
    %c0_183 = arith.constant 0 : index
    %341 = vector.load %arg23[%c1_182, %c0_183] : memref<2x384xf32, #tpu.memory_space<vmem>>, vector<1x384xf32>
    %342 = vector.broadcast %341 : vector<1x384xf32> to vector<32x384xf32>
    %343 = arith.addf %340, %342 : vector<32x384xf32>
    %c1_184 = arith.constant 1 : index
    %c0_185 = arith.constant 0 : index
    %c0_186 = arith.constant 0 : index
    %344 = vector.load %arg24[%c1_184, %c0_185, %c0_186] : memref<2x128x128xf32, #tpu.memory_space<vmem>>, vector<1x128x128xf32>
    %345 = vector.shape_cast %344 : vector<1x128x128xf32> to vector<128x128xf32>
    %cst_187 = arith.constant 0.000000e+00 : f32
    %346 = vector.broadcast %cst_187 : f32 to vector<32x128xf32>
    %347 = vector.extract_strided_slice %343 {offsets = [0, 0], sizes = [32, 32], strides = [1, 1]} : vector<32x384xf32> to vector<32x32xf32>
    %348 = vector.extract_strided_slice %343 {offsets = [0, 128], sizes = [32, 32], strides = [1, 1]} : vector<32x384xf32> to vector<32x32xf32>
    %349 = vector.extract_strided_slice %343 {offsets = [0, 256], sizes = [32, 32], strides = [1, 1]} : vector<32x384xf32> to vector<32x32xf32>
    %cst_188 = arith.constant dense<0.000000e+00> : vector<32x32xf32>
    %350 = tpu.matmul %347, %348, %cst_188 {dimension_numbers = #tpu.dot_dimension_numbers<[1], [1], [0], [0], [0, 0, 1, 0], [], []>} : vector<32x32xf32>, vector<32x32xf32>, vector<32x32xf32> -> vector<32x32xf32>
    %cst_189 = arith.constant 0.176776692 : f32
    %351 = vector.broadcast %cst_189 : f32 to vector<32x32xf32>
    %352 = arith.mulf %350, %351 : vector<32x32xf32>
    %353 = arith.addf %352, %147 : vector<32x32xf32>
    %cst_190 = arith.constant dense<0xFF800000> : vector<32xf32>
    %354 = vector.multi_reduction <maximumf>, %353, %cst_190 [1] : vector<32x32xf32> to vector<32xf32>
    %355 = vector.shape_cast %354 : vector<32xf32> to vector<32x1xf32>
    %356 = vector.broadcast %355 : vector<32x1xf32> to vector<32x32xf32>
    %357 = arith.subf %353, %356 : vector<32x32xf32>
    %358 = math.exp %357 : vector<32x32xf32>
    %cst_191 = arith.constant dense<0.000000e+00> : vector<32xf32>
    %359 = vector.multi_reduction <add>, %358, %cst_191 [1] : vector<32x32xf32> to vector<32xf32>
    %360 = vector.shape_cast %359 : vector<32xf32> to vector<32x1xf32>
    %361 = tpu.reciprocal %360 {approx = true} : vector<32x1xf32> -> vector<32x1xf32>
    %362 = vector.broadcast %361 : vector<32x1xf32> to vector<32x32xf32>
    %363 = arith.mulf %358, %362 : vector<32x32xf32>
    %cst_192 = arith.constant dense<0.000000e+00> : vector<32x32xf32>
    %364 = tpu.matmul %363, %349, %cst_192 {dimension_numbers = #tpu.dot_dimension_numbers<[1], [0], [0], [1], [0, 0, 1, 1], [], []>} : vector<32x32xf32>, vector<32x32xf32>, vector<32x32xf32> -> vector<32x32xf32>
    %365 = vector.extract_strided_slice %345 {offsets = [0, 0], sizes = [32, 128], strides = [1, 1]} : vector<128x128xf32> to vector<32x128xf32>
    %cst_193 = arith.constant dense<0.000000e+00> : vector<32x128xf32>
    %366 = tpu.matmul %364, %365, %cst_193 {dimension_numbers = #tpu.dot_dimension_numbers<[1], [0], [0], [1], [0, 0, 1, 1], [], []>} : vector<32x32xf32>, vector<32x128xf32>, vector<32x128xf32> -> vector<32x128xf32>
    %367 = arith.addf %346, %366 : vector<32x128xf32>
    %368 = vector.extract_strided_slice %343 {offsets = [0, 32], sizes = [32, 32], strides = [1, 1]} : vector<32x384xf32> to vector<32x32xf32>
    %369 = vector.extract_strided_slice %343 {offsets = [0, 160], sizes = [32, 32], strides = [1, 1]} : vector<32x384xf32> to vector<32x32xf32>
    %370 = vector.extract_strided_slice %343 {offsets = [0, 288], sizes = [32, 32], strides = [1, 1]} : vector<32x384xf32> to vector<32x32xf32>
    %cst_194 = arith.constant dense<0.000000e+00> : vector<32x32xf32>
    %371 = tpu.matmul %368, %369, %cst_194 {dimension_numbers = #tpu.dot_dimension_numbers<[1], [1], [0], [0], [0, 0, 1, 0], [], []>} : vector<32x32xf32>, vector<32x32xf32>, vector<32x32xf32> -> vector<32x32xf32>
    %cst_195 = arith.constant 0.176776692 : f32
    %372 = vector.broadcast %cst_195 : f32 to vector<32x32xf32>
    %373 = arith.mulf %371, %372 : vector<32x32xf32>
    %374 = arith.addf %373, %147 : vector<32x32xf32>
    %cst_196 = arith.constant dense<0xFF800000> : vector<32xf32>
    %375 = vector.multi_reduction <maximumf>, %374, %cst_196 [1] : vector<32x32xf32> to vector<32xf32>
    %376 = vector.shape_cast %375 : vector<32xf32> to vector<32x1xf32>
    %377 = vector.broadcast %376 : vector<32x1xf32> to vector<32x32xf32>
    %378 = arith.subf %374, %377 : vector<32x32xf32>
    %379 = math.exp %378 : vector<32x32xf32>
    %cst_197 = arith.constant dense<0.000000e+00> : vector<32xf32>
    %380 = vector.multi_reduction <add>, %379, %cst_197 [1] : vector<32x32xf32> to vector<32xf32>
    %381 = vector.shape_cast %380 : vector<32xf32> to vector<32x1xf32>
    %382 = tpu.reciprocal %381 {approx = true} : vector<32x1xf32> -> vector<32x1xf32>
    %383 = vector.broadcast %382 : vector<32x1xf32> to vector<32x32xf32>
    %384 = arith.mulf %379, %383 : vector<32x32xf32>
    %cst_198 = arith.constant dense<0.000000e+00> : vector<32x32xf32>
    %385 = tpu.matmul %384, %370, %cst_198 {dimension_numbers = #tpu.dot_dimension_numbers<[1], [0], [0], [1], [0, 0, 1, 1], [], []>} : vector<32x32xf32>, vector<32x32xf32>, vector<32x32xf32> -> vector<32x32xf32>
    %386 = vector.extract_strided_slice %345 {offsets = [32, 0], sizes = [32, 128], strides = [1, 1]} : vector<128x128xf32> to vector<32x128xf32>
    %cst_199 = arith.constant dense<0.000000e+00> : vector<32x128xf32>
    %387 = tpu.matmul %385, %386, %cst_199 {dimension_numbers = #tpu.dot_dimension_numbers<[1], [0], [0], [1], [0, 0, 1, 1], [], []>} : vector<32x32xf32>, vector<32x128xf32>, vector<32x128xf32> -> vector<32x128xf32>
    %388 = arith.addf %367, %387 : vector<32x128xf32>
    %389 = vector.extract_strided_slice %343 {offsets = [0, 64], sizes = [32, 32], strides = [1, 1]} : vector<32x384xf32> to vector<32x32xf32>
    %390 = vector.extract_strided_slice %343 {offsets = [0, 192], sizes = [32, 32], strides = [1, 1]} : vector<32x384xf32> to vector<32x32xf32>
    %391 = vector.extract_strided_slice %343 {offsets = [0, 320], sizes = [32, 32], strides = [1, 1]} : vector<32x384xf32> to vector<32x32xf32>
    %cst_200 = arith.constant dense<0.000000e+00> : vector<32x32xf32>
    %392 = tpu.matmul %389, %390, %cst_200 {dimension_numbers = #tpu.dot_dimension_numbers<[1], [1], [0], [0], [0, 0, 1, 0], [], []>} : vector<32x32xf32>, vector<32x32xf32>, vector<32x32xf32> -> vector<32x32xf32>
    %cst_201 = arith.constant 0.176776692 : f32
    %393 = vector.broadcast %cst_201 : f32 to vector<32x32xf32>
    %394 = arith.mulf %392, %393 : vector<32x32xf32>
    %395 = arith.addf %394, %147 : vector<32x32xf32>
    %cst_202 = arith.constant dense<0xFF800000> : vector<32xf32>
    %396 = vector.multi_reduction <maximumf>, %395, %cst_202 [1] : vector<32x32xf32> to vector<32xf32>
    %397 = vector.shape_cast %396 : vector<32xf32> to vector<32x1xf32>
    %398 = vector.broadcast %397 : vector<32x1xf32> to vector<32x32xf32>
    %399 = arith.subf %395, %398 : vector<32x32xf32>
    %400 = math.exp %399 : vector<32x32xf32>
    %cst_203 = arith.constant dense<0.000000e+00> : vector<32xf32>
    %401 = vector.multi_reduction <add>, %400, %cst_203 [1] : vector<32x32xf32> to vector<32xf32>
    %402 = vector.shape_cast %401 : vector<32xf32> to vector<32x1xf32>
    %403 = tpu.reciprocal %402 {approx = true} : vector<32x1xf32> -> vector<32x1xf32>
    %404 = vector.broadcast %403 : vector<32x1xf32> to vector<32x32xf32>
    %405 = arith.mulf %400, %404 : vector<32x32xf32>
    %cst_204 = arith.constant dense<0.000000e+00> : vector<32x32xf32>
    %406 = tpu.matmul %405, %391, %cst_204 {dimension_numbers = #tpu.dot_dimension_numbers<[1], [0], [0], [1], [0, 0, 1, 1], [], []>} : vector<32x32xf32>, vector<32x32xf32>, vector<32x32xf32> -> vector<32x32xf32>
    %407 = vector.extract_strided_slice %345 {offsets = [64, 0], sizes = [32, 128], strides = [1, 1]} : vector<128x128xf32> to vector<32x128xf32>
    %cst_205 = arith.constant dense<0.000000e+00> : vector<32x128xf32>
    %408 = tpu.matmul %406, %407, %cst_205 {dimension_numbers = #tpu.dot_dimension_numbers<[1], [0], [0], [1], [0, 0, 1, 1], [], []>} : vector<32x32xf32>, vector<32x128xf32>, vector<32x128xf32> -> vector<32x128xf32>
    %409 = arith.addf %388, %408 : vector<32x128xf32>
    %410 = vector.extract_strided_slice %343 {offsets = [0, 96], sizes = [32, 32], strides = [1, 1]} : vector<32x384xf32> to vector<32x32xf32>
    %411 = vector.extract_strided_slice %343 {offsets = [0, 224], sizes = [32, 32], strides = [1, 1]} : vector<32x384xf32> to vector<32x32xf32>
    %412 = vector.extract_strided_slice %343 {offsets = [0, 352], sizes = [32, 32], strides = [1, 1]} : vector<32x384xf32> to vector<32x32xf32>
    %cst_206 = arith.constant dense<0.000000e+00> : vector<32x32xf32>
    %413 = tpu.matmul %410, %411, %cst_206 {dimension_numbers = #tpu.dot_dimension_numbers<[1], [1], [0], [0], [0, 0, 1, 0], [], []>} : vector<32x32xf32>, vector<32x32xf32>, vector<32x32xf32> -> vector<32x32xf32>
    %cst_207 = arith.constant 0.176776692 : f32
    %414 = vector.broadcast %cst_207 : f32 to vector<32x32xf32>
    %415 = arith.mulf %413, %414 : vector<32x32xf32>
    %416 = arith.addf %415, %147 : vector<32x32xf32>
    %cst_208 = arith.constant dense<0xFF800000> : vector<32xf32>
    %417 = vector.multi_reduction <maximumf>, %416, %cst_208 [1] : vector<32x32xf32> to vector<32xf32>
    %418 = vector.shape_cast %417 : vector<32xf32> to vector<32x1xf32>
    %419 = vector.broadcast %418 : vector<32x1xf32> to vector<32x32xf32>
    %420 = arith.subf %416, %419 : vector<32x32xf32>
    %421 = math.exp %420 : vector<32x32xf32>
    %cst_209 = arith.constant dense<0.000000e+00> : vector<32xf32>
    %422 = vector.multi_reduction <add>, %421, %cst_209 [1] : vector<32x32xf32> to vector<32xf32>
    %423 = vector.shape_cast %422 : vector<32xf32> to vector<32x1xf32>
    %424 = tpu.reciprocal %423 {approx = true} : vector<32x1xf32> -> vector<32x1xf32>
    %425 = vector.broadcast %424 : vector<32x1xf32> to vector<32x32xf32>
    %426 = arith.mulf %421, %425 : vector<32x32xf32>
    %cst_210 = arith.constant dense<0.000000e+00> : vector<32x32xf32>
    %427 = tpu.matmul %426, %412, %cst_210 {dimension_numbers = #tpu.dot_dimension_numbers<[1], [0], [0], [1], [0, 0, 1, 1], [], []>} : vector<32x32xf32>, vector<32x32xf32>, vector<32x32xf32> -> vector<32x32xf32>
    %428 = vector.extract_strided_slice %345 {offsets = [96, 0], sizes = [32, 128], strides = [1, 1]} : vector<128x128xf32> to vector<32x128xf32>
    %cst_211 = arith.constant dense<0.000000e+00> : vector<32x128xf32>
    %429 = tpu.matmul %427, %428, %cst_211 {dimension_numbers = #tpu.dot_dimension_numbers<[1], [0], [0], [1], [0, 0, 1, 1], [], []>} : vector<32x32xf32>, vector<32x128xf32>, vector<32x128xf32> -> vector<32x128xf32>
    %430 = arith.addf %409, %429 : vector<32x128xf32>
    %431 = arith.addf %313, %430 : vector<32x128xf32>
    %c1_212 = arith.constant 1 : index
    %c0_213 = arith.constant 0 : index
    %432 = vector.load %arg25[%c1_212, %c0_213] : memref<2x128xf32, #tpu.memory_space<vmem>>, vector<1x128xf32>
    %433 = vector.broadcast %432 : vector<1x128xf32> to vector<32x128xf32>
    %434 = arith.addf %431, %433 : vector<32x128xf32>
    %c1_214 = arith.constant 1 : index
    %c0_215 = arith.constant 0 : index
    %435 = vector.load %arg26[%c1_214, %c0_215] : memref<2x128xf32, #tpu.memory_space<vmem>>, vector<1x128xf32>
    %c1_216 = arith.constant 1 : index
    %c0_217 = arith.constant 0 : index
    %436 = vector.load %arg27[%c1_216, %c0_217] : memref<2x128xf32, #tpu.memory_space<vmem>>, vector<1x128xf32>
    %cst_218 = arith.constant dense<0.000000e+00> : vector<32xf32>
    %437 = vector.multi_reduction <add>, %434, %cst_218 [1] : vector<32x128xf32> to vector<32xf32>
    %438 = vector.shape_cast %437 : vector<32xf32> to vector<32x1xf32>
    %cst_219 = arith.constant 1.280000e+02 : f32
    %439 = vector.broadcast %cst_219 : f32 to vector<32x1xf32>
    %440 = arith.divf %438, %439 : vector<32x1xf32>
    %441 = vector.broadcast %440 : vector<32x1xf32> to vector<32x128xf32>
    %442 = arith.subf %434, %441 : vector<32x128xf32>
    %443 = arith.mulf %442, %442 : vector<32x128xf32>
    %cst_220 = arith.constant dense<0.000000e+00> : vector<32xf32>
    %444 = vector.multi_reduction <add>, %443, %cst_220 [1] : vector<32x128xf32> to vector<32xf32>
    %445 = vector.shape_cast %444 : vector<32xf32> to vector<32x1xf32>
    %cst_221 = arith.constant 1.280000e+02 : f32
    %446 = vector.broadcast %cst_221 : f32 to vector<32x1xf32>
    %447 = arith.divf %445, %446 : vector<32x1xf32>
    %448 = vector.broadcast %440 : vector<32x1xf32> to vector<32x128xf32>
    %449 = arith.subf %434, %448 : vector<32x128xf32>
    %cst_222 = arith.constant 9.99999974E-6 : f32
    %450 = vector.broadcast %cst_222 : f32 to vector<32x1xf32>
    %451 = arith.addf %447, %450 : vector<32x1xf32>
    %452 = math.rsqrt %451 : vector<32x1xf32>
    %453 = vector.broadcast %452 : vector<32x1xf32> to vector<32x128xf32>
    %454 = arith.mulf %449, %453 : vector<32x128xf32>
    %455 = vector.broadcast %435 : vector<1x128xf32> to vector<32x128xf32>
    %456 = arith.mulf %454, %455 : vector<32x128xf32>
    %457 = vector.broadcast %436 : vector<1x128xf32> to vector<32x128xf32>
    %458 = arith.addf %456, %457 : vector<32x128xf32>
    %c1_223 = arith.constant 1 : index
    %c0_224 = arith.constant 0 : index
    %c0_225 = arith.constant 0 : index
    %459 = vector.load %arg28[%c1_223, %c0_224, %c0_225] : memref<2x128x512xf32, #tpu.memory_space<vmem>>, vector<1x128x512xf32>
    %460 = vector.shape_cast %459 : vector<1x128x512xf32> to vector<128x512xf32>
    %cst_226 = arith.constant dense<0.000000e+00> : vector<32x512xf32>
    %461 = tpu.matmul %458, %460, %cst_226 {dimension_numbers = #tpu.dot_dimension_numbers<[1], [0], [0], [1], [0, 0, 1, 1], [], []>} : vector<32x128xf32>, vector<128x512xf32>, vector<32x512xf32> -> vector<32x512xf32>
    %c1_227 = arith.constant 1 : index
    %c0_228 = arith.constant 0 : index
    %462 = vector.load %arg29[%c1_227, %c0_228] : memref<2x512xf32, #tpu.memory_space<vmem>>, vector<1x512xf32>
    %463 = vector.broadcast %462 : vector<1x512xf32> to vector<32x512xf32>
    %464 = arith.addf %461, %463 : vector<32x512xf32>
    %cst_229 = arith.constant 1.702000e+00 : f32
    %465 = vector.broadcast %cst_229 : f32 to vector<32x512xf32>
    %466 = arith.mulf %465, %464 : vector<32x512xf32>
    %467 = arith.negf %466 : vector<32x512xf32>
    %468 = math.exp %467 : vector<32x512xf32>
    %cst_230 = arith.constant 1.000000e+00 : f32
    %469 = vector.broadcast %cst_230 : f32 to vector<32x512xf32>
    %470 = arith.addf %469, %468 : vector<32x512xf32>
    %471 = arith.divf %469, %470 : vector<32x512xf32>
    %472 = arith.mulf %464, %471 : vector<32x512xf32>
    %c1_231 = arith.constant 1 : index
    %c0_232 = arith.constant 0 : index
    %c0_233 = arith.constant 0 : index
    %473 = vector.load %arg30[%c1_231, %c0_232, %c0_233] : memref<2x512x128xf32, #tpu.memory_space<vmem>>, vector<1x512x128xf32>
    %474 = vector.shape_cast %473 : vector<1x512x128xf32> to vector<512x128xf32>
    %cst_234 = arith.constant dense<0.000000e+00> : vector<32x128xf32>
    %475 = tpu.matmul %472, %474, %cst_234 {dimension_numbers = #tpu.dot_dimension_numbers<[1], [0], [0], [1], [0, 0, 1, 1], [], []>} : vector<32x512xf32>, vector<512x128xf32>, vector<32x128xf32> -> vector<32x128xf32>
    %476 = arith.addf %434, %475 : vector<32x128xf32>
    %c1_235 = arith.constant 1 : index
    %c0_236 = arith.constant 0 : index
    %477 = vector.load %arg31[%c1_235, %c0_236] : memref<2x128xf32, #tpu.memory_space<vmem>>, vector<1x128xf32>
    %478 = vector.broadcast %477 : vector<1x128xf32> to vector<32x128xf32>
    %479 = arith.addf %476, %478 : vector<32x128xf32>
    %480 = vector.extract_strided_slice %479 {offsets = [1, 0], sizes = [8, 128], strides = [1, 1]} : vector<32x128xf32> to vector<8x128xf32>
    %c0_237 = arith.constant 0 : index
    %c0_238 = arith.constant 0 : index
    %c0_239 = arith.constant 0 : index
    %481 = vector.load %arg1[%c0_237, %c0_238, %c0_239] : memref<1x32x3xf32, #tpu.memory_space<vmem>>, vector<1x32x3xf32>
    %482 = vector.shape_cast %481 : vector<1x32x3xf32> to vector<32x3xf32>
    %483 = arith.mulf %482, %482 : vector<32x3xf32>
    %cst_240 = arith.constant dense<0.000000e+00> : vector<32xf32>
    %484 = vector.multi_reduction <add>, %483, %cst_240 [1] : vector<32x3xf32> to vector<32xf32>
    %485 = vector.shape_cast %484 : vector<32xf32> to vector<32x1xf32>
    %486 = arith.mulf %94, %94 : vector<8x3xf32>
    %cst_241 = arith.constant dense<0.000000e+00> : vector<8xf32>
    %487 = vector.multi_reduction <add>, %486, %cst_241 [1] : vector<8x3xf32> to vector<8xf32>
    %488 = vector.shape_cast %487 : vector<8xf32> to vector<1x8xf32>
    %489 = vector.broadcast %485 : vector<32x1xf32> to vector<32x8xf32>
    %490 = vector.broadcast %488 : vector<1x8xf32> to vector<32x8xf32>
    %491 = arith.addf %489, %490 : vector<32x8xf32>
    %cst_242 = arith.constant dense<0.000000e+00> : vector<32x8xf32>
    %492 = tpu.matmul %482, %94, %cst_242 {dimension_numbers = #tpu.dot_dimension_numbers<[1], [1], [0], [0], [0, 0, 1, 0], [], []>} : vector<32x3xf32>, vector<8x3xf32>, vector<32x8xf32> -> vector<32x8xf32>
    %cst_243 = arith.constant 2.000000e+00 : f32
    %493 = vector.broadcast %cst_243 : f32 to vector<32x8xf32>
    %494 = arith.mulf %493, %492 : vector<32x8xf32>
    %495 = arith.subf %491, %494 : vector<32x8xf32>
    %cst_244 = arith.constant dense<0x7F800000> : vector<32xf32>
    %496 = vector.multi_reduction <minimumf>, %495, %cst_244 [1] : vector<32x8xf32> to vector<32xf32>
    %497 = vector.shape_cast %496 : vector<32xf32> to vector<32x1xf32>
    %498 = vector.broadcast %497 : vector<32x1xf32> to vector<32x8xf32>
    %499 = arith.cmpf ole, %495, %498 : vector<32x8xf32>
    %cst_245 = arith.constant 1.000000e+10 : f32
    %500 = vector.broadcast %cst_245 : f32 to vector<32x8xf32>
    %501 = arith.select %499, %500, %495 : vector<32x8xi1>, vector<32x8xf32>
    %cst_246 = arith.constant dense<0x7F800000> : vector<32xf32>
    %502 = vector.multi_reduction <minimumf>, %501, %cst_246 [1] : vector<32x8xf32> to vector<32xf32>
    %503 = vector.shape_cast %502 : vector<32xf32> to vector<32x1xf32>
    %504 = vector.broadcast %503 : vector<32x1xf32> to vector<32x8xf32>
    %505 = arith.cmpf ole, %501, %504 : vector<32x8xf32>
    %cst_247 = arith.constant 1.000000e+10 : f32
    %506 = vector.broadcast %cst_247 : f32 to vector<32x8xf32>
    %507 = arith.select %505, %506, %501 : vector<32x8xi1>, vector<32x8xf32>
    %cst_248 = arith.constant dense<0x7F800000> : vector<32xf32>
    %508 = vector.multi_reduction <minimumf>, %507, %cst_248 [1] : vector<32x8xf32> to vector<32xf32>
    %509 = vector.shape_cast %508 : vector<32xf32> to vector<32x1xf32>
    %510 = vector.broadcast %509 : vector<32x1xf32> to vector<32x8xf32>
    %511 = arith.cmpf ole, %495, %510 : vector<32x8xf32>
    %512 = arith.extui %511 : vector<32x8xi1> to vector<32x8xi32>
    %513 = arith.sitofp %512 : vector<32x8xi32> to vector<32x8xf32>
    %cst_249 = arith.constant 9.99999993E-9 : f32
    %514 = vector.broadcast %cst_249 : f32 to vector<32x8xf32>
    %515 = arith.addf %495, %514 : vector<32x8xf32>
    %516 = tpu.reciprocal %515 {approx = true} : vector<32x8xf32> -> vector<32x8xf32>
    %517 = arith.mulf %513, %516 : vector<32x8xf32>
    %cst_250 = arith.constant dense<0.000000e+00> : vector<32xf32>
    %518 = vector.multi_reduction <add>, %517, %cst_250 [1] : vector<32x8xf32> to vector<32xf32>
    %519 = vector.shape_cast %518 : vector<32xf32> to vector<32x1xf32>
    %520 = tpu.reciprocal %519 {approx = true} : vector<32x1xf32> -> vector<32x1xf32>
    %521 = vector.broadcast %520 : vector<32x1xf32> to vector<32x8xf32>
    %522 = arith.mulf %517, %521 : vector<32x8xf32>
    %cst_251 = arith.constant dense<0.000000e+00> : vector<32x128xf32>
    %523 = tpu.matmul %522, %480, %cst_251 {dimension_numbers = #tpu.dot_dimension_numbers<[1], [0], [0], [1], [0, 0, 1, 1], [], []>} : vector<32x8xf32>, vector<8x128xf32>, vector<32x128xf32> -> vector<32x128xf32>
    %c0_252 = arith.constant 0 : index
    %c0_253 = arith.constant 0 : index
    %524 = vector.load %arg32[%c0_252, %c0_253] : memref<128x16xf32, #tpu.memory_space<vmem>>, vector<128x16xf32>
    %cst_254 = arith.constant dense<0.000000e+00> : vector<32x16xf32>
    %525 = tpu.matmul %523, %524, %cst_254 {dimension_numbers = #tpu.dot_dimension_numbers<[1], [0], [0], [1], [0, 0, 1, 1], [], []>} : vector<32x128xf32>, vector<128x16xf32>, vector<32x16xf32> -> vector<32x16xf32>
    %c0_255 = arith.constant 0 : index
    %c0_256 = arith.constant 0 : index
    %526 = vector.load %arg33[%c0_255, %c0_256] : memref<1x16xf32, #tpu.memory_space<vmem>>, vector<1x16xf32>
    %527 = vector.broadcast %526 : vector<1x16xf32> to vector<32x16xf32>
    %528 = arith.addf %525, %527 : vector<32x16xf32>
    %cst_257 = arith.constant 0.000000e+00 : f32
    %529 = vector.broadcast %cst_257 : f32 to vector<32x16xf32>
    %530 = arith.maximumf %528, %529 : vector<32x16xf32>
    %c0_258 = arith.constant 0 : index
    %c0_259 = arith.constant 0 : index
    %c0_260 = arith.constant 0 : index
    %531 = vector.load %arg4[%c0_258, %c0_259, %c0_260] : memref<1x32x16xf32, #tpu.memory_space<vmem>>, vector<1x32x16xf32>
    %532 = vector.shape_cast %531 : vector<1x32x16xf32> to vector<32x16xf32>
    %533 = arith.addf %530, %532 : vector<32x16xf32>
    %c0_261 = arith.constant 0 : index
    %c0_262 = arith.constant 0 : index
    %c0_263 = arith.constant 0 : index
    %534 = vector.load %arg34[%c0_261, %c0_262, %c0_263] : memref<1x32x16xf32, #tpu.memory_space<vmem>>, vector<1x32x16xf32>
    %535 = vector.shape_cast %534 : vector<1x32x16xf32> to vector<32x16xf32>
    %536 = vector.shape_cast %533 : vector<32x16xf32> to vector<1x32x16xf32>
    tpu.vector_store %arg34[%c0_261, %c0_262, %c0_263], %536 {strides = array<i32>} : memref<1x32x16xf32, #tpu.memory_space<vmem>>, vector<1x32x16xf32>,
    return
  }
  func.func @transform_0(%arg0: i32) -> (i32, i32, i32) {
    %c0_i32 = arith.constant 0 : i32
    %c0_i32_0 = arith.constant 0 : i32
    %c0_i32_1 = arith.constant 0 : i32
    return %arg0, %c0_i32, %c0_i32_0 : i32, i32, i32
  }
  func.func @transform_1(%arg0: i32) -> (i32, i32, i32) {
    %c0_i32 = arith.constant 0 : i32
    %c0_i32_0 = arith.constant 0 : i32
    %c0_i32_1 = arith.constant 0 : i32
    return %arg0, %c0_i32, %c0_i32_0 : i32, i32, i32
  }
  func.func @transform_2(%arg0: i32) -> (i32, i32, i32) {
    %c0_i32 = arith.constant 0 : i32
    %c0_i32_0 = arith.constant 0 : i32
    %c0_i32_1 = arith.constant 0 : i32
    return %arg0, %c0_i32, %c0_i32_0 : i32, i32, i32
  }
  func.func @transform_3(%arg0: i32) -> (i32, i32, i32) {
    %c0_i32 = arith.constant 0 : i32
    %c0_i32_0 = arith.constant 0 : i32
    %c0_i32_1 = arith.constant 0 : i32
    return %arg0, %c0_i32, %c0_i32_0 : i32, i32, i32
  }
  func.func @transform_4(%arg0: i32) -> (i32, i32) {
    %c0_i32 = arith.constant 0 : i32
    %c0_i32_0 = arith.constant 0 : i32
    %c0_i32_1 = arith.constant 0 : i32
    return %c0_i32, %c0_i32_0 : i32, i32
  }
  func.func @transform_5(%arg0: i32) -> (i32, i32) {
    %c0_i32 = arith.constant 0 : i32
    %c0_i32_0 = arith.constant 0 : i32
    %c0_i32_1 = arith.constant 0 : i32
    return %c0_i32, %c0_i32_0 : i32, i32
  }
  func.func @transform_6(%arg0: i32) -> (i32, i32) {
    %c0_i32 = arith.constant 0 : i32
    %c0_i32_0 = arith.constant 0 : i32
    %c0_i32_1 = arith.constant 0 : i32
    return %c0_i32, %c0_i32_0 : i32, i32
  }
  func.func @transform_7(%arg0: i32) -> (i32, i32) {
    %c0_i32 = arith.constant 0 : i32
    %c0_i32_0 = arith.constant 0 : i32
    %c0_i32_1 = arith.constant 0 : i32
    return %c0_i32, %c0_i32_0 : i32, i32
  }
  func.func @transform_8(%arg0: i32) -> (i32, i32) {
    %c0_i32 = arith.constant 0 : i32
    %c0_i32_0 = arith.constant 0 : i32
    %c0_i32_1 = arith.constant 0 : i32
    return %c0_i32, %c0_i32_0 : i32, i32
  }
  func.func @transform_9(%arg0: i32) -> (i32, i32) {
    %c0_i32 = arith.constant 0 : i32
    %c0_i32_0 = arith.constant 0 : i32
    %c0_i32_1 = arith.constant 0 : i32
    return %c0_i32, %c0_i32_0 : i32, i32
  }
  func.func @transform_10(%arg0: i32) -> (i32, i32) {
    %c0_i32 = arith.constant 0 : i32
    %c0_i32_0 = arith.constant 0 : i32
    %c0_i32_1 = arith.constant 0 : i32
    return %c0_i32, %c0_i32_0 : i32, i32
  }
  func.func @transform_11(%arg0: i32) -> (i32, i32) {
    %c0_i32 = arith.constant 0 : i32
    %c0_i32_0 = arith.constant 0 : i32
    %c0_i32_1 = arith.constant 0 : i32
    return %c0_i32, %c0_i32_0 : i32, i32
  }
  func.func @transform_12(%arg0: i32) -> (i32, i32) {
    %c0_i32 = arith.constant 0 : i32
    %c0_i32_0 = arith.constant 0 : i32
    %c0_i32_1 = arith.constant 0 : i32
    return %c0_i32, %c0_i32_0 : i32, i32
  }
  func.func @transform_13(%arg0: i32) -> (i32, i32) {
    %c0_i32 = arith.constant 0 : i32
    %c0_i32_0 = arith.constant 0 : i32
    %c0_i32_1 = arith.constant 0 : i32
    return %c0_i32, %c0_i32_0 : i32, i32
  }
  func.func @transform_14(%arg0: i32) -> (i32, i32) {
    %c0_i32 = arith.constant 0 : i32
    %c0_i32_0 = arith.constant 0 : i32
    %c0_i32_1 = arith.constant 0 : i32
    return %c0_i32, %c0_i32_0 : i32, i32
  }
  func.func @transform_15(%arg0: i32) -> (i32, i32) {
    %c0_i32 = arith.constant 0 : i32
    %c0_i32_0 = arith.constant 0 : i32
    %c0_i32_1 = arith.constant 0 : i32
    return %c0_i32, %c0_i32_0 : i32, i32
  }
  func.func @transform_16(%arg0: i32) -> (i32, i32) {
    %c0_i32 = arith.constant 0 : i32
    %c0_i32_0 = arith.constant 0 : i32
    %c0_i32_1 = arith.constant 0 : i32
    return %c0_i32, %c0_i32_0 : i32, i32
  }
  func.func @transform_17(%arg0: i32) -> (i32, i32) {
    %c0_i32 = arith.constant 0 : i32
    %c0_i32_0 = arith.constant 0 : i32
    %c0_i32_1 = arith.constant 0 : i32
    return %c0_i32, %c0_i32_0 : i32, i32
  }
  func.func @transform_18(%arg0: i32) -> (i32, i32) {
    %c0_i32 = arith.constant 0 : i32
    %c0_i32_0 = arith.constant 0 : i32
    %c0_i32_1 = arith.constant 0 : i32
    return %c0_i32, %c0_i32_0 : i32, i32
  }
  func.func @transform_19(%arg0: i32) -> (i32, i32) {
    %c0_i32 = arith.constant 0 : i32
    %c0_i32_0 = arith.constant 0 : i32
    %c0_i32_1 = arith.constant 0 : i32
    return %c0_i32, %c0_i32_0 : i32, i32
  }
  func.func @transform_20(%arg0: i32) -> (i32, i32) {
    %c0_i32 = arith.constant 0 : i32
    %c0_i32_0 = arith.constant 0 : i32
    %c0_i32_1 = arith.constant 0 : i32
    return %c0_i32, %c0_i32_0 : i32, i32
  }
  func.func @transform_21(%arg0: i32) -> (i32, i32, i32) {
    %c0_i32 = arith.constant 0 : i32
    %c0_i32_0 = arith.constant 0 : i32
    %c0_i32_1 = arith.constant 0 : i32
    %c0_i32_2 = arith.constant 0 : i32
    return %c0_i32, %c0_i32_0, %c0_i32_1 : i32, i32, i32
  }
  func.func @transform_22(%arg0: i32) -> (i32, i32) {
    %c0_i32 = arith.constant 0 : i32
    %c0_i32_0 = arith.constant 0 : i32
    %c0_i32_1 = arith.constant 0 : i32
    return %c0_i32, %c0_i32_0 : i32, i32
  }
  func.func @transform_23(%arg0: i32) -> (i32, i32, i32) {
    %c0_i32 = arith.constant 0 : i32
    %c0_i32_0 = arith.constant 0 : i32
    %c0_i32_1 = arith.constant 0 : i32
    %c0_i32_2 = arith.constant 0 : i32
    return %c0_i32, %c0_i32_0, %c0_i32_1 : i32, i32, i32
  }
  func.func @transform_24(%arg0: i32) -> (i32, i32) {
    %c0_i32 = arith.constant 0 : i32
    %c0_i32_0 = arith.constant 0 : i32
    %c0_i32_1 = arith.constant 0 : i32
    return %c0_i32, %c0_i32_0 : i32, i32
  }
  func.func @transform_25(%arg0: i32) -> (i32, i32) {
    %c0_i32 = arith.constant 0 : i32
    %c0_i32_0 = arith.constant 0 : i32
    %c0_i32_1 = arith.constant 0 : i32
    return %c0_i32, %c0_i32_0 : i32, i32
  }
  func.func @transform_26(%arg0: i32) -> (i32, i32) {
    %c0_i32 = arith.constant 0 : i32
    %c0_i32_0 = arith.constant 0 : i32
    %c0_i32_1 = arith.constant 0 : i32
    return %c0_i32, %c0_i32_0 : i32, i32
  }
  func.func @transform_27(%arg0: i32) -> (i32, i32, i32) {
    %c0_i32 = arith.constant 0 : i32
    %c0_i32_0 = arith.constant 0 : i32
    %c0_i32_1 = arith.constant 0 : i32
    %c0_i32_2 = arith.constant 0 : i32
    return %c0_i32, %c0_i32_0, %c0_i32_1 : i32, i32, i32
  }
  func.func @transform_28(%arg0: i32) -> (i32, i32) {
    %c0_i32 = arith.constant 0 : i32
    %c0_i32_0 = arith.constant 0 : i32
    %c0_i32_1 = arith.constant 0 : i32
    return %c0_i32, %c0_i32_0 : i32, i32
  }
  func.func @transform_29(%arg0: i32) -> (i32, i32, i32) {
    %c0_i32 = arith.constant 0 : i32
    %c0_i32_0 = arith.constant 0 : i32
    %c0_i32_1 = arith.constant 0 : i32
    %c0_i32_2 = arith.constant 0 : i32
    return %c0_i32, %c0_i32_0, %c0_i32_1 : i32, i32, i32
  }
  func.func @transform_30(%arg0: i32) -> (i32, i32) {
    %c0_i32 = arith.constant 0 : i32
    %c0_i32_0 = arith.constant 0 : i32
    %c0_i32_1 = arith.constant 0 : i32
    return %c0_i32, %c0_i32_0 : i32, i32
  }
  func.func @transform_31(%arg0: i32) -> (i32, i32) {
    %c0_i32 = arith.constant 0 : i32
    %c0_i32_0 = arith.constant 0 : i32
    %c0_i32_1 = arith.constant 0 : i32
    return %c0_i32, %c0_i32_0 : i32, i32
  }
  func.func @transform_32(%arg0: i32) -> (i32, i32) {
    %c0_i32 = arith.constant 0 : i32
    %c0_i32_0 = arith.constant 0 : i32
    %c0_i32_1 = arith.constant 0 : i32
    return %c0_i32, %c0_i32_0 : i32, i32
  }
  func.func @transform_33(%arg0: i32) -> (i32, i32, i32) {
    %c0_i32 = arith.constant 0 : i32
    %c0_i32_0 = arith.constant 0 : i32
    %c0_i32_1 = arith.constant 0 : i32
    return %arg0, %c0_i32, %c0_i32_0 : i32, i32, i32
  }
}

</mosaic_0001>

<llo_original>
// kernel: tpu_custom_call.1
$region0: #{tpu_custom_call.1}
  #allocation0 [shape = 'u32[]', space=smem, size = 0x4, offset = 0x4, fixed_abs, tag = 'smem constant byte address 0x4 - core index']
  #allocation1 [shape = 'u32[72,128]{1,0:T(1,128)}', space=vmem, size = 0x9000, scoped, tag = 'internal scratch']
  #allocation2 [shape = 'f32[32,128]{1,0:T(8,128)}', space=vmem, size = 0x4000, scoped, tag = 'scratch operand']
  %s0 = inlined_call_operand.smem [shape: u32[34], index: -1, kind: input, shape index: {}]
  %s1 = sld [smem:[%s0]]
  %s2 = scalar_lea.smem %s0, 1
  %s3 = sld [smem:[%s2]]
  %s4 = scalar_lea.smem %s0, 2
  %s5 = sld [smem:[%s4]]
  %s6 = scalar_lea.smem %s0, 3
  %s7 = sld [smem:[%s6]]
  %s8 = scalar_lea.smem %s0, 4
  %s9 = sld [smem:[%s8]]
  %s10 = scalar_lea.smem %s0, 5
  %s11 = sld [smem:[%s10]]
  %s12 = scalar_lea.smem %s0, 6
  %s13 = sld [smem:[%s12]]
  %s14 = scalar_lea.smem %s0, 7
  %s15 = sld [smem:[%s14]]
  %s16 = scalar_lea.smem %s0, 8
  %s17 = sld [smem:[%s16]]
  %s18 = scalar_lea.smem %s0, 9
  %s19 = sld [smem:[%s18]]
  %s20 = scalar_lea.smem %s0, 10
  %s21 = sld [smem:[%s20]]
  %s22 = scalar_lea.smem %s0, 11
  %s23 = sld [smem:[%s22]]
  %s24 = scalar_lea.smem %s0, 12
  %s25 = sld [smem:[%s24]]
  %s26 = scalar_lea.smem %s0, 13
  %s27 = sld [smem:[%s26]]
  %s28 = scalar_lea.smem %s0, 14
  %s29 = sld [smem:[%s28]]
  %s30 = scalar_lea.smem %s0, 15
  %s31 = sld [smem:[%s30]]
  %s32 = scalar_lea.smem %s0, 16
  %s33 = sld [smem:[%s32]]
  %s34 = scalar_lea.smem %s0, 17
  %s35 = sld [smem:[%s34]]
  %s36 = scalar_lea.smem %s0, 18
  %s37 = sld [smem:[%s36]]
  %s38 = scalar_lea.smem %s0, 19
  %s39 = sld [smem:[%s38]]
  %s40 = scalar_lea.smem %s0, 20
  %s41 = sld [smem:[%s40]]
  %s42 = scalar_lea.smem %s0, 21
  %s43 = sld [smem:[%s42]]
  %s44 = scalar_lea.smem %s0, 22
  %s45 = sld [smem:[%s44]]
  %s46 = scalar_lea.smem %s0, 23
  %s47 = sld [smem:[%s46]]
  %s48 = scalar_lea.smem %s0, 24
  %s49 = sld [smem:[%s48]]
  %s50 = scalar_lea.smem %s0, 25
  %s51 = sld [smem:[%s50]]
  %s52 = scalar_lea.smem %s0, 26
  %s53 = sld [smem:[%s52]]
  %s54 = scalar_lea.smem %s0, 27
  %s55 = sld [smem:[%s54]]
  %s56 = scalar_lea.smem %s0, 28
  %s57 = sld [smem:[%s56]]
  %s58 = scalar_lea.smem %s0, 29
  %s59 = sld [smem:[%s58]]
  %s60 = scalar_lea.smem %s0, 30
  %s61 = sld [smem:[%s60]]
  %s62 = scalar_lea.smem %s0, 31
  %s63 = sld [smem:[%s62]]
  %s64 = scalar_lea.smem %s0, 32
  %s65 = sld [smem:[%s64]]
  %s66 = scalar_lea.smem %s0, 33
  %s67 = sld [smem:[%s66]]
  %s68 = sld [smem:[#allocation0]]
  $region229: #{tpu_custom_call.1} parent=0
    _
  %s70 = ssub.s32 1, %s68
  %s71 = scalar_select 0, %s70, %s68
  $region1: #{tpu_custom_call.1} parent=0
    #allocation3 [shape = 'u8[512]{0}', space=vmem, size = 0x400, scoped, tag = 'input window, operand 7, single buffered']
    #allocation4 [shape = 's32[2]{0}', space=sflag, size = 0x8, scoped, tag = 'scoped memory for tpu_custom_call.1']
    #allocation5 [shape = 'u8[2048]{0}', space=vmem, size = 0x800, scoped, tag = 'input window, operand 8, single buffered']
    #allocation6 [shape = 's32[1]{0}', space=sflag, size = 0x4, scoped, tag = 'scoped memory for tpu_custom_call.1']
    #allocation7 [shape = 'u8[512]{0}', space=vmem, size = 0x400, scoped, tag = 'input window, operand 9, single buffered']
    #allocation8 [shape = 'u8[512]{0}', space=vmem, size = 0x400, scoped, tag = 'input window, operand 11, single buffered']
    #allocation9 [shape = 's32[1]{0}', space=sflag, size = 0x4, scoped, tag = 'scoped memory for tpu_custom_call.1']
    #allocation10 [shape = 'u8[512]{0}', space=vmem, size = 0x400, scoped, tag = 'input window, operand 12, single buffered']
    #allocation11 [shape = 'u8[512]{0}', space=vmem, size = 0x400, scoped, tag = 'input window, operand 13, single buffered']
    #allocation12 [shape = 's32[1]{0}', space=sflag, size = 0x4, scoped, tag = 'scoped memory for tpu_custom_call.1']
    #allocation13 [shape = 'u8[65536]{0}', space=vmem, size = 0x10000, scoped, tag = 'input window, operand 15, single buffered']
    #allocation14 [shape = 'u8[512]{0}', space=vmem, size = 0x400, scoped, tag = 'input window, operand 16, single buffered']
    #allocation15 [shape = 's32[1]{0}', space=sflag, size = 0x4, scoped, tag = 'scoped memory for tpu_custom_call.1']
    #allocation16 [shape = 'u8[65536]{0}', space=vmem, size = 0x10000, scoped, tag = 'input window, operand 17, single buffered']
    #allocation17 [shape = 'u8[512]{0}', space=vmem, size = 0x400, scoped, tag = 'input window, operand 18, single buffered']
    #allocation18 [shape = 's32[1]{0}', space=sflag, size = 0x4, scoped, tag = 'scoped memory for tpu_custom_call.1']
    #allocation19 [shape = 'u8[1024]{0}', space=vmem, size = 0x400, scoped, tag = 'input window, operand 20, single buffered']
    #allocation20 [shape = 'u8[393216]{0}', space=vmem, size = 0x60000, scoped, tag = 'input window, operand 21, single buffered']
    #allocation21 [shape = 's32[1]{0}', space=sflag, size = 0x4, scoped, tag = 'scoped memory for tpu_custom_call.1']
    #allocation22 [shape = 'u8[131072]{0}', space=vmem, size = 0x20000, scoped, tag = 'input window, operand 23, single buffered']
    #allocation23 [shape = 'u8[1024]{0}', space=vmem, size = 0x400, scoped, tag = 'input window, operand 26, single buffered']
    #allocation24 [shape = 's32[1]{0}', space=sflag, size = 0x4, scoped, tag = 'scoped memory for tpu_custom_call.1']
    #allocation25 [shape = 'u8[524288]{0}', space=vmem, size = 0x80000, scoped, tag = 'input window, operand 27, single buffered']
    #allocation26 [shape = 'u8[524288]{0}', space=vmem, size = 0x80000, scoped, tag = 'input window, operand 29, single buffered']
    #allocation27 [shape = 's32[1]{0}', space=sflag, size = 0x4, scoped, tag = 'scoped memory for tpu_custom_call.1']
    %72 = vsyncpa [#allocation4], 0
    %73 = vsyncpa [#allocation6], 0
    %74 = vsyncpa [#allocation9], 0
    %75 = vsyncpa [#allocation12], 0
    %76 = vsyncpa [#allocation15], 0
    %77 = vsyncpa [#allocation18], 0
    %78 = vsyncpa [#allocation21], 0
    %79 = vsyncpa [#allocation24], 0
    %80 = vsyncpa [#allocation27], 0
    loop: start=0, step=1, limit=4
    $region2: #{tpu_custom_call.1} parent=1 // loop_pre_header
      _
    $region3: #{tpu_custom_call.1} parent=1 // loop_header
      %s82 = sphi 0, %s86
      %p83 = scmp.ge.s32.totalorder %s82, 4
      %s92 = sphi 0, %s94
      %s95 = sphi 0, %s92
      %s96 = sphi 0, %s95
      %s112 = sphi 0, %s96
      %s118 = sphi 0, %s120
      %s121 = sphi 0, %s118
      %s122 = sphi 0, %s121
      %s138 = sphi 0, %s122
      %s144 = sphi 0, %s146
      %s147 = sphi 0, %s144
      %s148 = sphi 0, %s147
      %s164 = sphi 0, %s148
      %s170 = sphi 0, %s172
      %s173 = sphi 0, %s170
      %s174 = sphi 0, %s173
      %s190 = sphi 0, %s174
      %s194 = sphi 0, %s194
      %s196 = sphi 0, %s194
      %s197 = sphi 0, %s196
      %s211 = sphi 0, %s197
      %s215 = sphi 0, %s215
      %s217 = sphi 0, %s215
      %s218 = sphi 0, %s217
      %s232 = sphi 0, %s218
      %s236 = sphi 0, %s236
      %s238 = sphi 0, %s236
      %s239 = sphi 0, %s238
      %s253 = sphi 0, %s239
      %s257 = sphi 0, %s257
      %s259 = sphi 0, %s257
      %s260 = sphi 0, %s259
      %s274 = sphi 0, %s260
      %s278 = sphi 0, %s278
      %s280 = sphi 0, %s278
      %s281 = sphi 0, %s280
      %s295 = sphi 0, %s281
      %s299 = sphi 0, %s299
      %s301 = sphi 0, %s299
      %s302 = sphi 0, %s301
      %s316 = sphi 0, %s302
      %s320 = sphi 0, %s320
      %s322 = sphi 0, %s320
      %s323 = sphi 0, %s322
      %s337 = sphi 0, %s323
      %s341 = sphi 0, %s341
      %s343 = sphi 0, %s341
      %s344 = sphi 0, %s343
      %s358 = sphi 0, %s344
      %s362 = sphi 0, %s362
      %s364 = sphi 0, %s362
      %s365 = sphi 0, %s364
      %s379 = sphi 0, %s365
      %s383 = sphi 0, %s383
      %s385 = sphi 0, %s383
      %s386 = sphi 0, %s385
      %s400 = sphi 0, %s386
      %s404 = sphi 0, %s404
      %s406 = sphi 0, %s404
      %s407 = sphi 0, %s406
      %s421 = sphi 0, %s407
      %s425 = sphi 0, %s425
      %s427 = sphi 0, %s425
      %s428 = sphi 0, %s427
      %s442 = sphi 0, %s428
      %s446 = sphi 0, %s446
      %s448 = sphi 0, %s446
      %s449 = sphi 0, %s448
      %s463 = sphi 0, %s449
      %s467 = sphi 0, %s467
      %s469 = sphi 0, %s467
      %s470 = sphi 0, %s469
      %s484 = sphi 0, %s470
      %s488 = sphi 0, %s488
      %s490 = sphi 0, %s488
      %s491 = sphi 0, %s490
      %s505 = sphi 0, %s491
      %s509 = sphi 0, %s509
      %s511 = sphi 0, %s509
      %s512 = sphi 0, %s511
      %s526 = sphi 0, %s512
      %s530 = sphi 0, %s530
      %s532 = sphi 0, %s530
      %s533 = sphi 0, %s532
      %s547 = sphi 0, %s533
      %s551 = sphi 0, %s551
      %s553 = sphi 0, %s551
      %s554 = sphi 0, %s553
      %s568 = sphi 0, %s554
      %s572 = sphi 0, %s572
      %s574 = sphi 0, %s572
      %s575 = sphi 0, %s574
      %s589 = sphi 0, %s575
      %s593 = sphi 0, %s593
      %s595 = sphi 0, %s593
      %s596 = sphi 0, %s595
      %s610 = sphi 0, %s596
      %s614 = sphi 0, %s614
      %s616 = sphi 0, %s614
      %s617 = sphi 0, %s616
      %s631 = sphi 0, %s617
      %s635 = sphi 0, %s635
      %s637 = sphi 0, %s635
      %s638 = sphi 0, %s637
      %s652 = sphi 0, %s638
      %s656 = sphi 0, %s656
      %s658 = sphi 0, %s656
      %s659 = sphi 0, %s658
      %s673 = sphi 0, %s659
      %s677 = sphi 0, %s677
      %s679 = sphi 0, %s677
      %s680 = sphi 0, %s679
      %s694 = sphi 0, %s680
      %s698 = sphi 0, %s698
      %s700 = sphi 0, %s698
      %s701 = sphi 0, %s700
      %s715 = sphi 0, %s701
      %s719 = sphi 0, %s719
      %s721 = sphi 0, %s719
      %s722 = sphi 0, %s721
      %s736 = sphi 0, %s722
      %s740 = sphi 0, %s740
      %s742 = sphi 0, %s740
      %s743 = sphi 0, %s742
      %s757 = sphi 0, %s743
      %s761 = sphi 0, %s761
      %s763 = sphi 0, %s761
      %s764 = sphi 0, %s763
      %s778 = sphi 0, %s764
      %s782 = sphi 0, %s782
      %s784 = sphi 0, %s782
      %s785 = sphi 0, %s784
      %s799 = sphi 0, %s785
      %s805 = sphi 0, %s807
      %s808 = sphi 0, %s805
      %s809 = sphi 0, %s808
      %s825 = sphi 0, %s809
    $region4: #{tpu_custom_call.1} parent=1 // loop_header_branch
      %85 = sbr.rel (%p83) target = $region8
    $region5: #{tpu_custom_call.1} parent=1 // loop_body
      %s87 = ssub.s32 %s82, 1
      %s88 = ssub.s32 %s82, 2
      %s89 = sadd.s32 %s82, 1
      %s90 = ssub.s32 %s82, %s89
      %p91 = scmp.eq.s32.totalorder %s90, 0
      %s93 = sadd.s32 %s92, 1
      %s94 = scalar_select %p91, %s92, %s93
      %p97 = pneg %p91
      %p98 = scmp.eq.s32.totalorder %s82, 1
      %p99 = por %p97, %p98
      %p100 = scmp.ne.s32.totalorder %s92, %s95
      %p101 = scmp.eq.s32.totalorder %s82, 0
      %p102 = por %p100, %p101
      %p103 = scmp.ne.s32.totalorder %s92, %s95
      %p104 = scmp.eq.s32.totalorder %s87, 1
      %p105 = por %p103, %p104
      %p106 = scmp.ne.s32.totalorder %s95, %s96
      %p107 = scmp.eq.s32.totalorder %s87, 0
      %p108 = por %p106, %p107
      %p109 = scmp.ne.s32.totalorder %s95, %s96
      %p110 = scmp.eq.s32.totalorder %s88, 1
      %p111 = por %p109, %p110
      %p113 = scmp.ne.s32.totalorder %s96, %s112
      %p114 = scmp.eq.s32.totalorder %s88, 0
      %p115 = por %p113, %p114
      %s116 = ssub.s32 %s82, %s89
      %p117 = scmp.eq.s32.totalorder %s116, 0
      %s119 = sadd.s32 %s118, 1
      %s120 = scalar_select %p117, %s118, %s119
      %p123 = pneg %p117
      %p124 = scmp.eq.s32.totalorder %s82, 1
      %p125 = por %p123, %p124
      %p126 = scmp.ne.s32.totalorder %s118, %s121
      %p127 = scmp.eq.s32.totalorder %s82, 0
      %p128 = por %p126, %p127
      %p129 = scmp.ne.s32.totalorder %s118, %s121
      %p130 = scmp.eq.s32.totalorder %s87, 1
      %p131 = por %p129, %p130
      %p132 = scmp.ne.s32.totalorder %s121, %s122
      %p133 = scmp.eq.s32.totalorder %s87, 0
      %p134 = por %p132, %p133
      %p135 = scmp.ne.s32.totalorder %s121, %s122
      %p136 = scmp.eq.s32.totalorder %s88, 1
      %p137 = por %p135, %p136
      %p139 = scmp.ne.s32.totalorder %s122, %s138
      %p140 = scmp.eq.s32.totalorder %s88, 0
      %p141 = por %p139, %p140
      %s142 = ssub.s32 %s82, %s89
      %p143 = scmp.eq.s32.totalorder %s142, 0
      %s145 = sadd.s32 %s144, 1
      %s146 = scalar_select %p143, %s144, %s145
      %p149 = pneg %p143
      %p150 = scmp.eq.s32.totalorder %s82, 1
      %p151 = por %p149, %p150
      %p152 = scmp.ne.s32.totalorder %s144, %s147
      %p153 = scmp.eq.s32.totalorder %s82, 0
      %p154 = por %p152, %p153
      %p155 = scmp.ne.s32.totalorder %s144, %s147
      %p156 = scmp.eq.s32.totalorder %s87, 1
      %p157 = por %p155, %p156
      %p158 = scmp.ne.s32.totalorder %s147, %s148
      %p159 = scmp.eq.s32.totalorder %s87, 0
      %p160 = por %p158, %p159
      %p161 = scmp.ne.s32.totalorder %s147, %s148
      %p162 = scmp.eq.s32.totalorder %s88, 1
      %p163 = por %p161, %p162
      %p165 = scmp.ne.s32.totalorder %s148, %s164
      %p166 = scmp.eq.s32.totalorder %s88, 0
      %p167 = por %p165, %p166
      %s168 = ssub.s32 %s82, %s89
      %p169 = scmp.eq.s32.totalorder %s168, 0
      %s171 = sadd.s32 %s170, 1
      %s172 = scalar_select %p169, %s170, %s171
      %p175 = pneg %p169
      %p176 = scmp.eq.s32.totalorder %s82, 1
      %p177 = por %p175, %p176
      %p178 = scmp.ne.s32.totalorder %s170, %s173
      %p179 = scmp.eq.s32.totalorder %s82, 0
      %p180 = por %p178, %p179
      %p181 = scmp.ne.s32.totalorder %s170, %s173
      %p182 = scmp.eq.s32.totalorder %s87, 1
      %p183 = por %p181, %p182
      %p184 = scmp.ne.s32.totalorder %s173, %s174
      %p185 = scmp.eq.s32.totalorder %s87, 0
      %p186 = por %p184, %p185
      %p187 = scmp.ne.s32.totalorder %s173, %s174
      %p188 = scmp.eq.s32.totalorder %s88, 1
      %p189 = por %p187, %p188
      %p191 = scmp.ne.s32.totalorder %s174, %s190
      %p192 = scmp.eq.s32.totalorder %s88, 0
      %p193 = por %p191, %p192
      %s195 = sadd.s32 %s194, 1
      %p198 = scmp.eq.s32.totalorder %s82, 1
      %p199 = scmp.ne.s32.totalorder %s194, %s196
      %p200 = scmp.eq.s32.totalorder %s82, 0
      %p201 = por %p199, %p200
      %p202 = scmp.ne.s32.totalorder %s194, %s196
      %p203 = scmp.eq.s32.totalorder %s87, 1
      %p204 = por %p202, %p203
      %p205 = scmp.ne.s32.totalorder %s196, %s197
      %p206 = scmp.eq.s32.totalorder %s87, 0
      %p207 = por %p205, %p206
      %p208 = scmp.ne.s32.totalorder %s196, %s197
      %p209 = scmp.eq.s32.totalorder %s88, 1
      %p210 = por %p208, %p209
      %p212 = scmp.ne.s32.totalorder %s197, %s211
      %p213 = scmp.eq.s32.totalorder %s88, 0
      %p214 = por %p212, %p213
      %s216 = sadd.s32 %s215, 1
      %p219 = scmp.eq.s32.totalorder %s82, 1
      %p220 = scmp.ne.s32.totalorder %s215, %s217
      %p221 = scmp.eq.s32.totalorder %s82, 0
      %p222 = por %p220, %p221
      %p223 = scmp.ne.s32.totalorder %s215, %s217
      %p224 = scmp.eq.s32.totalorder %s87, 1
      %p225 = por %p223, %p224
      %p226 = scmp.ne.s32.totalorder %s217, %s218
      %p227 = scmp.eq.s32.totalorder %s87, 0
      %p228 = por %p226, %p227
      %p229 = scmp.ne.s32.totalorder %s217, %s218
      %p230 = scmp.eq.s32.totalorder %s88, 1
      %p231 = por %p229, %p230
      %p233 = scmp.ne.s32.totalorder %s218, %s232
      %p234 = scmp.eq.s32.totalorder %s88, 0
      %p235 = por %p233, %p234
      %s237 = sadd.s32 %s236, 1
      %p240 = scmp.eq.s32.totalorder %s82, 1
      %p241 = scmp.ne.s32.totalorder %s236, %s238
      %p242 = scmp.eq.s32.totalorder %s82, 0
      %p243 = por %p241, %p242
      %p244 = scmp.ne.s32.totalorder %s236, %s238
      %p245 = scmp.eq.s32.totalorder %s87, 1
      %p246 = por %p244, %p245
      %p247 = scmp.ne.s32.totalorder %s238, %s239
      %p248 = scmp.eq.s32.totalorder %s87, 0
      %p249 = por %p247, %p248
      %p250 = scmp.ne.s32.totalorder %s238, %s239
      %p251 = scmp.eq.s32.totalorder %s88, 1
      %p252 = por %p250, %p251
      %p254 = scmp.ne.s32.totalorder %s239, %s253
      %p255 = scmp.eq.s32.totalorder %s88, 0
      %p256 = por %p254, %p255
      %s258 = sadd.s32 %s257, 1
      %p261 = scmp.eq.s32.totalorder %s82, 1
      %p262 = scmp.ne.s32.totalorder %s257, %s259
      %p263 = scmp.eq.s32.totalorder %s82, 0
      %p264 = por %p262, %p263
      %p265 = scmp.ne.s32.totalorder %s257, %s259
      %p266 = scmp.eq.s32.totalorder %s87, 1
      %p267 = por %p265, %p266
      %p268 = scmp.ne.s32.totalorder %s259, %s260
      %p269 = scmp.eq.s32.totalorder %s87, 0
      %p270 = por %p268, %p269
      %p271 = scmp.ne.s32.totalorder %s259, %s260
      %p272 = scmp.eq.s32.totalorder %s88, 1
      %p273 = por %p271, %p272
      %p275 = scmp.ne.s32.totalorder %s260, %s274
      %p276 = scmp.eq.s32.totalorder %s88, 0
      %p277 = por %p275, %p276
      %s279 = sadd.s32 %s278, 1
      %p282 = scmp.eq.s32.totalorder %s82, 1
      %p283 = scmp.ne.s32.totalorder %s278, %s280
      %p284 = scmp.eq.s32.totalorder %s82, 0
      %p285 = por %p283, %p284
      %p286 = scmp.ne.s32.totalorder %s278, %s280
      %p287 = scmp.eq.s32.totalorder %s87, 1
      %p288 = por %p286, %p287
      %p289 = scmp.ne.s32.totalorder %s280, %s281
      %p290 = scmp.eq.s32.totalorder %s87, 0
      %p291 = por %p289, %p290
      %p292 = scmp.ne.s32.totalorder %s280, %s281
      %p293 = scmp.eq.s32.totalorder %s88, 1
      %p294 = por %p292, %p293
      %p296 = scmp.ne.s32.totalorder %s281, %s295
      %p297 = scmp.eq.s32.totalorder %s88, 0
      %p298 = por %p296, %p297
      %s300 = sadd.s32 %s299, 1
      %p303 = scmp.eq.s32.totalorder %s82, 1
      %p304 = scmp.ne.s32.totalorder %s299, %s301
      %p305 = scmp.eq.s32.totalorder %s82, 0
      %p306 = por %p304, %p305
      %p307 = scmp.ne.s32.totalorder %s299, %s301
      %p308 = scmp.eq.s32.totalorder %s87, 1
      %p309 = por %p307, %p308
      %p310 = scmp.ne.s32.totalorder %s301, %s302
      %p311 = scmp.eq.s32.totalorder %s87, 0
      %p312 = por %p310, %p311
      %p313 = scmp.ne.s32.totalorder %s301, %s302
      %p314 = scmp.eq.s32.totalorder %s88, 1
      %p315 = por %p313, %p314
      %p317 = scmp.ne.s32.totalorder %s302, %s316
      %p318 = scmp.eq.s32.totalorder %s88, 0
      %p319 = por %p317, %p318
      %s321 = sadd.s32 %s320, 1
      %p324 = scmp.eq.s32.totalorder %s82, 1
      %p325 = scmp.ne.s32.totalorder %s320, %s322
      %p326 = scmp.eq.s32.totalorder %s82, 0
      %p327 = por %p325, %p326
      %p328 = scmp.ne.s32.totalorder %s320, %s322
      %p329 = scmp.eq.s32.totalorder %s87, 1
      %p330 = por %p328, %p329
      %p331 = scmp.ne.s32.totalorder %s322, %s323
      %p332 = scmp.eq.s32.totalorder %s87, 0
      %p333 = por %p331, %p332
      %p334 = scmp.ne.s32.totalorder %s322, %s323
      %p335 = scmp.eq.s32.totalorder %s88, 1
      %p336 = por %p334, %p335
      %p338 = scmp.ne.s32.totalorder %s323, %s337
      %p339 = scmp.eq.s32.totalorder %s88, 0
      %p340 = por %p338, %p339
      %s342 = sadd.s32 %s341, 1
      %p345 = scmp.eq.s32.totalorder %s82, 1
      %p346 = scmp.ne.s32.totalorder %s341, %s343
      %p347 = scmp.eq.s32.totalorder %s82, 0
      %p348 = por %p346, %p347
      %p349 = scmp.ne.s32.totalorder %s341, %s343
      %p350 = scmp.eq.s32.totalorder %s87, 1
      %p351 = por %p349, %p350
      %p352 = scmp.ne.s32.totalorder %s343, %s344
      %p353 = scmp.eq.s32.totalorder %s87, 0
      %p354 = por %p352, %p353
      %p355 = scmp.ne.s32.totalorder %s343, %s344
      %p356 = scmp.eq.s32.totalorder %s88, 1
      %p357 = por %p355, %p356
      %p359 = scmp.ne.s32.totalorder %s344, %s358
      %p360 = scmp.eq.s32.totalorder %s88, 0
      %p361 = por %p359, %p360
      %s363 = sadd.s32 %s362, 1
      %p366 = scmp.eq.s32.totalorder %s82, 1
      %p367 = scmp.ne.s32.totalorder %s362, %s364
      %p368 = scmp.eq.s32.totalorder %s82, 0
      %p369 = por %p367, %p368
      %p370 = scmp.ne.s32.totalorder %s362, %s364
      %p371 = scmp.eq.s32.totalorder %s87, 1
      %p372 = por %p370, %p371
      %p373 = scmp.ne.s32.totalorder %s364, %s365
      %p374 = scmp.eq.s32.totalorder %s87, 0
      %p375 = por %p373, %p374
      %p376 = scmp.ne.s32.totalorder %s364, %s365
      %p377 = scmp.eq.s32.totalorder %s88, 1
      %p378 = por %p376, %p377
      %p380 = scmp.ne.s32.totalorder %s365, %s379
      %p381 = scmp.eq.s32.totalorder %s88, 0
      %p382 = por %p380, %p381
      %s384 = sadd.s32 %s383, 1
      %p387 = scmp.eq.s32.totalorder %s82, 1
      %p388 = scmp.ne.s32.totalorder %s383, %s385
      %p389 = scmp.eq.s32.totalorder %s82, 0
      %p390 = por %p388, %p389
      %p391 = scmp.ne.s32.totalorder %s383, %s385
      %p392 = scmp.eq.s32.totalorder %s87, 1
      %p393 = por %p391, %p392
      %p394 = scmp.ne.s32.totalorder %s385, %s386
      %p395 = scmp.eq.s32.totalorder %s87, 0
      %p396 = por %p394, %p395
      %p397 = scmp.ne.s32.totalorder %s385, %s386
      %p398 = scmp.eq.s32.totalorder %s88, 1
      %p399 = por %p397, %p398
      %p401 = scmp.ne.s32.totalorder %s386, %s400
      %p402 = scmp.eq.s32.totalorder %s88, 0
      %p403 = por %p401, %p402
      %s405 = sadd.s32 %s404, 1
      %p408 = scmp.eq.s32.totalorder %s82, 1
      %p409 = scmp.ne.s32.totalorder %s404, %s406
      %p410 = scmp.eq.s32.totalorder %s82, 0
      %p411 = por %p409, %p410
      %p412 = scmp.ne.s32.totalorder %s404, %s406
      %p413 = scmp.eq.s32.totalorder %s87, 1
      %p414 = por %p412, %p413
      %p415 = scmp.ne.s32.totalorder %s406, %s407
      %p416 = scmp.eq.s32.totalorder %s87, 0
      %p417 = por %p415, %p416
      %p418 = scmp.ne.s32.totalorder %s406, %s407
      %p419 = scmp.eq.s32.totalorder %s88, 1
      %p420 = por %p418, %p419
      %p422 = scmp.ne.s32.totalorder %s407, %s421
      %p423 = scmp.eq.s32.totalorder %s88, 0
      %p424 = por %p422, %p423
      %s426 = sadd.s32 %s425, 1
      %p429 = scmp.eq.s32.totalorder %s82, 1
      %p430 = scmp.ne.s32.totalorder %s425, %s427
      %p431 = scmp.eq.s32.totalorder %s82, 0
      %p432 = por %p430, %p431
      %p433 = scmp.ne.s32.totalorder %s425, %s427
      %p434 = scmp.eq.s32.totalorder %s87, 1
      %p435 = por %p433, %p434
      %p436 = scmp.ne.s32.totalorder %s427, %s428
      %p437 = scmp.eq.s32.totalorder %s87, 0
      %p438 = por %p436, %p437
      %p439 = scmp.ne.s32.totalorder %s427, %s428
      %p440 = scmp.eq.s32.totalorder %s88, 1
      %p441 = por %p439, %p440
      %p443 = scmp.ne.s32.totalorder %s428, %s442
      %p444 = scmp.eq.s32.totalorder %s88, 0
      %p445 = por %p443, %p444
      %s447 = sadd.s32 %s446, 1
      %p450 = scmp.eq.s32.totalorder %s82, 1
      %p451 = scmp.ne.s32.totalorder %s446, %s448
      %p452 = scmp.eq.s32.totalorder %s82, 0
      %p453 = por %p451, %p452
      %p454 = scmp.ne.s32.totalorder %s446, %s448
      %p455 = scmp.eq.s32.totalorder %s87, 1
      %p456 = por %p454, %p455
      %p457 = scmp.ne.s32.totalorder %s448, %s449
      %p458 = scmp.eq.s32.totalorder %s87, 0
      %p459 = por %p457, %p458
      %p460 = scmp.ne.s32.totalorder %s448, %s449
      %p461 = scmp.eq.s32.totalorder %s88, 1
      %p462 = por %p460, %p461
      %p464 = scmp.ne.s32.totalorder %s449, %s463
      %p465 = scmp.eq.s32.totalorder %s88, 0
      %p466 = por %p464, %p465
      %s468 = sadd.s32 %s467, 1
      %p471 = scmp.eq.s32.totalorder %s82, 1
      %p472 = scmp.ne.s32.totalorder %s467, %s469
      %p473 = scmp.eq.s32.totalorder %s82, 0
      %p474 = por %p472, %p473
      %p475 = scmp.ne.s32.totalorder %s467, %s469
      %p476 = scmp.eq.s32.totalorder %s87, 1
      %p477 = por %p475, %p476
      %p478 = scmp.ne.s32.totalorder %s469, %s470
      %p479 = scmp.eq.s32.totalorder %s87, 0
      %p480 = por %p478, %p479
      %p481 = scmp.ne.s32.totalorder %s469, %s470
      %p482 = scmp.eq.s32.totalorder %s88, 1
      %p483 = por %p481, %p482
      %p485 = scmp.ne.s32.totalorder %s470, %s484
      %p486 = scmp.eq.s32.totalorder %s88, 0
      %p487 = por %p485, %p486
      %s489 = sadd.s32 %s488, 1
      %p492 = scmp.eq.s32.totalorder %s82, 1
      %p493 = scmp.ne.s32.totalorder %s488, %s490
      %p494 = scmp.eq.s32.totalorder %s82, 0
      %p495 = por %p493, %p494
      %p496 = scmp.ne.s32.totalorder %s488, %s490
      %p497 = scmp.eq.s32.totalorder %s87, 1
      %p498 = por %p496, %p497
      %p499 = scmp.ne.s32.totalorder %s490, %s491
      %p500 = scmp.eq.s32.totalorder %s87, 0
      %p501 = por %p499, %p500
      %p502 = scmp.ne.s32.totalorder %s490, %s491
      %p503 = scmp.eq.s32.totalorder %s88, 1
      %p504 = por %p502, %p503
      %p506 = scmp.ne.s32.totalorder %s491, %s505
      %p507 = scmp.eq.s32.totalorder %s88, 0
      %p508 = por %p506, %p507
      %s510 = sadd.s32 %s509, 1
      %p513 = scmp.eq.s32.totalorder %s82, 1
      %p514 = scmp.ne.s32.totalorder %s509, %s511
      %p515 = scmp.eq.s32.totalorder %s82, 0
      %p516 = por %p514, %p515
      %p517 = scmp.ne.s32.totalorder %s509, %s511
      %p518 = scmp.eq.s32.totalorder %s87, 1
      %p519 = por %p517, %p518
      %p520 = scmp.ne.s32.totalorder %s511, %s512
      %p521 = scmp.eq.s32.totalorder %s87, 0
      %p522 = por %p520, %p521
      %p523 = scmp.ne.s32.totalorder %s511, %s512
      %p524 = scmp.eq.s32.totalorder %s88, 1
      %p525 = por %p523, %p524
      %p527 = scmp.ne.s32.totalorder %s512, %s526
      %p528 = scmp.eq.s32.totalorder %s88, 0
      %p529 = por %p527, %p528
      %s531 = sadd.s32 %s530, 1
      %p534 = scmp.eq.s32.totalorder %s82, 1
      %p535 = scmp.ne.s32.totalorder %s530, %s532
      %p536 = scmp.eq.s32.totalorder %s82, 0
      %p537 = por %p535, %p536
      %p538 = scmp.ne.s32.totalorder %s530, %s532
      %p539 = scmp.eq.s32.totalorder %s87, 1
      %p540 = por %p538, %p539
      %p541 = scmp.ne.s32.totalorder %s532, %s533
      %p542 = scmp.eq.s32.totalorder %s87, 0
      %p543 = por %p541, %p542
      %p544 = scmp.ne.s32.totalorder %s532, %s533
      %p545 = scmp.eq.s32.totalorder %s88, 1
      %p546 = por %p544, %p545
      %p548 = scmp.ne.s32.totalorder %s533, %s547
      %p549 = scmp.eq.s32.totalorder %s88, 0
      %p550 = por %p548, %p549
      %s552 = sadd.s32 %s551, 1
      %p555 = scmp.eq.s32.totalorder %s82, 1
      %p556 = scmp.ne.s32.totalorder %s551, %s553
      %p557 = scmp.eq.s32.totalorder %s82, 0
      %p558 = por %p556, %p557
      %p559 = scmp.ne.s32.totalorder %s551, %s553
      %p560 = scmp.eq.s32.totalorder %s87, 1
      %p561 = por %p559, %p560
      %p562 = scmp.ne.s32.totalorder %s553, %s554
      %p563 = scmp.eq.s32.totalorder %s87, 0
      %p564 = por %p562, %p563
      %p565 = scmp.ne.s32.totalorder %s553, %s554
      %p566 = scmp.eq.s32.totalorder %s88, 1
      %p567 = por %p565, %p566
      %p569 = scmp.ne.s32.totalorder %s554, %s568
      %p570 = scmp.eq.s32.totalorder %s88, 0
      %p571 = por %p569, %p570
      %s573 = sadd.s32 %s572, 1
      %p576 = scmp.eq.s32.totalorder %s82, 1
      %p577 = scmp.ne.s32.totalorder %s572, %s574
      %p578 = scmp.eq.s32.totalorder %s82, 0
      %p579 = por %p577, %p578
      %p580 = scmp.ne.s32.totalorder %s572, %s574
      %p581 = scmp.eq.s32.totalorder %s87, 1
      %p582 = por %p580, %p581
      %p583 = scmp.ne.s32.totalorder %s574, %s575
      %p584 = scmp.eq.s32.totalorder %s87, 0
      %p585 = por %p583, %p584
      %p586 = scmp.ne.s32.totalorder %s574, %s575
      %p587 = scmp.eq.s32.totalorder %s88, 1
      %p588 = por %p586, %p587
      %p590 = scmp.ne.s32.totalorder %s575, %s589
      %p591 = scmp.eq.s32.totalorder %s88, 0
      %p592 = por %p590, %p591
      %s594 = sadd.s32 %s593, 1
      %p597 = scmp.eq.s32.totalorder %s82, 1
      %p598 = scmp.ne.s32.totalorder %s593, %s595
      %p599 = scmp.eq.s32.totalorder %s82, 0
      %p600 = por %p598, %p599
      %p601 = scmp.ne.s32.totalorder %s593, %s595
      %p602 = scmp.eq.s32.totalorder %s87, 1
      %p603 = por %p601, %p602
      %p604 = scmp.ne.s32.totalorder %s595, %s596
      %p605 = scmp.eq.s32.totalorder %s87, 0
      %p606 = por %p604, %p605
      %p607 = scmp.ne.s32.totalorder %s595, %s596
      %p608 = scmp.eq.s32.totalorder %s88, 1
      %p609 = por %p607, %p608
      %p611 = scmp.ne.s32.totalorder %s596, %s610
      %p612 = scmp.eq.s32.totalorder %s88, 0
      %p613 = por %p611, %p612
      %s615 = sadd.s32 %s614, 1
      %p618 = scmp.eq.s32.totalorder %s82, 1
      %p619 = scmp.ne.s32.totalorder %s614, %s616
      %p620 = scmp.eq.s32.totalorder %s82, 0
      %p621 = por %p619, %p620
      %p622 = scmp.ne.s32.totalorder %s614, %s616
      %p623 = scmp.eq.s32.totalorder %s87, 1
      %p624 = por %p622, %p623
      %p625 = scmp.ne.s32.totalorder %s616, %s617
      %p626 = scmp.eq.s32.totalorder %s87, 0
      %p627 = por %p625, %p626
      %p628 = scmp.ne.s32.totalorder %s616, %s617
      %p629 = scmp.eq.s32.totalorder %s88, 1
      %p630 = por %p628, %p629
      %p632 = scmp.ne.s32.totalorder %s617, %s631
      %p633 = scmp.eq.s32.totalorder %s88, 0
      %p634 = por %p632, %p633
      %s636 = sadd.s32 %s635, 1
      %p639 = scmp.eq.s32.totalorder %s82, 1
      %p640 = scmp.ne.s32.totalorder %s635, %s637
      %p641 = scmp.eq.s32.totalorder %s82, 0
      %p642 = por %p640, %p641
      %p643 = scmp.ne.s32.totalorder %s635, %s637
      %p644 = scmp.eq.s32.totalorder %s87, 1
      %p645 = por %p643, %p644
      %p646 = scmp.ne.s32.totalorder %s637, %s638
      %p647 = scmp.eq.s32.totalorder %s87, 0
      %p648 = por %p646, %p647
      %p649 = scmp.ne.s32.totalorder %s637, %s638
      %p650 = scmp.eq.s32.totalorder %s88, 1
      %p651 = por %p649, %p650
      %p653 = scmp.ne.s32.totalorder %s638, %s652
      %p654 = scmp.eq.s32.totalorder %s88, 0
      %p655 = por %p653, %p654
      %s657 = sadd.s32 %s656, 1
      %p660 = scmp.eq.s32.totalorder %s82, 1
      %p661 = scmp.ne.s32.totalorder %s656, %s658
      %p662 = scmp.eq.s32.totalorder %s82, 0
      %p663 = por %p661, %p662
      %p664 = scmp.ne.s32.totalorder %s656, %s658
      %p665 = scmp.eq.s32.totalorder %s87, 1
      %p666 = por %p664, %p665
      %p667 = scmp.ne.s32.totalorder %s658, %s659
      %p668 = scmp.eq.s32.totalorder %s87, 0
      %p669 = por %p667, %p668
      %p670 = scmp.ne.s32.totalorder %s658, %s659
      %p671 = scmp.eq.s32.totalorder %s88, 1
      %p672 = por %p670, %p671
      %p674 = scmp.ne.s32.totalorder %s659, %s673
      %p675 = scmp.eq.s32.totalorder %s88, 0
      %p676 = por %p674, %p675
      %s678 = sadd.s32 %s677, 1
      %p681 = scmp.eq.s32.totalorder %s82, 1
      %p682 = scmp.ne.s32.totalorder %s677, %s679
      %p683 = scmp.eq.s32.totalorder %s82, 0
      %p684 = por %p682, %p683
      %p685 = scmp.ne.s32.totalorder %s677, %s679
      %p686 = scmp.eq.s32.totalorder %s87, 1
      %p687 = por %p685, %p686
      %p688 = scmp.ne.s32.totalorder %s679, %s680
      %p689 = scmp.eq.s32.totalorder %s87, 0
      %p690 = por %p688, %p689
      %p691 = scmp.ne.s32.totalorder %s679, %s680
      %p692 = scmp.eq.s32.totalorder %s88, 1
      %p693 = por %p691, %p692
      %p695 = scmp.ne.s32.totalorder %s680, %s694
      %p696 = scmp.eq.s32.totalorder %s88, 0
      %p697 = por %p695, %p696
      %s699 = sadd.s32 %s698, 1
      %p702 = scmp.eq.s32.totalorder %s82, 1
      %p703 = scmp.ne.s32.totalorder %s698, %s700
      %p704 = scmp.eq.s32.totalorder %s82, 0
      %p705 = por %p703, %p704
      %p706 = scmp.ne.s32.totalorder %s698, %s700
      %p707 = scmp.eq.s32.totalorder %s87, 1
      %p708 = por %p706, %p707
      %p709 = scmp.ne.s32.totalorder %s700, %s701
      %p710 = scmp.eq.s32.totalorder %s87, 0
      %p711 = por %p709, %p710
      %p712 = scmp.ne.s32.totalorder %s700, %s701
      %p713 = scmp.eq.s32.totalorder %s88, 1
      %p714 = por %p712, %p713
      %p716 = scmp.ne.s32.totalorder %s701, %s715
      %p717 = scmp.eq.s32.totalorder %s88, 0
      %p718 = por %p716, %p717
      %s720 = sadd.s32 %s719, 1
      %p723 = scmp.eq.s32.totalorder %s82, 1
      %p724 = scmp.ne.s32.totalorder %s719, %s721
      %p725 = scmp.eq.s32.totalorder %s82, 0
      %p726 = por %p724, %p725
      %p727 = scmp.ne.s32.totalorder %s719, %s721
      %p728 = scmp.eq.s32.totalorder %s87, 1
      %p729 = por %p727, %p728
      %p730 = scmp.ne.s32.totalorder %s721, %s722
      %p731 = scmp.eq.s32.totalorder %s87, 0
      %p732 = por %p730, %p731
      %p733 = scmp.ne.s32.totalorder %s721, %s722
      %p734 = scmp.eq.s32.totalorder %s88, 1
      %p735 = por %p733, %p734
      %p737 = scmp.ne.s32.totalorder %s722, %s736
      %p738 = scmp.eq.s32.totalorder %s88, 0
      %p739 = por %p737, %p738
      %s741 = sadd.s32 %s740, 1
      %p744 = scmp.eq.s32.totalorder %s82, 1
      %p745 = scmp.ne.s32.totalorder %s740, %s742
      %p746 = scmp.eq.s32.totalorder %s82, 0
      %p747 = por %p745, %p746
      %p748 = scmp.ne.s32.totalorder %s740, %s742
      %p749 = scmp.eq.s32.totalorder %s87, 1
      %p750 = por %p748, %p749
      %p751 = scmp.ne.s32.totalorder %s742, %s743
      %p752 = scmp.eq.s32.totalorder %s87, 0
      %p753 = por %p751, %p752
      %p754 = scmp.ne.s32.totalorder %s742, %s743
      %p755 = scmp.eq.s32.totalorder %s88, 1
      %p756 = por %p754, %p755
      %p758 = scmp.ne.s32.totalorder %s743, %s757
      %p759 = scmp.eq.s32.totalorder %s88, 0
      %p760 = por %p758, %p759
      %s762 = sadd.s32 %s761, 1
      %p765 = scmp.eq.s32.totalorder %s82, 1
      %p766 = scmp.ne.s32.totalorder %s761, %s763
      %p767 = scmp.eq.s32.totalorder %s82, 0
      %p768 = por %p766, %p767
      %p769 = scmp.ne.s32.totalorder %s761, %s763
      %p770 = scmp.eq.s32.totalorder %s87, 1
      %p771 = por %p769, %p770
      %p772 = scmp.ne.s32.totalorder %s763, %s764
      %p773 = scmp.eq.s32.totalorder %s87, 0
      %p774 = por %p772, %p773
      %p775 = scmp.ne.s32.totalorder %s763, %s764
      %p776 = scmp.eq.s32.totalorder %s88, 1
      %p777 = por %p775, %p776
      %p779 = scmp.ne.s32.totalorder %s764, %s778
      %p780 = scmp.eq.s32.totalorder %s88, 0
      %p781 = por %p779, %p780
      %s783 = sadd.s32 %s782, 1
      %p786 = scmp.eq.s32.totalorder %s82, 1
      %p787 = scmp.ne.s32.totalorder %s782, %s784
      %p788 = scmp.eq.s32.totalorder %s82, 0
      %p789 = por %p787, %p788
      %p790 = scmp.ne.s32.totalorder %s782, %s784
      %p791 = scmp.eq.s32.totalorder %s87, 1
      %p792 = por %p790, %p791
      %p793 = scmp.ne.s32.totalorder %s784, %s785
      %p794 = scmp.eq.s32.totalorder %s87, 0
      %p795 = por %p793, %p794
      %p796 = scmp.ne.s32.totalorder %s784, %s785
      %p797 = scmp.eq.s32.totalorder %s88, 1
      %p798 = por %p796, %p797
      %p800 = scmp.ne.s32.totalorder %s785, %s799
      %p801 = scmp.eq.s32.totalorder %s88, 0
      %p802 = por %p800, %p801
      %s803 = ssub.s32 %s82, %s89
      %p804 = scmp.eq.s32.totalorder %s803, 0
      %s806 = sadd.s32 %s805, 1
      %s807 = scalar_select %p804, %s805, %s806
      %p810 = pneg %p804
      %p811 = scmp.eq.s32.totalorder %s82, 1
      %p812 = por %p810, %p811
      %p813 = scmp.ne.s32.totalorder %s805, %s808
      %p814 = scmp.eq.s32.totalorder %s82, 0
      %p815 = por %p813, %p814
      %p816 = scmp.ne.s32.totalorder %s805, %s808
      %p817 = scmp.eq.s32.totalorder %s87, 1
      %p818 = por %p816, %p817
      %p819 = scmp.ne.s32.totalorder %s808, %s809
      %p820 = scmp.eq.s32.totalorder %s87, 0
      %p821 = por %p819, %p820
      %p822 = scmp.ne.s32.totalorder %s808, %s809
      %p823 = scmp.eq.s32.totalorder %s88, 1
      %p824 = por %p822, %p823
      %p826 = scmp.ne.s32.totalorder %s809, %s825
      %p827 = scmp.eq.s32.totalorder %s88, 0
      %p828 = por %p826, %p827
      %p829 = scmp.le.s32.totalorder 1, %s82
      %p830 = scmp.lt.s32.totalorder %s82, 3
      %p831 = pnand %p829, %p830
      %p832 = pneg %p831
      // Predicated region
      $region9: #{tpu_custom_call.1} parent=5 // pred_check
        _
      $region10: #{tpu_custom_call.1} parent=5 // pred_check_branch
        %834 = sbr.rel (%p831) target = $region12
      $region11: #{tpu_custom_call.1} parent=5 // pred_region
        %s835 = ssub.s32 %s82, 1
        // Predicated region
        $region13: #{tpu_custom_call.1} parent=11 // pred_check
          %p836 = pneg %p207
        $region14: #{tpu_custom_call.1} parent=11 // pred_check_branch
          %838 = sbr.rel (%p836) target = $region16
        $region15: #{tpu_custom_call.1} parent=11 // pred_region
          _
        $region16: #{tpu_custom_call.1} parent=11 // pred_fallthru
          _
        // Predicated region
        $region17: #{tpu_custom_call.1} parent=11 // pred_check
          %p839 = pneg %p228
        $region18: #{tpu_custom_call.1} parent=11 // pred_check_branch
          %841 = sbr.rel (%p839) target = $region20
        $region19: #{tpu_custom_call.1} parent=11 // pred_region
          _
        $region20: #{tpu_custom_call.1} parent=11 // pred_fallthru
          _
        // Predicated region
        $region21: #{tpu_custom_call.1} parent=11 // pred_check
          %p842 = pneg %p249
        $region22: #{tpu_custom_call.1} parent=11 // pred_check_branch
          %844 = sbr.rel (%p842) target = $region24
        $region23: #{tpu_custom_call.1} parent=11 // pred_region
          _
        $region24: #{tpu_custom_call.1} parent=11 // pred_fallthru
          _
        // Predicated region
        $region25: #{tpu_custom_call.1} parent=11 // pred_check
          %p845 = pneg %p270
        $region26: #{tpu_custom_call.1} parent=11 // pred_check_branch
          %847 = sbr.rel (%p845) target = $region28
        $region27: #{tpu_custom_call.1} parent=11 // pred_region
          %849 = vsyncadd [#allocation4], 0
          %s851 = sshll.u32 %s15, 4
          %s852 = int_to_ptr.hbm [resolvable:$true] %s851
          %s853 = sshll.u32 [#allocation3], 4
          %s854 = int_to_ptr.vmem [resolvable:$true] %s853
          %856 = dma.hbm_to_vmem [thread:$0]  %s852, 16, %s854, [#allocation4]
        $region28: #{tpu_custom_call.1} parent=11 // pred_fallthru
          _
        // Predicated region
        $region29: #{tpu_custom_call.1} parent=11 // pred_check
          %p857 = pneg %p291
        $region30: #{tpu_custom_call.1} parent=11 // pred_check_branch
          %859 = sbr.rel (%p857) target = $region32
        $region31: #{tpu_custom_call.1} parent=11 // pred_region
          %861 = vsyncadd [#allocation6], 0
          %s863 = sshll.u32 %s17, 4
          %s864 = int_to_ptr.hbm [resolvable:$true] %s863
          %s865 = sshll.u32 [#allocation5], 4
          %s866 = int_to_ptr.vmem [resolvable:$true] %s865
          %868 = dma.hbm_to_vmem [thread:$0]  %s864, 64, %s866, [#allocation6]
        $region32: #{tpu_custom_call.1} parent=11 // pred_fallthru
          _
        // Predicated region
        $region33: #{tpu_custom_call.1} parent=11 // pred_check
          %p869 = pneg %p312
        $region34: #{tpu_custom_call.1} parent=11 // pred_check_branch
          %871 = sbr.rel (%p869) target = $region36
        $region35: #{tpu_custom_call.1} parent=11 // pred_region
          %873 = vsyncadd [#allocation6], 0
          %s875 = sshll.u32 %s19, 4
          %s876 = int_to_ptr.hbm [resolvable:$true] %s875
          %s877 = sshll.u32 [#allocation7], 4
          %s878 = int_to_ptr.vmem [resolvable:$true] %s877
          %880 = dma.hbm_to_vmem [thread:$0]  %s876, 16, %s878, [#allocation6]
        $region36: #{tpu_custom_call.1} parent=11 // pred_fallthru
          _
        // Predicated region
        $region37: #{tpu_custom_call.1} parent=11 // pred_check
          %p881 = pneg %p333
        $region38: #{tpu_custom_call.1} parent=11 // pred_check_branch
          %883 = sbr.rel (%p881) target = $region40
        $region39: #{tpu_custom_call.1} parent=11 // pred_region
          _
        $region40: #{tpu_custom_call.1} parent=11 // pred_fallthru
          _
        // Predicated region
        $region41: #{tpu_custom_call.1} parent=11 // pred_check
          %p884 = pneg %p354
        $region42: #{tpu_custom_call.1} parent=11 // pred_check_branch
          %886 = sbr.rel (%p884) target = $region44
        $region43: #{tpu_custom_call.1} parent=11 // pred_region
          %888 = vsyncadd [#allocation9], 0
          %s890 = sshll.u32 %s23, 4
          %s891 = int_to_ptr.hbm [resolvable:$true] %s890
          %s892 = sshll.u32 [#allocation8], 4
          %s893 = int_to_ptr.vmem [resolvable:$true] %s892
          %895 = dma.hbm_to_vmem [thread:$0]  %s891, 16, %s893, [#allocation9]
        $region44: #{tpu_custom_call.1} parent=11 // pred_fallthru
          _
        // Predicated region
        $region45: #{tpu_custom_call.1} parent=11 // pred_check
          %p896 = pneg %p375
        $region46: #{tpu_custom_call.1} parent=11 // pred_check_branch
          %898 = sbr.rel (%p896) target = $region48
        $region47: #{tpu_custom_call.1} parent=11 // pred_region
          %900 = vsyncadd [#allocation9], 0
          %s902 = sshll.u32 %s25, 4
          %s903 = int_to_ptr.hbm [resolvable:$true] %s902
          %s904 = sshll.u32 [#allocation10], 4
          %s905 = int_to_ptr.vmem [resolvable:$true] %s904
          %907 = dma.hbm_to_vmem [thread:$0]  %s903, 16, %s905, [#allocation9]
        $region48: #{tpu_custom_call.1} parent=11 // pred_fallthru
          _
        // Predicated region
        $region49: #{tpu_custom_call.1} parent=11 // pred_check
          %p908 = pneg %p396
        $region50: #{tpu_custom_call.1} parent=11 // pred_check_branch
          %910 = sbr.rel (%p908) target = $region52
        $region51: #{tpu_custom_call.1} parent=11 // pred_region
          %912 = vsyncadd [#allocation12], 0
          %s914 = sshll.u32 %s27, 4
          %s915 = int_to_ptr.hbm [resolvable:$true] %s914
          %s916 = sshll.u32 [#allocation11], 4
          %s917 = int_to_ptr.vmem [resolvable:$true] %s916
          %919 = dma.hbm_to_vmem [thread:$0]  %s915, 16, %s917, [#allocation12]
        $region52: #{tpu_custom_call.1} parent=11 // pred_fallthru
          _
        // Predicated region
        $region53: #{tpu_custom_call.1} parent=11 // pred_check
          %p920 = pneg %p417
        $region54: #{tpu_custom_call.1} parent=11 // pred_check_branch
          %922 = sbr.rel (%p920) target = $region56
        $region55: #{tpu_custom_call.1} parent=11 // pred_region
          _
        $region56: #{tpu_custom_call.1} parent=11 // pred_fallthru
          _
        // Predicated region
        $region57: #{tpu_custom_call.1} parent=11 // pred_check
          %p923 = pneg %p438
        $region58: #{tpu_custom_call.1} parent=11 // pred_check_branch
          %925 = sbr.rel (%p923) target = $region60
        $region59: #{tpu_custom_call.1} parent=11 // pred_region
          %927 = vsyncadd [#allocation12], 0
          %s928 = sshll.u32 %s31, 4
          %s929 = int_to_ptr.hbm [resolvable:$true] %s928
          %s930 = sshll.u32 [#allocation13], 4
          %s931 = int_to_ptr.vmem [resolvable:$true] %s930
          %936 = dma.hbm_to_vmem [thread:$0]  %s929, 2048, %s931, [#allocation12], 128, 128, 8
        $region60: #{tpu_custom_call.1} parent=11 // pred_fallthru
          _
        // Predicated region
        $region61: #{tpu_custom_call.1} parent=11 // pred_check
          %p937 = pneg %p459
        $region62: #{tpu_custom_call.1} parent=11 // pred_check_branch
          %939 = sbr.rel (%p937) target = $region64
        $region63: #{tpu_custom_call.1} parent=11 // pred_region
          %941 = vsyncadd [#allocation15], 0
          %s943 = sshll.u32 %s33, 4
          %s944 = int_to_ptr.hbm [resolvable:$true] %s943
          %s945 = sshll.u32 [#allocation14], 4
          %s946 = int_to_ptr.vmem [resolvable:$true] %s945
          %948 = dma.hbm_to_vmem [thread:$0]  %s944, 16, %s946, [#allocation15]
        $region64: #{tpu_custom_call.1} parent=11 // pred_fallthru
          _
        // Predicated region
        $region65: #{tpu_custom_call.1} parent=11 // pred_check
          %p949 = pneg %p480
        $region66: #{tpu_custom_call.1} parent=11 // pred_check_branch
          %951 = sbr.rel (%p949) target = $region68
        $region67: #{tpu_custom_call.1} parent=11 // pred_region
          %953 = vsyncadd [#allocation15], 0
          %s954 = sshll.u32 %s35, 4
          %s955 = int_to_ptr.hbm [resolvable:$true] %s954
          %s956 = sshll.u32 [#allocation16], 4
          %s957 = int_to_ptr.vmem [resolvable:$true] %s956
          %962 = dma.hbm_to_vmem [thread:$0]  %s955, 2048, %s957, [#allocation15], 128, 128, 8
        $region68: #{tpu_custom_call.1} parent=11 // pred_fallthru
          _
        // Predicated region
        $region69: #{tpu_custom_call.1} parent=11 // pred_check
          %p963 = pneg %p501
        $region70: #{tpu_custom_call.1} parent=11 // pred_check_branch
          %965 = sbr.rel (%p963) target = $region72
        $region71: #{tpu_custom_call.1} parent=11 // pred_region
          %967 = vsyncadd [#allocation18], 0
          %s969 = sshll.u32 %s37, 4
          %s970 = int_to_ptr.hbm [resolvable:$true] %s969
          %s971 = sshll.u32 [#allocation17], 4
          %s972 = int_to_ptr.vmem [resolvable:$true] %s971
          %974 = dma.hbm_to_vmem [thread:$0]  %s970, 16, %s972, [#allocation18]
        $region72: #{tpu_custom_call.1} parent=11 // pred_fallthru
          _
        // Predicated region
        $region73: #{tpu_custom_call.1} parent=11 // pred_check
          %p975 = pneg %p522
        $region74: #{tpu_custom_call.1} parent=11 // pred_check_branch
          %977 = sbr.rel (%p975) target = $region76
        $region75: #{tpu_custom_call.1} parent=11 // pred_region
          _
        $region76: #{tpu_custom_call.1} parent=11 // pred_fallthru
          _
        // Predicated region
        $region77: #{tpu_custom_call.1} parent=11 // pred_check
          %p978 = pneg %p543
        $region78: #{tpu_custom_call.1} parent=11 // pred_check_branch
          %980 = sbr.rel (%p978) target = $region80
        $region79: #{tpu_custom_call.1} parent=11 // pred_region
          %982 = vsyncadd [#allocation18], 0
          %s984 = sshll.u32 %s41, 4
          %s985 = int_to_ptr.hbm [resolvable:$true] %s984
          %s986 = sshll.u32 [#allocation19], 4
          %s987 = int_to_ptr.vmem [resolvable:$true] %s986
          %989 = dma.hbm_to_vmem [thread:$0]  %s985, 32, %s987, [#allocation18]
        $region80: #{tpu_custom_call.1} parent=11 // pred_fallthru
          _
        // Predicated region
        $region81: #{tpu_custom_call.1} parent=11 // pred_check
          %p990 = pneg %p564
        $region82: #{tpu_custom_call.1} parent=11 // pred_check_branch
          %992 = sbr.rel (%p990) target = $region84
        $region83: #{tpu_custom_call.1} parent=11 // pred_region
          %994 = vsyncadd [#allocation21], 0
          %s995 = sshll.u32 %s43, 4
          %s996 = int_to_ptr.hbm [resolvable:$true] %s995
          %s997 = sshll.u32 [#allocation20], 4
          %s998 = int_to_ptr.vmem [resolvable:$true] %s997
          %1003 = dma.hbm_to_vmem [thread:$0]  %s996, 12288, %s998, [#allocation21], 384, 384, 24
        $region84: #{tpu_custom_call.1} parent=11 // pred_fallthru
          _
        // Predicated region
        $region85: #{tpu_custom_call.1} parent=11 // pred_check
          %p1004 = pneg %p585
        $region86: #{tpu_custom_call.1} parent=11 // pred_check_branch
          %1006 = sbr.rel (%p1004) target = $region88
        $region87: #{tpu_custom_call.1} parent=11 // pred_region
          _
        $region88: #{tpu_custom_call.1} parent=11 // pred_fallthru
          _
        // Predicated region
        $region89: #{tpu_custom_call.1} parent=11 // pred_check
          %p1007 = pneg %p606
        $region90: #{tpu_custom_call.1} parent=11 // pred_check_branch
          %1009 = sbr.rel (%p1007) target = $region92
        $region91: #{tpu_custom_call.1} parent=11 // pred_region
          %1011 = vsyncadd [#allocation21], 0
          %s1012 = sshll.u32 %s47, 4
          %s1013 = int_to_ptr.hbm [resolvable:$true] %s1012
          %s1014 = sshll.u32 [#allocation22], 4
          %s1015 = int_to_ptr.vmem [resolvable:$true] %s1014
          %1020 = dma.hbm_to_vmem [thread:$0]  %s1013, 4096, %s1015, [#allocation21], 128, 128, 8
        $region92: #{tpu_custom_call.1} parent=11 // pred_fallthru
          _
        // Predicated region
        $region93: #{tpu_custom_call.1} parent=11 // pred_check
          %p1021 = pneg %p627
        $region94: #{tpu_custom_call.1} parent=11 // pred_check_branch
          %1023 = sbr.rel (%p1021) target = $region96
        $region95: #{tpu_custom_call.1} parent=11 // pred_region
          _
        $region96: #{tpu_custom_call.1} parent=11 // pred_fallthru
          _
        // Predicated region
        $region97: #{tpu_custom_call.1} parent=11 // pred_check
          %p1024 = pneg %p648
        $region98: #{tpu_custom_call.1} parent=11 // pred_check_branch
          %1026 = sbr.rel (%p1024) target = $region100
        $region99: #{tpu_custom_call.1} parent=11 // pred_region
          _
        $region100: #{tpu_custom_call.1} parent=11 // pred_fallthru
          _
        // Predicated region
        $region101: #{tpu_custom_call.1} parent=11 // pred_check
          %p1027 = pneg %p669
        $region102: #{tpu_custom_call.1} parent=11 // pred_check_branch
          %1029 = sbr.rel (%p1027) target = $region104
        $region103: #{tpu_custom_call.1} parent=11 // pred_region
          %1031 = vsyncadd [#allocation24], 0
          %s1033 = sshll.u32 %s53, 4
          %s1034 = int_to_ptr.hbm [resolvable:$true] %s1033
          %s1035 = sshll.u32 [#allocation23], 4
          %s1036 = int_to_ptr.vmem [resolvable:$true] %s1035
          %1038 = dma.hbm_to_vmem [thread:$0]  %s1034, 32, %s1036, [#allocation24]
        $region104: #{tpu_custom_call.1} parent=11 // pred_fallthru
          _
        // Predicated region
        $region105: #{tpu_custom_call.1} parent=11 // pred_check
          %p1039 = pneg %p690
        $region106: #{tpu_custom_call.1} parent=11 // pred_check_branch
          %1041 = sbr.rel (%p1039) target = $region108
        $region107: #{tpu_custom_call.1} parent=11 // pred_region
          %1043 = vsyncadd [#allocation24], 0
          %s1044 = sshll.u32 %s55, 4
          %s1045 = int_to_ptr.hbm [resolvable:$true] %s1044
          %s1046 = sshll.u32 [#allocation25], 4
          %s1047 = int_to_ptr.vmem [resolvable:$true] %s1046
          %1052 = dma.hbm_to_vmem [thread:$0]  %s1045, 16384, %s1047, [#allocation24], 512, 512, 32
        $region108: #{tpu_custom_call.1} parent=11 // pred_fallthru
          _
        // Predicated region
        $region109: #{tpu_custom_call.1} parent=11 // pred_check
          %p1053 = pneg %p711
        $region110: #{tpu_custom_call.1} parent=11 // pred_check_branch
          %1055 = sbr.rel (%p1053) target = $region112
        $region111: #{tpu_custom_call.1} parent=11 // pred_region
          _
        $region112: #{tpu_custom_call.1} parent=11 // pred_fallthru
          _
        // Predicated region
        $region113: #{tpu_custom_call.1} parent=11 // pred_check
          %p1056 = pneg %p732
        $region114: #{tpu_custom_call.1} parent=11 // pred_check_branch
          %1058 = sbr.rel (%p1056) target = $region116
        $region115: #{tpu_custom_call.1} parent=11 // pred_region
          %1060 = vsyncadd [#allocation27], 0
          %s1061 = sshll.u32 %s59, 4
          %s1062 = int_to_ptr.hbm [resolvable:$true] %s1061
          %s1063 = sshll.u32 [#allocation26], 4
          %s1064 = int_to_ptr.vmem [resolvable:$true] %s1063
          %1069 = dma.hbm_to_vmem [thread:$0]  %s1062, 16384, %s1064, [#allocation27], 128, 128, 8
        $region116: #{tpu_custom_call.1} parent=11 // pred_fallthru
          _
        // Predicated region
        $region117: #{tpu_custom_call.1} parent=11 // pred_check
          %p1070 = pneg %p753
        $region118: #{tpu_custom_call.1} parent=11 // pred_check_branch
          %1072 = sbr.rel (%p1070) target = $region120
        $region119: #{tpu_custom_call.1} parent=11 // pred_region
          _
        $region120: #{tpu_custom_call.1} parent=11 // pred_fallthru
          _
        // Predicated region
        $region121: #{tpu_custom_call.1} parent=11 // pred_check
          %p1073 = pneg %p774
        $region122: #{tpu_custom_call.1} parent=11 // pred_check_branch
          %1075 = sbr.rel (%p1073) target = $region124
        $region123: #{tpu_custom_call.1} parent=11 // pred_region
          _
        $region124: #{tpu_custom_call.1} parent=11 // pred_fallthru
          _
        // Predicated region
        $region125: #{tpu_custom_call.1} parent=11 // pred_check
          %p1076 = pneg %p795
        $region126: #{tpu_custom_call.1} parent=11 // pred_check_branch
          %1078 = sbr.rel (%p1076) target = $region128
        $region127: #{tpu_custom_call.1} parent=11 // pred_region
          _
        $region128: #{tpu_custom_call.1} parent=11 // pred_fallthru
          _
      $region12: #{tpu_custom_call.1} parent=5 // pred_fallthru
        _
      %p1079 = scmp.lt.s32.totalorder %s82, 2
      // Predicated region
      $region129: #{tpu_custom_call.1} parent=5 // pred_check
        %p1080 = pneg %p1079
      $region130: #{tpu_custom_call.1} parent=5 // pred_check_branch
        %1082 = sbr.rel (%p1080) target = $region132
      $region131: #{tpu_custom_call.1} parent=5 // pred_region
        // Predicated region
        $region133: #{tpu_custom_call.1} parent=131 // pred_check
          %p1083 = pneg %p102
        $region134: #{tpu_custom_call.1} parent=131 // pred_check_branch
          %1085 = sbr.rel (%p1083) target = $region136
        $region135: #{tpu_custom_call.1} parent=131 // pred_region
          %p1086 = scmp.lt.s32.totalorder %s82, 1
          %s1087 = scalar_select %p1086, %s82, 1
          %s1088 = smul.addr %s1087, 4
          %s1089 = smul.addr %s1088, 8
          %s1090 = scalar_lea.vmem %s1, %s1089
        $region136: #{tpu_custom_call.1} parent=131 // pred_fallthru
          _
        // Predicated region
        $region137: #{tpu_custom_call.1} parent=131 // pred_check
          %p1091 = pneg %p128
        $region138: #{tpu_custom_call.1} parent=131 // pred_check_branch
          %1093 = sbr.rel (%p1091) target = $region140
        $region139: #{tpu_custom_call.1} parent=131 // pred_region
          %p1094 = scmp.lt.s32.totalorder %s82, 1
          %s1095 = scalar_select %p1094, %s82, 1
          %s1096 = smul.addr %s1095, 8
          %s1097 = scalar_lea.vmem %s3, %s1096
        $region140: #{tpu_custom_call.1} parent=131 // pred_fallthru
          _
        // Predicated region
        $region141: #{tpu_custom_call.1} parent=131 // pred_check
          %p1098 = pneg %p154
        $region142: #{tpu_custom_call.1} parent=131 // pred_check_branch
          %1100 = sbr.rel (%p1098) target = $region144
        $region143: #{tpu_custom_call.1} parent=131 // pred_region
          %p1101 = scmp.lt.s32.totalorder %s82, 1
          %s1102 = scalar_select %p1101, %s82, 1
          %s1103 = smul.addr %s1102, 8
          %s1104 = scalar_lea.vmem %s5, %s1103
        $region144: #{tpu_custom_call.1} parent=131 // pred_fallthru
          _
        // Predicated region
        $region145: #{tpu_custom_call.1} parent=131 // pred_check
          %p1105 = pneg %p180
        $region146: #{tpu_custom_call.1} parent=131 // pred_check_branch
          %1107 = sbr.rel (%p1105) target = $region148
        $region147: #{tpu_custom_call.1} parent=131 // pred_region
          %p1108 = scmp.lt.s32.totalorder %s82, 1
          %s1109 = scalar_select %p1108, %s82, 1
          %s1110 = smul.addr %s1109, 4
          %s1111 = smul.addr %s1110, 8
          %s1112 = scalar_lea.vmem %s7, %s1111
        $region148: #{tpu_custom_call.1} parent=131 // pred_fallthru
          _
      $region132: #{tpu_custom_call.1} parent=5 // pred_fallthru
        _
      %p1113 = scmp.le.s32.totalorder 1, %s82
      %p1114 = scmp.lt.s32.totalorder %s82, 3
      %p1115 = pnand %p1113, %p1114
      %p1116 = pneg %p1115
      // Predicated region
      $region149: #{tpu_custom_call.1} parent=5 // pred_check
        _
      $region150: #{tpu_custom_call.1} parent=5 // pred_check_branch
        %1118 = sbr.rel (%p1115) target = $region152
      $region151: #{tpu_custom_call.1} parent=5 // pred_region
        %s1119 = ssub.s32 %s82, 1
        // Predicated region
        $region153: #{tpu_custom_call.1} parent=151 // pred_check
          %p1120 = pneg %p270
        $region154: #{tpu_custom_call.1} parent=151 // pred_check_branch
          %1122 = sbr.rel (%p1120) target = $region156
        $region155: #{tpu_custom_call.1} parent=151 // pred_region
          %1124 = dma.done [#allocation4], 16
        $region156: #{tpu_custom_call.1} parent=151 // pred_fallthru
          _
        // Predicated region
        $region157: #{tpu_custom_call.1} parent=151 // pred_check
          %p1125 = pneg %p291
        $region158: #{tpu_custom_call.1} parent=151 // pred_check_branch
          %1127 = sbr.rel (%p1125) target = $region160
        $region159: #{tpu_custom_call.1} parent=151 // pred_region
          %1129 = dma.done [#allocation6], 64
        $region160: #{tpu_custom_call.1} parent=151 // pred_fallthru
          _
        // Predicated region
        $region161: #{tpu_custom_call.1} parent=151 // pred_check
          %p1130 = pneg %p312
        $region162: #{tpu_custom_call.1} parent=151 // pred_check_branch
          %1132 = sbr.rel (%p1130) target = $region164
        $region163: #{tpu_custom_call.1} parent=151 // pred_region
          %1134 = dma.done [#allocation6], 16
        $region164: #{tpu_custom_call.1} parent=151 // pred_fallthru
          _
        // Predicated region
        $region165: #{tpu_custom_call.1} parent=151 // pred_check
          %p1135 = pneg %p354
        $region166: #{tpu_custom_call.1} parent=151 // pred_check_branch
          %1137 = sbr.rel (%p1135) target = $region168
        $region167: #{tpu_custom_call.1} parent=151 // pred_region
          %1139 = dma.done [#allocation9], 16
        $region168: #{tpu_custom_call.1} parent=151 // pred_fallthru
          _
        // Predicated region
        $region169: #{tpu_custom_call.1} parent=151 // pred_check
          %p1140 = pneg %p375
        $region170: #{tpu_custom_call.1} parent=151 // pred_check_branch
          %1142 = sbr.rel (%p1140) target = $region172
        $region171: #{tpu_custom_call.1} parent=151 // pred_region
          %1144 = dma.done [#allocation9], 16
        $region172: #{tpu_custom_call.1} parent=151 // pred_fallthru
          _
        // Predicated region
        $region173: #{tpu_custom_call.1} parent=151 // pred_check
          %p1145 = pneg %p396
        $region174: #{tpu_custom_call.1} parent=151 // pred_check_branch
          %1147 = sbr.rel (%p1145) target = $region176
        $region175: #{tpu_custom_call.1} parent=151 // pred_region
          %1149 = dma.done [#allocation12], 16
        $region176: #{tpu_custom_call.1} parent=151 // pred_fallthru
          _
        // Predicated region
        $region177: #{tpu_custom_call.1} parent=151 // pred_check
          %p1150 = pneg %p438
        $region178: #{tpu_custom_call.1} parent=151 // pred_check_branch
          %1152 = sbr.rel (%p1150) target = $region180
        $region179: #{tpu_custom_call.1} parent=151 // pred_region
          %1154 = dma.done [#allocation12], 2048
        $region180: #{tpu_custom_call.1} parent=151 // pred_fallthru
          _
        // Predicated region
        $region181: #{tpu_custom_call.1} parent=151 // pred_check
          %p1155 = pneg %p459
        $region182: #{tpu_custom_call.1} parent=151 // pred_check_branch
          %1157 = sbr.rel (%p1155) target = $region184
        $region183: #{tpu_custom_call.1} parent=151 // pred_region
          %1159 = dma.done [#allocation15], 16
        $region184: #{tpu_custom_call.1} parent=151 // pred_fallthru
          _
        // Predicated region
        $region185: #{tpu_custom_call.1} parent=151 // pred_check
          %p1160 = pneg %p480
        $region186: #{tpu_custom_call.1} parent=151 // pred_check_branch
          %1162 = sbr.rel (%p1160) target = $region188
        $region187: #{tpu_custom_call.1} parent=151 // pred_region
          %1164 = dma.done [#allocation15], 2048
        $region188: #{tpu_custom_call.1} parent=151 // pred_fallthru
          _
        // Predicated region
        $region189: #{tpu_custom_call.1} parent=151 // pred_check
          %p1165 = pneg %p501
        $region190: #{tpu_custom_call.1} parent=151 // pred_check_branch
          %1167 = sbr.rel (%p1165) target = $region192
        $region191: #{tpu_custom_call.1} parent=151 // pred_region
          %1169 = dma.done [#allocation18], 16
        $region192: #{tpu_custom_call.1} parent=151 // pred_fallthru
          _
        // Predicated region
        $region193: #{tpu_custom_call.1} parent=151 // pred_check
          %p1170 = pneg %p543
        $region194: #{tpu_custom_call.1} parent=151 // pred_check_branch
          %1172 = sbr.rel (%p1170) target = $region196
        $region195: #{tpu_custom_call.1} parent=151 // pred_region
          %1174 = dma.done [#allocation18], 32
        $region196: #{tpu_custom_call.1} parent=151 // pred_fallthru
          _
        // Predicated region
        $region197: #{tpu_custom_call.1} parent=151 // pred_check
          %p1175 = pneg %p564
        $region198: #{tpu_custom_call.1} parent=151 // pred_check_branch
          %1177 = sbr.rel (%p1175) target = $region200
        $region199: #{tpu_custom_call.1} parent=151 // pred_region
          %1179 = dma.done [#allocation21], 12288
        $region200: #{tpu_custom_call.1} parent=151 // pred_fallthru
          _
        // Predicated region
        $region201: #{tpu_custom_call.1} parent=151 // pred_check
          %p1180 = pneg %p606
        $region202: #{tpu_custom_call.1} parent=151 // pred_check_branch
          %1182 = sbr.rel (%p1180) target = $region204
        $region203: #{tpu_custom_call.1} parent=151 // pred_region
          %1184 = dma.done [#allocation21], 4096
        $region204: #{tpu_custom_call.1} parent=151 // pred_fallthru
          _
        // Predicated region
        $region205: #{tpu_custom_call.1} parent=151 // pred_check
          %p1185 = pneg %p669
        $region206: #{tpu_custom_call.1} parent=151 // pred_check_branch
          %1187 = sbr.rel (%p1185) target = $region208
        $region207: #{tpu_custom_call.1} parent=151 // pred_region
          %1189 = dma.done [#allocation24], 32
        $region208: #{tpu_custom_call.1} parent=151 // pred_fallthru
          _
        // Predicated region
        $region209: #{tpu_custom_call.1} parent=151 // pred_check
          %p1190 = pneg %p690
        $region210: #{tpu_custom_call.1} parent=151 // pred_check_branch
          %1192 = sbr.rel (%p1190) target = $region212
        $region211: #{tpu_custom_call.1} parent=151 // pred_region
          %1194 = dma.done [#allocation24], 16384
        $region212: #{tpu_custom_call.1} parent=151 // pred_fallthru
          _
        // Predicated region
        $region213: #{tpu_custom_call.1} parent=151 // pred_check
          %p1195 = pneg %p732
        $region214: #{tpu_custom_call.1} parent=151 // pred_check_branch
          %1197 = sbr.rel (%p1195) target = $region216
        $region215: #{tpu_custom_call.1} parent=151 // pred_region
          %1199 = dma.done [#allocation27], 16384
        $region216: #{tpu_custom_call.1} parent=151 // pred_fallthru
          _
        %p1200 = scmp.lt.s32.totalorder %s87, 1
        %s1201 = scalar_select %p1200, %s87, 1
        %s1202 = smul.addr %s1201, 4
        %s1203 = smul.addr %s1202, 8
        %s1204 = scalar_lea.vmem %s1, %s1203
        %p1205 = pneg %p108
        %p1206 = pneg %p105
        %p1207 = scmp.lt.s32.totalorder %s87, 1
        %s1208 = scalar_select %p1207, %s87, 1
        %s1209 = smul.addr %s1208, 8
        %s1210 = scalar_lea.vmem %s3, %s1209
        %p1211 = pneg %p134
        %p1212 = pneg %p131
        %p1213 = scmp.lt.s32.totalorder %s87, 1
        %s1214 = scalar_select %p1213, %s87, 1
        %s1215 = smul.addr %s1214, 8
        %s1216 = scalar_lea.vmem %s5, %s1215
        %p1217 = pneg %p160
        %p1218 = pneg %p157
        %p1219 = scmp.lt.s32.totalorder %s87, 1
        %s1220 = scalar_select %p1219, %s87, 1
        %s1221 = smul.addr %s1220, 4
        %s1222 = smul.addr %s1221, 8
        %s1223 = scalar_lea.vmem %s7, %s1222
        %p1224 = pneg %p186
        %p1225 = pneg %p183
        %p1226 = pneg %p207
        %p1227 = pneg %p204
        %p1228 = pneg %p228
        %p1229 = pneg %p225
        %p1230 = pneg %p249
        %p1231 = pneg %p246
        %p1232 = pneg %p270
        %p1233 = pneg %p267
        %p1234 = pneg %p291
        %p1235 = pneg %p288
        %p1236 = pneg %p312
        %p1237 = pneg %p309
        %p1238 = pneg %p333
        %p1239 = pneg %p330
        %p1240 = pneg %p354
        %p1241 = pneg %p351
        %p1242 = pneg %p375
        %p1243 = pneg %p372
        %p1244 = pneg %p396
        %p1245 = pneg %p393
        %p1246 = pneg %p417
        %p1247 = pneg %p414
        %p1248 = pneg %p438
        %p1249 = pneg %p435
        %p1250 = pneg %p459
        %p1251 = pneg %p456
        %p1252 = pneg %p480
        %p1253 = pneg %p477
        %p1254 = pneg %p501
        %p1255 = pneg %p498
        %p1256 = pneg %p522
        %p1257 = pneg %p519
        %p1258 = pneg %p543
        %p1259 = pneg %p540
        %p1260 = pneg %p564
        %p1261 = pneg %p561
        %p1262 = pneg %p585
        %p1263 = pneg %p582
        %p1264 = pneg %p606
        %p1265 = pneg %p603
        %p1266 = pneg %p627
        %p1267 = pneg %p624
        %p1268 = pneg %p648
        %p1269 = pneg %p645
        %p1270 = pneg %p669
        %p1271 = pneg %p666
        %p1272 = pneg %p690
        %p1273 = pneg %p687
        %p1274 = pneg %p711
        %p1275 = pneg %p708
        %p1276 = pneg %p732
        %p1277 = pneg %p729
        %p1278 = pneg %p753
        %p1279 = pneg %p750
        %p1280 = pneg %p774
        %p1281 = pneg %p771
        %p1282 = pneg %p795
        %p1283 = pneg %p792
        %p1284 = pneg %p821
        %p1285 = pneg %p818
        %p1286 = scmp.lt.s32.totalorder %s87, 1
        %s1287 = scalar_select %p1286, %s87, 1
        %s1288 = smul.addr %s1287, 4
        %s1289 = smul.addr %s1288, 8
        %s1290 = scalar_lea.vmem %s67, %s1289
        %p1291 = scmp.lt.s32.totalorder %s87, 1
        %s1292 = scalar_select %p1291, %s87, 1
        %s1293 = smul.addr %s1292, 4
        %s1294 = smul.addr %s1293, 8
        %s1295 = scalar_lea.vmem %s1, %s1294
        %p1296 = scmp.lt.s32.totalorder %s87, 1
        %s1297 = scalar_select %p1296, %s87, 1
        %s1298 = smul.addr %s1297, 8
        %s1299 = scalar_lea.vmem %s3, %s1298
        %p1300 = scmp.lt.s32.totalorder %s87, 1
        %s1301 = scalar_select %p1300, %s87, 1
        %s1302 = smul.addr %s1301, 8
        %s1303 = scalar_lea.vmem %s5, %s1302
        %p1304 = scmp.lt.s32.totalorder %s87, 1
        %s1305 = scalar_select %p1304, %s87, 1
        %s1306 = smul.addr %s1305, 4
        %s1307 = smul.addr %s1306, 8
        %s1308 = scalar_lea.vmem %s7, %s1307
        %p1309 = scmp.lt.s32.totalorder %s87, 1
        %s1310 = scalar_select %p1309, %s87, 1
        %s1311 = smul.addr %s1310, 4
        %s1312 = smul.addr %s1311, 8
        %s1313 = scalar_lea.vmem %s67, %s1312
        %v1314 = vld [vmem:[%s1303] sm:$0xff]
        %v1315 = vld [vmem:[%s9] sm:$0xff]
        %v1316 = vld [vmem:[%s9 + $0x8] sm:$0xff]
        %v1317 = vld [vmem:[%s11] sm:$0x1]
        %v1319 = vperm.slane %v1317, 0
        %vm1321 = vcmask 130048
        %v1323 = vsel %vm1321, %v1314, 0
        %1325 = vmatpush.msra.mxu0 0.0
        %1326 = vmatpush.msra.mxu0 0.0
        %1327 = vmatpush.msra.mxu0 0.0
        %1328 = vmatpush.msra.mxu0 0.0
        %1329 = vmatpush.msra.mxu0 0.0
        %1330 = vmatpush.msra.mxu0 0.0
        %1331 = vmatpush.msra.mxu0 0.0
        %1332 = vmatpush.msra.mxu0 0.0
        %1333 = vmatpush.msra.mxu0 0.0
        %1334 = vmatpush.msra.mxu0 0.0
        %1335 = vmatpush.msra.mxu0 0.0
        %1336 = vmatpush.msra.mxu0 0.0
        %1337 = vmatpush.msra.mxu0 0.0
        %1338 = vmatpush.msra.mxu0 0.0
        %1339 = vmatpush.msra.mxu0 %v1316
        %1340 = vmatpush.msra.mxu0 %v1315
        %1341 = vmatmul.f32.gmra.mxu0 %v1323
        %v1342 = vpop.f32.mrf.mxu0
        %v1343 = vadd.f32 %v1319, %v1342
        %1344 = vdwg.mxu0
        %v1345 = vmul.f32 %v1343, 0.5
        %v1346 = vrcp.pop 1.4142135
        %v1347 = vmul.f32 1.4142135, %v1346
        %v1348 = vsub.f32 1.0, %v1347
        %v1349 = vmul.f32 %v1346, %v1348
        %v1350 = vadd.f32 %v1346, %v1349
        %vm1351 = vweird.f32 %v1346
        %v1352 = vsel %vm1351, %v1346, %v1350
        %v1353 = vmul.f32 %v1343, %v1352
        %v1354 = vmul.f32 %v1353, %v1353
        %v1355 = vmin.f32 16.0, %v1354
        %v1356 = vmul.f32 %v1355, 2.1237322e-06
        %v1357 = vadd.f32 %v1356, 0.00028619796
        %v1358 = vmul.f32 %v1355, %v1357
        %v1359 = vadd.f32 %v1358, 0.0036580483
        %v1360 = vmul.f32 %v1355, %v1359
        %v1361 = vadd.f32 %v1360, 0.05243302
        %v1362 = vmul.f32 %v1355, %v1361
        %v1363 = vadd.f32 %v1362, 0.18741608
        %v1364 = vmul.f32 %v1355, %v1363
        %v1365 = vadd.f32 %v1364, 1.1283791
        %v1366 = vmul.f32 %v1353, %v1365
        %v1367 = vmul.f32 %v1355, 3.8918573e-05
        %v1368 = vadd.f32 %v1367, 0.001143296
        %v1369 = vmul.f32 %v1355, %v1368
        %v1370 = vadd.f32 %v1369, 0.014752088
        %v1371 = vmul.f32 %v1355, %v1370
        %v1372 = vadd.f32 %v1371, 0.112945676
        %v1373 = vmul.f32 %v1355, %v1372
        %v1374 = vadd.f32 %v1373, 0.4994258
        %v1375 = vmul.f32 %v1355, %v1374
        %v1376 = vadd.f32 %v1375, 1.0
        %v1377 = vrcp.pop %v1376
        %v1378 = vmul.f32 %v1376, %v1377
        %v1379 = vsub.f32 1.0, %v1378
        %v1380 = vmul.f32 %v1377, %v1379
        %v1381 = vadd.f32 %v1377, %v1380
        %vm1382 = vweird.f32 %v1376
        %vm1383 = vweird.f32 %v1377
        %vm1384 = vmor %vm1382, %vm1383
        %v1385 = vsel %vm1384, %v1377, %v1381
        %v1386 = vand.u32 2147483647, %v1376
        %vm1387 = vcmp.eq.f32.partialorder %v1386, 8.507059e+37
        %v1388 = vand.u32 %v1376, 2147483648
        %v1389 = vor.u32 1.1754944e-38, %v1388
        %v1390 = vsel %vm1387, %v1389, %v1385
        %v1391 = vmul.f32 %v1366, %v1390
        %v1392 = vmin.f32 %v1391, 1.0
        %v1393 = vmax.f32 %v1392, -1.0
        %v1394 = vadd.f32 %v1393, 1.0
        %v1395 = vmul.f32 %v1345, %v1394
        %1396 = vrot.lane.b32.xlu0 %v1314, 112
        %v1397 = vpop.permute.xlu0 %1396
        %v1398 = vsel %vm1321, %v1397, 0
        %1400 = vmatpush.msra.mxu0 0.0
        %1401 = vmatpush.msra.mxu0 0.0
        %1402 = vmatpush.msra.mxu0 0.0
        %1403 = vmatpush.msra.mxu0 0.0
        %1404 = vmatpush.msra.mxu0 0.0
        %1405 = vmatpush.msra.mxu0 0.0
        %1406 = vmatpush.msra.mxu0 0.0
        %1407 = vmatpush.msra.mxu0 0.0
        %1408 = vmatpush.msra.mxu0 0.0
        %1409 = vmatpush.msra.mxu0 0.0
        %1410 = vmatpush.msra.mxu0 0.0
        %1411 = vmatpush.msra.mxu0 0.0
        %1412 = vmatpush.msra.mxu0 0.0
        %1413 = vmatpush.msra.mxu0 0.0
        %1414 = vmatpush.msra.mxu0 %v1316
        %1415 = vmatpush.msra.mxu0 %v1315
        %1416 = vmatmul.f32.gmra.mxu0 %v1398
        %v1417 = vpop.f32.mrf.mxu0
        %v1418 = vadd.f32 %v1319, %v1417
        %1419 = vdwg.mxu0
        %v1420 = vmul.f32 %v1418, 0.5
        %v1421 = vmul.f32 %v1418, %v1352
        %v1422 = vmul.f32 %v1421, %v1421
        %v1423 = vmin.f32 16.0, %v1422
        %v1424 = vmul.f32 %v1423, 2.1237322e-06
        %v1425 = vadd.f32 %v1424, 0.00028619796
        %v1426 = vmul.f32 %v1423, %v1425
        %v1427 = vadd.f32 %v1426, 0.0036580483
        %v1428 = vmul.f32 %v1423, %v1427
        %v1429 = vadd.f32 %v1428, 0.05243302
        %v1430 = vmul.f32 %v1423, %v1429
        %v1431 = vadd.f32 %v1430, 0.18741608
        %v1432 = vmul.f32 %v1423, %v1431
        %v1433 = vadd.f32 %v1432, 1.1283791
        %v1434 = vmul.f32 %v1421, %v1433
        %v1435 = vmul.f32 %v1423, 3.8918573e-05
        %v1436 = vadd.f32 %v1435, 0.001143296
        %v1437 = vmul.f32 %v1423, %v1436
        %v1438 = vadd.f32 %v1437, 0.014752088
        %v1439 = vmul.f32 %v1423, %v1438
        %v1440 = vadd.f32 %v1439, 0.112945676
        %v1441 = vmul.f32 %v1423, %v1440
        %v1442 = vadd.f32 %v1441, 0.4994258
        %v1443 = vmul.f32 %v1423, %v1442
        %v1444 = vadd.f32 %v1443, 1.0
        %v1445 = vrcp.pop %v1444
        %v1446 = vmul.f32 %v1444, %v1445
        %v1447 = vsub.f32 1.0, %v1446
        %v1448 = vmul.f32 %v1445, %v1447
        %v1449 = vadd.f32 %v1445, %v1448
        %vm1450 = vweird.f32 %v1444
        %vm1451 = vweird.f32 %v1445
        %vm1452 = vmor %vm1450, %vm1451
        %v1453 = vsel %vm1452, %v1445, %v1449
        %v1454 = vand.u32 2147483647, %v1444
        %vm1455 = vcmp.eq.f32.partialorder %v1454, 8.507059e+37
        %v1456 = vand.u32 %v1444, 2147483648
        %v1457 = vor.u32 1.1754944e-38, %v1456
        %v1458 = vsel %vm1455, %v1457, %v1453
        %v1459 = vmul.f32 %v1434, %v1458
        %v1460 = vmin.f32 %v1459, 1.0
        %v1461 = vmax.f32 %v1460, -1.0
        %v1462 = vadd.f32 %v1461, 1.0
        %v1463 = vmul.f32 %v1420, %v1462
        %v1464 = vmax.f32 %v1395, %v1463
        %1465 = vrot.lane.b32.xlu0 %v1314, 96
        %v1466 = vpop.permute.xlu0 %1465
        %v1467 = vsel %vm1321, %v1466, 0
        %1469 = vmatpush.msra.mxu0 0.0
        %1470 = vmatpush.msra.mxu0 0.0
        %1471 = vmatpush.msra.mxu0 0.0
        %1472 = vmatpush.msra.mxu0 0.0
        %1473 = vmatpush.msra.mxu0 0.0
        %1474 = vmatpush.msra.mxu0 0.0
        %1475 = vmatpush.msra.mxu0 0.0
        %1476 = vmatpush.msra.mxu0 0.0
        %1477 = vmatpush.msra.mxu0 0.0
        %1478 = vmatpush.msra.mxu0 0.0
        %1479 = vmatpush.msra.mxu0 0.0
        %1480 = vmatpush.msra.mxu0 0.0
        %1481 = vmatpush.msra.mxu0 0.0
        %1482 = vmatpush.msra.mxu0 0.0
        %1483 = vmatpush.msra.mxu0 %v1316
        %1484 = vmatpush.msra.mxu0 %v1315
        %1485 = vmatmul.f32.gmra.mxu0 %v1467
        %v1486 = vpop.f32.mrf.mxu0
        %v1487 = vadd.f32 %v1319, %v1486
        %1488 = vdwg.mxu0
        %v1489 = vmul.f32 %v1487, 0.5
        %v1490 = vmul.f32 %v1487, %v1352
        %v1491 = vmul.f32 %v1490, %v1490
        %v1492 = vmin.f32 16.0, %v1491
        %v1493 = vmul.f32 %v1492, 2.1237322e-06
        %v1494 = vadd.f32 %v1493, 0.00028619796
        %v1495 = vmul.f32 %v1492, %v1494
        %v1496 = vadd.f32 %v1495, 0.0036580483
        %v1497 = vmul.f32 %v1492, %v1496
        %v1498 = vadd.f32 %v1497, 0.05243302
        %v1499 = vmul.f32 %v1492, %v1498
        %v1500 = vadd.f32 %v1499, 0.18741608
        %v1501 = vmul.f32 %v1492, %v1500
        %v1502 = vadd.f32 %v1501, 1.1283791
        %v1503 = vmul.f32 %v1490, %v1502
        %v1504 = vmul.f32 %v1492, 3.8918573e-05
        %v1505 = vadd.f32 %v1504, 0.001143296
        %v1506 = vmul.f32 %v1492, %v1505
        %v1507 = vadd.f32 %v1506, 0.014752088
        %v1508 = vmul.f32 %v1492, %v1507
        %v1509 = vadd.f32 %v1508, 0.112945676
        %v1510 = vmul.f32 %v1492, %v1509
        %v1511 = vadd.f32 %v1510, 0.4994258
        %v1512 = vmul.f32 %v1492, %v1511
        %v1513 = vadd.f32 %v1512, 1.0
        %v1514 = vrcp.pop %v1513
        %v1515 = vmul.f32 %v1513, %v1514
        %v1516 = vsub.f32 1.0, %v1515
        %v1517 = vmul.f32 %v1514, %v1516
        %v1518 = vadd.f32 %v1514, %v1517
        %vm1519 = vweird.f32 %v1513
        %vm1520 = vweird.f32 %v1514
        %vm1521 = vmor %vm1519, %vm1520
        %v1522 = vsel %vm1521, %v1514, %v1518
        %v1523 = vand.u32 2147483647, %v1513
        %vm1524 = vcmp.eq.f32.partialorder %v1523, 8.507059e+37
        %v1525 = vand.u32 %v1513, 2147483648
        %v1526 = vor.u32 1.1754944e-38, %v1525
        %v1527 = vsel %vm1524, %v1526, %v1522
        %v1528 = vmul.f32 %v1503, %v1527
        %v1529 = vmin.f32 %v1528, 1.0
        %v1530 = vmax.f32 %v1529, -1.0
        %v1531 = vadd.f32 %v1530, 1.0
        %v1532 = vmul.f32 %v1489, %v1531
        %v1533 = vmax.f32 %v1464, %v1532
        %1534 = vrot.lane.b32.xlu0 %v1314, 80
        %v1535 = vpop.permute.xlu0 %1534
        %v1536 = vsel %vm1321, %v1535, 0
        %1538 = vmatpush.msra.mxu0 0.0
        %1539 = vmatpush.msra.mxu0 0.0
        %1540 = vmatpush.msra.mxu0 0.0
        %1541 = vmatpush.msra.mxu0 0.0
        %1542 = vmatpush.msra.mxu0 0.0
        %1543 = vmatpush.msra.mxu0 0.0
        %1544 = vmatpush.msra.mxu0 0.0
        %1545 = vmatpush.msra.mxu0 0.0
        %1546 = vmatpush.msra.mxu0 0.0
        %1547 = vmatpush.msra.mxu0 0.0
        %1548 = vmatpush.msra.mxu0 0.0
        %1549 = vmatpush.msra.mxu0 0.0
        %1550 = vmatpush.msra.mxu0 0.0
        %1551 = vmatpush.msra.mxu0 0.0
        %1552 = vmatpush.msra.mxu0 %v1316
        %1553 = vmatpush.msra.mxu0 %v1315
        %1554 = vmatmul.f32.gmra.mxu0 %v1536
        %v1555 = vpop.f32.mrf.mxu0
        %v1556 = vadd.f32 %v1319, %v1555
        %1557 = vdwg.mxu0
        %v1558 = vmul.f32 %v1556, 0.5
        %v1559 = vmul.f32 %v1556, %v1352
        %v1560 = vmul.f32 %v1559, %v1559
        %v1561 = vmin.f32 16.0, %v1560
        %v1562 = vmul.f32 %v1561, 2.1237322e-06
        %v1563 = vadd.f32 %v1562, 0.00028619796
        %v1564 = vmul.f32 %v1561, %v1563
        %v1565 = vadd.f32 %v1564, 0.0036580483
        %v1566 = vmul.f32 %v1561, %v1565
        %v1567 = vadd.f32 %v1566, 0.05243302
        %v1568 = vmul.f32 %v1561, %v1567
        %v1569 = vadd.f32 %v1568, 0.18741608
        %v1570 = vmul.f32 %v1561, %v1569
        %v1571 = vadd.f32 %v1570, 1.1283791
        %v1572 = vmul.f32 %v1559, %v1571
        %v1573 = vmul.f32 %v1561, 3.8918573e-05
        %v1574 = vadd.f32 %v1573, 0.001143296
        %v1575 = vmul.f32 %v1561, %v1574
        %v1576 = vadd.f32 %v1575, 0.014752088
        %v1577 = vmul.f32 %v1561, %v1576
        %v1578 = vadd.f32 %v1577, 0.112945676
        %v1579 = vmul.f32 %v1561, %v1578
        %v1580 = vadd.f32 %v1579, 0.4994258
        %v1581 = vmul.f32 %v1561, %v1580
        %v1582 = vadd.f32 %v1581, 1.0
        %v1583 = vrcp.pop %v1582
        %v1584 = vmul.f32 %v1582, %v1583
        %v1585 = vsub.f32 1.0, %v1584
        %v1586 = vmul.f32 %v1583, %v1585
        %v1587 = vadd.f32 %v1583, %v1586
        %vm1588 = vweird.f32 %v1582
        %vm1589 = vweird.f32 %v1583
        %vm1590 = vmor %vm1588, %vm1589
        %v1591 = vsel %vm1590, %v1583, %v1587
        %v1592 = vand.u32 2147483647, %v1582
        %vm1593 = vcmp.eq.f32.partialorder %v1592, 8.507059e+37
        %v1594 = vand.u32 %v1582, 2147483648
        %v1595 = vor.u32 1.1754944e-38, %v1594
        %v1596 = vsel %vm1593, %v1595, %v1591
        %v1597 = vmul.f32 %v1572, %v1596
        %v1598 = vmin.f32 %v1597, 1.0
        %v1599 = vmax.f32 %v1598, -1.0
        %v1600 = vadd.f32 %v1599, 1.0
        %v1601 = vmul.f32 %v1558, %v1600
        %v1602 = vmax.f32 %v1533, %v1601
        %v1603 = vld [vmem:[%s13] sm:$0xff]
        %v1604 = vld [vmem:[%s13 + $0x8] sm:$0xff]
        %v1605 = vld [vmem:[%s13 + $0x10] sm:$0xff]
        %v1606 = vld [vmem:[%s13 + $0x18] sm:$0xff]
        %v1607 = vld [vmem:[%s13 + $0x20] sm:$0xff]
        %v1608 = vld [vmem:[%s13 + $0x28] sm:$0xff]
        %v1609 = vld [vmem:[%s13 + $0x30] sm:$0xff]
        %v1610 = vld [vmem:[%s13 + $0x38] sm:$0xff]
        %v1611 = vld [vmem:[#allocation3] sm:$0x1]
        %v1613 = vperm.slane %v1611, 0
        %vm1615 = vcmask 523264
        %v1617 = vsel %vm1615, %v1602, 0
        %1619 = vmatpush.msra.mxu0 0.0
        %1620 = vmatpush.msra.mxu0 0.0
        %1621 = vmatpush.msra.mxu0 0.0
        %1622 = vmatpush.msra.mxu0 0.0
        %1623 = vmatpush.msra.mxu0 0.0
        %1624 = vmatpush.msra.mxu0 0.0
        %1625 = vmatpush.msra.mxu0 0.0
        %1626 = vmatpush.msra.mxu0 0.0
        %1627 = vmatpush.msra.mxu0 %v1610
        %1628 = vmatpush.msra.mxu0 %v1609
        %1629 = vmatpush.msra.mxu0 %v1608
        %1630 = vmatpush.msra.mxu0 %v1607
        %1631 = vmatpush.msra.mxu0 %v1606
        %1632 = vmatpush.msra.mxu0 %v1605
        %1633 = vmatpush.msra.mxu0 %v1604
        %1634 = vmatpush.msra.mxu0 %v1603
        %1635 = vmatmul.f32.gmra.mxu0 %v1617
        %v1636 = vpop.f32.mrf.mxu0
        %v1637 = vadd.f32 %v1613, %v1636
        %1638 = vdwg.mxu0
        %v1639 = vld [vmem:[%s1299] sm:$0xff]
        %1641 = vrot.lane.b32.xlu0 %v1639, 125
        %v1642 = vpop.permute.xlu0 %1641
        %v1644 = vadd.f32 %v1639, %v1642
        %1645 = vrot.lane.b32.xlu0 %v1639, 122
        %v1646 = vpop.permute.xlu0 %1645
        %v1648 = vadd.f32 %v1644, %v1646
        %1649 = vrot.lane.b32.xlu0 %v1639, 119
        %v1650 = vpop.permute.xlu0 %1649
        %v1652 = vadd.f32 %v1648, %v1650
        %v1653 = vmul.f32 %v1652, 0.0125
        %vm1654 = vcmask 23552
        %v1655 = vsel %vm1654, %v1653, 0.0
        %v1656 = vrot.slane %v1655, 4
        %v1657 = vadd.f32 %v1655, %v1656
        %v1658 = vrot.slane %v1657, 2
        %v1659 = vadd.f32 %v1657, %v1658
        %v1660 = vrot.slane %v1659, 1
        %v1661 = vadd.f32 %v1659, %v1660
        %v1662 = vrcp.pop 8.0
        %v1663 = vmul.f32 8.0, %v1662
        %v1664 = vsub.f32 1.0, %v1663
        %v1665 = vmul.f32 %v1662, %v1664
        %v1666 = vadd.f32 %v1662, %v1665
        %vm1667 = vweird.f32 %v1662
        %v1668 = vsel %vm1667, %v1662, %v1666
        %v1669 = vmul.f32 %v1661, %v1668
        %v1670 = vsub.f32 %v1653, %v1669
        %v1671 = vmul.f32 %v1670, %v1670
        %v1672 = vsel %vm1654, %v1671, 0.0
        %1673 = vadd.xlane.f32.xlu0 %v1672
        %v1674 = vpop.xlane.xlu0 %1673
        %v1675 = vrsqrt.pop %v1674
        %v1676 = vmul.f32 %v1675, %v1674
        %v1677 = vmul.f32 %v1676, %v1675
        %v1678 = vmul.f32 0.5, %v1677
        %v1679 = vsub.f32 1.5, %v1678
        %v1680 = vmul.f32 %v1675, %v1679
        %v1681 = vmul.f32 %v1674, %v1680
        %vm1682 = vcmp.eq.f32.partialorder %v1674, inf
        %v1683 = vsel %vm1682, %v1674, %v1681
        %vm1684 = vcmp.eq.f32.partialorder %v1674, 0.0
        %v1685 = vand.u32 %v1674, 2147483648
        %v1686 = vsel %vm1684, %v1685, %v1683
        %v1687 = vrot.slane %v1686, 4
        %v1688 = vmax.f32 %v1686, %v1687
        %v1689 = vrot.slane %v1688, 2
        %v1690 = vmax.f32 %v1688, %v1689
        %v1691 = vrot.slane %v1690, 1
        %v1692 = vmax.f32 %v1690, %v1691
        %v1693 = vrcp.pop %v1692
        %v1694 = vmul.f32 %v1692, %v1693
        %v1695 = vsub.f32 1.0, %v1694
        %v1696 = vmul.f32 %v1693, %v1695
        %v1697 = vadd.f32 %v1693, %v1696
        %vm1698 = vweird.f32 %v1692
        %vm1699 = vweird.f32 %v1693
        %vm1700 = vmor %vm1698, %vm1699
        %v1701 = vsel %vm1700, %v1693, %v1697
        %v1702 = vand.u32 2147483647, %v1692
        %vm1703 = vcmp.eq.f32.partialorder %v1702, 8.507059e+37
        %v1704 = vand.u32 %v1692, 2147483648
        %v1705 = vor.u32 1.1754944e-38, %v1704
        %v1706 = vsel %vm1703, %v1705, %v1701
        %v1707 = vmul.f32 %v1670, %v1706
        %v1708 = vld [vmem:[#allocation5] sm:$0x7]
        %v1709 = vld [vmem:[#allocation7] sm:$0x1]
        %v1711 = vperm.slane %v1709, 0
        %v1714 = vsel %vm1654, %v1707, 0
        %vm1716 = vcmask 1042432
        %v1718 = vsel %vm1716, %v1708, 0
        %1720 = vmatpush.msra.mxu0 0.0
        %1721 = vmatpush.msra.mxu0 0.0
        %1722 = vmatpush.msra.mxu0 0.0
        %1723 = vmatpush.msra.mxu0 0.0
        %1724 = vmatpush.msra.mxu0 0.0
        %1725 = vmatpush.msra.mxu0 0.0
        %1726 = vmatpush.msra.mxu0 0.0
        %1727 = vmatpush.msra.mxu0 0.0
        %1728 = vmatpush.msra.mxu0 0.0
        %1729 = vmatpush.msra.mxu0 0.0
        %1730 = vmatpush.msra.mxu0 0.0
        %1731 = vmatpush.msra.mxu0 0.0
        %1732 = vmatpush.msra.mxu0 0.0
        %1733 = vmatpush.msra.mxu0 0.0
        %1734 = vmatpush.msra.mxu0 0.0
        %1735 = vmatpush.msra.mxu0 %v1718
        %1736 = vmatmul.f32.gmra.mxu0 %v1714
        %v1737 = vpop.f32.mrf.mxu0
        %v1738 = vadd.f32 %v1711, %v1737
        %1739 = vdwg.mxu0
        %v1740 = vmul.f32 %v1738, 0.5
        %v1741 = vmul.f32 %v1738, %v1352
        %v1742 = vmul.f32 %v1741, %v1741
        %v1743 = vmin.f32 16.0, %v1742
        %v1744 = vmul.f32 %v1743, 2.1237322e-06
        %v1745 = vadd.f32 %v1744, 0.00028619796
        %v1746 = vmul.f32 %v1743, %v1745
        %v1747 = vadd.f32 %v1746, 0.0036580483
        %v1748 = vmul.f32 %v1743, %v1747
        %v1749 = vadd.f32 %v1748, 0.05243302
        %v1750 = vmul.f32 %v1743, %v1749
        %v1751 = vadd.f32 %v1750, 0.18741608
        %v1752 = vmul.f32 %v1743, %v1751
        %v1753 = vadd.f32 %v1752, 1.1283791
        %v1754 = vmul.f32 %v1741, %v1753
        %v1755 = vmul.f32 %v1743, 3.8918573e-05
        %v1756 = vadd.f32 %v1755, 0.001143296
        %v1757 = vmul.f32 %v1743, %v1756
        %v1758 = vadd.f32 %v1757, 0.014752088
        %v1759 = vmul.f32 %v1743, %v1758
        %v1760 = vadd.f32 %v1759, 0.112945676
        %v1761 = vmul.f32 %v1743, %v1760
        %v1762 = vadd.f32 %v1761, 0.4994258
        %v1763 = vmul.f32 %v1743, %v1762
        %v1764 = vadd.f32 %v1763, 1.0
        %v1765 = vrcp.pop %v1764
        %v1766 = vmul.f32 %v1764, %v1765
        %v1767 = vsub.f32 1.0, %v1766
        %v1768 = vmul.f32 %v1765, %v1767
        %v1769 = vadd.f32 %v1765, %v1768
        %vm1770 = vweird.f32 %v1764
        %vm1771 = vweird.f32 %v1765
        %vm1772 = vmor %vm1770, %vm1771
        %v1773 = vsel %vm1772, %v1765, %v1769
        %v1774 = vand.u32 2147483647, %v1764
        %vm1775 = vcmp.eq.f32.partialorder %v1774, 8.507059e+37
        %v1776 = vand.u32 %v1764, 2147483648
        %v1777 = vor.u32 1.1754944e-38, %v1776
        %v1778 = vsel %vm1775, %v1777, %v1773
        %v1779 = vmul.f32 %v1754, %v1778
        %v1780 = vmin.f32 %v1779, 1.0
        %v1781 = vmax.f32 %v1780, -1.0
        %v1782 = vadd.f32 %v1781, 1.0
        %v1783 = vmul.f32 %v1740, %v1782
        %v1784 = vld [vmem:[%s21] sm:$0xff]
        %v1785 = vld [vmem:[%s21 + $0x8] sm:$0xff]
        %v1786 = vld [vmem:[%s21 + $0x10] sm:$0xff]
        %v1787 = vld [vmem:[%s21 + $0x18] sm:$0xff]
        %v1788 = vld [vmem:[%s21 + $0x20] sm:$0xff]
        %v1789 = vld [vmem:[%s21 + $0x28] sm:$0xff]
        %v1790 = vld [vmem:[%s21 + $0x30] sm:$0xff]
        %v1791 = vld [vmem:[%s21 + $0x38] sm:$0xff]
        %v1792 = vld [vmem:[%s21 + $0x40] sm:$0xff]
        %v1793 = vld [vmem:[%s21 + $0x48] sm:$0xff]
        %v1794 = vld [vmem:[%s21 + $0x50] sm:$0xff]
        %v1795 = vld [vmem:[%s21 + $0x58] sm:$0xff]
        %v1796 = vld [vmem:[%s21 + $0x60] sm:$0xff]
        %v1797 = vld [vmem:[%s21 + $0x68] sm:$0xff]
        %v1798 = vld [vmem:[%s21 + $0x70] sm:$0xff]
        %v1799 = vld [vmem:[%s21 + $0x78] sm:$0xff]
        %v1800 = vld [vmem:[#allocation8] sm:$0x1]
        %v1802 = vperm.slane %v1800, 0
        %1804 = vmatpush.msra.mxu0 %v1799
        %1805 = vmatpush.msra.mxu0 %v1798
        %1806 = vmatpush.msra.mxu0 %v1797
        %1807 = vmatpush.msra.mxu0 %v1796
        %1808 = vmatpush.msra.mxu0 %v1795
        %1809 = vmatpush.msra.mxu0 %v1794
        %1810 = vmatpush.msra.mxu0 %v1793
        %1811 = vmatpush.msra.mxu0 %v1792
        %1812 = vmatpush.msra.mxu0 %v1791
        %1813 = vmatpush.msra.mxu0 %v1790
        %1814 = vmatpush.msra.mxu0 %v1789
        %1815 = vmatpush.msra.mxu0 %v1788
        %1816 = vmatpush.msra.mxu0 %v1787
        %1817 = vmatpush.msra.mxu0 %v1786
        %1818 = vmatpush.msra.mxu0 %v1785
        %1819 = vmatpush.msra.mxu0 %v1784
        %1820 = vmatmul.f32.gmra.mxu0 %v1783
        %v1821 = vpop.f32.mrf.mxu0
        %v1822 = vadd.f32 %v1802, %v1821
        %1823 = vdwg.mxu0
        %v1824 = vld [vmem:[%s29] sm:$0xff]
        %v1825 = vld [vmem:[%s29 + $0x8] sm:$0xff]
        %v1826 = vld [vmem:[%s29 + $0x10] sm:$0xf]
        %v1827 = vld [vmem:[#allocation13] sm:$0xff]
        %v1828 = vld [vmem:[#allocation13 + $0x8] sm:$0xff]
        %v1829 = vld [vmem:[#allocation13 + $0x10] sm:$0xff]
        %v1830 = vld [vmem:[#allocation13 + $0x18] sm:$0xff]
        %v1831 = vld [vmem:[#allocation13 + $0x20] sm:$0xff]
        %v1832 = vld [vmem:[#allocation13 + $0x28] sm:$0xff]
        %v1833 = vld [vmem:[#allocation13 + $0x30] sm:$0xff]
        %v1834 = vld [vmem:[#allocation13 + $0x38] sm:$0xff]
        %v1835 = vld [vmem:[#allocation13 + $0x40] sm:$0xff]
        %v1836 = vld [vmem:[#allocation13 + $0x48] sm:$0xff]
        %v1837 = vld [vmem:[#allocation13 + $0x50] sm:$0xff]
        %v1838 = vld [vmem:[#allocation13 + $0x58] sm:$0xff]
        %v1839 = vld [vmem:[#allocation13 + $0x60] sm:$0xff]
        %v1840 = vld [vmem:[#allocation13 + $0x68] sm:$0xff]
        %v1841 = vld [vmem:[#allocation13 + $0x70] sm:$0xff]
        %v1842 = vld [vmem:[#allocation13 + $0x78] sm:$0xff]
        %v1843 = vld [vmem:[#allocation14] sm:$0x1]
        %v1845 = vperm.slane %v1843, 0
        %1847 = vmatpush.msra.mxu0 %v1842
        %1848 = vmatpush.msra.mxu0 %v1841
        %1849 = vmatpush.msra.mxu0 %v1840
        %1850 = vmatpush.msra.mxu0 %v1839
        %1851 = vmatpush.msra.mxu0 %v1838
        %1852 = vmatpush.msra.mxu0 %v1837
        %1853 = vmatpush.msra.mxu0 %v1836
        %1854 = vmatpush.msra.mxu0 %v1835
        %1855 = vmatpush.msra.mxu0 %v1834
        %1856 = vmatpush.msra.mxu0 %v1833
        %1857 = vmatpush.msra.mxu0 %v1832
        %1858 = vmatpush.msra.mxu0 %v1831
        %1859 = vmatpush.msra.mxu0 %v1830
        %1860 = vmatpush.msra.mxu0 %v1829
        %1861 = vmatpush.msra.mxu0 %v1828
        %1862 = vmatpush.msra.mxu0 %v1827
        %1863 = vmatmul.f32.gmra.mxu0 %v1824
        %v1864 = vpop.f32.mrf.mxu0
        %v1865 = vadd.f32 %v1845, %v1864
        %1866 = vmatmul.f32.gmra.mxu0 %v1825
        %v1867 = vpop.f32.mrf.mxu0
        %v1868 = vadd.f32 %v1845, %v1867
        %1869 = vmatmul.f32.gmra.mxu0 %v1826
        %v1870 = vpop.f32.mrf.mxu0
        %v1871 = vadd.f32 %v1845, %v1870
        %1872 = vdwg.mxu0
        %v1873 = vmul.f32 %v1865, 0.5
        %v1874 = vmul.f32 %v1868, 0.5
        %v1875 = vmul.f32 %v1871, 0.5
        %v1876 = vmul.f32 %v1865, %v1352
        %v1877 = vmul.f32 %v1868, %v1352
        %v1878 = vmul.f32 %v1871, %v1352
        %v1879 = vmul.f32 %v1876, %v1876
        %v1880 = vmin.f32 16.0, %v1879
        %v1881 = vmul.f32 %v1880, 2.1237322e-06
        %v1882 = vadd.f32 %v1881, 0.00028619796
        %v1883 = vmul.f32 %v1880, %v1882
        %v1884 = vadd.f32 %v1883, 0.0036580483
        %v1885 = vmul.f32 %v1880, %v1884
        %v1886 = vadd.f32 %v1885, 0.05243302
        %v1887 = vmul.f32 %v1880, %v1886
        %v1888 = vadd.f32 %v1887, 0.18741608
        %v1889 = vmul.f32 %v1880, %v1888
        %v1890 = vadd.f32 %v1889, 1.1283791
        %v1891 = vmul.f32 %v1876, %v1890
        %v1892 = vmul.f32 %v1880, 3.8918573e-05
        %v1893 = vadd.f32 %v1892, 0.001143296
        %v1894 = vmul.f32 %v1880, %v1893
        %v1895 = vadd.f32 %v1894, 0.014752088
        %v1896 = vmul.f32 %v1880, %v1895
        %v1897 = vadd.f32 %v1896, 0.112945676
        %v1898 = vmul.f32 %v1880, %v1897
        %v1899 = vadd.f32 %v1898, 0.4994258
        %v1900 = vmul.f32 %v1880, %v1899
        %v1901 = vadd.f32 %v1900, 1.0
        %v1902 = vrcp.pop %v1901
        %v1903 = vmul.f32 %v1901, %v1902
        %v1904 = vsub.f32 1.0, %v1903
        %v1905 = vmul.f32 %v1902, %v1904
        %v1906 = vadd.f32 %v1902, %v1905
        %vm1907 = vweird.f32 %v1901
        %vm1908 = vweird.f32 %v1902
        %vm1909 = vmor %vm1907, %vm1908
        %v1910 = vsel %vm1909, %v1902, %v1906
        %v1911 = vand.u32 2147483647, %v1901
        %vm1912 = vcmp.eq.f32.partialorder %v1911, 8.507059e+37
        %v1913 = vand.u32 %v1901, 2147483648
        %v1914 = vor.u32 1.1754944e-38, %v1913
        %v1915 = vsel %vm1912, %v1914, %v1910
        %v1916 = vmul.f32 %v1891, %v1915
        %v1917 = vmin.f32 %v1916, 1.0
        %v1918 = vmax.f32 %v1917, -1.0
        %v1919 = vmul.f32 %v1877, %v1877
        %v1920 = vmin.f32 16.0, %v1919
        %v1921 = vmul.f32 %v1920, 2.1237322e-06
        %v1922 = vadd.f32 %v1921, 0.00028619796
        %v1923 = vmul.f32 %v1920, %v1922
        %v1924 = vadd.f32 %v1923, 0.0036580483
        %v1925 = vmul.f32 %v1920, %v1924
        %v1926 = vadd.f32 %v1925, 0.05243302
        %v1927 = vmul.f32 %v1920, %v1926
        %v1928 = vadd.f32 %v1927, 0.18741608
        %v1929 = vmul.f32 %v1920, %v1928
        %v1930 = vadd.f32 %v1929, 1.1283791
        %v1931 = vmul.f32 %v1877, %v1930
        %v1932 = vmul.f32 %v1920, 3.8918573e-05
        %v1933 = vadd.f32 %v1932, 0.001143296
        %v1934 = vmul.f32 %v1920, %v1933
        %v1935 = vadd.f32 %v1934, 0.014752088
        %v1936 = vmul.f32 %v1920, %v1935
        %v1937 = vadd.f32 %v1936, 0.112945676
        %v1938 = vmul.f32 %v1920, %v1937
        %v1939 = vadd.f32 %v1938, 0.4994258
        %v1940 = vmul.f32 %v1920, %v1939
        %v1941 = vadd.f32 %v1940, 1.0
        %v1942 = vrcp.pop %v1941
        %v1943 = vmul.f32 %v1941, %v1942
        %v1944 = vsub.f32 1.0, %v1943
        %v1945 = vmul.f32 %v1942, %v1944
        %v1946 = vadd.f32 %v1942, %v1945
        %vm1947 = vweird.f32 %v1941
        %vm1948 = vweird.f32 %v1942
        %vm1949 = vmor %vm1947, %vm1948
        %v1950 = vsel %vm1949, %v1942, %v1946
        %v1951 = vand.u32 2147483647, %v1941
        %vm1952 = vcmp.eq.f32.partialorder %v1951, 8.507059e+37
        %v1953 = vand.u32 %v1941, 2147483648
        %v1954 = vor.u32 1.1754944e-38, %v1953
        %v1955 = vsel %vm1952, %v1954, %v1950
        %v1956 = vmul.f32 %v1931, %v1955
        %v1957 = vmin.f32 %v1956, 1.0
        %v1958 = vmax.f32 %v1957, -1.0
        %v1959 = vmul.f32 %v1878, %v1878
        %v1960 = vmin.f32 16.0, %v1959
        %v1961 = vmul.f32 %v1960, 2.1237322e-06
        %v1962 = vadd.f32 %v1961, 0.00028619796
        %v1963 = vmul.f32 %v1960, %v1962
        %v1964 = vadd.f32 %v1963, 0.0036580483
        %v1965 = vmul.f32 %v1960, %v1964
        %v1966 = vadd.f32 %v1965, 0.05243302
        %v1967 = vmul.f32 %v1960, %v1966
        %v1968 = vadd.f32 %v1967, 0.18741608
        %v1969 = vmul.f32 %v1960, %v1968
        %v1970 = vadd.f32 %v1969, 1.1283791
        %v1971 = vmul.f32 %v1878, %v1970
        %v1972 = vmul.f32 %v1960, 3.8918573e-05
        %v1973 = vadd.f32 %v1972, 0.001143296
        %v1974 = vmul.f32 %v1960, %v1973
        %v1975 = vadd.f32 %v1974, 0.014752088
        %v1976 = vmul.f32 %v1960, %v1975
        %v1977 = vadd.f32 %v1976, 0.112945676
        %v1978 = vmul.f32 %v1960, %v1977
        %v1979 = vadd.f32 %v1978, 0.4994258
        %v1980 = vmul.f32 %v1960, %v1979
        %v1981 = vadd.f32 %v1980, 1.0
        %v1982 = vrcp.pop %v1981
        %v1983 = vmul.f32 %v1981, %v1982
        %v1984 = vsub.f32 1.0, %v1983
        %v1985 = vmul.f32 %v1982, %v1984
        %v1986 = vadd.f32 %v1982, %v1985
        %vm1987 = vweird.f32 %v1981
        %vm1988 = vweird.f32 %v1982
        %vm1989 = vmor %vm1987, %vm1988
        %v1990 = vsel %vm1989, %v1982, %v1986
        %v1991 = vand.u32 2147483647, %v1981
        %vm1992 = vcmp.eq.f32.partialorder %v1991, 8.507059e+37
        %v1993 = vand.u32 %v1981, 2147483648
        %v1994 = vor.u32 1.1754944e-38, %v1993
        %v1995 = vsel %vm1992, %v1994, %v1990
        %v1996 = vmul.f32 %v1971, %v1995
        %v1997 = vmin.f32 %v1996, 1.0
        %v1998 = vmax.f32 %v1997, -1.0
        %v1999 = vadd.f32 %v1918, 1.0
        %v2000 = vadd.f32 %v1958, 1.0
        %v2001 = vadd.f32 %v1998, 1.0
        %v2002 = vmul.f32 %v1873, %v1999
        %v2003 = vmul.f32 %v1874, %v2000
        %v2004 = vmul.f32 %v1875, %v2001
        %v2005 = vld [vmem:[#allocation16] sm:$0xff]
        %v2006 = vld [vmem:[#allocation16 + $0x8] sm:$0xff]
        %v2007 = vld [vmem:[#allocation16 + $0x10] sm:$0xff]
        %v2008 = vld [vmem:[#allocation16 + $0x18] sm:$0xff]
        %v2009 = vld [vmem:[#allocation16 + $0x20] sm:$0xff]
        %v2010 = vld [vmem:[#allocation16 + $0x28] sm:$0xff]
        %v2011 = vld [vmem:[#allocation16 + $0x30] sm:$0xff]
        %v2012 = vld [vmem:[#allocation16 + $0x38] sm:$0xff]
        %v2013 = vld [vmem:[#allocation16 + $0x40] sm:$0xff]
        %v2014 = vld [vmem:[#allocation16 + $0x48] sm:$0xff]
        %v2015 = vld [vmem:[#allocation16 + $0x50] sm:$0xff]
        %v2016 = vld [vmem:[#allocation16 + $0x58] sm:$0xff]
        %v2017 = vld [vmem:[#allocation16 + $0x60] sm:$0xff]
        %v2018 = vld [vmem:[#allocation16 + $0x68] sm:$0xff]
        %v2019 = vld [vmem:[#allocation16 + $0x70] sm:$0xff]
        %v2020 = vld [vmem:[#allocation16 + $0x78] sm:$0xff]
        %v2021 = vld [vmem:[#allocation17] sm:$0x1]
        %v2023 = vperm.slane %v2021, 0
        %2025 = vmatpush.msra.mxu0 %v2020
        %2026 = vmatpush.msra.mxu0 %v2019
        %2027 = vmatpush.msra.mxu0 %v2018
        %2028 = vmatpush.msra.mxu0 %v2017
        %2029 = vmatpush.msra.mxu0 %v2016
        %2030 = vmatpush.msra.mxu0 %v2015
        %2031 = vmatpush.msra.mxu0 %v2014
        %2032 = vmatpush.msra.mxu0 %v2013
        %2033 = vmatpush.msra.mxu0 %v2012
        %2034 = vmatpush.msra.mxu0 %v2011
        %2035 = vmatpush.msra.mxu0 %v2010
        %2036 = vmatpush.msra.mxu0 %v2009
        %2037 = vmatpush.msra.mxu0 %v2008
        %2038 = vmatpush.msra.mxu0 %v2007
        %2039 = vmatpush.msra.mxu0 %v2006
        %2040 = vmatpush.msra.mxu0 %v2005
        %2041 = vmatmul.f32.gmra.mxu0 %v2002
        %v2042 = vpop.f32.mrf.mxu0
        %v2043 = vadd.f32 %v2023, %v2042
        %2044 = vmatmul.f32.gmra.mxu0 %v2003
        %v2045 = vpop.f32.mrf.mxu0
        %v2046 = vadd.f32 %v2023, %v2045
        %2047 = vmatmul.f32.gmra.mxu0 %v2004
        %v2048 = vpop.f32.mrf.mxu0
        %v2049 = vadd.f32 %v2023, %v2048
        %2050 = vdwg.mxu0
        %v2051 = vld [vmem:[#allocation10] sm:$0x1]
        %v2052 = vld [vmem:[#allocation11] sm:$0x1]
        %v2053 = vadd.f32 %v2051, %v2052
        %2054 = vst [vmem:[#allocation2] sm:$0x1] %v2053
        %v2055 = vadd.f32 %v1637, %v1822
        %2056 = vst [vmem:[#allocation2 + $0x1] sm:$0xff] %v2055
        %2057 = vst [vmem:[#allocation2 + $0x9] sm:$0xff] %v2043
        %2058 = vst [vmem:[#allocation2 + $0x11] sm:$0xff] %v2046
        %2059 = vst [vmem:[#allocation2 + $0x19] sm:$0xf] %v2049
        %2060 = vst [vmem:[#allocation2 + $0x1d] sm:$0x7] 0.0
        %v2061 = vld [vmem:[#allocation2] sm:$0xff]
        %v2062 = vld [vmem:[#allocation2 + $0x8] sm:$0xff]
        %v2063 = vld [vmem:[#allocation2 + $0x10] sm:$0xff]
        %v2064 = vld [vmem:[#allocation2 + $0x18] sm:$0xff]
        %v2065 = vlaneseq
        %v2066 = vand.u32 %v2065, 127
        %vm2067 = vcmp.lt.s32.totalorder %v2066, 29
        %v2068 = vsel %vm2067, 0.0, -1e+30
        %v2069 = vld [vmem:[%s39] sm:$0x1]
        %v2070 = vld [vmem:[#allocation19] sm:$0x1]
        %2071 = vadd.xlane.f32.xlu0 %v2061
        %v2072 = vpop.xlane.xlu0 %2071
        %2073 = vadd.xlane.f32.xlu0 %v2062
        %v2074 = vpop.xlane.xlu0 %2073
        %2075 = vadd.xlane.f32.xlu0 %v2063
        %v2076 = vpop.xlane.xlu0 %2075
        %2077 = vadd.xlane.f32.xlu0 %v2064
        %v2078 = vpop.xlane.xlu0 %2077
        %v2079 = vrcp.pop 128.0
        %v2080 = vmul.f32 128.0, %v2079
        %v2081 = vsub.f32 1.0, %v2080
        %v2082 = vmul.f32 %v2079, %v2081
        %v2083 = vadd.f32 %v2079, %v2082
        %vm2084 = vweird.f32 %v2079
        %v2085 = vsel %vm2084, %v2079, %v2083
        %v2086 = vmul.f32 %v2072, %v2085
        %v2087 = vmul.f32 %v2074, %v2085
        %v2088 = vmul.f32 %v2076, %v2085
        %v2089 = vmul.f32 %v2078, %v2085
        %v2090 = vsub.f32 %v2061, %v2086
        %v2091 = vsub.f32 %v2062, %v2087
        %v2092 = vsub.f32 %v2063, %v2088
        %v2093 = vsub.f32 %v2064, %v2089
        %v2094 = vmul.f32 %v2090, %v2090
        %v2095 = vmul.f32 %v2091, %v2091
        %v2096 = vmul.f32 %v2092, %v2092
        %v2097 = vmul.f32 %v2093, %v2093
        %2098 = vadd.xlane.f32.xlu0 %v2094
        %v2099 = vpop.xlane.xlu0 %2098
        %2100 = vadd.xlane.f32.xlu0 %v2095
        %v2101 = vpop.xlane.xlu0 %2100
        %2102 = vadd.xlane.f32.xlu0 %v2096
        %v2103 = vpop.xlane.xlu0 %2102
        %2104 = vadd.xlane.f32.xlu0 %v2097
        %v2105 = vpop.xlane.xlu0 %2104
        %v2106 = vmul.f32 %v2099, %v2085
        %v2107 = vmul.f32 %v2101, %v2085
        %v2108 = vmul.f32 %v2103, %v2085
        %v2109 = vmul.f32 %v2105, %v2085
        %v2110 = vadd.f32 %v2106, 1e-05
        %v2111 = vadd.f32 %v2107, 1e-05
        %v2112 = vadd.f32 %v2108, 1e-05
        %v2113 = vadd.f32 %v2109, 1e-05
        %v2114 = vrsqrt.pop %v2110
        %v2115 = vmul.f32 %v2114, %v2110
        %v2116 = vmul.f32 %v2115, %v2114
        %v2117 = vmul.f32 0.5, %v2116
        %v2118 = vsub.f32 1.5, %v2117
        %v2119 = vmul.f32 %v2114, %v2118
        %vm2120 = vweird.f32 %v2110
        %vm2121 = vweird.f32 %v2114
        %vm2122 = vmor %vm2120, %vm2121
        %v2123 = vsel %vm2122, %v2114, %v2119
        %v2124 = vrsqrt.pop %v2111
        %v2125 = vmul.f32 %v2124, %v2111
        %v2126 = vmul.f32 %v2125, %v2124
        %v2127 = vmul.f32 0.5, %v2126
        %v2128 = vsub.f32 1.5, %v2127
        %v2129 = vmul.f32 %v2124, %v2128
        %vm2130 = vweird.f32 %v2111
        %vm2131 = vweird.f32 %v2124
        %vm2132 = vmor %vm2130, %vm2131
        %v2133 = vsel %vm2132, %v2124, %v2129
        %v2134 = vrsqrt.pop %v2112
        %v2135 = vmul.f32 %v2134, %v2112
        %v2136 = vmul.f32 %v2135, %v2134
        %v2137 = vmul.f32 0.5, %v2136
        %v2138 = vsub.f32 1.5, %v2137
        %v2139 = vmul.f32 %v2134, %v2138
        %vm2140 = vweird.f32 %v2112
        %vm2141 = vweird.f32 %v2134
        %vm2142 = vmor %vm2140, %vm2141
        %v2143 = vsel %vm2142, %v2134, %v2139
        %v2144 = vrsqrt.pop %v2113
        %v2145 = vmul.f32 %v2144, %v2113
        %v2146 = vmul.f32 %v2145, %v2144
        %v2147 = vmul.f32 0.5, %v2146
        %v2148 = vsub.f32 1.5, %v2147
        %v2149 = vmul.f32 %v2144, %v2148
        %vm2150 = vweird.f32 %v2113
        %vm2151 = vweird.f32 %v2144
        %vm2152 = vmor %vm2150, %vm2151
        %v2153 = vsel %vm2152, %v2144, %v2149
        %v2154 = vmul.f32 %v2090, %v2123
        %v2155 = vmul.f32 %v2091, %v2133
        %v2156 = vmul.f32 %v2092, %v2143
        %v2157 = vmul.f32 %v2093, %v2153
        %v2158 = vperm.slane %v2069, 0
        %v2159 = vmul.f32 %v2154, %v2158
        %v2160 = vmul.f32 %v2155, %v2158
        %v2161 = vmul.f32 %v2156, %v2158
        %v2162 = vmul.f32 %v2157, %v2158
        %v2163 = vperm.slane %v2070, 0
        %v2164 = vadd.f32 %v2159, %v2163
        %v2165 = vadd.f32 %v2160, %v2163
        %v2166 = vadd.f32 %v2161, %v2163
        %v2167 = vadd.f32 %v2162, %v2163
        %v2168 = vld [vmem:[#allocation20] sm:$0xff]
        %v2169 = vld [vmem:[#allocation20 + $0x8] sm:$0xff]
        %v2170 = vld [vmem:[#allocation20 + $0x10] sm:$0xff]
        %v2171 = vld [vmem:[#allocation20 + $0x18] sm:$0xff]
        %v2172 = vld [vmem:[#allocation20 + $0x20] sm:$0xff]
        %v2173 = vld [vmem:[#allocation20 + $0x28] sm:$0xff]
        %v2174 = vld [vmem:[#allocation20 + $0x30] sm:$0xff]
        %v2175 = vld [vmem:[#allocation20 + $0x38] sm:$0xff]
        %v2176 = vld [vmem:[#allocation20 + $0x40] sm:$0xff]
        %v2177 = vld [vmem:[#allocation20 + $0x48] sm:$0xff]
        %v2178 = vld [vmem:[#allocation20 + $0x50] sm:$0xff]
        %v2179 = vld [vmem:[#allocation20 + $0x58] sm:$0xff]
        %v2180 = vld [vmem:[#allocation20 + $0x60] sm:$0xff]
        %v2181 = vld [vmem:[#allocation20 + $0x68] sm:$0xff]
        %v2182 = vld [vmem:[#allocation20 + $0x70] sm:$0xff]
        %v2183 = vld [vmem:[#allocation20 + $0x78] sm:$0xff]
        %v2184 = vld [vmem:[#allocation20 + $0x80] sm:$0xff]
        %v2185 = vld [vmem:[#allocation20 + $0x88] sm:$0xff]
        %v2186 = vld [vmem:[#allocation20 + $0x90] sm:$0xff]
        %v2187 = vld [vmem:[#allocation20 + $0x98] sm:$0xff]
        %v2188 = vld [vmem:[#allocation20 + $0xa0] sm:$0xff]
        %v2189 = vld [vmem:[#allocation20 + $0xa8] sm:$0xff]
        %v2190 = vld [vmem:[#allocation20 + $0xb0] sm:$0xff]
        %v2191 = vld [vmem:[#allocation20 + $0xb8] sm:$0xff]
        %v2192 = vld [vmem:[#allocation20 + $0xc0] sm:$0xff]
        %v2193 = vld [vmem:[#allocation20 + $0xc8] sm:$0xff]
        %v2194 = vld [vmem:[#allocation20 + $0xd0] sm:$0xff]
        %v2195 = vld [vmem:[#allocation20 + $0xd8] sm:$0xff]
        %v2196 = vld [vmem:[#allocation20 + $0xe0] sm:$0xff]
        %v2197 = vld [vmem:[#allocation20 + $0xe8] sm:$0xff]
        %v2198 = vld [vmem:[#allocation20 + $0xf0] sm:$0xff]
        %v2199 = vld [vmem:[#allocation20 + $0xf8] sm:$0xff]
        %v2200 = vld [vmem:[#allocation20 + $0x100] sm:$0xff]
        %v2201 = vld [vmem:[#allocation20 + $0x108] sm:$0xff]
        %v2202 = vld [vmem:[#allocation20 + $0x110] sm:$0xff]
        %v2203 = vld [vmem:[#allocation20 + $0x118] sm:$0xff]
        %v2204 = vld [vmem:[#allocation20 + $0x120] sm:$0xff]
        %v2205 = vld [vmem:[#allocation20 + $0x128] sm:$0xff]
        %v2206 = vld [vmem:[#allocation20 + $0x130] sm:$0xff]
        %v2207 = vld [vmem:[#allocation20 + $0x138] sm:$0xff]
        %v2208 = vld [vmem:[#allocation20 + $0x140] sm:$0xff]
        %v2209 = vld [vmem:[#allocation20 + $0x148] sm:$0xff]
        %v2210 = vld [vmem:[#allocation20 + $0x150] sm:$0xff]
        %v2211 = vld [vmem:[#allocation20 + $0x158] sm:$0xff]
        %v2212 = vld [vmem:[#allocation20 + $0x160] sm:$0xff]
        %v2213 = vld [vmem:[#allocation20 + $0x168] sm:$0xff]
        %v2214 = vld [vmem:[#allocation20 + $0x170] sm:$0xff]
        %v2215 = vld [vmem:[#allocation20 + $0x178] sm:$0xff]
        %v2216 = vld [vmem:[%s45] ss:$2 sm:$0x7]
        %v2218 = vperm.slane %v2216, 0
        %v2219 = vperm.slane %v2216, 1
        %v2220 = vperm.slane %v2216, 2
        %2224 = vmatpush.msra.mxu0 %v2213
        %2225 = vmatpush.msra.mxu0 %v2210
        %2226 = vmatpush.msra.mxu0 %v2207
        %2227 = vmatpush.msra.mxu0 %v2204
        %2228 = vmatpush.msra.mxu0 %v2201
        %2229 = vmatpush.msra.mxu0 %v2198
        %2230 = vmatpush.msra.mxu0 %v2195
        %2231 = vmatpush.msra.mxu0 %v2192
        %2232 = vmatpush.msra.mxu0 %v2189
        %2233 = vmatpush.msra.mxu0 %v2186
        %2234 = vmatpush.msra.mxu0 %v2183
        %2235 = vmatpush.msra.mxu0 %v2180
        %2236 = vmatpush.msra.mxu0 %v2177
        %2237 = vmatpush.msra.mxu0 %v2174
        %2238 = vmatpush.msra.mxu0 %v2171
        %2239 = vmatpush.msra.mxu0 %v2168
        %2240 = vmatmul.f32.gmra.mxu0 %v2164
        %v2241 = vpop.f32.mrf.mxu0
        %v2242 = vadd.f32 %v2218, %v2241
        %2243 = vmatmul.f32.gmra.mxu0 %v2165
        %v2244 = vpop.f32.mrf.mxu0
        %v2245 = vadd.f32 %v2218, %v2244
        %2246 = vmatmul.f32.gmra.mxu0 %v2166
        %v2247 = vpop.f32.mrf.mxu0
        %v2248 = vadd.f32 %v2218, %v2247
        %2249 = vmatmul.f32.gmra.mxu0 %v2167
        %v2250 = vpop.f32.mrf.mxu0
        %v2251 = vadd.f32 %v2218, %v2250
        %2252 = vdwg.mxu0
        %2253 = vmatpush.msra.mxu0 %v2214
        %2254 = vmatpush.msra.mxu0 %v2211
        %2255 = vmatpush.msra.mxu0 %v2208
        %2256 = vmatpush.msra.mxu0 %v2205
        %2257 = vmatpush.msra.mxu0 %v2202
        %2258 = vmatpush.msra.mxu0 %v2199
        %2259 = vmatpush.msra.mxu0 %v2196
        %2260 = vmatpush.msra.mxu0 %v2193
        %2261 = vmatpush.msra.mxu0 %v2190
        %2262 = vmatpush.msra.mxu0 %v2187
        %2263 = vmatpush.msra.mxu0 %v2184
        %2264 = vmatpush.msra.mxu0 %v2181
        %2265 = vmatpush.msra.mxu0 %v2178
        %2266 = vmatpush.msra.mxu0 %v2175
        %2267 = vmatpush.msra.mxu0 %v2172
        %2268 = vmatpush.msra.mxu0 %v2169
        %2269 = vmatmul.f32.gmra.mxu0 %v2164
        %v2270 = vpop.f32.mrf.mxu0
        %v2271 = vadd.f32 %v2219, %v2270
        %2272 = vmatmul.f32.gmra.mxu0 %v2165
        %v2273 = vpop.f32.mrf.mxu0
        %v2274 = vadd.f32 %v2219, %v2273
        %2275 = vmatmul.f32.gmra.mxu0 %v2166
        %v2276 = vpop.f32.mrf.mxu0
        %v2277 = vadd.f32 %v2219, %v2276
        %2278 = vmatmul.f32.gmra.mxu0 %v2167
        %v2279 = vpop.f32.mrf.mxu0
        %v2280 = vadd.f32 %v2219, %v2279
        %2281 = vdwg.mxu0
        %2282 = vmatpush.msra.mxu0 %v2215
        %2283 = vmatpush.msra.mxu0 %v2212
        %2284 = vmatpush.msra.mxu0 %v2209
        %2285 = vmatpush.msra.mxu0 %v2206
        %2286 = vmatpush.msra.mxu0 %v2203
        %2287 = vmatpush.msra.mxu0 %v2200
        %2288 = vmatpush.msra.mxu0 %v2197
        %2289 = vmatpush.msra.mxu0 %v2194
        %2290 = vmatpush.msra.mxu0 %v2191
        %2291 = vmatpush.msra.mxu0 %v2188
        %2292 = vmatpush.msra.mxu0 %v2185
        %2293 = vmatpush.msra.mxu0 %v2182
        %2294 = vmatpush.msra.mxu0 %v2179
        %2295 = vmatpush.msra.mxu0 %v2176
        %2296 = vmatpush.msra.mxu0 %v2173
        %2297 = vmatpush.msra.mxu0 %v2170
        %2298 = vmatmul.f32.gmra.mxu0 %v2164
        %v2299 = vpop.f32.mrf.mxu0
        %v2300 = vadd.f32 %v2220, %v2299
        %2301 = vmatmul.f32.gmra.mxu0 %v2165
        %v2302 = vpop.f32.mrf.mxu0
        %v2303 = vadd.f32 %v2220, %v2302
        %2304 = vmatmul.f32.gmra.mxu0 %v2166
        %v2305 = vpop.f32.mrf.mxu0
        %v2306 = vadd.f32 %v2220, %v2305
        %2307 = vmatmul.f32.gmra.mxu0 %v2167
        %v2308 = vpop.f32.mrf.mxu0
        %v2309 = vadd.f32 %v2220, %v2308
        %2310 = vdwg.mxu0
        %v2311 = vld [vmem:[#allocation22] sm:$0xff]
        %v2312 = vld [vmem:[#allocation22 + $0x8] sm:$0xff]
        %v2313 = vld [vmem:[#allocation22 + $0x10] sm:$0xff]
        %v2314 = vld [vmem:[#allocation22 + $0x18] sm:$0xff]
        %v2315 = vld [vmem:[#allocation22 + $0x20] sm:$0xff]
        %v2316 = vld [vmem:[#allocation22 + $0x28] sm:$0xff]
        %v2317 = vld [vmem:[#allocation22 + $0x30] sm:$0xff]
        %v2318 = vld [vmem:[#allocation22 + $0x38] sm:$0xff]
        %v2319 = vld [vmem:[#allocation22 + $0x40] sm:$0xff]
        %v2320 = vld [vmem:[#allocation22 + $0x48] sm:$0xff]
        %v2321 = vld [vmem:[#allocation22 + $0x50] sm:$0xff]
        %v2322 = vld [vmem:[#allocation22 + $0x58] sm:$0xff]
        %v2323 = vld [vmem:[#allocation22 + $0x60] sm:$0xff]
        %v2324 = vld [vmem:[#allocation22 + $0x68] sm:$0xff]
        %v2325 = vld [vmem:[#allocation22 + $0x70] sm:$0xff]
        %v2326 = vld [vmem:[#allocation22 + $0x78] sm:$0xff]
        %vm2327 = vcmask 261120
        %v2329 = vsel %vm2327, %v2242, 0
        %v2332 = vsel %vm2327, %v2245, 0
        %v2335 = vsel %vm2327, %v2248, 0
        %v2338 = vsel %vm2327, %v2251, 0
        %v2341 = vsel %vm2327, %v2271, 0
        %v2344 = vsel %vm2327, %v2274, 0
        %v2347 = vsel %vm2327, %v2277, 0
        %v2350 = vsel %vm2327, %v2280, 0
        %2352 = vmatpush.xpose.msra.mxu0 0.0
        %2353 = vmatpush.xpose.msra.mxu0 0.0
        %2354 = vmatpush.xpose.msra.mxu0 0.0
        %2355 = vmatpush.xpose.msra.mxu0 0.0
        %2356 = vmatpush.xpose.msra.mxu0 0.0
        %2357 = vmatpush.xpose.msra.mxu0 0.0
        %2358 = vmatpush.xpose.msra.mxu0 0.0
        %2359 = vmatpush.xpose.msra.mxu0 0.0
        %2360 = vmatpush.xpose.msra.mxu0 0.0
        %2361 = vmatpush.xpose.msra.mxu0 0.0
        %2362 = vmatpush.xpose.msra.mxu0 0.0
        %2363 = vmatpush.xpose.msra.mxu0 0.0
        %2364 = vmatpush.xpose.msra.mxu0 %v2350
        %2365 = vmatpush.xpose.msra.mxu0 %v2347
        %2366 = vmatpush.xpose.msra.mxu0 %v2344
        %2367 = vmatpush.xpose.msra.mxu0 %v2341
        %2368 = vmatmul.f32.gmra.mxu0 %v2329
        %v2369 = vpop.f32.mrf.mxu0
        %v2370 = vadd.f32 0.0, %v2369
        %2371 = vmatmul.f32.gmra.mxu0 %v2332
        %v2372 = vpop.f32.mrf.mxu0
        %v2373 = vadd.f32 0.0, %v2372
        %2374 = vmatmul.f32.gmra.mxu0 %v2335
        %v2375 = vpop.f32.mrf.mxu0
        %v2376 = vadd.f32 0.0, %v2375
        %2377 = vmatmul.f32.gmra.mxu0 %v2338
        %v2378 = vpop.f32.mrf.mxu0
        %v2379 = vadd.f32 0.0, %v2378
        %2380 = vdwg.mxu0
        %v2381 = vmul.f32 %v2370, 0.17677669
        %v2382 = vmul.f32 %v2373, 0.17677669
        %v2383 = vmul.f32 %v2376, 0.17677669
        %v2384 = vmul.f32 %v2379, 0.17677669
        %v2385 = vadd.f32 %v2381, %v2068
        %v2386 = vadd.f32 %v2382, %v2068
        %v2387 = vadd.f32 %v2383, %v2068
        %v2388 = vadd.f32 %v2384, %v2068
        %v2389 = vsel %vm2327, %v2385, -inf
        %2390 = vmax.xlane.f32.xlu0 %v2389
        %v2391 = vpop.xlane.xlu0 %2390
        %v2392 = vsel %vm2327, %v2386, -inf
        %2393 = vmax.xlane.f32.xlu0 %v2392
        %v2394 = vpop.xlane.xlu0 %2393
        %v2395 = vsel %vm2327, %v2387, -inf
        %2396 = vmax.xlane.f32.xlu0 %v2395
        %v2397 = vpop.xlane.xlu0 %2396
        %v2398 = vsel %vm2327, %v2388, -inf
        %2399 = vmax.xlane.f32.xlu0 %v2398
        %v2400 = vpop.xlane.xlu0 %2399
        %v2401 = vsub.f32 %v2385, %v2391
        %v2402 = vsub.f32 %v2386, %v2394
        %v2403 = vsub.f32 %v2387, %v2397
        %v2404 = vsub.f32 %v2388, %v2400
        %v2405 = vmul.f32 %v2401, 1.442695
        %v2406 = vpow.pop %v2405
        %v2407 = vmul.f32 %v2402, 1.442695
        %v2408 = vpow.pop %v2407
        %v2409 = vmul.f32 %v2403, 1.442695
        %v2410 = vpow.pop %v2409
        %v2411 = vmul.f32 %v2404, 1.442695
        %v2412 = vpow.pop %v2411
        %v2413 = vsel %vm2327, %v2406, 0.0
        %2414 = vadd.xlane.f32.xlu0 %v2413
        %v2415 = vpop.xlane.xlu0 %2414
        %v2416 = vsel %vm2327, %v2408, 0.0
        %2417 = vadd.xlane.f32.xlu0 %v2416
        %v2418 = vpop.xlane.xlu0 %2417
        %v2419 = vsel %vm2327, %v2410, 0.0
        %2420 = vadd.xlane.f32.xlu0 %v2419
        %v2421 = vpop.xlane.xlu0 %2420
        %v2422 = vsel %vm2327, %v2412, 0.0
        %2423 = vadd.xlane.f32.xlu0 %v2422
        %v2424 = vpop.xlane.xlu0 %2423
        %v2425 = vrcp.pop %v2415
        %v2426 = vrcp.pop %v2418
        %v2427 = vrcp.pop %v2421
        %v2428 = vrcp.pop %v2424
        %v2429 = vmul.f32 %v2406, %v2425
        %v2430 = vmul.f32 %v2408, %v2426
        %v2431 = vmul.f32 %v2410, %v2427
        %v2432 = vmul.f32 %v2412, %v2428
        %v2434 = vsel %vm2327, %v2429, 0
        %v2437 = vsel %vm2327, %v2430, 0
        %v2440 = vsel %vm2327, %v2431, 0
        %v2443 = vsel %vm2327, %v2432, 0
        %2445 = vmatpush.msra.mxu0 0.0
        %2446 = vmatpush.msra.mxu0 0.0
        %2447 = vmatpush.msra.mxu0 0.0
        %2448 = vmatpush.msra.mxu0 0.0
        %2449 = vmatpush.msra.mxu0 0.0
        %2450 = vmatpush.msra.mxu0 0.0
        %2451 = vmatpush.msra.mxu0 0.0
        %2452 = vmatpush.msra.mxu0 0.0
        %2453 = vmatpush.msra.mxu0 0.0
        %2454 = vmatpush.msra.mxu0 0.0
        %2455 = vmatpush.msra.mxu0 0.0
        %2456 = vmatpush.msra.mxu0 0.0
        %2457 = vmatpush.msra.mxu0 %v2309
        %2458 = vmatpush.msra.mxu0 %v2306
        %2459 = vmatpush.msra.mxu0 %v2303
        %2460 = vmatpush.msra.mxu0 %v2300
        %2461 = vmatmul.f32.gmra.mxu0 %v2434
        %v2462 = vpop.f32.mrf.mxu0
        %v2463 = vadd.f32 0.0, %v2462
        %2464 = vmatmul.f32.gmra.mxu0 %v2437
        %v2465 = vpop.f32.mrf.mxu0
        %v2466 = vadd.f32 0.0, %v2465
        %2467 = vmatmul.f32.gmra.mxu0 %v2440
        %v2468 = vpop.f32.mrf.mxu0
        %v2469 = vadd.f32 0.0, %v2468
        %2470 = vmatmul.f32.gmra.mxu0 %v2443
        %v2471 = vpop.f32.mrf.mxu0
        %v2472 = vadd.f32 0.0, %v2471
        %2473 = vdwg.mxu0
        %2474 = vrot.lane.b32.xlu0 %v2242, 96
        %v2475 = vpop.permute.xlu0 %2474
        %2476 = vrot.lane.b32.xlu0 %v2245, 96
        %v2477 = vpop.permute.xlu0 %2476
        %2478 = vrot.lane.b32.xlu0 %v2248, 96
        %v2479 = vpop.permute.xlu0 %2478
        %2480 = vrot.lane.b32.xlu0 %v2251, 96
        %v2481 = vpop.permute.xlu0 %2480
        %2482 = vrot.lane.b32.xlu0 %v2271, 96
        %v2483 = vpop.permute.xlu0 %2482
        %2484 = vrot.lane.b32.xlu0 %v2274, 96
        %v2485 = vpop.permute.xlu0 %2484
        %2486 = vrot.lane.b32.xlu0 %v2277, 96
        %v2487 = vpop.permute.xlu0 %2486
        %2488 = vrot.lane.b32.xlu0 %v2280, 96
        %v2489 = vpop.permute.xlu0 %2488
        %v2490 = vsel %vm2327, %v2475, 0
        %v2492 = vsel %vm2327, %v2477, 0
        %v2494 = vsel %vm2327, %v2479, 0
        %v2496 = vsel %vm2327, %v2481, 0
        %v2498 = vsel %vm2327, %v2483, 0
        %v2500 = vsel %vm2327, %v2485, 0
        %v2502 = vsel %vm2327, %v2487, 0
        %v2504 = vsel %vm2327, %v2489, 0
        %2506 = vmatpush.xpose.msra.mxu0 0.0
        %2507 = vmatpush.xpose.msra.mxu0 0.0
        %2508 = vmatpush.xpose.msra.mxu0 0.0
        %2509 = vmatpush.xpose.msra.mxu0 0.0
        %2510 = vmatpush.xpose.msra.mxu0 0.0
        %2511 = vmatpush.xpose.msra.mxu0 0.0
        %2512 = vmatpush.xpose.msra.mxu0 0.0
        %2513 = vmatpush.xpose.msra.mxu0 0.0
        %2514 = vmatpush.xpose.msra.mxu0 0.0
        %2515 = vmatpush.xpose.msra.mxu0 0.0
        %2516 = vmatpush.xpose.msra.mxu0 0.0
        %2517 = vmatpush.xpose.msra.mxu0 0.0
        %2518 = vmatpush.xpose.msra.mxu0 %v2504
        %2519 = vmatpush.xpose.msra.mxu0 %v2502
        %2520 = vmatpush.xpose.msra.mxu0 %v2500
        %2521 = vmatpush.xpose.msra.mxu0 %v2498
        %2522 = vmatmul.f32.gmra.mxu0 %v2490
        %v2523 = vpop.f32.mrf.mxu0
        %v2524 = vadd.f32 0.0, %v2523
        %2525 = vmatmul.f32.gmra.mxu0 %v2492
        %v2526 = vpop.f32.mrf.mxu0
        %v2527 = vadd.f32 0.0, %v2526
        %2528 = vmatmul.f32.gmra.mxu0 %v2494
        %v2529 = vpop.f32.mrf.mxu0
        %v2530 = vadd.f32 0.0, %v2529
        %2531 = vmatmul.f32.gmra.mxu0 %v2496
        %v2532 = vpop.f32.mrf.mxu0
        %v2533 = vadd.f32 0.0, %v2532
        %2534 = vdwg.mxu0
        %v2535 = vmul.f32 %v2524, 0.17677669
        %v2536 = vmul.f32 %v2527, 0.17677669
        %v2537 = vmul.f32 %v2530, 0.17677669
        %v2538 = vmul.f32 %v2533, 0.17677669
        %v2539 = vadd.f32 %v2535, %v2068
        %v2540 = vadd.f32 %v2536, %v2068
        %v2541 = vadd.f32 %v2537, %v2068
        %v2542 = vadd.f32 %v2538, %v2068
        %v2543 = vsel %vm2327, %v2539, -inf
        %2544 = vmax.xlane.f32.xlu0 %v2543
        %v2545 = vpop.xlane.xlu0 %2544
        %v2546 = vsel %vm2327, %v2540, -inf
        %2547 = vmax.xlane.f32.xlu0 %v2546
        %v2548 = vpop.xlane.xlu0 %2547
        %v2549 = vsel %vm2327, %v2541, -inf
        %2550 = vmax.xlane.f32.xlu0 %v2549
        %v2551 = vpop.xlane.xlu0 %2550
        %v2552 = vsel %vm2327, %v2542, -inf
        %2553 = vmax.xlane.f32.xlu0 %v2552
        %v2554 = vpop.xlane.xlu0 %2553
        %v2555 = vsub.f32 %v2539, %v2545
        %v2556 = vsub.f32 %v2540, %v2548
        %v2557 = vsub.f32 %v2541, %v2551
        %v2558 = vsub.f32 %v2542, %v2554
        %v2559 = vmul.f32 %v2555, 1.442695
        %v2560 = vpow.pop %v2559
        %v2561 = vmul.f32 %v2556, 1.442695
        %v2562 = vpow.pop %v2561
        %v2563 = vmul.f32 %v2557, 1.442695
        %v2564 = vpow.pop %v2563
        %v2565 = vmul.f32 %v2558, 1.442695
        %v2566 = vpow.pop %v2565
        %v2567 = vsel %vm2327, %v2560, 0.0
        %2568 = vadd.xlane.f32.xlu0 %v2567
        %v2569 = vpop.xlane.xlu0 %2568
        %v2570 = vsel %vm2327, %v2562, 0.0
        %2571 = vadd.xlane.f32.xlu0 %v2570
        %v2572 = vpop.xlane.xlu0 %2571
        %v2573 = vsel %vm2327, %v2564, 0.0
        %2574 = vadd.xlane.f32.xlu0 %v2573
        %v2575 = vpop.xlane.xlu0 %2574
        %v2576 = vsel %vm2327, %v2566, 0.0
        %2577 = vadd.xlane.f32.xlu0 %v2576
        %v2578 = vpop.xlane.xlu0 %2577
        %v2579 = vrcp.pop %v2569
        %v2580 = vrcp.pop %v2572
        %v2581 = vrcp.pop %v2575
        %v2582 = vrcp.pop %v2578
        %v2583 = vmul.f32 %v2560, %v2579
        %v2584 = vmul.f32 %v2562, %v2580
        %v2585 = vmul.f32 %v2564, %v2581
        %v2586 = vmul.f32 %v2566, %v2582
        %2591 = vrot.lane.b32.xlu0 %v2300, 96
        %v2592 = vpop.permute.xlu0 %2591
        %2593 = vrot.lane.b32.xlu0 %v2303, 96
        %v2594 = vpop.permute.xlu0 %2593
        %2595 = vrot.lane.b32.xlu0 %v2306, 96
        %v2596 = vpop.permute.xlu0 %2595
        %2597 = vrot.lane.b32.xlu0 %v2309, 96
        %v2598 = vpop.permute.xlu0 %2597
        %v2604 = vsel %vm2327, %v2583, 0
        %v2607 = vsel %vm2327, %v2584, 0
        %v2610 = vsel %vm2327, %v2585, 0
        %v2613 = vsel %vm2327, %v2586, 0
        %2615 = vmatpush.msra.mxu0 0.0
        %2616 = vmatpush.msra.mxu0 0.0
        %2617 = vmatpush.msra.mxu0 0.0
        %2618 = vmatpush.msra.mxu0 0.0
        %2619 = vmatpush.msra.mxu0 0.0
        %2620 = vmatpush.msra.mxu0 0.0
        %2621 = vmatpush.msra.mxu0 0.0
        %2622 = vmatpush.msra.mxu0 0.0
        %2623 = vmatpush.msra.mxu0 0.0
        %2624 = vmatpush.msra.mxu0 0.0
        %2625 = vmatpush.msra.mxu0 0.0
        %2626 = vmatpush.msra.mxu0 0.0
        %2627 = vmatpush.msra.mxu0 %v2598
        %2628 = vmatpush.msra.mxu0 %v2596
        %2629 = vmatpush.msra.mxu0 %v2594
        %2630 = vmatpush.msra.mxu0 %v2592
        %2631 = vmatmul.f32.gmra.mxu0 %v2604
        %v2632 = vpop.f32.mrf.mxu0
        %v2633 = vadd.f32 0.0, %v2632
        %2634 = vmatmul.f32.gmra.mxu0 %v2607
        %v2635 = vpop.f32.mrf.mxu0
        %v2636 = vadd.f32 0.0, %v2635
        %2637 = vmatmul.f32.gmra.mxu0 %v2610
        %v2638 = vpop.f32.mrf.mxu0
        %v2639 = vadd.f32 0.0, %v2638
        %2640 = vmatmul.f32.gmra.mxu0 %v2613
        %v2641 = vpop.f32.mrf.mxu0
        %v2642 = vadd.f32 0.0, %v2641
        %2643 = vdwg.mxu0
        %v2645 = vsel %vm2327, %v2633, 0
        %v2648 = vsel %vm2327, %v2636, 0
        %v2651 = vsel %vm2327, %v2639, 0
        %v2654 = vsel %vm2327, %v2642, 0
        %2656 = vmatpush.msra.mxu0 0.0
        %2657 = vmatpush.msra.mxu0 0.0
        %2658 = vmatpush.msra.mxu0 0.0
        %2659 = vmatpush.msra.mxu0 0.0
        %2660 = vmatpush.msra.mxu0 0.0
        %2661 = vmatpush.msra.mxu0 0.0
        %2662 = vmatpush.msra.mxu0 0.0
        %2663 = vmatpush.msra.mxu0 0.0
        %2664 = vmatpush.msra.mxu0 0.0
        %2665 = vmatpush.msra.mxu0 0.0
        %2666 = vmatpush.msra.mxu0 0.0
        %2667 = vmatpush.msra.mxu0 0.0
        %2668 = vmatpush.msra.mxu0 %v2318
        %2669 = vmatpush.msra.mxu0 %v2317
        %2670 = vmatpush.msra.mxu0 %v2316
        %2671 = vmatpush.msra.mxu0 %v2315
        %2672 = vmatmul.f32.gmra.mxu0 %v2645
        %v2673 = vpop.f32.mrf.mxu0
        %v2674 = vadd.f32 0.0, %v2673
        %2675 = vmatmul.f32.gmra.mxu0 %v2648
        %v2676 = vpop.f32.mrf.mxu0
        %v2677 = vadd.f32 0.0, %v2676
        %2678 = vmatmul.f32.gmra.mxu0 %v2651
        %v2679 = vpop.f32.mrf.mxu0
        %v2680 = vadd.f32 0.0, %v2679
        %2681 = vmatmul.f32.gmra.mxu0 %v2654
        %v2682 = vpop.f32.mrf.mxu0
        %v2683 = vadd.f32 0.0, %v2682
        %2684 = vdwg.mxu0
        %v2686 = vsel %vm2327, %v2463, 0
        %v2689 = vsel %vm2327, %v2466, 0
        %v2692 = vsel %vm2327, %v2469, 0
        %v2695 = vsel %vm2327, %v2472, 0
        %2697 = vmatpush.msra.mxu0 0.0
        %2698 = vmatpush.msra.mxu0 0.0
        %2699 = vmatpush.msra.mxu0 0.0
        %2700 = vmatpush.msra.mxu0 0.0
        %2701 = vmatpush.msra.mxu0 0.0
        %2702 = vmatpush.msra.mxu0 0.0
        %2703 = vmatpush.msra.mxu0 0.0
        %2704 = vmatpush.msra.mxu0 0.0
        %2705 = vmatpush.msra.mxu0 0.0
        %2706 = vmatpush.msra.mxu0 0.0
        %2707 = vmatpush.msra.mxu0 0.0
        %2708 = vmatpush.msra.mxu0 0.0
        %2709 = vmatpush.msra.mxu0 %v2314
        %2710 = vmatpush.msra.mxu0 %v2313
        %2711 = vmatpush.msra.mxu0 %v2312
        %2712 = vmatpush.msra.mxu0 %v2311
        %2713 = vmatmul.f32.gmra.mxu0 %v2686
        %v2714 = vpop.f32.mrf.mxu0
        %v2715 = vadd.f32 %v2674, %v2714
        %2716 = vmatmul.f32.gmra.mxu0 %v2689
        %v2717 = vpop.f32.mrf.mxu0
        %v2718 = vadd.f32 %v2677, %v2717
        %2719 = vmatmul.f32.gmra.mxu0 %v2692
        %v2720 = vpop.f32.mrf.mxu0
        %v2721 = vadd.f32 %v2680, %v2720
        %2722 = vmatmul.f32.gmra.mxu0 %v2695
        %v2723 = vpop.f32.mrf.mxu0
        %v2724 = vadd.f32 %v2683, %v2723
        %2725 = vdwg.mxu0
        %2726 = vrot.lane.b32.xlu0 %v2242, 64
        %v2727 = vpop.permute.xlu0 %2726
        %2728 = vrot.lane.b32.xlu0 %v2245, 64
        %v2729 = vpop.permute.xlu0 %2728
        %2730 = vrot.lane.b32.xlu0 %v2248, 64
        %v2731 = vpop.permute.xlu0 %2730
        %2732 = vrot.lane.b32.xlu0 %v2251, 64
        %v2733 = vpop.permute.xlu0 %2732
        %2734 = vrot.lane.b32.xlu0 %v2271, 64
        %v2735 = vpop.permute.xlu0 %2734
        %2736 = vrot.lane.b32.xlu0 %v2274, 64
        %v2737 = vpop.permute.xlu0 %2736
        %2738 = vrot.lane.b32.xlu0 %v2277, 64
        %v2739 = vpop.permute.xlu0 %2738
        %2740 = vrot.lane.b32.xlu0 %v2280, 64
        %v2741 = vpop.permute.xlu0 %2740
        %v2742 = vsel %vm2327, %v2727, 0
        %v2744 = vsel %vm2327, %v2729, 0
        %v2746 = vsel %vm2327, %v2731, 0
        %v2748 = vsel %vm2327, %v2733, 0
        %v2750 = vsel %vm2327, %v2735, 0
        %v2752 = vsel %vm2327, %v2737, 0
        %v2754 = vsel %vm2327, %v2739, 0
        %v2756 = vsel %vm2327, %v2741, 0
        %2758 = vmatpush.xpose.msra.mxu0 0.0
        %2759 = vmatpush.xpose.msra.mxu0 0.0
        %2760 = vmatpush.xpose.msra.mxu0 0.0
        %2761 = vmatpush.xpose.msra.mxu0 0.0
        %2762 = vmatpush.xpose.msra.mxu0 0.0
        %2763 = vmatpush.xpose.msra.mxu0 0.0
        %2764 = vmatpush.xpose.msra.mxu0 0.0
        %2765 = vmatpush.xpose.msra.mxu0 0.0
        %2766 = vmatpush.xpose.msra.mxu0 0.0
        %2767 = vmatpush.xpose.msra.mxu0 0.0
        %2768 = vmatpush.xpose.msra.mxu0 0.0
        %2769 = vmatpush.xpose.msra.mxu0 0.0
        %2770 = vmatpush.xpose.msra.mxu0 %v2756
        %2771 = vmatpush.xpose.msra.mxu0 %v2754
        %2772 = vmatpush.xpose.msra.mxu0 %v2752
        %2773 = vmatpush.xpose.msra.mxu0 %v2750
        %2774 = vmatmul.f32.gmra.mxu0 %v2742
        %v2775 = vpop.f32.mrf.mxu0
        %v2776 = vadd.f32 0.0, %v2775
        %2777 = vmatmul.f32.gmra.mxu0 %v2744
        %v2778 = vpop.f32.mrf.mxu0
        %v2779 = vadd.f32 0.0, %v2778
        %2780 = vmatmul.f32.gmra.mxu0 %v2746
        %v2781 = vpop.f32.mrf.mxu0
        %v2782 = vadd.f32 0.0, %v2781
        %2783 = vmatmul.f32.gmra.mxu0 %v2748
        %v2784 = vpop.f32.mrf.mxu0
        %v2785 = vadd.f32 0.0, %v2784
        %2786 = vdwg.mxu0
        %v2787 = vmul.f32 %v2776, 0.17677669
        %v2788 = vmul.f32 %v2779, 0.17677669
        %v2789 = vmul.f32 %v2782, 0.17677669
        %v2790 = vmul.f32 %v2785, 0.17677669
        %v2791 = vadd.f32 %v2787, %v2068
        %v2792 = vadd.f32 %v2788, %v2068
        %v2793 = vadd.f32 %v2789, %v2068
        %v2794 = vadd.f32 %v2790, %v2068
        %v2795 = vsel %vm2327, %v2791, -inf
        %2796 = vmax.xlane.f32.xlu0 %v2795
        %v2797 = vpop.xlane.xlu0 %2796
        %v2798 = vsel %vm2327, %v2792, -inf
        %2799 = vmax.xlane.f32.xlu0 %v2798
        %v2800 = vpop.xlane.xlu0 %2799
        %v2801 = vsel %vm2327, %v2793, -inf
        %2802 = vmax.xlane.f32.xlu0 %v2801
        %v2803 = vpop.xlane.xlu0 %2802
        %v2804 = vsel %vm2327, %v2794, -inf
        %2805 = vmax.xlane.f32.xlu0 %v2804
        %v2806 = vpop.xlane.xlu0 %2805
        %v2807 = vsub.f32 %v2791, %v2797
        %v2808 = vsub.f32 %v2792, %v2800
        %v2809 = vsub.f32 %v2793, %v2803
        %v2810 = vsub.f32 %v2794, %v2806
        %v2811 = vmul.f32 %v2807, 1.442695
        %v2812 = vpow.pop %v2811
        %v2813 = vmul.f32 %v2808, 1.442695
        %v2814 = vpow.pop %v2813
        %v2815 = vmul.f32 %v2809, 1.442695
        %v2816 = vpow.pop %v2815
        %v2817 = vmul.f32 %v2810, 1.442695
        %v2818 = vpow.pop %v2817
        %v2819 = vsel %vm2327, %v2812, 0.0
        %2820 = vadd.xlane.f32.xlu0 %v2819
        %v2821 = vpop.xlane.xlu0 %2820
        %v2822 = vsel %vm2327, %v2814, 0.0
        %2823 = vadd.xlane.f32.xlu0 %v2822
        %v2824 = vpop.xlane.xlu0 %2823
        %v2825 = vsel %vm2327, %v2816, 0.0
        %2826 = vadd.xlane.f32.xlu0 %v2825
        %v2827 = vpop.xlane.xlu0 %2826
        %v2828 = vsel %vm2327, %v2818, 0.0
        %2829 = vadd.xlane.f32.xlu0 %v2828
        %v2830 = vpop.xlane.xlu0 %2829
        %v2831 = vrcp.pop %v2821
        %v2832 = vrcp.pop %v2824
        %v2833 = vrcp.pop %v2827
        %v2834 = vrcp.pop %v2830
        %v2835 = vmul.f32 %v2812, %v2831
        %v2836 = vmul.f32 %v2814, %v2832
        %v2837 = vmul.f32 %v2816, %v2833
        %v2838 = vmul.f32 %v2818, %v2834
        %2839 = vrot.lane.b32.xlu0 %v2300, 64
        %v2840 = vpop.permute.xlu0 %2839
        %2841 = vrot.lane.b32.xlu0 %v2303, 64
        %v2842 = vpop.permute.xlu0 %2841
        %2843 = vrot.lane.b32.xlu0 %v2306, 64
        %v2844 = vpop.permute.xlu0 %2843
        %2845 = vrot.lane.b32.xlu0 %v2309, 64
        %v2846 = vpop.permute.xlu0 %2845
        %v2852 = vsel %vm2327, %v2835, 0
        %v2855 = vsel %vm2327, %v2836, 0
        %v2858 = vsel %vm2327, %v2837, 0
        %v2861 = vsel %vm2327, %v2838, 0
        %2863 = vmatpush.msra.mxu0 0.0
        %2864 = vmatpush.msra.mxu0 0.0
        %2865 = vmatpush.msra.mxu0 0.0
        %2866 = vmatpush.msra.mxu0 0.0
        %2867 = vmatpush.msra.mxu0 0.0
        %2868 = vmatpush.msra.mxu0 0.0
        %2869 = vmatpush.msra.mxu0 0.0
        %2870 = vmatpush.msra.mxu0 0.0
        %2871 = vmatpush.msra.mxu0 0.0
        %2872 = vmatpush.msra.mxu0 0.0
        %2873 = vmatpush.msra.mxu0 0.0
        %2874 = vmatpush.msra.mxu0 0.0
        %2875 = vmatpush.msra.mxu0 %v2846
        %2876 = vmatpush.msra.mxu0 %v2844
        %2877 = vmatpush.msra.mxu0 %v2842
        %2878 = vmatpush.msra.mxu0 %v2840
        %2879 = vmatmul.f32.gmra.mxu0 %v2852
        %v2880 = vpop.f32.mrf.mxu0
        %v2881 = vadd.f32 0.0, %v2880
        %2882 = vmatmul.f32.gmra.mxu0 %v2855
        %v2883 = vpop.f32.mrf.mxu0
        %v2884 = vadd.f32 0.0, %v2883
        %2885 = vmatmul.f32.gmra.mxu0 %v2858
        %v2886 = vpop.f32.mrf.mxu0
        %v2887 = vadd.f32 0.0, %v2886
        %2888 = vmatmul.f32.gmra.mxu0 %v2861
        %v2889 = vpop.f32.mrf.mxu0
        %v2890 = vadd.f32 0.0, %v2889
        %2891 = vdwg.mxu0
        %v2893 = vsel %vm2327, %v2881, 0
        %v2896 = vsel %vm2327, %v2884, 0
        %v2899 = vsel %vm2327, %v2887, 0
        %v2902 = vsel %vm2327, %v2890, 0
        %2904 = vmatpush.msra.mxu0 0.0
        %2905 = vmatpush.msra.mxu0 0.0
        %2906 = vmatpush.msra.mxu0 0.0
        %2907 = vmatpush.msra.mxu0 0.0
        %2908 = vmatpush.msra.mxu0 0.0
        %2909 = vmatpush.msra.mxu0 0.0
        %2910 = vmatpush.msra.mxu0 0.0
        %2911 = vmatpush.msra.mxu0 0.0
        %2912 = vmatpush.msra.mxu0 0.0
        %2913 = vmatpush.msra.mxu0 0.0
        %2914 = vmatpush.msra.mxu0 0.0
        %2915 = vmatpush.msra.mxu0 0.0
        %2916 = vmatpush.msra.mxu0 %v2322
        %2917 = vmatpush.msra.mxu0 %v2321
        %2918 = vmatpush.msra.mxu0 %v2320
        %2919 = vmatpush.msra.mxu0 %v2319
        %2920 = vmatmul.f32.gmra.mxu0 %v2893
        %v2921 = vpop.f32.mrf.mxu0
        %v2922 = vadd.f32 0.0, %v2921
        %2923 = vmatmul.f32.gmra.mxu0 %v2896
        %v2924 = vpop.f32.mrf.mxu0
        %v2925 = vadd.f32 0.0, %v2924
        %2926 = vmatmul.f32.gmra.mxu0 %v2899
        %v2927 = vpop.f32.mrf.mxu0
        %v2928 = vadd.f32 0.0, %v2927
        %2929 = vmatmul.f32.gmra.mxu0 %v2902
        %v2930 = vpop.f32.mrf.mxu0
        %v2931 = vadd.f32 0.0, %v2930
        %2932 = vdwg.mxu0
        %v2933 = vadd.f32 %v2715, %v2922
        %v2934 = vadd.f32 %v2718, %v2925
        %v2935 = vadd.f32 %v2721, %v2928
        %v2936 = vadd.f32 %v2724, %v2931
        %2937 = vrot.lane.b32.xlu0 %v2242, 32
        %v2938 = vpop.permute.xlu0 %2937
        %2939 = vrot.lane.b32.xlu0 %v2245, 32
        %v2940 = vpop.permute.xlu0 %2939
        %2941 = vrot.lane.b32.xlu0 %v2248, 32
        %v2942 = vpop.permute.xlu0 %2941
        %2943 = vrot.lane.b32.xlu0 %v2251, 32
        %v2944 = vpop.permute.xlu0 %2943
        %2945 = vrot.lane.b32.xlu0 %v2271, 32
        %v2946 = vpop.permute.xlu0 %2945
        %2947 = vrot.lane.b32.xlu0 %v2274, 32
        %v2948 = vpop.permute.xlu0 %2947
        %2949 = vrot.lane.b32.xlu0 %v2277, 32
        %v2950 = vpop.permute.xlu0 %2949
        %2951 = vrot.lane.b32.xlu0 %v2280, 32
        %v2952 = vpop.permute.xlu0 %2951
        %v2953 = vsel %vm2327, %v2938, 0
        %v2955 = vsel %vm2327, %v2940, 0
        %v2957 = vsel %vm2327, %v2942, 0
        %v2959 = vsel %vm2327, %v2944, 0
        %v2961 = vsel %vm2327, %v2946, 0
        %v2963 = vsel %vm2327, %v2948, 0
        %v2965 = vsel %vm2327, %v2950, 0
        %v2967 = vsel %vm2327, %v2952, 0
        %2969 = vmatpush.xpose.msra.mxu0 0.0
        %2970 = vmatpush.xpose.msra.mxu0 0.0
        %2971 = vmatpush.xpose.msra.mxu0 0.0
        %2972 = vmatpush.xpose.msra.mxu0 0.0
        %2973 = vmatpush.xpose.msra.mxu0 0.0
        %2974 = vmatpush.xpose.msra.mxu0 0.0
        %2975 = vmatpush.xpose.msra.mxu0 0.0
        %2976 = vmatpush.xpose.msra.mxu0 0.0
        %2977 = vmatpush.xpose.msra.mxu0 0.0
        %2978 = vmatpush.xpose.msra.mxu0 0.0
        %2979 = vmatpush.xpose.msra.mxu0 0.0
        %2980 = vmatpush.xpose.msra.mxu0 0.0
        %2981 = vmatpush.xpose.msra.mxu0 %v2967
        %2982 = vmatpush.xpose.msra.mxu0 %v2965
        %2983 = vmatpush.xpose.msra.mxu0 %v2963
        %2984 = vmatpush.xpose.msra.mxu0 %v2961
        %2985 = vmatmul.f32.gmra.mxu0 %v2953
        %v2986 = vpop.f32.mrf.mxu0
        %v2987 = vadd.f32 0.0, %v2986
        %2988 = vmatmul.f32.gmra.mxu0 %v2955
        %v2989 = vpop.f32.mrf.mxu0
        %v2990 = vadd.f32 0.0, %v2989
        %2991 = vmatmul.f32.gmra.mxu0 %v2957
        %v2992 = vpop.f32.mrf.mxu0
        %v2993 = vadd.f32 0.0, %v2992
        %2994 = vmatmul.f32.gmra.mxu0 %v2959
        %v2995 = vpop.f32.mrf.mxu0
        %v2996 = vadd.f32 0.0, %v2995
        %2997 = vdwg.mxu0
        %v2998 = vmul.f32 %v2987, 0.17677669
        %v2999 = vmul.f32 %v2990, 0.17677669
        %v3000 = vmul.f32 %v2993, 0.17677669
        %v3001 = vmul.f32 %v2996, 0.17677669
        %v3002 = vadd.f32 %v2998, %v2068
        %v3003 = vadd.f32 %v2999, %v2068
        %v3004 = vadd.f32 %v3000, %v2068
        %v3005 = vadd.f32 %v3001, %v2068
        %v3006 = vsel %vm2327, %v3002, -inf
        %3007 = vmax.xlane.f32.xlu0 %v3006
        %v3008 = vpop.xlane.xlu0 %3007
        %v3009 = vsel %vm2327, %v3003, -inf
        %3010 = vmax.xlane.f32.xlu0 %v3009
        %v3011 = vpop.xlane.xlu0 %3010
        %v3012 = vsel %vm2327, %v3004, -inf
        %3013 = vmax.xlane.f32.xlu0 %v3012
        %v3014 = vpop.xlane.xlu0 %3013
        %v3015 = vsel %vm2327, %v3005, -inf
        %3016 = vmax.xlane.f32.xlu0 %v3015
        %v3017 = vpop.xlane.xlu0 %3016
        %v3018 = vsub.f32 %v3002, %v3008
        %v3019 = vsub.f32 %v3003, %v3011
        %v3020 = vsub.f32 %v3004, %v3014
        %v3021 = vsub.f32 %v3005, %v3017
        %v3022 = vmul.f32 %v3018, 1.442695
        %v3023 = vpow.pop %v3022
        %v3024 = vmul.f32 %v3019, 1.442695
        %v3025 = vpow.pop %v3024
        %v3026 = vmul.f32 %v3020, 1.442695
        %v3027 = vpow.pop %v3026
        %v3028 = vmul.f32 %v3021, 1.442695
        %v3029 = vpow.pop %v3028
        %v3030 = vsel %vm2327, %v3023, 0.0
        %3031 = vadd.xlane.f32.xlu0 %v3030
        %v3032 = vpop.xlane.xlu0 %3031
        %v3033 = vsel %vm2327, %v3025, 0.0
        %3034 = vadd.xlane.f32.xlu0 %v3033
        %v3035 = vpop.xlane.xlu0 %3034
        %v3036 = vsel %vm2327, %v3027, 0.0
        %3037 = vadd.xlane.f32.xlu0 %v3036
        %v3038 = vpop.xlane.xlu0 %3037
        %v3039 = vsel %vm2327, %v3029, 0.0
        %3040 = vadd.xlane.f32.xlu0 %v3039
        %v3041 = vpop.xlane.xlu0 %3040
        %v3042 = vrcp.pop %v3032
        %v3043 = vrcp.pop %v3035
        %v3044 = vrcp.pop %v3038
        %v3045 = vrcp.pop %v3041
        %v3046 = vmul.f32 %v3023, %v3042
        %v3047 = vmul.f32 %v3025, %v3043
        %v3048 = vmul.f32 %v3027, %v3044
        %v3049 = vmul.f32 %v3029, %v3045
        %3050 = vrot.lane.b32.xlu0 %v2300, 32
        %v3051 = vpop.permute.xlu0 %3050
        %3052 = vrot.lane.b32.xlu0 %v2303, 32
        %v3053 = vpop.permute.xlu0 %3052
        %3054 = vrot.lane.b32.xlu0 %v2306, 32
        %v3055 = vpop.permute.xlu0 %3054
        %3056 = vrot.lane.b32.xlu0 %v2309, 32
        %v3057 = vpop.permute.xlu0 %3056
        %v3063 = vsel %vm2327, %v3046, 0
        %v3066 = vsel %vm2327, %v3047, 0
        %v3069 = vsel %vm2327, %v3048, 0
        %v3072 = vsel %vm2327, %v3049, 0
        %3074 = vmatpush.msra.mxu0 0.0
        %3075 = vmatpush.msra.mxu0 0.0
        %3076 = vmatpush.msra.mxu0 0.0
        %3077 = vmatpush.msra.mxu0 0.0
        %3078 = vmatpush.msra.mxu0 0.0
        %3079 = vmatpush.msra.mxu0 0.0
        %3080 = vmatpush.msra.mxu0 0.0
        %3081 = vmatpush.msra.mxu0 0.0
        %3082 = vmatpush.msra.mxu0 0.0
        %3083 = vmatpush.msra.mxu0 0.0
        %3084 = vmatpush.msra.mxu0 0.0
        %3085 = vmatpush.msra.mxu0 0.0
        %3086 = vmatpush.msra.mxu0 %v3057
        %3087 = vmatpush.msra.mxu0 %v3055
        %3088 = vmatpush.msra.mxu0 %v3053
        %3089 = vmatpush.msra.mxu0 %v3051
        %3090 = vmatmul.f32.gmra.mxu0 %v3063
        %v3091 = vpop.f32.mrf.mxu0
        %v3092 = vadd.f32 0.0, %v3091
        %3093 = vmatmul.f32.gmra.mxu0 %v3066
        %v3094 = vpop.f32.mrf.mxu0
        %v3095 = vadd.f32 0.0, %v3094
        %3096 = vmatmul.f32.gmra.mxu0 %v3069
        %v3097 = vpop.f32.mrf.mxu0
        %v3098 = vadd.f32 0.0, %v3097
        %3099 = vmatmul.f32.gmra.mxu0 %v3072
        %v3100 = vpop.f32.mrf.mxu0
        %v3101 = vadd.f32 0.0, %v3100
        %3102 = vdwg.mxu0
        %v3104 = vsel %vm2327, %v3092, 0
        %v3107 = vsel %vm2327, %v3095, 0
        %v3110 = vsel %vm2327, %v3098, 0
        %v3113 = vsel %vm2327, %v3101, 0
        %3115 = vmatpush.msra.mxu0 0.0
        %3116 = vmatpush.msra.mxu0 0.0
        %3117 = vmatpush.msra.mxu0 0.0
        %3118 = vmatpush.msra.mxu0 0.0
        %3119 = vmatpush.msra.mxu0 0.0
        %3120 = vmatpush.msra.mxu0 0.0
        %3121 = vmatpush.msra.mxu0 0.0
        %3122 = vmatpush.msra.mxu0 0.0
        %3123 = vmatpush.msra.mxu0 0.0
        %3124 = vmatpush.msra.mxu0 0.0
        %3125 = vmatpush.msra.mxu0 0.0
        %3126 = vmatpush.msra.mxu0 0.0
        %3127 = vmatpush.msra.mxu0 %v2326
        %3128 = vmatpush.msra.mxu0 %v2325
        %3129 = vmatpush.msra.mxu0 %v2324
        %3130 = vmatpush.msra.mxu0 %v2323
        %3131 = vmatmul.f32.gmra.mxu0 %v3104
        %v3132 = vpop.f32.mrf.mxu0
        %v3133 = vadd.f32 0.0, %v3132
        %3134 = vmatmul.f32.gmra.mxu0 %v3107
        %v3135 = vpop.f32.mrf.mxu0
        %v3136 = vadd.f32 0.0, %v3135
        %3137 = vmatmul.f32.gmra.mxu0 %v3110
        %v3138 = vpop.f32.mrf.mxu0
        %v3139 = vadd.f32 0.0, %v3138
        %3140 = vmatmul.f32.gmra.mxu0 %v3113
        %v3141 = vpop.f32.mrf.mxu0
        %v3142 = vadd.f32 0.0, %v3141
        %3143 = vdwg.mxu0
        %v3144 = vadd.f32 %v2933, %v3133
        %v3145 = vadd.f32 %v2934, %v3136
        %v3146 = vadd.f32 %v2935, %v3139
        %v3147 = vadd.f32 %v2936, %v3142
        %v3148 = vadd.f32 %v2061, %v3144
        %v3149 = vadd.f32 %v2062, %v3145
        %v3150 = vadd.f32 %v2063, %v3146
        %v3151 = vadd.f32 %v2064, %v3147
        %v3152 = vld [vmem:[%s49] sm:$0x1]
        %v3153 = vperm.slane %v3152, 0
        %v3154 = vadd.f32 %v3148, %v3153
        %v3155 = vadd.f32 %v3149, %v3153
        %v3156 = vadd.f32 %v3150, %v3153
        %v3157 = vadd.f32 %v3151, %v3153
        %v3158 = vld [vmem:[%s51] sm:$0x1]
        %v3159 = vld [vmem:[#allocation23] sm:$0x1]
        %3160 = vadd.xlane.f32.xlu0 %v3154
        %v3161 = vpop.xlane.xlu0 %3160
        %3162 = vadd.xlane.f32.xlu0 %v3155
        %v3163 = vpop.xlane.xlu0 %3162
        %3164 = vadd.xlane.f32.xlu0 %v3156
        %v3165 = vpop.xlane.xlu0 %3164
        %3166 = vadd.xlane.f32.xlu0 %v3157
        %v3167 = vpop.xlane.xlu0 %3166
        %v3168 = vmul.f32 %v3161, %v2085
        %v3169 = vmul.f32 %v3163, %v2085
        %v3170 = vmul.f32 %v3165, %v2085
        %v3171 = vmul.f32 %v3167, %v2085
        %v3172 = vsub.f32 %v3154, %v3168
        %v3173 = vsub.f32 %v3155, %v3169
        %v3174 = vsub.f32 %v3156, %v3170
        %v3175 = vsub.f32 %v3157, %v3171
        %v3176 = vmul.f32 %v3172, %v3172
        %v3177 = vmul.f32 %v3173, %v3173
        %v3178 = vmul.f32 %v3174, %v3174
        %v3179 = vmul.f32 %v3175, %v3175
        %3180 = vadd.xlane.f32.xlu0 %v3176
        %v3181 = vpop.xlane.xlu0 %3180
        %3182 = vadd.xlane.f32.xlu0 %v3177
        %v3183 = vpop.xlane.xlu0 %3182
        %3184 = vadd.xlane.f32.xlu0 %v3178
        %v3185 = vpop.xlane.xlu0 %3184
        %3186 = vadd.xlane.f32.xlu0 %v3179
        %v3187 = vpop.xlane.xlu0 %3186
        %v3188 = vmul.f32 %v3181, %v2085
        %v3189 = vmul.f32 %v3183, %v2085
        %v3190 = vmul.f32 %v3185, %v2085
        %v3191 = vmul.f32 %v3187, %v2085
        %v3192 = vadd.f32 %v3188, 1e-05
        %v3193 = vadd.f32 %v3189, 1e-05
        %v3194 = vadd.f32 %v3190, 1e-05
        %v3195 = vadd.f32 %v3191, 1e-05
        %v3196 = vrsqrt.pop %v3192
        %v3197 = vmul.f32 %v3196, %v3192
        %v3198 = vmul.f32 %v3197, %v3196
        %v3199 = vmul.f32 0.5, %v3198
        %v3200 = vsub.f32 1.5, %v3199
        %v3201 = vmul.f32 %v3196, %v3200
        %vm3202 = vweird.f32 %v3192
        %vm3203 = vweird.f32 %v3196
        %vm3204 = vmor %vm3202, %vm3203
        %v3205 = vsel %vm3204, %v3196, %v3201
        %v3206 = vrsqrt.pop %v3193
        %v3207 = vmul.f32 %v3206, %v3193
        %v3208 = vmul.f32 %v3207, %v3206
        %v3209 = vmul.f32 0.5, %v3208
        %v3210 = vsub.f32 1.5, %v3209
        %v3211 = vmul.f32 %v3206, %v3210
        %vm3212 = vweird.f32 %v3193
        %vm3213 = vweird.f32 %v3206
        %vm3214 = vmor %vm3212, %vm3213
        %v3215 = vsel %vm3214, %v3206, %v3211
        %v3216 = vrsqrt.pop %v3194
        %v3217 = vmul.f32 %v3216, %v3194
        %v3218 = vmul.f32 %v3217, %v3216
        %v3219 = vmul.f32 0.5, %v3218
        %v3220 = vsub.f32 1.5, %v3219
        %v3221 = vmul.f32 %v3216, %v3220
        %vm3222 = vweird.f32 %v3194
        %vm3223 = vweird.f32 %v3216
        %vm3224 = vmor %vm3222, %vm3223
        %v3225 = vsel %vm3224, %v3216, %v3221
        %v3226 = vrsqrt.pop %v3195
        %v3227 = vmul.f32 %v3226, %v3195
        %v3228 = vmul.f32 %v3227, %v3226
        %v3229 = vmul.f32 0.5, %v3228
        %v3230 = vsub.f32 1.5, %v3229
        %v3231 = vmul.f32 %v3226, %v3230
        %vm3232 = vweird.f32 %v3195
        %vm3233 = vweird.f32 %v3226
        %vm3234 = vmor %vm3232, %vm3233
        %v3235 = vsel %vm3234, %v3226, %v3231
        %v3236 = vmul.f32 %v3172, %v3205
        %v3237 = vmul.f32 %v3173, %v3215
        %v3238 = vmul.f32 %v3174, %v3225
        %v3239 = vmul.f32 %v3175, %v3235
        %v3240 = vperm.slane %v3158, 0
        %v3241 = vmul.f32 %v3236, %v3240
        %v3242 = vmul.f32 %v3237, %v3240
        %v3243 = vmul.f32 %v3238, %v3240
        %v3244 = vmul.f32 %v3239, %v3240
        %v3245 = vperm.slane %v3159, 0
        %v3246 = vadd.f32 %v3241, %v3245
        %v3247 = vadd.f32 %v3242, %v3245
        %v3248 = vadd.f32 %v3243, %v3245
        %v3249 = vadd.f32 %v3244, %v3245
        %v3250 = vld [vmem:[#allocation25] sm:$0xff]
        %v3251 = vld [vmem:[#allocation25 + $0x8] sm:$0xff]
        %v3252 = vld [vmem:[#allocation25 + $0x10] sm:$0xff]
        %v3253 = vld [vmem:[#allocation25 + $0x18] sm:$0xff]
        %v3254 = vld [vmem:[#allocation25 + $0x20] sm:$0xff]
        %v3255 = vld [vmem:[#allocation25 + $0x28] sm:$0xff]
        %v3256 = vld [vmem:[#allocation25 + $0x30] sm:$0xff]
        %v3257 = vld [vmem:[#allocation25 + $0x38] sm:$0xff]
        %v3258 = vld [vmem:[#allocation25 + $0x40] sm:$0xff]
        %v3259 = vld [vmem:[#allocation25 + $0x48] sm:$0xff]
        %v3260 = vld [vmem:[#allocation25 + $0x50] sm:$0xff]
        %v3261 = vld [vmem:[#allocation25 + $0x58] sm:$0xff]
        %v3262 = vld [vmem:[#allocation25 + $0x60] sm:$0xff]
        %v3263 = vld [vmem:[#allocation25 + $0x68] sm:$0xff]
        %v3264 = vld [vmem:[#allocation25 + $0x70] sm:$0xff]
        %v3265 = vld [vmem:[#allocation25 + $0x78] sm:$0xff]
        %v3266 = vld [vmem:[#allocation25 + $0x80] sm:$0xff]
        %v3267 = vld [vmem:[#allocation25 + $0x88] sm:$0xff]
        %v3268 = vld [vmem:[#allocation25 + $0x90] sm:$0xff]
        %v3269 = vld [vmem:[#allocation25 + $0x98] sm:$0xff]
        %v3270 = vld [vmem:[#allocation25 + $0xa0] sm:$0xff]
        %v3271 = vld [vmem:[#allocation25 + $0xa8] sm:$0xff]
        %v3272 = vld [vmem:[#allocation25 + $0xb0] sm:$0xff]
        %v3273 = vld [vmem:[#allocation25 + $0xb8] sm:$0xff]
        %v3274 = vld [vmem:[#allocation25 + $0xc0] sm:$0xff]
        %v3275 = vld [vmem:[#allocation25 + $0xc8] sm:$0xff]
        %v3276 = vld [vmem:[#allocation25 + $0xd0] sm:$0xff]
        %v3277 = vld [vmem:[#allocation25 + $0xd8] sm:$0xff]
        %v3278 = vld [vmem:[#allocation25 + $0xe0] sm:$0xff]
        %v3279 = vld [vmem:[#allocation25 + $0xe8] sm:$0xff]
        %v3280 = vld [vmem:[#allocation25 + $0xf0] sm:$0xff]
        %v3281 = vld [vmem:[#allocation25 + $0xf8] sm:$0xff]
        %v3282 = vld [vmem:[#allocation25 + $0x100] sm:$0xff]
        %v3283 = vld [vmem:[#allocation25 + $0x108] sm:$0xff]
        %v3284 = vld [vmem:[#allocation25 + $0x110] sm:$0xff]
        %v3285 = vld [vmem:[#allocation25 + $0x118] sm:$0xff]
        %v3286 = vld [vmem:[#allocation25 + $0x120] sm:$0xff]
        %v3287 = vld [vmem:[#allocation25 + $0x128] sm:$0xff]
        %v3288 = vld [vmem:[#allocation25 + $0x130] sm:$0xff]
        %v3289 = vld [vmem:[#allocation25 + $0x138] sm:$0xff]
        %v3290 = vld [vmem:[#allocation25 + $0x140] sm:$0xff]
        %v3291 = vld [vmem:[#allocation25 + $0x148] sm:$0xff]
        %v3292 = vld [vmem:[#allocation25 + $0x150] sm:$0xff]
        %v3293 = vld [vmem:[#allocation25 + $0x158] sm:$0xff]
        %v3294 = vld [vmem:[#allocation25 + $0x160] sm:$0xff]
        %v3295 = vld [vmem:[#allocation25 + $0x168] sm:$0xff]
        %v3296 = vld [vmem:[#allocation25 + $0x170] sm:$0xff]
        %v3297 = vld [vmem:[#allocation25 + $0x178] sm:$0xff]
        %v3298 = vld [vmem:[#allocation25 + $0x180] sm:$0xff]
        %v3299 = vld [vmem:[#allocation25 + $0x188] sm:$0xff]
        %v3300 = vld [vmem:[#allocation25 + $0x190] sm:$0xff]
        %v3301 = vld [vmem:[#allocation25 + $0x198] sm:$0xff]
        %v3302 = vld [vmem:[#allocation25 + $0x1a0] sm:$0xff]
        %v3303 = vld [vmem:[#allocation25 + $0x1a8] sm:$0xff]
        %v3304 = vld [vmem:[#allocation25 + $0x1b0] sm:$0xff]
        %v3305 = vld [vmem:[#allocation25 + $0x1b8] sm:$0xff]
        %v3306 = vld [vmem:[#allocation25 + $0x1c0] sm:$0xff]
        %v3307 = vld [vmem:[#allocation25 + $0x1c8] sm:$0xff]
        %v3308 = vld [vmem:[#allocation25 + $0x1d0] sm:$0xff]
        %v3309 = vld [vmem:[#allocation25 + $0x1d8] sm:$0xff]
        %v3310 = vld [vmem:[#allocation25 + $0x1e0] sm:$0xff]
        %v3311 = vld [vmem:[#allocation25 + $0x1e8] sm:$0xff]
        %v3312 = vld [vmem:[#allocation25 + $0x1f0] sm:$0xff]
        %v3313 = vld [vmem:[#allocation25 + $0x1f8] sm:$0xff]
        %v3314 = vld [vmem:[%s57] ss:$2 sm:$0xf]
        %v3316 = vperm.slane %v3314, 0
        %v3317 = vperm.slane %v3314, 1
        %v3318 = vperm.slane %v3314, 2
        %v3319 = vperm.slane %v3314, 3
        %3324 = vmatpush.msra.mxu0 %v3310
        %3325 = vmatpush.msra.mxu0 %v3306
        %3326 = vmatpush.msra.mxu0 %v3302
        %3327 = vmatpush.msra.mxu0 %v3298
        %3328 = vmatpush.msra.mxu0 %v3294
        %3329 = vmatpush.msra.mxu0 %v3290
        %3330 = vmatpush.msra.mxu0 %v3286
        %3331 = vmatpush.msra.mxu0 %v3282
        %3332 = vmatpush.msra.mxu0 %v3278
        %3333 = vmatpush.msra.mxu0 %v3274
        %3334 = vmatpush.msra.mxu0 %v3270
        %3335 = vmatpush.msra.mxu0 %v3266
        %3336 = vmatpush.msra.mxu0 %v3262
        %3337 = vmatpush.msra.mxu0 %v3258
        %3338 = vmatpush.msra.mxu0 %v3254
        %3339 = vmatpush.msra.mxu0 %v3250
        %3340 = vmatmul.f32.gmra.mxu0 %v3246
        %v3341 = vpop.f32.mrf.mxu0
        %v3342 = vadd.f32 %v3316, %v3341
        %3343 = vmatmul.f32.gmra.mxu0 %v3247
        %v3344 = vpop.f32.mrf.mxu0
        %v3345 = vadd.f32 %v3316, %v3344
        %3346 = vmatmul.f32.gmra.mxu0 %v3248
        %v3347 = vpop.f32.mrf.mxu0
        %v3348 = vadd.f32 %v3316, %v3347
        %3349 = vmatmul.f32.gmra.mxu0 %v3249
        %v3350 = vpop.f32.mrf.mxu0
        %v3351 = vadd.f32 %v3316, %v3350
        %3352 = vdwg.mxu0
        %3353 = vmatpush.msra.mxu0 %v3311
        %3354 = vmatpush.msra.mxu0 %v3307
        %3355 = vmatpush.msra.mxu0 %v3303
        %3356 = vmatpush.msra.mxu0 %v3299
        %3357 = vmatpush.msra.mxu0 %v3295
        %3358 = vmatpush.msra.mxu0 %v3291
        %3359 = vmatpush.msra.mxu0 %v3287
        %3360 = vmatpush.msra.mxu0 %v3283
        %3361 = vmatpush.msra.mxu0 %v3279
        %3362 = vmatpush.msra.mxu0 %v3275
        %3363 = vmatpush.msra.mxu0 %v3271
        %3364 = vmatpush.msra.mxu0 %v3267
        %3365 = vmatpush.msra.mxu0 %v3263
        %3366 = vmatpush.msra.mxu0 %v3259
        %3367 = vmatpush.msra.mxu0 %v3255
        %3368 = vmatpush.msra.mxu0 %v3251
        %3369 = vmatmul.f32.gmra.mxu0 %v3246
        %v3370 = vpop.f32.mrf.mxu0
        %v3371 = vadd.f32 %v3317, %v3370
        %3372 = vmatmul.f32.gmra.mxu0 %v3247
        %v3373 = vpop.f32.mrf.mxu0
        %v3374 = vadd.f32 %v3317, %v3373
        %3375 = vmatmul.f32.gmra.mxu0 %v3248
        %v3376 = vpop.f32.mrf.mxu0
        %v3377 = vadd.f32 %v3317, %v3376
        %3378 = vmatmul.f32.gmra.mxu0 %v3249
        %v3379 = vpop.f32.mrf.mxu0
        %v3380 = vadd.f32 %v3317, %v3379
        %3381 = vdwg.mxu0
        %3382 = vmatpush.msra.mxu0 %v3312
        %3383 = vmatpush.msra.mxu0 %v3308
        %3384 = vmatpush.msra.mxu0 %v3304
        %3385 = vmatpush.msra.mxu0 %v3300
        %3386 = vmatpush.msra.mxu0 %v3296
        %3387 = vmatpush.msra.mxu0 %v3292
        %3388 = vmatpush.msra.mxu0 %v3288
        %3389 = vmatpush.msra.mxu0 %v3284
        %3390 = vmatpush.msra.mxu0 %v3280
        %3391 = vmatpush.msra.mxu0 %v3276
        %3392 = vmatpush.msra.mxu0 %v3272
        %3393 = vmatpush.msra.mxu0 %v3268
        %3394 = vmatpush.msra.mxu0 %v3264
        %3395 = vmatpush.msra.mxu0 %v3260
        %3396 = vmatpush.msra.mxu0 %v3256
        %3397 = vmatpush.msra.mxu0 %v3252
        %3398 = vmatmul.f32.gmra.mxu0 %v3246
        %v3399 = vpop.f32.mrf.mxu0
        %v3400 = vadd.f32 %v3318, %v3399
        %3401 = vmatmul.f32.gmra.mxu0 %v3247
        %v3402 = vpop.f32.mrf.mxu0
        %v3403 = vadd.f32 %v3318, %v3402
        %3404 = vmatmul.f32.gmra.mxu0 %v3248
        %v3405 = vpop.f32.mrf.mxu0
        %v3406 = vadd.f32 %v3318, %v3405
        %3407 = vmatmul.f32.gmra.mxu0 %v3249
        %v3408 = vpop.f32.mrf.mxu0
        %v3409 = vadd.f32 %v3318, %v3408
        %3410 = vdwg.mxu0
        %3411 = vmatpush.msra.mxu0 %v3313
        %3412 = vmatpush.msra.mxu0 %v3309
        %3413 = vmatpush.msra.mxu0 %v3305
        %3414 = vmatpush.msra.mxu0 %v3301
        %3415 = vmatpush.msra.mxu0 %v3297
        %3416 = vmatpush.msra.mxu0 %v3293
        %3417 = vmatpush.msra.mxu0 %v3289
        %3418 = vmatpush.msra.mxu0 %v3285
        %3419 = vmatpush.msra.mxu0 %v3281
        %3420 = vmatpush.msra.mxu0 %v3277
        %3421 = vmatpush.msra.mxu0 %v3273
        %3422 = vmatpush.msra.mxu0 %v3269
        %3423 = vmatpush.msra.mxu0 %v3265
        %3424 = vmatpush.msra.mxu0 %v3261
        %3425 = vmatpush.msra.mxu0 %v3257
        %3426 = vmatpush.msra.mxu0 %v3253
        %3427 = vmatmul.f32.gmra.mxu0 %v3246
        %v3428 = vpop.f32.mrf.mxu0
        %v3429 = vadd.f32 %v3319, %v3428
        %3430 = vmatmul.f32.gmra.mxu0 %v3247
        %v3431 = vpop.f32.mrf.mxu0
        %v3432 = vadd.f32 %v3319, %v3431
        %3433 = vmatmul.f32.gmra.mxu0 %v3248
        %v3434 = vpop.f32.mrf.mxu0
        %v3435 = vadd.f32 %v3319, %v3434
        %3436 = vmatmul.f32.gmra.mxu0 %v3249
        %v3437 = vpop.f32.mrf.mxu0
        %v3438 = vadd.f32 %v3319, %v3437
        %3439 = vdwg.mxu0
        %v3440 = vmul.f32 %v3342, 1.702
        %v3441 = vmul.f32 %v3371, 1.702
        %v3442 = vmul.f32 %v3400, 1.702
        %v3443 = vmul.f32 %v3429, 1.702
        %v3444 = vmul.f32 %v3345, 1.702
        %v3445 = vmul.f32 %v3374, 1.702
        %v3446 = vmul.f32 %v3403, 1.702
        %v3447 = vmul.f32 %v3432, 1.702
        %v3448 = vmul.f32 %v3348, 1.702
        %v3449 = vmul.f32 %v3377, 1.702
        %v3450 = vmul.f32 %v3406, 1.702
        %v3451 = vmul.f32 %v3435, 1.702
        %v3452 = vmul.f32 %v3351, 1.702
        %v3453 = vmul.f32 %v3380, 1.702
        %v3454 = vmul.f32 %v3409, 1.702
        %v3455 = vmul.f32 %v3438, 1.702
        %v3456 = vxor.u32 %v3440, 2147483648
        %v3457 = vxor.u32 %v3441, 2147483648
        %v3458 = vxor.u32 %v3442, 2147483648
        %v3459 = vxor.u32 %v3443, 2147483648
        %v3460 = vxor.u32 %v3444, 2147483648
        %v3461 = vxor.u32 %v3445, 2147483648
        %v3462 = vxor.u32 %v3446, 2147483648
        %v3463 = vxor.u32 %v3447, 2147483648
        %v3464 = vxor.u32 %v3448, 2147483648
        %v3465 = vxor.u32 %v3449, 2147483648
        %v3466 = vxor.u32 %v3450, 2147483648
        %v3467 = vxor.u32 %v3451, 2147483648
        %v3468 = vxor.u32 %v3452, 2147483648
        %v3469 = vxor.u32 %v3453, 2147483648
        %v3470 = vxor.u32 %v3454, 2147483648
        %v3471 = vxor.u32 %v3455, 2147483648
        %v3472 = vmul.f32 %v3456, 1.442695
        %v3473 = vpow.pop %v3472
        %v3474 = vmul.f32 %v3457, 1.442695
        %v3475 = vpow.pop %v3474
        %v3476 = vmul.f32 %v3458, 1.442695
        %v3477 = vpow.pop %v3476
        %v3478 = vmul.f32 %v3459, 1.442695
        %v3479 = vpow.pop %v3478
        %v3480 = vmul.f32 %v3460, 1.442695
        %v3481 = vpow.pop %v3480
        %v3482 = vmul.f32 %v3461, 1.442695
        %v3483 = vpow.pop %v3482
        %v3484 = vmul.f32 %v3462, 1.442695
        %v3485 = vpow.pop %v3484
        %v3486 = vmul.f32 %v3463, 1.442695
        %v3487 = vpow.pop %v3486
        %v3488 = vmul.f32 %v3464, 1.442695
        %v3489 = vpow.pop %v3488
        %v3490 = vmul.f32 %v3465, 1.442695
        %v3491 = vpow.pop %v3490
        %v3492 = vmul.f32 %v3466, 1.442695
        %v3493 = vpow.pop %v3492
        %v3494 = vmul.f32 %v3467, 1.442695
        %v3495 = vpow.pop %v3494
        %v3496 = vmul.f32 %v3468, 1.442695
        %v3497 = vpow.pop %v3496
        %v3498 = vmul.f32 %v3469, 1.442695
        %v3499 = vpow.pop %v3498
        %v3500 = vmul.f32 %v3470, 1.442695
        %v3501 = vpow.pop %v3500
        %v3502 = vmul.f32 %v3471, 1.442695
        %v3503 = vpow.pop %v3502
        %v3504 = vadd.f32 %v3473, 1.0
        %v3505 = vadd.f32 %v3475, 1.0
        %v3506 = vadd.f32 %v3477, 1.0
        %v3507 = vadd.f32 %v3479, 1.0
        %v3508 = vadd.f32 %v3481, 1.0
        %v3509 = vadd.f32 %v3483, 1.0
        %v3510 = vadd.f32 %v3485, 1.0
        %v3511 = vadd.f32 %v3487, 1.0
        %v3512 = vadd.f32 %v3489, 1.0
        %v3513 = vadd.f32 %v3491, 1.0
        %v3514 = vadd.f32 %v3493, 1.0
        %v3515 = vadd.f32 %v3495, 1.0
        %v3516 = vadd.f32 %v3497, 1.0
        %v3517 = vadd.f32 %v3499, 1.0
        %v3518 = vadd.f32 %v3501, 1.0
        %v3519 = vadd.f32 %v3503, 1.0
        %v3520 = vrcp.pop %v3504
        %v3521 = vmul.f32 %v3504, %v3520
        %v3522 = vsub.f32 1.0, %v3521
        %v3523 = vmul.f32 %v3520, %v3522
        %v3524 = vadd.f32 %v3520, %v3523
        %vm3525 = vweird.f32 %v3504
        %vm3526 = vweird.f32 %v3520
        %vm3527 = vmor %vm3525, %vm3526
        %v3528 = vsel %vm3527, %v3520, %v3524
        %v3529 = vand.u32 2147483647, %v3504
        %vm3530 = vcmp.eq.f32.partialorder %v3529, 8.507059e+37
        %v3531 = vand.u32 %v3504, 2147483648
        %v3532 = vor.u32 1.1754944e-38, %v3531
        %v3533 = vsel %vm3530, %v3532, %v3528
        %v3534 = vmul.f32 1.0, %v3533
        %v3535 = vrcp.pop %v3505
        %v3536 = vmul.f32 %v3505, %v3535
        %v3537 = vsub.f32 1.0, %v3536
        %v3538 = vmul.f32 %v3535, %v3537
        %v3539 = vadd.f32 %v3535, %v3538
        %vm3540 = vweird.f32 %v3505
        %vm3541 = vweird.f32 %v3535
        %vm3542 = vmor %vm3540, %vm3541
        %v3543 = vsel %vm3542, %v3535, %v3539
        %v3544 = vand.u32 2147483647, %v3505
        %vm3545 = vcmp.eq.f32.partialorder %v3544, 8.507059e+37
        %v3546 = vand.u32 %v3505, 2147483648
        %v3547 = vor.u32 1.1754944e-38, %v3546
        %v3548 = vsel %vm3545, %v3547, %v3543
        %v3549 = vmul.f32 1.0, %v3548
        %v3550 = vrcp.pop %v3506
        %v3551 = vmul.f32 %v3506, %v3550
        %v3552 = vsub.f32 1.0, %v3551
        %v3553 = vmul.f32 %v3550, %v3552
        %v3554 = vadd.f32 %v3550, %v3553
        %vm3555 = vweird.f32 %v3506
        %vm3556 = vweird.f32 %v3550
        %vm3557 = vmor %vm3555, %vm3556
        %v3558 = vsel %vm3557, %v3550, %v3554
        %v3559 = vand.u32 2147483647, %v3506
        %vm3560 = vcmp.eq.f32.partialorder %v3559, 8.507059e+37
        %v3561 = vand.u32 %v3506, 2147483648
        %v3562 = vor.u32 1.1754944e-38, %v3561
        %v3563 = vsel %vm3560, %v3562, %v3558
        %v3564 = vmul.f32 1.0, %v3563
        %v3565 = vrcp.pop %v3507
        %v3566 = vmul.f32 %v3507, %v3565
        %v3567 = vsub.f32 1.0, %v3566
        %v3568 = vmul.f32 %v3565, %v3567
        %v3569 = vadd.f32 %v3565, %v3568
        %vm3570 = vweird.f32 %v3507
        %vm3571 = vweird.f32 %v3565
        %vm3572 = vmor %vm3570, %vm3571
        %v3573 = vsel %vm3572, %v3565, %v3569
        %v3574 = vand.u32 2147483647, %v3507
        %vm3575 = vcmp.eq.f32.partialorder %v3574, 8.507059e+37
        %v3576 = vand.u32 %v3507, 2147483648
        %v3577 = vor.u32 1.1754944e-38, %v3576
        %v3578 = vsel %vm3575, %v3577, %v3573
        %v3579 = vmul.f32 1.0, %v3578
        %v3580 = vrcp.pop %v3508
        %v3581 = vmul.f32 %v3508, %v3580
        %v3582 = vsub.f32 1.0, %v3581
        %v3583 = vmul.f32 %v3580, %v3582
        %v3584 = vadd.f32 %v3580, %v3583
        %vm3585 = vweird.f32 %v3508
        %vm3586 = vweird.f32 %v3580
        %vm3587 = vmor %vm3585, %vm3586
        %v3588 = vsel %vm3587, %v3580, %v3584
        %v3589 = vand.u32 2147483647, %v3508
        %vm3590 = vcmp.eq.f32.partialorder %v3589, 8.507059e+37
        %v3591 = vand.u32 %v3508, 2147483648
        %v3592 = vor.u32 1.1754944e-38, %v3591
        %v3593 = vsel %vm3590, %v3592, %v3588
        %v3594 = vmul.f32 1.0, %v3593
        %v3595 = vrcp.pop %v3509
        %v3596 = vmul.f32 %v3509, %v3595
        %v3597 = vsub.f32 1.0, %v3596
        %v3598 = vmul.f32 %v3595, %v3597
        %v3599 = vadd.f32 %v3595, %v3598
        %vm3600 = vweird.f32 %v3509
        %vm3601 = vweird.f32 %v3595
        %vm3602 = vmor %vm3600, %vm3601
        %v3603 = vsel %vm3602, %v3595, %v3599
        %v3604 = vand.u32 2147483647, %v3509
        %vm3605 = vcmp.eq.f32.partialorder %v3604, 8.507059e+37
        %v3606 = vand.u32 %v3509, 2147483648
        %v3607 = vor.u32 1.1754944e-38, %v3606
        %v3608 = vsel %vm3605, %v3607, %v3603
        %v3609 = vmul.f32 1.0, %v3608
        %v3610 = vrcp.pop %v3510
        %v3611 = vmul.f32 %v3510, %v3610
        %v3612 = vsub.f32 1.0, %v3611
        %v3613 = vmul.f32 %v3610, %v3612
        %v3614 = vadd.f32 %v3610, %v3613
        %vm3615 = vweird.f32 %v3510
        %vm3616 = vweird.f32 %v3610
        %vm3617 = vmor %vm3615, %vm3616
        %v3618 = vsel %vm3617, %v3610, %v3614
        %v3619 = vand.u32 2147483647, %v3510
        %vm3620 = vcmp.eq.f32.partialorder %v3619, 8.507059e+37
        %v3621 = vand.u32 %v3510, 2147483648
        %v3622 = vor.u32 1.1754944e-38, %v3621
        %v3623 = vsel %vm3620, %v3622, %v3618
        %v3624 = vmul.f32 1.0, %v3623
        %v3625 = vrcp.pop %v3511
        %v3626 = vmul.f32 %v3511, %v3625
        %v3627 = vsub.f32 1.0, %v3626
        %v3628 = vmul.f32 %v3625, %v3627
        %v3629 = vadd.f32 %v3625, %v3628
        %vm3630 = vweird.f32 %v3511
        %vm3631 = vweird.f32 %v3625
        %vm3632 = vmor %vm3630, %vm3631
        %v3633 = vsel %vm3632, %v3625, %v3629
        %v3634 = vand.u32 2147483647, %v3511
        %vm3635 = vcmp.eq.f32.partialorder %v3634, 8.507059e+37
        %v3636 = vand.u32 %v3511, 2147483648
        %v3637 = vor.u32 1.1754944e-38, %v3636
        %v3638 = vsel %vm3635, %v3637, %v3633
        %v3639 = vmul.f32 1.0, %v3638
        %v3640 = vrcp.pop %v3512
        %v3641 = vmul.f32 %v3512, %v3640
        %v3642 = vsub.f32 1.0, %v3641
        %v3643 = vmul.f32 %v3640, %v3642
        %v3644 = vadd.f32 %v3640, %v3643
        %vm3645 = vweird.f32 %v3512
        %vm3646 = vweird.f32 %v3640
        %vm3647 = vmor %vm3645, %vm3646
        %v3648 = vsel %vm3647, %v3640, %v3644
        %v3649 = vand.u32 2147483647, %v3512
        %vm3650 = vcmp.eq.f32.partialorder %v3649, 8.507059e+37
        %v3651 = vand.u32 %v3512, 2147483648
        %v3652 = vor.u32 1.1754944e-38, %v3651
        %v3653 = vsel %vm3650, %v3652, %v3648
        %v3654 = vmul.f32 1.0, %v3653
        %v3655 = vrcp.pop %v3513
        %v3656 = vmul.f32 %v3513, %v3655
        %v3657 = vsub.f32 1.0, %v3656
        %v3658 = vmul.f32 %v3655, %v3657
        %v3659 = vadd.f32 %v3655, %v3658
        %vm3660 = vweird.f32 %v3513
        %vm3661 = vweird.f32 %v3655
        %vm3662 = vmor %vm3660, %vm3661
        %v3663 = vsel %vm3662, %v3655, %v3659
        %v3664 = vand.u32 2147483647, %v3513
        %vm3665 = vcmp.eq.f32.partialorder %v3664, 8.507059e+37
        %v3666 = vand.u32 %v3513, 2147483648
        %v3667 = vor.u32 1.1754944e-38, %v3666
        %v3668 = vsel %vm3665, %v3667, %v3663
        %v3669 = vmul.f32 1.0, %v3668
        %v3670 = vrcp.pop %v3514
        %v3671 = vmul.f32 %v3514, %v3670
        %v3672 = vsub.f32 1.0, %v3671
        %v3673 = vmul.f32 %v3670, %v3672
        %v3674 = vadd.f32 %v3670, %v3673
        %vm3675 = vweird.f32 %v3514
        %vm3676 = vweird.f32 %v3670
        %vm3677 = vmor %vm3675, %vm3676
        %v3678 = vsel %vm3677, %v3670, %v3674
        %v3679 = vand.u32 2147483647, %v3514
        %vm3680 = vcmp.eq.f32.partialorder %v3679, 8.507059e+37
        %v3681 = vand.u32 %v3514, 2147483648
        %v3682 = vor.u32 1.1754944e-38, %v3681
        %v3683 = vsel %vm3680, %v3682, %v3678
        %v3684 = vmul.f32 1.0, %v3683
        %v3685 = vrcp.pop %v3515
        %v3686 = vmul.f32 %v3515, %v3685
        %v3687 = vsub.f32 1.0, %v3686
        %v3688 = vmul.f32 %v3685, %v3687
        %v3689 = vadd.f32 %v3685, %v3688
        %vm3690 = vweird.f32 %v3515
        %vm3691 = vweird.f32 %v3685
        %vm3692 = vmor %vm3690, %vm3691
        %v3693 = vsel %vm3692, %v3685, %v3689
        %v3694 = vand.u32 2147483647, %v3515
        %vm3695 = vcmp.eq.f32.partialorder %v3694, 8.507059e+37
        %v3696 = vand.u32 %v3515, 2147483648
        %v3697 = vor.u32 1.1754944e-38, %v3696
        %v3698 = vsel %vm3695, %v3697, %v3693
        %v3699 = vmul.f32 1.0, %v3698
        %v3700 = vrcp.pop %v3516
        %v3701 = vmul.f32 %v3516, %v3700
        %v3702 = vsub.f32 1.0, %v3701
        %v3703 = vmul.f32 %v3700, %v3702
        %v3704 = vadd.f32 %v3700, %v3703
        %vm3705 = vweird.f32 %v3516
        %vm3706 = vweird.f32 %v3700
        %vm3707 = vmor %vm3705, %vm3706
        %v3708 = vsel %vm3707, %v3700, %v3704
        %v3709 = vand.u32 2147483647, %v3516
        %vm3710 = vcmp.eq.f32.partialorder %v3709, 8.507059e+37
        %v3711 = vand.u32 %v3516, 2147483648
        %v3712 = vor.u32 1.1754944e-38, %v3711
        %v3713 = vsel %vm3710, %v3712, %v3708
        %v3714 = vmul.f32 1.0, %v3713
        %v3715 = vrcp.pop %v3517
        %v3716 = vmul.f32 %v3517, %v3715
        %v3717 = vsub.f32 1.0, %v3716
        %v3718 = vmul.f32 %v3715, %v3717
        %v3719 = vadd.f32 %v3715, %v3718
        %vm3720 = vweird.f32 %v3517
        %vm3721 = vweird.f32 %v3715
        %vm3722 = vmor %vm3720, %vm3721
        %v3723 = vsel %vm3722, %v3715, %v3719
        %v3724 = vand.u32 2147483647, %v3517
        %vm3725 = vcmp.eq.f32.partialorder %v3724, 8.507059e+37
        %v3726 = vand.u32 %v3517, 2147483648
        %v3727 = vor.u32 1.1754944e-38, %v3726
        %v3728 = vsel %vm3725, %v3727, %v3723
        %v3729 = vmul.f32 1.0, %v3728
        %v3730 = vrcp.pop %v3518
        %v3731 = vmul.f32 %v3518, %v3730
        %v3732 = vsub.f32 1.0, %v3731
        %v3733 = vmul.f32 %v3730, %v3732
        %v3734 = vadd.f32 %v3730, %v3733
        %vm3735 = vweird.f32 %v3518
        %vm3736 = vweird.f32 %v3730
        %vm3737 = vmor %vm3735, %vm3736
        %v3738 = vsel %vm3737, %v3730, %v3734
        %v3739 = vand.u32 2147483647, %v3518
        %vm3740 = vcmp.eq.f32.partialorder %v3739, 8.507059e+37
        %v3741 = vand.u32 %v3518, 2147483648
        %v3742 = vor.u32 1.1754944e-38, %v3741
        %v3743 = vsel %vm3740, %v3742, %v3738
        %v3744 = vmul.f32 1.0, %v3743
        %v3745 = vrcp.pop %v3519
        %v3746 = vmul.f32 %v3519, %v3745
        %v3747 = vsub.f32 1.0, %v3746
        %v3748 = vmul.f32 %v3745, %v3747
        %v3749 = vadd.f32 %v3745, %v3748
        %vm3750 = vweird.f32 %v3519
        %vm3751 = vweird.f32 %v3745
        %vm3752 = vmor %vm3750, %vm3751
        %v3753 = vsel %vm3752, %v3745, %v3749
        %v3754 = vand.u32 2147483647, %v3519
        %vm3755 = vcmp.eq.f32.partialorder %v3754, 8.507059e+37
        %v3756 = vand.u32 %v3519, 2147483648
        %v3757 = vor.u32 1.1754944e-38, %v3756
        %v3758 = vsel %vm3755, %v3757, %v3753
        %v3759 = vmul.f32 1.0, %v3758
        %v3760 = vmul.f32 %v3342, %v3534
        %v3761 = vmul.f32 %v3371, %v3549
        %v3762 = vmul.f32 %v3400, %v3564
        %v3763 = vmul.f32 %v3429, %v3579
        %v3764 = vmul.f32 %v3345, %v3594
        %v3765 = vmul.f32 %v3374, %v3609
        %v3766 = vmul.f32 %v3403, %v3624
        %v3767 = vmul.f32 %v3432, %v3639
        %v3768 = vmul.f32 %v3348, %v3654
        %v3769 = vmul.f32 %v3377, %v3669
        %v3770 = vmul.f32 %v3406, %v3684
        %v3771 = vmul.f32 %v3435, %v3699
        %v3772 = vmul.f32 %v3351, %v3714
        %v3773 = vmul.f32 %v3380, %v3729
        %v3774 = vmul.f32 %v3409, %v3744
        %v3775 = vmul.f32 %v3438, %v3759
        %v3776 = vld [vmem:[#allocation26] sm:$0xff]
        %v3777 = vld [vmem:[#allocation26 + $0x8] sm:$0xff]
        %v3778 = vld [vmem:[#allocation26 + $0x10] sm:$0xff]
        %v3779 = vld [vmem:[#allocation26 + $0x18] sm:$0xff]
        %v3780 = vld [vmem:[#allocation26 + $0x20] sm:$0xff]
        %v3781 = vld [vmem:[#allocation26 + $0x28] sm:$0xff]
        %v3782 = vld [vmem:[#allocation26 + $0x30] sm:$0xff]
        %v3783 = vld [vmem:[#allocation26 + $0x38] sm:$0xff]
        %v3784 = vld [vmem:[#allocation26 + $0x40] sm:$0xff]
        %v3785 = vld [vmem:[#allocation26 + $0x48] sm:$0xff]
        %v3786 = vld [vmem:[#allocation26 + $0x50] sm:$0xff]
        %v3787 = vld [vmem:[#allocation26 + $0x58] sm:$0xff]
        %v3788 = vld [vmem:[#allocation26 + $0x60] sm:$0xff]
        %v3789 = vld [vmem:[#allocation26 + $0x68] sm:$0xff]
        %v3790 = vld [vmem:[#allocation26 + $0x70] sm:$0xff]
        %v3791 = vld [vmem:[#allocation26 + $0x78] sm:$0xff]
        %v3792 = vld [vmem:[#allocation26 + $0x80] sm:$0xff]
        %v3793 = vld [vmem:[#allocation26 + $0x88] sm:$0xff]
        %v3794 = vld [vmem:[#allocation26 + $0x90] sm:$0xff]
        %v3795 = vld [vmem:[#allocation26 + $0x98] sm:$0xff]
        %v3796 = vld [vmem:[#allocation26 + $0xa0] sm:$0xff]
        %v3797 = vld [vmem:[#allocation26 + $0xa8] sm:$0xff]
        %v3798 = vld [vmem:[#allocation26 + $0xb0] sm:$0xff]
        %v3799 = vld [vmem:[#allocation26 + $0xb8] sm:$0xff]
        %v3800 = vld [vmem:[#allocation26 + $0xc0] sm:$0xff]
        %v3801 = vld [vmem:[#allocation26 + $0xc8] sm:$0xff]
        %v3802 = vld [vmem:[#allocation26 + $0xd0] sm:$0xff]
        %v3803 = vld [vmem:[#allocation26 + $0xd8] sm:$0xff]
        %v3804 = vld [vmem:[#allocation26 + $0xe0] sm:$0xff]
        %v3805 = vld [vmem:[#allocation26 + $0xe8] sm:$0xff]
        %v3806 = vld [vmem:[#allocation26 + $0xf0] sm:$0xff]
        %v3807 = vld [vmem:[#allocation26 + $0xf8] sm:$0xff]
        %v3808 = vld [vmem:[#allocation26 + $0x100] sm:$0xff]
        %v3809 = vld [vmem:[#allocation26 + $0x108] sm:$0xff]
        %v3810 = vld [vmem:[#allocation26 + $0x110] sm:$0xff]
        %v3811 = vld [vmem:[#allocation26 + $0x118] sm:$0xff]
        %v3812 = vld [vmem:[#allocation26 + $0x120] sm:$0xff]
        %v3813 = vld [vmem:[#allocation26 + $0x128] sm:$0xff]
        %v3814 = vld [vmem:[#allocation26 + $0x130] sm:$0xff]
        %v3815 = vld [vmem:[#allocation26 + $0x138] sm:$0xff]
        %v3816 = vld [vmem:[#allocation26 + $0x140] sm:$0xff]
        %v3817 = vld [vmem:[#allocation26 + $0x148] sm:$0xff]
        %v3818 = vld [vmem:[#allocation26 + $0x150] sm:$0xff]
        %v3819 = vld [vmem:[#allocation26 + $0x158] sm:$0xff]
        %v3820 = vld [vmem:[#allocation26 + $0x160] sm:$0xff]
        %v3821 = vld [vmem:[#allocation26 + $0x168] sm:$0xff]
        %v3822 = vld [vmem:[#allocation26 + $0x170] sm:$0xff]
        %v3823 = vld [vmem:[#allocation26 + $0x178] sm:$0xff]
        %v3824 = vld [vmem:[#allocation26 + $0x180] sm:$0xff]
        %v3825 = vld [vmem:[#allocation26 + $0x188] sm:$0xff]
        %v3826 = vld [vmem:[#allocation26 + $0x190] sm:$0xff]
        %v3827 = vld [vmem:[#allocation26 + $0x198] sm:$0xff]
        %v3828 = vld [vmem:[#allocation26 + $0x1a0] sm:$0xff]
        %v3829 = vld [vmem:[#allocation26 + $0x1a8] sm:$0xff]
        %v3830 = vld [vmem:[#allocation26 + $0x1b0] sm:$0xff]
        %v3831 = vld [vmem:[#allocation26 + $0x1b8] sm:$0xff]
        %v3832 = vld [vmem:[#allocation26 + $0x1c0] sm:$0xff]
        %v3833 = vld [vmem:[#allocation26 + $0x1c8] sm:$0xff]
        %v3834 = vld [vmem:[#allocation26 + $0x1d0] sm:$0xff]
        %v3835 = vld [vmem:[#allocation26 + $0x1d8] sm:$0xff]
        %v3836 = vld [vmem:[#allocation26 + $0x1e0] sm:$0xff]
        %v3837 = vld [vmem:[#allocation26 + $0x1e8] sm:$0xff]
        %v3838 = vld [vmem:[#allocation26 + $0x1f0] sm:$0xff]
        %v3839 = vld [vmem:[#allocation26 + $0x1f8] sm:$0xff]
        %3840 = vmatpush.msra.mxu0 %v3791
        %3841 = vmatpush.msra.mxu0 %v3790
        %3842 = vmatpush.msra.mxu0 %v3789
        %3843 = vmatpush.msra.mxu0 %v3788
        %3844 = vmatpush.msra.mxu0 %v3787
        %3845 = vmatpush.msra.mxu0 %v3786
        %3846 = vmatpush.msra.mxu0 %v3785
        %3847 = vmatpush.msra.mxu0 %v3784
        %3848 = vmatpush.msra.mxu0 %v3783
        %3849 = vmatpush.msra.mxu0 %v3782
        %3850 = vmatpush.msra.mxu0 %v3781
        %3851 = vmatpush.msra.mxu0 %v3780
        %3852 = vmatpush.msra.mxu0 %v3779
        %3853 = vmatpush.msra.mxu0 %v3778
        %3854 = vmatpush.msra.mxu0 %v3777
        %3855 = vmatpush.msra.mxu0 %v3776
        %3856 = vmatmul.f32.gmra.mxu0 %v3760
        %v3857 = vpop.f32.mrf.mxu0
        %v3858 = vadd.f32 0.0, %v3857
        %3859 = vmatmul.f32.gmra.mxu0 %v3764
        %v3860 = vpop.f32.mrf.mxu0
        %v3861 = vadd.f32 0.0, %v3860
        %3862 = vmatmul.f32.gmra.mxu0 %v3768
        %v3863 = vpop.f32.mrf.mxu0
        %v3864 = vadd.f32 0.0, %v3863
        %3865 = vmatmul.f32.gmra.mxu0 %v3772
        %v3866 = vpop.f32.mrf.mxu0
        %v3867 = vadd.f32 0.0, %v3866
        %3868 = vdwg.mxu0
        %3869 = vmatpush.msra.mxu0 %v3807
        %3870 = vmatpush.msra.mxu0 %v3806
        %3871 = vmatpush.msra.mxu0 %v3805
        %3872 = vmatpush.msra.mxu0 %v3804
        %3873 = vmatpush.msra.mxu0 %v3803
        %3874 = vmatpush.msra.mxu0 %v3802
        %3875 = vmatpush.msra.mxu0 %v3801
        %3876 = vmatpush.msra.mxu0 %v3800
        %3877 = vmatpush.msra.mxu0 %v3799
        %3878 = vmatpush.msra.mxu0 %v3798
        %3879 = vmatpush.msra.mxu0 %v3797
        %3880 = vmatpush.msra.mxu0 %v3796
        %3881 = vmatpush.msra.mxu0 %v3795
        %3882 = vmatpush.msra.mxu0 %v3794
        %3883 = vmatpush.msra.mxu0 %v3793
        %3884 = vmatpush.msra.mxu0 %v3792
        %3885 = vmatmul.f32.gmra.mxu0 %v3761
        %v3886 = vpop.f32.mrf.mxu0
        %v3887 = vadd.f32 %v3858, %v3886
        %3888 = vmatmul.f32.gmra.mxu0 %v3765
        %v3889 = vpop.f32.mrf.mxu0
        %v3890 = vadd.f32 %v3861, %v3889
        %3891 = vmatmul.f32.gmra.mxu0 %v3769
        %v3892 = vpop.f32.mrf.mxu0
        %v3893 = vadd.f32 %v3864, %v3892
        %3894 = vmatmul.f32.gmra.mxu0 %v3773
        %v3895 = vpop.f32.mrf.mxu0
        %v3896 = vadd.f32 %v3867, %v3895
        %3897 = vdwg.mxu0
        %3898 = vmatpush.msra.mxu0 %v3823
        %3899 = vmatpush.msra.mxu0 %v3822
        %3900 = vmatpush.msra.mxu0 %v3821
        %3901 = vmatpush.msra.mxu0 %v3820
        %3902 = vmatpush.msra.mxu0 %v3819
        %3903 = vmatpush.msra.mxu0 %v3818
        %3904 = vmatpush.msra.mxu0 %v3817
        %3905 = vmatpush.msra.mxu0 %v3816
        %3906 = vmatpush.msra.mxu0 %v3815
        %3907 = vmatpush.msra.mxu0 %v3814
        %3908 = vmatpush.msra.mxu0 %v3813
        %3909 = vmatpush.msra.mxu0 %v3812
        %3910 = vmatpush.msra.mxu0 %v3811
        %3911 = vmatpush.msra.mxu0 %v3810
        %3912 = vmatpush.msra.mxu0 %v3809
        %3913 = vmatpush.msra.mxu0 %v3808
        %3914 = vmatmul.f32.gmra.mxu0 %v3762
        %v3915 = vpop.f32.mrf.mxu0
        %v3916 = vadd.f32 %v3887, %v3915
        %3917 = vmatmul.f32.gmra.mxu0 %v3766
        %v3918 = vpop.f32.mrf.mxu0
        %v3919 = vadd.f32 %v3890, %v3918
        %3920 = vmatmul.f32.gmra.mxu0 %v3770
        %v3921 = vpop.f32.mrf.mxu0
        %v3922 = vadd.f32 %v3893, %v3921
        %3923 = vmatmul.f32.gmra.mxu0 %v3774
        %v3924 = vpop.f32.mrf.mxu0
        %v3925 = vadd.f32 %v3896, %v3924
        %3926 = vdwg.mxu0
        %3927 = vmatpush.msra.mxu0 %v3839
        %3928 = vmatpush.msra.mxu0 %v3838
        %3929 = vmatpush.msra.mxu0 %v3837
        %3930 = vmatpush.msra.mxu0 %v3836
        %3931 = vmatpush.msra.mxu0 %v3835
        %3932 = vmatpush.msra.mxu0 %v3834
        %3933 = vmatpush.msra.mxu0 %v3833
        %3934 = vmatpush.msra.mxu0 %v3832
        %3935 = vmatpush.msra.mxu0 %v3831
        %3936 = vmatpush.msra.mxu0 %v3830
        %3937 = vmatpush.msra.mxu0 %v3829
        %3938 = vmatpush.msra.mxu0 %v3828
        %3939 = vmatpush.msra.mxu0 %v3827
        %3940 = vmatpush.msra.mxu0 %v3826
        %3941 = vmatpush.msra.mxu0 %v3825
        %3942 = vmatpush.msra.mxu0 %v3824
        %3943 = vmatmul.f32.gmra.mxu0 %v3763
        %v3944 = vpop.f32.mrf.mxu0
        %v3945 = vadd.f32 %v3916, %v3944
        %3946 = vmatmul.f32.gmra.mxu0 %v3767
        %v3947 = vpop.f32.mrf.mxu0
        %v3948 = vadd.f32 %v3919, %v3947
        %3949 = vmatmul.f32.gmra.mxu0 %v3771
        %v3950 = vpop.f32.mrf.mxu0
        %v3951 = vadd.f32 %v3922, %v3950
        %3952 = vmatmul.f32.gmra.mxu0 %v3775
        %v3953 = vpop.f32.mrf.mxu0
        %v3954 = vadd.f32 %v3925, %v3953
        %3955 = vdwg.mxu0
        %v3956 = vadd.f32 %v3154, %v3945
        %v3957 = vadd.f32 %v3155, %v3948
        %v3958 = vadd.f32 %v3156, %v3951
        %v3959 = vadd.f32 %v3157, %v3954
        %v3960 = vld [vmem:[%s61] sm:$0x1]
        %v3961 = vperm.slane %v3960, 0
        %v3962 = vadd.f32 %v3956, %v3961
        %v3963 = vadd.f32 %v3957, %v3961
        %v3964 = vadd.f32 %v3958, %v3961
        %v3965 = vadd.f32 %v3959, %v3961
        %v3966 = vld [vmem:[%s39 + $0x1] sm:$0x1]
        %v3967 = vld [vmem:[#allocation19 + $0x1] sm:$0x1]
        %3968 = vadd.xlane.f32.xlu0 %v3962
        %v3969 = vpop.xlane.xlu0 %3968
        %3970 = vadd.xlane.f32.xlu0 %v3963
        %v3971 = vpop.xlane.xlu0 %3970
        %3972 = vadd.xlane.f32.xlu0 %v3964
        %v3973 = vpop.xlane.xlu0 %3972
        %3974 = vadd.xlane.f32.xlu0 %v3965
        %v3975 = vpop.xlane.xlu0 %3974
        %v3976 = vmul.f32 %v3969, %v2085
        %v3977 = vmul.f32 %v3971, %v2085
        %v3978 = vmul.f32 %v3973, %v2085
        %v3979 = vmul.f32 %v3975, %v2085
        %v3980 = vsub.f32 %v3962, %v3976
        %v3981 = vsub.f32 %v3963, %v3977
        %v3982 = vsub.f32 %v3964, %v3978
        %v3983 = vsub.f32 %v3965, %v3979
        %v3984 = vmul.f32 %v3980, %v3980
        %v3985 = vmul.f32 %v3981, %v3981
        %v3986 = vmul.f32 %v3982, %v3982
        %v3987 = vmul.f32 %v3983, %v3983
        %3988 = vadd.xlane.f32.xlu0 %v3984
        %v3989 = vpop.xlane.xlu0 %3988
        %3990 = vadd.xlane.f32.xlu0 %v3985
        %v3991 = vpop.xlane.xlu0 %3990
        %3992 = vadd.xlane.f32.xlu0 %v3986
        %v3993 = vpop.xlane.xlu0 %3992
        %3994 = vadd.xlane.f32.xlu0 %v3987
        %v3995 = vpop.xlane.xlu0 %3994
        %v3996 = vmul.f32 %v3989, %v2085
        %v3997 = vmul.f32 %v3991, %v2085
        %v3998 = vmul.f32 %v3993, %v2085
        %v3999 = vmul.f32 %v3995, %v2085
        %v4000 = vadd.f32 %v3996, 1e-05
        %v4001 = vadd.f32 %v3997, 1e-05
        %v4002 = vadd.f32 %v3998, 1e-05
        %v4003 = vadd.f32 %v3999, 1e-05
        %v4004 = vrsqrt.pop %v4000
        %v4005 = vmul.f32 %v4004, %v4000
        %v4006 = vmul.f32 %v4005, %v4004
        %v4007 = vmul.f32 0.5, %v4006
        %v4008 = vsub.f32 1.5, %v4007
        %v4009 = vmul.f32 %v4004, %v4008
        %vm4010 = vweird.f32 %v4000
        %vm4011 = vweird.f32 %v4004
        %vm4012 = vmor %vm4010, %vm4011
        %v4013 = vsel %vm4012, %v4004, %v4009
        %v4014 = vrsqrt.pop %v4001
        %v4015 = vmul.f32 %v4014, %v4001
        %v4016 = vmul.f32 %v4015, %v4014
        %v4017 = vmul.f32 0.5, %v4016
        %v4018 = vsub.f32 1.5, %v4017
        %v4019 = vmul.f32 %v4014, %v4018
        %vm4020 = vweird.f32 %v4001
        %vm4021 = vweird.f32 %v4014
        %vm4022 = vmor %vm4020, %vm4021
        %v4023 = vsel %vm4022, %v4014, %v4019
        %v4024 = vrsqrt.pop %v4002
        %v4025 = vmul.f32 %v4024, %v4002
        %v4026 = vmul.f32 %v4025, %v4024
        %v4027 = vmul.f32 0.5, %v4026
        %v4028 = vsub.f32 1.5, %v4027
        %v4029 = vmul.f32 %v4024, %v4028
        %vm4030 = vweird.f32 %v4002
        %vm4031 = vweird.f32 %v4024
        %vm4032 = vmor %vm4030, %vm4031
        %v4033 = vsel %vm4032, %v4024, %v4029
        %v4034 = vrsqrt.pop %v4003
        %v4035 = vmul.f32 %v4034, %v4003
        %v4036 = vmul.f32 %v4035, %v4034
        %v4037 = vmul.f32 0.5, %v4036
        %v4038 = vsub.f32 1.5, %v4037
        %v4039 = vmul.f32 %v4034, %v4038
        %vm4040 = vweird.f32 %v4003
        %vm4041 = vweird.f32 %v4034
        %vm4042 = vmor %vm4040, %vm4041
        %v4043 = vsel %vm4042, %v4034, %v4039
        %v4044 = vmul.f32 %v3980, %v4013
        %v4045 = vmul.f32 %v3981, %v4023
        %v4046 = vmul.f32 %v3982, %v4033
        %v4047 = vmul.f32 %v3983, %v4043
        %v4048 = vperm.slane %v3966, 0
        %v4049 = vmul.f32 %v4044, %v4048
        %v4050 = vmul.f32 %v4045, %v4048
        %v4051 = vmul.f32 %v4046, %v4048
        %v4052 = vmul.f32 %v4047, %v4048
        %v4053 = vperm.slane %v3967, 0
        %v4054 = vadd.f32 %v4049, %v4053
        %v4055 = vadd.f32 %v4050, %v4053
        %v4056 = vadd.f32 %v4051, %v4053
        %v4057 = vadd.f32 %v4052, %v4053
        %s4058 = scalar_lea.vmem [#allocation20], 384
        %v4059 = vld [vmem:[%s4058] sm:$0xff]
        %v4060 = vld [vmem:[%s4058 + $0x8] sm:$0xff]
        %v4061 = vld [vmem:[%s4058 + $0x10] sm:$0xff]
        %v4062 = vld [vmem:[%s4058 + $0x18] sm:$0xff]
        %v4063 = vld [vmem:[%s4058 + $0x20] sm:$0xff]
        %v4064 = vld [vmem:[%s4058 + $0x28] sm:$0xff]
        %v4065 = vld [vmem:[%s4058 + $0x30] sm:$0xff]
        %v4066 = vld [vmem:[%s4058 + $0x38] sm:$0xff]
        %v4067 = vld [vmem:[%s4058 + $0x40] sm:$0xff]
        %v4068 = vld [vmem:[%s4058 + $0x48] sm:$0xff]
        %v4069 = vld [vmem:[%s4058 + $0x50] sm:$0xff]
        %v4070 = vld [vmem:[%s4058 + $0x58] sm:$0xff]
        %v4071 = vld [vmem:[%s4058 + $0x60] sm:$0xff]
        %v4072 = vld [vmem:[%s4058 + $0x68] sm:$0xff]
        %v4073 = vld [vmem:[%s4058 + $0x70] sm:$0xff]
        %v4074 = vld [vmem:[%s4058 + $0x78] sm:$0xff]
        %v4075 = vld [vmem:[%s4058 + $0x80] sm:$0xff]
        %v4076 = vld [vmem:[%s4058 + $0x88] sm:$0xff]
        %v4077 = vld [vmem:[%s4058 + $0x90] sm:$0xff]
        %v4078 = vld [vmem:[%s4058 + $0x98] sm:$0xff]
        %v4079 = vld [vmem:[%s4058 + $0xa0] sm:$0xff]
        %v4080 = vld [vmem:[%s4058 + $0xa8] sm:$0xff]
        %v4081 = vld [vmem:[%s4058 + $0xb0] sm:$0xff]
        %v4082 = vld [vmem:[%s4058 + $0xb8] sm:$0xff]
        %v4083 = vld [vmem:[%s4058 + $0xc0] sm:$0xff]
        %v4084 = vld [vmem:[%s4058 + $0xc8] sm:$0xff]
        %v4085 = vld [vmem:[%s4058 + $0xd0] sm:$0xff]
        %v4086 = vld [vmem:[%s4058 + $0xd8] sm:$0xff]
        %v4087 = vld [vmem:[%s4058 + $0xe0] sm:$0xff]
        %v4088 = vld [vmem:[%s4058 + $0xe8] sm:$0xff]
        %v4089 = vld [vmem:[%s4058 + $0xf0] sm:$0xff]
        %v4090 = vld [vmem:[%s4058 + $0xf8] sm:$0xff]
        %v4091 = vld [vmem:[%s4058 + $0x100] sm:$0xff]
        %v4092 = vld [vmem:[%s4058 + $0x108] sm:$0xff]
        %v4093 = vld [vmem:[%s4058 + $0x110] sm:$0xff]
        %v4094 = vld [vmem:[%s4058 + $0x118] sm:$0xff]
        %v4095 = vld [vmem:[%s4058 + $0x120] sm:$0xff]
        %v4096 = vld [vmem:[%s4058 + $0x128] sm:$0xff]
        %v4097 = vld [vmem:[%s4058 + $0x130] sm:$0xff]
        %v4098 = vld [vmem:[%s4058 + $0x138] sm:$0xff]
        %v4099 = vld [vmem:[%s4058 + $0x140] sm:$0xff]
        %v4100 = vld [vmem:[%s4058 + $0x148] sm:$0xff]
        %v4101 = vld [vmem:[%s4058 + $0x150] sm:$0xff]
        %v4102 = vld [vmem:[%s4058 + $0x158] sm:$0xff]
        %v4103 = vld [vmem:[%s4058 + $0x160] sm:$0xff]
        %v4104 = vld [vmem:[%s4058 + $0x168] sm:$0xff]
        %v4105 = vld [vmem:[%s4058 + $0x170] sm:$0xff]
        %v4106 = vld [vmem:[%s4058 + $0x178] sm:$0xff]
        %s4107 = scalar_lea.vmem %s45, 1
        %v4108 = vld [vmem:[%s4107] ss:$2 sm:$0x7]
        %v4110 = vperm.slane %v4108, 0
        %v4111 = vperm.slane %v4108, 1
        %v4112 = vperm.slane %v4108, 2
        %4116 = vmatpush.msra.mxu0 %v4104
        %4117 = vmatpush.msra.mxu0 %v4101
        %4118 = vmatpush.msra.mxu0 %v4098
        %4119 = vmatpush.msra.mxu0 %v4095
        %4120 = vmatpush.msra.mxu0 %v4092
        %4121 = vmatpush.msra.mxu0 %v4089
        %4122 = vmatpush.msra.mxu0 %v4086
        %4123 = vmatpush.msra.mxu0 %v4083
        %4124 = vmatpush.msra.mxu0 %v4080
        %4125 = vmatpush.msra.mxu0 %v4077
        %4126 = vmatpush.msra.mxu0 %v4074
        %4127 = vmatpush.msra.mxu0 %v4071
        %4128 = vmatpush.msra.mxu0 %v4068
        %4129 = vmatpush.msra.mxu0 %v4065
        %4130 = vmatpush.msra.mxu0 %v4062
        %4131 = vmatpush.msra.mxu0 %v4059
        %4132 = vmatmul.f32.gmra.mxu0 %v4054
        %v4133 = vpop.f32.mrf.mxu0
        %v4134 = vadd.f32 %v4110, %v4133
        %4135 = vmatmul.f32.gmra.mxu0 %v4055
        %v4136 = vpop.f32.mrf.mxu0
        %v4137 = vadd.f32 %v4110, %v4136
        %4138 = vmatmul.f32.gmra.mxu0 %v4056
        %v4139 = vpop.f32.mrf.mxu0
        %v4140 = vadd.f32 %v4110, %v4139
        %4141 = vmatmul.f32.gmra.mxu0 %v4057
        %v4142 = vpop.f32.mrf.mxu0
        %v4143 = vadd.f32 %v4110, %v4142
        %4144 = vdwg.mxu0
        %4145 = vmatpush.msra.mxu0 %v4105
        %4146 = vmatpush.msra.mxu0 %v4102
        %4147 = vmatpush.msra.mxu0 %v4099
        %4148 = vmatpush.msra.mxu0 %v4096
        %4149 = vmatpush.msra.mxu0 %v4093
        %4150 = vmatpush.msra.mxu0 %v4090
        %4151 = vmatpush.msra.mxu0 %v4087
        %4152 = vmatpush.msra.mxu0 %v4084
        %4153 = vmatpush.msra.mxu0 %v4081
        %4154 = vmatpush.msra.mxu0 %v4078
        %4155 = vmatpush.msra.mxu0 %v4075
        %4156 = vmatpush.msra.mxu0 %v4072
        %4157 = vmatpush.msra.mxu0 %v4069
        %4158 = vmatpush.msra.mxu0 %v4066
        %4159 = vmatpush.msra.mxu0 %v4063
        %4160 = vmatpush.msra.mxu0 %v4060
        %4161 = vmatmul.f32.gmra.mxu0 %v4054
        %v4162 = vpop.f32.mrf.mxu0
        %v4163 = vadd.f32 %v4111, %v4162
        %4164 = vmatmul.f32.gmra.mxu0 %v4055
        %v4165 = vpop.f32.mrf.mxu0
        %v4166 = vadd.f32 %v4111, %v4165
        %4167 = vmatmul.f32.gmra.mxu0 %v4056
        %v4168 = vpop.f32.mrf.mxu0
        %v4169 = vadd.f32 %v4111, %v4168
        %4170 = vmatmul.f32.gmra.mxu0 %v4057
        %v4171 = vpop.f32.mrf.mxu0
        %v4172 = vadd.f32 %v4111, %v4171
        %4173 = vdwg.mxu0
        %4174 = vmatpush.msra.mxu0 %v4106
        %4175 = vmatpush.msra.mxu0 %v4103
        %4176 = vmatpush.msra.mxu0 %v4100
        %4177 = vmatpush.msra.mxu0 %v4097
        %4178 = vmatpush.msra.mxu0 %v4094
        %4179 = vmatpush.msra.mxu0 %v4091
        %4180 = vmatpush.msra.mxu0 %v4088
        %4181 = vmatpush.msra.mxu0 %v4085
        %4182 = vmatpush.msra.mxu0 %v4082
        %4183 = vmatpush.msra.mxu0 %v4079
        %4184 = vmatpush.msra.mxu0 %v4076
        %4185 = vmatpush.msra.mxu0 %v4073
        %4186 = vmatpush.msra.mxu0 %v4070
        %4187 = vmatpush.msra.mxu0 %v4067
        %4188 = vmatpush.msra.mxu0 %v4064
        %4189 = vmatpush.msra.mxu0 %v4061
        %4190 = vmatmul.f32.gmra.mxu0 %v4054
        %v4191 = vpop.f32.mrf.mxu0
        %v4192 = vadd.f32 %v4112, %v4191
        %4193 = vmatmul.f32.gmra.mxu0 %v4055
        %v4194 = vpop.f32.mrf.mxu0
        %v4195 = vadd.f32 %v4112, %v4194
        %4196 = vmatmul.f32.gmra.mxu0 %v4056
        %v4197 = vpop.f32.mrf.mxu0
        %v4198 = vadd.f32 %v4112, %v4197
        %4199 = vmatmul.f32.gmra.mxu0 %v4057
        %v4200 = vpop.f32.mrf.mxu0
        %v4201 = vadd.f32 %v4112, %v4200
        %4202 = vdwg.mxu0
        %s4203 = scalar_lea.vmem [#allocation22], 128
        %v4204 = vld [vmem:[%s4203] sm:$0xff]
        %v4205 = vld [vmem:[%s4203 + $0x8] sm:$0xff]
        %v4206 = vld [vmem:[%s4203 + $0x10] sm:$0xff]
        %v4207 = vld [vmem:[%s4203 + $0x18] sm:$0xff]
        %v4208 = vld [vmem:[%s4203 + $0x20] sm:$0xff]
        %v4209 = vld [vmem:[%s4203 + $0x28] sm:$0xff]
        %v4210 = vld [vmem:[%s4203 + $0x30] sm:$0xff]
        %v4211 = vld [vmem:[%s4203 + $0x38] sm:$0xff]
        %v4212 = vld [vmem:[%s4203 + $0x40] sm:$0xff]
        %v4213 = vld [vmem:[%s4203 + $0x48] sm:$0xff]
        %v4214 = vld [vmem:[%s4203 + $0x50] sm:$0xff]
        %v4215 = vld [vmem:[%s4203 + $0x58] sm:$0xff]
        %v4216 = vld [vmem:[%s4203 + $0x60] sm:$0xff]
        %v4217 = vld [vmem:[%s4203 + $0x68] sm:$0xff]
        %v4218 = vld [vmem:[%s4203 + $0x70] sm:$0xff]
        %v4219 = vld [vmem:[%s4203 + $0x78] sm:$0xff]
        %v4221 = vsel %vm2327, %v4134, 0
        %v4224 = vsel %vm2327, %v4137, 0
        %v4227 = vsel %vm2327, %v4140, 0
        %v4230 = vsel %vm2327, %v4143, 0
        %v4233 = vsel %vm2327, %v4163, 0
        %v4236 = vsel %vm2327, %v4166, 0
        %v4239 = vsel %vm2327, %v4169, 0
        %v4242 = vsel %vm2327, %v4172, 0
        %4244 = vmatpush.xpose.msra.mxu0 0.0
        %4245 = vmatpush.xpose.msra.mxu0 0.0
        %4246 = vmatpush.xpose.msra.mxu0 0.0
        %4247 = vmatpush.xpose.msra.mxu0 0.0
        %4248 = vmatpush.xpose.msra.mxu0 0.0
        %4249 = vmatpush.xpose.msra.mxu0 0.0
        %4250 = vmatpush.xpose.msra.mxu0 0.0
        %4251 = vmatpush.xpose.msra.mxu0 0.0
        %4252 = vmatpush.xpose.msra.mxu0 0.0
        %4253 = vmatpush.xpose.msra.mxu0 0.0
        %4254 = vmatpush.xpose.msra.mxu0 0.0
        %4255 = vmatpush.xpose.msra.mxu0 0.0
        %4256 = vmatpush.xpose.msra.mxu0 %v4242
        %4257 = vmatpush.xpose.msra.mxu0 %v4239
        %4258 = vmatpush.xpose.msra.mxu0 %v4236
        %4259 = vmatpush.xpose.msra.mxu0 %v4233
        %4260 = vmatmul.f32.gmra.mxu0 %v4221
        %v4261 = vpop.f32.mrf.mxu0
        %v4262 = vadd.f32 0.0, %v4261
        %4263 = vmatmul.f32.gmra.mxu0 %v4224
        %v4264 = vpop.f32.mrf.mxu0
        %v4265 = vadd.f32 0.0, %v4264
        %4266 = vmatmul.f32.gmra.mxu0 %v4227
        %v4267 = vpop.f32.mrf.mxu0
        %v4268 = vadd.f32 0.0, %v4267
        %4269 = vmatmul.f32.gmra.mxu0 %v4230
        %v4270 = vpop.f32.mrf.mxu0
        %v4271 = vadd.f32 0.0, %v4270
        %4272 = vdwg.mxu0
        %v4273 = vmul.f32 %v4262, 0.17677669
        %v4274 = vmul.f32 %v4265, 0.17677669
        %v4275 = vmul.f32 %v4268, 0.17677669
        %v4276 = vmul.f32 %v4271, 0.17677669
        %v4277 = vadd.f32 %v4273, %v2068
        %v4278 = vadd.f32 %v4274, %v2068
        %v4279 = vadd.f32 %v4275, %v2068
        %v4280 = vadd.f32 %v4276, %v2068
        %v4281 = vsel %vm2327, %v4277, -inf
        %4282 = vmax.xlane.f32.xlu0 %v4281
        %v4283 = vpop.xlane.xlu0 %4282
        %v4284 = vsel %vm2327, %v4278, -inf
        %4285 = vmax.xlane.f32.xlu0 %v4284
        %v4286 = vpop.xlane.xlu0 %4285
        %v4287 = vsel %vm2327, %v4279, -inf
        %4288 = vmax.xlane.f32.xlu0 %v4287
        %v4289 = vpop.xlane.xlu0 %4288
        %v4290 = vsel %vm2327, %v4280, -inf
        %4291 = vmax.xlane.f32.xlu0 %v4290
        %v4292 = vpop.xlane.xlu0 %4291
        %v4293 = vsub.f32 %v4277, %v4283
        %v4294 = vsub.f32 %v4278, %v4286
        %v4295 = vsub.f32 %v4279, %v4289
        %v4296 = vsub.f32 %v4280, %v4292
        %v4297 = vmul.f32 %v4293, 1.442695
        %v4298 = vpow.pop %v4297
        %v4299 = vmul.f32 %v4294, 1.442695
        %v4300 = vpow.pop %v4299
        %v4301 = vmul.f32 %v4295, 1.442695
        %v4302 = vpow.pop %v4301
        %v4303 = vmul.f32 %v4296, 1.442695
        %v4304 = vpow.pop %v4303
        %v4305 = vsel %vm2327, %v4298, 0.0
        %4306 = vadd.xlane.f32.xlu0 %v4305
        %v4307 = vpop.xlane.xlu0 %4306
        %v4308 = vsel %vm2327, %v4300, 0.0
        %4309 = vadd.xlane.f32.xlu0 %v4308
        %v4310 = vpop.xlane.xlu0 %4309
        %v4311 = vsel %vm2327, %v4302, 0.0
        %4312 = vadd.xlane.f32.xlu0 %v4311
        %v4313 = vpop.xlane.xlu0 %4312
        %v4314 = vsel %vm2327, %v4304, 0.0
        %4315 = vadd.xlane.f32.xlu0 %v4314
        %v4316 = vpop.xlane.xlu0 %4315
        %v4317 = vrcp.pop %v4307
        %v4318 = vrcp.pop %v4310
        %v4319 = vrcp.pop %v4313
        %v4320 = vrcp.pop %v4316
        %v4321 = vmul.f32 %v4298, %v4317
        %v4322 = vmul.f32 %v4300, %v4318
        %v4323 = vmul.f32 %v4302, %v4319
        %v4324 = vmul.f32 %v4304, %v4320
        %v4326 = vsel %vm2327, %v4321, 0
        %v4329 = vsel %vm2327, %v4322, 0
        %v4332 = vsel %vm2327, %v4323, 0
        %v4335 = vsel %vm2327, %v4324, 0
        %4337 = vmatpush.msra.mxu0 0.0
        %4338 = vmatpush.msra.mxu0 0.0
        %4339 = vmatpush.msra.mxu0 0.0
        %4340 = vmatpush.msra.mxu0 0.0
        %4341 = vmatpush.msra.mxu0 0.0
        %4342 = vmatpush.msra.mxu0 0.0
        %4343 = vmatpush.msra.mxu0 0.0
        %4344 = vmatpush.msra.mxu0 0.0
        %4345 = vmatpush.msra.mxu0 0.0
        %4346 = vmatpush.msra.mxu0 0.0
        %4347 = vmatpush.msra.mxu0 0.0
        %4348 = vmatpush.msra.mxu0 0.0
        %4349 = vmatpush.msra.mxu0 %v4201
        %4350 = vmatpush.msra.mxu0 %v4198
        %4351 = vmatpush.msra.mxu0 %v4195
        %4352 = vmatpush.msra.mxu0 %v4192
        %4353 = vmatmul.f32.gmra.mxu0 %v4326
        %v4354 = vpop.f32.mrf.mxu0
        %v4355 = vadd.f32 0.0, %v4354
        %4356 = vmatmul.f32.gmra.mxu0 %v4329
        %v4357 = vpop.f32.mrf.mxu0
        %v4358 = vadd.f32 0.0, %v4357
        %4359 = vmatmul.f32.gmra.mxu0 %v4332
        %v4360 = vpop.f32.mrf.mxu0
        %v4361 = vadd.f32 0.0, %v4360
        %4362 = vmatmul.f32.gmra.mxu0 %v4335
        %v4363 = vpop.f32.mrf.mxu0
        %v4364 = vadd.f32 0.0, %v4363
        %4365 = vdwg.mxu0
        %4366 = vrot.lane.b32.xlu0 %v4134, 96
        %v4367 = vpop.permute.xlu0 %4366
        %4368 = vrot.lane.b32.xlu0 %v4137, 96
        %v4369 = vpop.permute.xlu0 %4368
        %4370 = vrot.lane.b32.xlu0 %v4140, 96
        %v4371 = vpop.permute.xlu0 %4370
        %4372 = vrot.lane.b32.xlu0 %v4143, 96
        %v4373 = vpop.permute.xlu0 %4372
        %4374 = vrot.lane.b32.xlu0 %v4163, 96
        %v4375 = vpop.permute.xlu0 %4374
        %4376 = vrot.lane.b32.xlu0 %v4166, 96
        %v4377 = vpop.permute.xlu0 %4376
        %4378 = vrot.lane.b32.xlu0 %v4169, 96
        %v4379 = vpop.permute.xlu0 %4378
        %4380 = vrot.lane.b32.xlu0 %v4172, 96
        %v4381 = vpop.permute.xlu0 %4380
        %v4382 = vsel %vm2327, %v4367, 0
        %v4384 = vsel %vm2327, %v4369, 0
        %v4386 = vsel %vm2327, %v4371, 0
        %v4388 = vsel %vm2327, %v4373, 0
        %v4390 = vsel %vm2327, %v4375, 0
        %v4392 = vsel %vm2327, %v4377, 0
        %v4394 = vsel %vm2327, %v4379, 0
        %v4396 = vsel %vm2327, %v4381, 0
        %4398 = vmatpush.xpose.msra.mxu0 0.0
        %4399 = vmatpush.xpose.msra.mxu0 0.0
        %4400 = vmatpush.xpose.msra.mxu0 0.0
        %4401 = vmatpush.xpose.msra.mxu0 0.0
        %4402 = vmatpush.xpose.msra.mxu0 0.0
        %4403 = vmatpush.xpose.msra.mxu0 0.0
        %4404 = vmatpush.xpose.msra.mxu0 0.0
        %4405 = vmatpush.xpose.msra.mxu0 0.0
        %4406 = vmatpush.xpose.msra.mxu0 0.0
        %4407 = vmatpush.xpose.msra.mxu0 0.0
        %4408 = vmatpush.xpose.msra.mxu0 0.0
        %4409 = vmatpush.xpose.msra.mxu0 0.0
        %4410 = vmatpush.xpose.msra.mxu0 %v4396
        %4411 = vmatpush.xpose.msra.mxu0 %v4394
        %4412 = vmatpush.xpose.msra.mxu0 %v4392
        %4413 = vmatpush.xpose.msra.mxu0 %v4390
        %4414 = vmatmul.f32.gmra.mxu0 %v4382
        %v4415 = vpop.f32.mrf.mxu0
        %v4416 = vadd.f32 0.0, %v4415
        %4417 = vmatmul.f32.gmra.mxu0 %v4384
        %v4418 = vpop.f32.mrf.mxu0
        %v4419 = vadd.f32 0.0, %v4418
        %4420 = vmatmul.f32.gmra.mxu0 %v4386
        %v4421 = vpop.f32.mrf.mxu0
        %v4422 = vadd.f32 0.0, %v4421
        %4423 = vmatmul.f32.gmra.mxu0 %v4388
        %v4424 = vpop.f32.mrf.mxu0
        %v4425 = vadd.f32 0.0, %v4424
        %4426 = vdwg.mxu0
        %v4427 = vmul.f32 %v4416, 0.17677669
        %v4428 = vmul.f32 %v4419, 0.17677669
        %v4429 = vmul.f32 %v4422, 0.17677669
        %v4430 = vmul.f32 %v4425, 0.17677669
        %v4431 = vadd.f32 %v4427, %v2068
        %v4432 = vadd.f32 %v4428, %v2068
        %v4433 = vadd.f32 %v4429, %v2068
        %v4434 = vadd.f32 %v4430, %v2068
        %v4435 = vsel %vm2327, %v4431, -inf
        %4436 = vmax.xlane.f32.xlu0 %v4435
        %v4437 = vpop.xlane.xlu0 %4436
        %v4438 = vsel %vm2327, %v4432, -inf
        %4439 = vmax.xlane.f32.xlu0 %v4438
        %v4440 = vpop.xlane.xlu0 %4439
        %v4441 = vsel %vm2327, %v4433, -inf
        %4442 = vmax.xlane.f32.xlu0 %v4441
        %v4443 = vpop.xlane.xlu0 %4442
        %v4444 = vsel %vm2327, %v4434, -inf
        %4445 = vmax.xlane.f32.xlu0 %v4444
        %v4446 = vpop.xlane.xlu0 %4445
        %v4447 = vsub.f32 %v4431, %v4437
        %v4448 = vsub.f32 %v4432, %v4440
        %v4449 = vsub.f32 %v4433, %v4443
        %v4450 = vsub.f32 %v4434, %v4446
        %v4451 = vmul.f32 %v4447, 1.442695
        %v4452 = vpow.pop %v4451
        %v4453 = vmul.f32 %v4448, 1.442695
        %v4454 = vpow.pop %v4453
        %v4455 = vmul.f32 %v4449, 1.442695
        %v4456 = vpow.pop %v4455
        %v4457 = vmul.f32 %v4450, 1.442695
        %v4458 = vpow.pop %v4457
        %v4459 = vsel %vm2327, %v4452, 0.0
        %4460 = vadd.xlane.f32.xlu0 %v4459
        %v4461 = vpop.xlane.xlu0 %4460
        %v4462 = vsel %vm2327, %v4454, 0.0
        %4463 = vadd.xlane.f32.xlu0 %v4462
        %v4464 = vpop.xlane.xlu0 %4463
        %v4465 = vsel %vm2327, %v4456, 0.0
        %4466 = vadd.xlane.f32.xlu0 %v4465
        %v4467 = vpop.xlane.xlu0 %4466
        %v4468 = vsel %vm2327, %v4458, 0.0
        %4469 = vadd.xlane.f32.xlu0 %v4468
        %v4470 = vpop.xlane.xlu0 %4469
        %v4471 = vrcp.pop %v4461
        %v4472 = vrcp.pop %v4464
        %v4473 = vrcp.pop %v4467
        %v4474 = vrcp.pop %v4470
        %v4475 = vmul.f32 %v4452, %v4471
        %v4476 = vmul.f32 %v4454, %v4472
        %v4477 = vmul.f32 %v4456, %v4473
        %v4478 = vmul.f32 %v4458, %v4474
        %4483 = vrot.lane.b32.xlu0 %v4192, 96
        %v4484 = vpop.permute.xlu0 %4483
        %4485 = vrot.lane.b32.xlu0 %v4195, 96
        %v4486 = vpop.permute.xlu0 %4485
        %4487 = vrot.lane.b32.xlu0 %v4198, 96
        %v4488 = vpop.permute.xlu0 %4487
        %4489 = vrot.lane.b32.xlu0 %v4201, 96
        %v4490 = vpop.permute.xlu0 %4489
        %v4496 = vsel %vm2327, %v4475, 0
        %v4499 = vsel %vm2327, %v4476, 0
        %v4502 = vsel %vm2327, %v4477, 0
        %v4505 = vsel %vm2327, %v4478, 0
        %4507 = vmatpush.msra.mxu0 0.0
        %4508 = vmatpush.msra.mxu0 0.0
        %4509 = vmatpush.msra.mxu0 0.0
        %4510 = vmatpush.msra.mxu0 0.0
        %4511 = vmatpush.msra.mxu0 0.0
        %4512 = vmatpush.msra.mxu0 0.0
        %4513 = vmatpush.msra.mxu0 0.0
        %4514 = vmatpush.msra.mxu0 0.0
        %4515 = vmatpush.msra.mxu0 0.0
        %4516 = vmatpush.msra.mxu0 0.0
        %4517 = vmatpush.msra.mxu0 0.0
        %4518 = vmatpush.msra.mxu0 0.0
        %4519 = vmatpush.msra.mxu0 %v4490
        %4520 = vmatpush.msra.mxu0 %v4488
        %4521 = vmatpush.msra.mxu0 %v4486
        %4522 = vmatpush.msra.mxu0 %v4484
        %4523 = vmatmul.f32.gmra.mxu0 %v4496
        %v4524 = vpop.f32.mrf.mxu0
        %v4525 = vadd.f32 0.0, %v4524
        %4526 = vmatmul.f32.gmra.mxu0 %v4499
        %v4527 = vpop.f32.mrf.mxu0
        %v4528 = vadd.f32 0.0, %v4527
        %4529 = vmatmul.f32.gmra.mxu0 %v4502
        %v4530 = vpop.f32.mrf.mxu0
        %v4531 = vadd.f32 0.0, %v4530
        %4532 = vmatmul.f32.gmra.mxu0 %v4505
        %v4533 = vpop.f32.mrf.mxu0
        %v4534 = vadd.f32 0.0, %v4533
        %4535 = vdwg.mxu0
        %v4537 = vsel %vm2327, %v4525, 0
        %v4540 = vsel %vm2327, %v4528, 0
        %v4543 = vsel %vm2327, %v4531, 0
        %v4546 = vsel %vm2327, %v4534, 0
        %4548 = vmatpush.msra.mxu0 0.0
        %4549 = vmatpush.msra.mxu0 0.0
        %4550 = vmatpush.msra.mxu0 0.0
        %4551 = vmatpush.msra.mxu0 0.0
        %4552 = vmatpush.msra.mxu0 0.0
        %4553 = vmatpush.msra.mxu0 0.0
        %4554 = vmatpush.msra.mxu0 0.0
        %4555 = vmatpush.msra.mxu0 0.0
        %4556 = vmatpush.msra.mxu0 0.0
        %4557 = vmatpush.msra.mxu0 0.0
        %4558 = vmatpush.msra.mxu0 0.0
        %4559 = vmatpush.msra.mxu0 0.0
        %4560 = vmatpush.msra.mxu0 %v4211
        %4561 = vmatpush.msra.mxu0 %v4210
        %4562 = vmatpush.msra.mxu0 %v4209
        %4563 = vmatpush.msra.mxu0 %v4208
        %4564 = vmatmul.f32.gmra.mxu0 %v4537
        %v4565 = vpop.f32.mrf.mxu0
        %v4566 = vadd.f32 0.0, %v4565
        %4567 = vmatmul.f32.gmra.mxu0 %v4540
        %v4568 = vpop.f32.mrf.mxu0
        %v4569 = vadd.f32 0.0, %v4568
        %4570 = vmatmul.f32.gmra.mxu0 %v4543
        %v4571 = vpop.f32.mrf.mxu0
        %v4572 = vadd.f32 0.0, %v4571
        %4573 = vmatmul.f32.gmra.mxu0 %v4546
        %v4574 = vpop.f32.mrf.mxu0
        %v4575 = vadd.f32 0.0, %v4574
        %4576 = vdwg.mxu0
        %v4578 = vsel %vm2327, %v4355, 0
        %v4581 = vsel %vm2327, %v4358, 0
        %v4584 = vsel %vm2327, %v4361, 0
        %v4587 = vsel %vm2327, %v4364, 0
        %4589 = vmatpush.msra.mxu0 0.0
        %4590 = vmatpush.msra.mxu0 0.0
        %4591 = vmatpush.msra.mxu0 0.0
        %4592 = vmatpush.msra.mxu0 0.0
        %4593 = vmatpush.msra.mxu0 0.0
        %4594 = vmatpush.msra.mxu0 0.0
        %4595 = vmatpush.msra.mxu0 0.0
        %4596 = vmatpush.msra.mxu0 0.0
        %4597 = vmatpush.msra.mxu0 0.0
        %4598 = vmatpush.msra.mxu0 0.0
        %4599 = vmatpush.msra.mxu0 0.0
        %4600 = vmatpush.msra.mxu0 0.0
        %4601 = vmatpush.msra.mxu0 %v4207
        %4602 = vmatpush.msra.mxu0 %v4206
        %4603 = vmatpush.msra.mxu0 %v4205
        %4604 = vmatpush.msra.mxu0 %v4204
        %4605 = vmatmul.f32.gmra.mxu0 %v4578
        %v4606 = vpop.f32.mrf.mxu0
        %v4607 = vadd.f32 %v4566, %v4606
        %4608 = vmatmul.f32.gmra.mxu0 %v4581
        %v4609 = vpop.f32.mrf.mxu0
        %v4610 = vadd.f32 %v4569, %v4609
        %4611 = vmatmul.f32.gmra.mxu0 %v4584
        %v4612 = vpop.f32.mrf.mxu0
        %v4613 = vadd.f32 %v4572, %v4612
        %4614 = vmatmul.f32.gmra.mxu0 %v4587
        %v4615 = vpop.f32.mrf.mxu0
        %v4616 = vadd.f32 %v4575, %v4615
        %4617 = vdwg.mxu0
        %4618 = vrot.lane.b32.xlu0 %v4134, 64
        %v4619 = vpop.permute.xlu0 %4618
        %4620 = vrot.lane.b32.xlu0 %v4137, 64
        %v4621 = vpop.permute.xlu0 %4620
        %4622 = vrot.lane.b32.xlu0 %v4140, 64
        %v4623 = vpop.permute.xlu0 %4622
        %4624 = vrot.lane.b32.xlu0 %v4143, 64
        %v4625 = vpop.permute.xlu0 %4624
        %4626 = vrot.lane.b32.xlu0 %v4163, 64
        %v4627 = vpop.permute.xlu0 %4626
        %4628 = vrot.lane.b32.xlu0 %v4166, 64
        %v4629 = vpop.permute.xlu0 %4628
        %4630 = vrot.lane.b32.xlu0 %v4169, 64
        %v4631 = vpop.permute.xlu0 %4630
        %4632 = vrot.lane.b32.xlu0 %v4172, 64
        %v4633 = vpop.permute.xlu0 %4632
        %v4634 = vsel %vm2327, %v4619, 0
        %v4636 = vsel %vm2327, %v4621, 0
        %v4638 = vsel %vm2327, %v4623, 0
        %v4640 = vsel %vm2327, %v4625, 0
        %v4642 = vsel %vm2327, %v4627, 0
        %v4644 = vsel %vm2327, %v4629, 0
        %v4646 = vsel %vm2327, %v4631, 0
        %v4648 = vsel %vm2327, %v4633, 0
        %4650 = vmatpush.xpose.msra.mxu0 0.0
        %4651 = vmatpush.xpose.msra.mxu0 0.0
        %4652 = vmatpush.xpose.msra.mxu0 0.0
        %4653 = vmatpush.xpose.msra.mxu0 0.0
        %4654 = vmatpush.xpose.msra.mxu0 0.0
        %4655 = vmatpush.xpose.msra.mxu0 0.0
        %4656 = vmatpush.xpose.msra.mxu0 0.0
        %4657 = vmatpush.xpose.msra.mxu0 0.0
        %4658 = vmatpush.xpose.msra.mxu0 0.0
        %4659 = vmatpush.xpose.msra.mxu0 0.0
        %4660 = vmatpush.xpose.msra.mxu0 0.0
        %4661 = vmatpush.xpose.msra.mxu0 0.0
        %4662 = vmatpush.xpose.msra.mxu0 %v4648
        %4663 = vmatpush.xpose.msra.mxu0 %v4646
        %4664 = vmatpush.xpose.msra.mxu0 %v4644
        %4665 = vmatpush.xpose.msra.mxu0 %v4642
        %4666 = vmatmul.f32.gmra.mxu0 %v4634
        %v4667 = vpop.f32.mrf.mxu0
        %v4668 = vadd.f32 0.0, %v4667
        %4669 = vmatmul.f32.gmra.mxu0 %v4636
        %v4670 = vpop.f32.mrf.mxu0
        %v4671 = vadd.f32 0.0, %v4670
        %4672 = vmatmul.f32.gmra.mxu0 %v4638
        %v4673 = vpop.f32.mrf.mxu0
        %v4674 = vadd.f32 0.0, %v4673
        %4675 = vmatmul.f32.gmra.mxu0 %v4640
        %v4676 = vpop.f32.mrf.mxu0
        %v4677 = vadd.f32 0.0, %v4676
        %4678 = vdwg.mxu0
        %v4679 = vmul.f32 %v4668, 0.17677669
        %v4680 = vmul.f32 %v4671, 0.17677669
        %v4681 = vmul.f32 %v4674, 0.17677669
        %v4682 = vmul.f32 %v4677, 0.17677669
        %v4683 = vadd.f32 %v4679, %v2068
        %v4684 = vadd.f32 %v4680, %v2068
        %v4685 = vadd.f32 %v4681, %v2068
        %v4686 = vadd.f32 %v4682, %v2068
        %v4687 = vsel %vm2327, %v4683, -inf
        %4688 = vmax.xlane.f32.xlu0 %v4687
        %v4689 = vpop.xlane.xlu0 %4688
        %v4690 = vsel %vm2327, %v4684, -inf
        %4691 = vmax.xlane.f32.xlu0 %v4690
        %v4692 = vpop.xlane.xlu0 %4691
        %v4693 = vsel %vm2327, %v4685, -inf
        %4694 = vmax.xlane.f32.xlu0 %v4693
        %v4695 = vpop.xlane.xlu0 %4694
        %v4696 = vsel %vm2327, %v4686, -inf
        %4697 = vmax.xlane.f32.xlu0 %v4696
        %v4698 = vpop.xlane.xlu0 %4697
        %v4699 = vsub.f32 %v4683, %v4689
        %v4700 = vsub.f32 %v4684, %v4692
        %v4701 = vsub.f32 %v4685, %v4695
        %v4702 = vsub.f32 %v4686, %v4698
        %v4703 = vmul.f32 %v4699, 1.442695
        %v4704 = vpow.pop %v4703
        %v4705 = vmul.f32 %v4700, 1.442695
        %v4706 = vpow.pop %v4705
        %v4707 = vmul.f32 %v4701, 1.442695
        %v4708 = vpow.pop %v4707
        %v4709 = vmul.f32 %v4702, 1.442695
        %v4710 = vpow.pop %v4709
        %v4711 = vsel %vm2327, %v4704, 0.0
        %4712 = vadd.xlane.f32.xlu0 %v4711
        %v4713 = vpop.xlane.xlu0 %4712
        %v4714 = vsel %vm2327, %v4706, 0.0
        %4715 = vadd.xlane.f32.xlu0 %v4714
        %v4716 = vpop.xlane.xlu0 %4715
        %v4717 = vsel %vm2327, %v4708, 0.0
        %4718 = vadd.xlane.f32.xlu0 %v4717
        %v4719 = vpop.xlane.xlu0 %4718
        %v4720 = vsel %vm2327, %v4710, 0.0
        %4721 = vadd.xlane.f32.xlu0 %v4720
        %v4722 = vpop.xlane.xlu0 %4721
        %v4723 = vrcp.pop %v4713
        %v4724 = vrcp.pop %v4716
        %v4725 = vrcp.pop %v4719
        %v4726 = vrcp.pop %v4722
        %v4727 = vmul.f32 %v4704, %v4723
        %v4728 = vmul.f32 %v4706, %v4724
        %v4729 = vmul.f32 %v4708, %v4725
        %v4730 = vmul.f32 %v4710, %v4726
        %4731 = vrot.lane.b32.xlu0 %v4192, 64
        %v4732 = vpop.permute.xlu0 %4731
        %4733 = vrot.lane.b32.xlu0 %v4195, 64
        %v4734 = vpop.permute.xlu0 %4733
        %4735 = vrot.lane.b32.xlu0 %v4198, 64
        %v4736 = vpop.permute.xlu0 %4735
        %4737 = vrot.lane.b32.xlu0 %v4201, 64
        %v4738 = vpop.permute.xlu0 %4737
        %v4744 = vsel %vm2327, %v4727, 0
        %v4747 = vsel %vm2327, %v4728, 0
        %v4750 = vsel %vm2327, %v4729, 0
        %v4753 = vsel %vm2327, %v4730, 0
        %4755 = vmatpush.msra.mxu0 0.0
        %4756 = vmatpush.msra.mxu0 0.0
        %4757 = vmatpush.msra.mxu0 0.0
        %4758 = vmatpush.msra.mxu0 0.0
        %4759 = vmatpush.msra.mxu0 0.0
        %4760 = vmatpush.msra.mxu0 0.0
        %4761 = vmatpush.msra.mxu0 0.0
        %4762 = vmatpush.msra.mxu0 0.0
        %4763 = vmatpush.msra.mxu0 0.0
        %4764 = vmatpush.msra.mxu0 0.0
        %4765 = vmatpush.msra.mxu0 0.0
        %4766 = vmatpush.msra.mxu0 0.0
        %4767 = vmatpush.msra.mxu0 %v4738
        %4768 = vmatpush.msra.mxu0 %v4736
        %4769 = vmatpush.msra.mxu0 %v4734
        %4770 = vmatpush.msra.mxu0 %v4732
        %4771 = vmatmul.f32.gmra.mxu0 %v4744
        %v4772 = vpop.f32.mrf.mxu0
        %v4773 = vadd.f32 0.0, %v4772
        %4774 = vmatmul.f32.gmra.mxu0 %v4747
        %v4775 = vpop.f32.mrf.mxu0
        %v4776 = vadd.f32 0.0, %v4775
        %4777 = vmatmul.f32.gmra.mxu0 %v4750
        %v4778 = vpop.f32.mrf.mxu0
        %v4779 = vadd.f32 0.0, %v4778
        %4780 = vmatmul.f32.gmra.mxu0 %v4753
        %v4781 = vpop.f32.mrf.mxu0
        %v4782 = vadd.f32 0.0, %v4781
        %4783 = vdwg.mxu0
        %v4785 = vsel %vm2327, %v4773, 0
        %v4788 = vsel %vm2327, %v4776, 0
        %v4791 = vsel %vm2327, %v4779, 0
        %v4794 = vsel %vm2327, %v4782, 0
        %4796 = vmatpush.msra.mxu0 0.0
        %4797 = vmatpush.msra.mxu0 0.0
        %4798 = vmatpush.msra.mxu0 0.0
        %4799 = vmatpush.msra.mxu0 0.0
        %4800 = vmatpush.msra.mxu0 0.0
        %4801 = vmatpush.msra.mxu0 0.0
        %4802 = vmatpush.msra.mxu0 0.0
        %4803 = vmatpush.msra.mxu0 0.0
        %4804 = vmatpush.msra.mxu0 0.0
        %4805 = vmatpush.msra.mxu0 0.0
        %4806 = vmatpush.msra.mxu0 0.0
        %4807 = vmatpush.msra.mxu0 0.0
        %4808 = vmatpush.msra.mxu0 %v4215
        %4809 = vmatpush.msra.mxu0 %v4214
        %4810 = vmatpush.msra.mxu0 %v4213
        %4811 = vmatpush.msra.mxu0 %v4212
        %4812 = vmatmul.f32.gmra.mxu0 %v4785
        %v4813 = vpop.f32.mrf.mxu0
        %v4814 = vadd.f32 0.0, %v4813
        %4815 = vmatmul.f32.gmra.mxu0 %v4788
        %v4816 = vpop.f32.mrf.mxu0
        %v4817 = vadd.f32 0.0, %v4816
        %4818 = vmatmul.f32.gmra.mxu0 %v4791
        %v4819 = vpop.f32.mrf.mxu0
        %v4820 = vadd.f32 0.0, %v4819
        %4821 = vmatmul.f32.gmra.mxu0 %v4794
        %v4822 = vpop.f32.mrf.mxu0
        %v4823 = vadd.f32 0.0, %v4822
        %4824 = vdwg.mxu0
        %v4825 = vadd.f32 %v4607, %v4814
        %v4826 = vadd.f32 %v4610, %v4817
        %v4827 = vadd.f32 %v4613, %v4820
        %v4828 = vadd.f32 %v4616, %v4823
        %4829 = vrot.lane.b32.xlu0 %v4134, 32
        %v4830 = vpop.permute.xlu0 %4829
        %4831 = vrot.lane.b32.xlu0 %v4137, 32
        %v4832 = vpop.permute.xlu0 %4831
        %4833 = vrot.lane.b32.xlu0 %v4140, 32
        %v4834 = vpop.permute.xlu0 %4833
        %4835 = vrot.lane.b32.xlu0 %v4143, 32
        %v4836 = vpop.permute.xlu0 %4835
        %4837 = vrot.lane.b32.xlu0 %v4163, 32
        %v4838 = vpop.permute.xlu0 %4837
        %4839 = vrot.lane.b32.xlu0 %v4166, 32
        %v4840 = vpop.permute.xlu0 %4839
        %4841 = vrot.lane.b32.xlu0 %v4169, 32
        %v4842 = vpop.permute.xlu0 %4841
        %4843 = vrot.lane.b32.xlu0 %v4172, 32
        %v4844 = vpop.permute.xlu0 %4843
        %v4845 = vsel %vm2327, %v4830, 0
        %v4847 = vsel %vm2327, %v4832, 0
        %v4849 = vsel %vm2327, %v4834, 0
        %v4851 = vsel %vm2327, %v4836, 0
        %v4853 = vsel %vm2327, %v4838, 0
        %v4855 = vsel %vm2327, %v4840, 0
        %v4857 = vsel %vm2327, %v4842, 0
        %v4859 = vsel %vm2327, %v4844, 0
        %4861 = vmatpush.xpose.msra.mxu0 0.0
        %4862 = vmatpush.xpose.msra.mxu0 0.0
        %4863 = vmatpush.xpose.msra.mxu0 0.0
        %4864 = vmatpush.xpose.msra.mxu0 0.0
        %4865 = vmatpush.xpose.msra.mxu0 0.0
        %4866 = vmatpush.xpose.msra.mxu0 0.0
        %4867 = vmatpush.xpose.msra.mxu0 0.0
        %4868 = vmatpush.xpose.msra.mxu0 0.0
        %4869 = vmatpush.xpose.msra.mxu0 0.0
        %4870 = vmatpush.xpose.msra.mxu0 0.0
        %4871 = vmatpush.xpose.msra.mxu0 0.0
        %4872 = vmatpush.xpose.msra.mxu0 0.0
        %4873 = vmatpush.xpose.msra.mxu0 %v4859
        %4874 = vmatpush.xpose.msra.mxu0 %v4857
        %4875 = vmatpush.xpose.msra.mxu0 %v4855
        %4876 = vmatpush.xpose.msra.mxu0 %v4853
        %4877 = vmatmul.f32.gmra.mxu0 %v4845
        %v4878 = vpop.f32.mrf.mxu0
        %v4879 = vadd.f32 0.0, %v4878
        %4880 = vmatmul.f32.gmra.mxu0 %v4847
        %v4881 = vpop.f32.mrf.mxu0
        %v4882 = vadd.f32 0.0, %v4881
        %4883 = vmatmul.f32.gmra.mxu0 %v4849
        %v4884 = vpop.f32.mrf.mxu0
        %v4885 = vadd.f32 0.0, %v4884
        %4886 = vmatmul.f32.gmra.mxu0 %v4851
        %v4887 = vpop.f32.mrf.mxu0
        %v4888 = vadd.f32 0.0, %v4887
        %4889 = vdwg.mxu0
        %v4890 = vmul.f32 %v4879, 0.17677669
        %v4891 = vmul.f32 %v4882, 0.17677669
        %v4892 = vmul.f32 %v4885, 0.17677669
        %v4893 = vmul.f32 %v4888, 0.17677669
        %v4894 = vadd.f32 %v4890, %v2068
        %v4895 = vadd.f32 %v4891, %v2068
        %v4896 = vadd.f32 %v4892, %v2068
        %v4897 = vadd.f32 %v4893, %v2068
        %v4898 = vsel %vm2327, %v4894, -inf
        %4899 = vmax.xlane.f32.xlu0 %v4898
        %v4900 = vpop.xlane.xlu0 %4899
        %v4901 = vsel %vm2327, %v4895, -inf
        %4902 = vmax.xlane.f32.xlu0 %v4901
        %v4903 = vpop.xlane.xlu0 %4902
        %v4904 = vsel %vm2327, %v4896, -inf
        %4905 = vmax.xlane.f32.xlu0 %v4904
        %v4906 = vpop.xlane.xlu0 %4905
        %v4907 = vsel %vm2327, %v4897, -inf
        %4908 = vmax.xlane.f32.xlu0 %v4907
        %v4909 = vpop.xlane.xlu0 %4908
        %v4910 = vsub.f32 %v4894, %v4900
        %v4911 = vsub.f32 %v4895, %v4903
        %v4912 = vsub.f32 %v4896, %v4906
        %v4913 = vsub.f32 %v4897, %v4909
        %v4914 = vmul.f32 %v4910, 1.442695
        %v4915 = vpow.pop %v4914
        %v4916 = vmul.f32 %v4911, 1.442695
        %v4917 = vpow.pop %v4916
        %v4918 = vmul.f32 %v4912, 1.442695
        %v4919 = vpow.pop %v4918
        %v4920 = vmul.f32 %v4913, 1.442695
        %v4921 = vpow.pop %v4920
        %v4922 = vsel %vm2327, %v4915, 0.0
        %4923 = vadd.xlane.f32.xlu0 %v4922
        %v4924 = vpop.xlane.xlu0 %4923
        %v4925 = vsel %vm2327, %v4917, 0.0
        %4926 = vadd.xlane.f32.xlu0 %v4925
        %v4927 = vpop.xlane.xlu0 %4926
        %v4928 = vsel %vm2327, %v4919, 0.0
        %4929 = vadd.xlane.f32.xlu0 %v4928
        %v4930 = vpop.xlane.xlu0 %4929
        %v4931 = vsel %vm2327, %v4921, 0.0
        %4932 = vadd.xlane.f32.xlu0 %v4931
        %v4933 = vpop.xlane.xlu0 %4932
        %v4934 = vrcp.pop %v4924
        %v4935 = vrcp.pop %v4927
        %v4936 = vrcp.pop %v4930
        %v4937 = vrcp.pop %v4933
        %v4938 = vmul.f32 %v4915, %v4934
        %v4939 = vmul.f32 %v4917, %v4935
        %v4940 = vmul.f32 %v4919, %v4936
        %v4941 = vmul.f32 %v4921, %v4937
        %4942 = vrot.lane.b32.xlu0 %v4192, 32
        %v4943 = vpop.permute.xlu0 %4942
        %4944 = vrot.lane.b32.xlu0 %v4195, 32
        %v4945 = vpop.permute.xlu0 %4944
        %4946 = vrot.lane.b32.xlu0 %v4198, 32
        %v4947 = vpop.permute.xlu0 %4946
        %4948 = vrot.lane.b32.xlu0 %v4201, 32
        %v4949 = vpop.permute.xlu0 %4948
        %v4955 = vsel %vm2327, %v4938, 0
        %v4958 = vsel %vm2327, %v4939, 0
        %v4961 = vsel %vm2327, %v4940, 0
        %v4964 = vsel %vm2327, %v4941, 0
        %4966 = vmatpush.msra.mxu0 0.0
        %4967 = vmatpush.msra.mxu0 0.0
        %4968 = vmatpush.msra.mxu0 0.0
        %4969 = vmatpush.msra.mxu0 0.0
        %4970 = vmatpush.msra.mxu0 0.0
        %4971 = vmatpush.msra.mxu0 0.0
        %4972 = vmatpush.msra.mxu0 0.0
        %4973 = vmatpush.msra.mxu0 0.0
        %4974 = vmatpush.msra.mxu0 0.0
        %4975 = vmatpush.msra.mxu0 0.0
        %4976 = vmatpush.msra.mxu0 0.0
        %4977 = vmatpush.msra.mxu0 0.0
        %4978 = vmatpush.msra.mxu0 %v4949
        %4979 = vmatpush.msra.mxu0 %v4947
        %4980 = vmatpush.msra.mxu0 %v4945
        %4981 = vmatpush.msra.mxu0 %v4943
        %4982 = vmatmul.f32.gmra.mxu0 %v4955
        %v4983 = vpop.f32.mrf.mxu0
        %v4984 = vadd.f32 0.0, %v4983
        %4985 = vmatmul.f32.gmra.mxu0 %v4958
        %v4986 = vpop.f32.mrf.mxu0
        %v4987 = vadd.f32 0.0, %v4986
        %4988 = vmatmul.f32.gmra.mxu0 %v4961
        %v4989 = vpop.f32.mrf.mxu0
        %v4990 = vadd.f32 0.0, %v4989
        %4991 = vmatmul.f32.gmra.mxu0 %v4964
        %v4992 = vpop.f32.mrf.mxu0
        %v4993 = vadd.f32 0.0, %v4992
        %4994 = vdwg.mxu0
        %v4996 = vsel %vm2327, %v4984, 0
        %v4999 = vsel %vm2327, %v4987, 0
        %v5002 = vsel %vm2327, %v4990, 0
        %v5005 = vsel %vm2327, %v4993, 0
        %5007 = vmatpush.msra.mxu0 0.0
        %5008 = vmatpush.msra.mxu0 0.0
        %5009 = vmatpush.msra.mxu0 0.0
        %5010 = vmatpush.msra.mxu0 0.0
        %5011 = vmatpush.msra.mxu0 0.0
        %5012 = vmatpush.msra.mxu0 0.0
        %5013 = vmatpush.msra.mxu0 0.0
        %5014 = vmatpush.msra.mxu0 0.0
        %5015 = vmatpush.msra.mxu0 0.0
        %5016 = vmatpush.msra.mxu0 0.0
        %5017 = vmatpush.msra.mxu0 0.0
        %5018 = vmatpush.msra.mxu0 0.0
        %5019 = vmatpush.msra.mxu0 %v4219
        %5020 = vmatpush.msra.mxu0 %v4218
        %5021 = vmatpush.msra.mxu0 %v4217
        %5022 = vmatpush.msra.mxu0 %v4216
        %5023 = vmatmul.f32.gmra.mxu0 %v4996
        %v5024 = vpop.f32.mrf.mxu0
        %v5025 = vadd.f32 0.0, %v5024
        %5026 = vmatmul.f32.gmra.mxu0 %v4999
        %v5027 = vpop.f32.mrf.mxu0
        %v5028 = vadd.f32 0.0, %v5027
        %5029 = vmatmul.f32.gmra.mxu0 %v5002
        %v5030 = vpop.f32.mrf.mxu0
        %v5031 = vadd.f32 0.0, %v5030
        %5032 = vmatmul.f32.gmra.mxu0 %v5005
        %v5033 = vpop.f32.mrf.mxu0
        %v5034 = vadd.f32 0.0, %v5033
        %5035 = vdwg.mxu0
        %v5036 = vadd.f32 %v4825, %v5025
        %v5037 = vadd.f32 %v4826, %v5028
        %v5038 = vadd.f32 %v4827, %v5031
        %v5039 = vadd.f32 %v4828, %v5034
        %v5040 = vadd.f32 %v3962, %v5036
        %v5041 = vadd.f32 %v3963, %v5037
        %v5042 = vadd.f32 %v3964, %v5038
        %v5043 = vadd.f32 %v3965, %v5039
        %v5044 = vld [vmem:[%s49 + $0x1] sm:$0x1]
        %v5045 = vperm.slane %v5044, 0
        %v5046 = vadd.f32 %v5040, %v5045
        %v5047 = vadd.f32 %v5041, %v5045
        %v5048 = vadd.f32 %v5042, %v5045
        %v5049 = vadd.f32 %v5043, %v5045
        %v5050 = vld [vmem:[%s51 + $0x1] sm:$0x1]
        %v5051 = vld [vmem:[#allocation23 + $0x1] sm:$0x1]
        %5052 = vadd.xlane.f32.xlu0 %v5046
        %v5053 = vpop.xlane.xlu0 %5052
        %5054 = vadd.xlane.f32.xlu0 %v5047
        %v5055 = vpop.xlane.xlu0 %5054
        %5056 = vadd.xlane.f32.xlu0 %v5048
        %v5057 = vpop.xlane.xlu0 %5056
        %5058 = vadd.xlane.f32.xlu0 %v5049
        %v5059 = vpop.xlane.xlu0 %5058
        %v5060 = vmul.f32 %v5053, %v2085
        %v5061 = vmul.f32 %v5055, %v2085
        %v5062 = vmul.f32 %v5057, %v2085
        %v5063 = vmul.f32 %v5059, %v2085
        %v5064 = vsub.f32 %v5046, %v5060
        %v5065 = vsub.f32 %v5047, %v5061
        %v5066 = vsub.f32 %v5048, %v5062
        %v5067 = vsub.f32 %v5049, %v5063
        %v5068 = vmul.f32 %v5064, %v5064
        %v5069 = vmul.f32 %v5065, %v5065
        %v5070 = vmul.f32 %v5066, %v5066
        %v5071 = vmul.f32 %v5067, %v5067
        %5072 = vadd.xlane.f32.xlu0 %v5068
        %v5073 = vpop.xlane.xlu0 %5072
        %5074 = vadd.xlane.f32.xlu0 %v5069
        %v5075 = vpop.xlane.xlu0 %5074
        %5076 = vadd.xlane.f32.xlu0 %v5070
        %v5077 = vpop.xlane.xlu0 %5076
        %5078 = vadd.xlane.f32.xlu0 %v5071
        %v5079 = vpop.xlane.xlu0 %5078
        %v5080 = vmul.f32 %v5073, %v2085
        %v5081 = vmul.f32 %v5075, %v2085
        %v5082 = vmul.f32 %v5077, %v2085
        %v5083 = vmul.f32 %v5079, %v2085
        %v5084 = vadd.f32 %v5080, 1e-05
        %v5085 = vadd.f32 %v5081, 1e-05
        %v5086 = vadd.f32 %v5082, 1e-05
        %v5087 = vadd.f32 %v5083, 1e-05
        %v5088 = vrsqrt.pop %v5084
        %v5089 = vmul.f32 %v5088, %v5084
        %v5090 = vmul.f32 %v5089, %v5088
        %v5091 = vmul.f32 0.5, %v5090
        %v5092 = vsub.f32 1.5, %v5091
        %v5093 = vmul.f32 %v5088, %v5092
        %vm5094 = vweird.f32 %v5084
        %vm5095 = vweird.f32 %v5088
        %vm5096 = vmor %vm5094, %vm5095
        %v5097 = vsel %vm5096, %v5088, %v5093
        %v5098 = vrsqrt.pop %v5085
        %v5099 = vmul.f32 %v5098, %v5085
        %v5100 = vmul.f32 %v5099, %v5098
        %v5101 = vmul.f32 0.5, %v5100
        %v5102 = vsub.f32 1.5, %v5101
        %v5103 = vmul.f32 %v5098, %v5102
        %vm5104 = vweird.f32 %v5085
        %vm5105 = vweird.f32 %v5098
        %vm5106 = vmor %vm5104, %vm5105
        %v5107 = vsel %vm5106, %v5098, %v5103
        %v5108 = vrsqrt.pop %v5086
        %v5109 = vmul.f32 %v5108, %v5086
        %v5110 = vmul.f32 %v5109, %v5108
        %v5111 = vmul.f32 0.5, %v5110
        %v5112 = vsub.f32 1.5, %v5111
        %v5113 = vmul.f32 %v5108, %v5112
        %vm5114 = vweird.f32 %v5086
        %vm5115 = vweird.f32 %v5108
        %vm5116 = vmor %vm5114, %vm5115
        %v5117 = vsel %vm5116, %v5108, %v5113
        %v5118 = vrsqrt.pop %v5087
        %v5119 = vmul.f32 %v5118, %v5087
        %v5120 = vmul.f32 %v5119, %v5118
        %v5121 = vmul.f32 0.5, %v5120
        %v5122 = vsub.f32 1.5, %v5121
        %v5123 = vmul.f32 %v5118, %v5122
        %vm5124 = vweird.f32 %v5087
        %vm5125 = vweird.f32 %v5118
        %vm5126 = vmor %vm5124, %vm5125
        %v5127 = vsel %vm5126, %v5118, %v5123
        %v5128 = vmul.f32 %v5064, %v5097
        %v5129 = vmul.f32 %v5065, %v5107
        %v5130 = vmul.f32 %v5066, %v5117
        %v5131 = vmul.f32 %v5067, %v5127
        %v5132 = vperm.slane %v5050, 0
        %v5133 = vmul.f32 %v5128, %v5132
        %v5134 = vmul.f32 %v5129, %v5132
        %v5135 = vmul.f32 %v5130, %v5132
        %v5136 = vmul.f32 %v5131, %v5132
        %v5137 = vperm.slane %v5051, 0
        %v5138 = vadd.f32 %v5133, %v5137
        %v5139 = vadd.f32 %v5134, %v5137
        %v5140 = vadd.f32 %v5135, %v5137
        %v5141 = vadd.f32 %v5136, %v5137
        %s5142 = scalar_lea.vmem [#allocation25], 512
        %v5143 = vld [vmem:[%s5142] sm:$0xff]
        %v5144 = vld [vmem:[%s5142 + $0x8] sm:$0xff]
        %v5145 = vld [vmem:[%s5142 + $0x10] sm:$0xff]
        %v5146 = vld [vmem:[%s5142 + $0x18] sm:$0xff]
        %v5147 = vld [vmem:[%s5142 + $0x20] sm:$0xff]
        %v5148 = vld [vmem:[%s5142 + $0x28] sm:$0xff]
        %v5149 = vld [vmem:[%s5142 + $0x30] sm:$0xff]
        %v5150 = vld [vmem:[%s5142 + $0x38] sm:$0xff]
        %v5151 = vld [vmem:[%s5142 + $0x40] sm:$0xff]
        %v5152 = vld [vmem:[%s5142 + $0x48] sm:$0xff]
        %v5153 = vld [vmem:[%s5142 + $0x50] sm:$0xff]
        %v5154 = vld [vmem:[%s5142 + $0x58] sm:$0xff]
        %v5155 = vld [vmem:[%s5142 + $0x60] sm:$0xff]
        %v5156 = vld [vmem:[%s5142 + $0x68] sm:$0xff]
        %v5157 = vld [vmem:[%s5142 + $0x70] sm:$0xff]
        %v5158 = vld [vmem:[%s5142 + $0x78] sm:$0xff]
        %v5159 = vld [vmem:[%s5142 + $0x80] sm:$0xff]
        %v5160 = vld [vmem:[%s5142 + $0x88] sm:$0xff]
        %v5161 = vld [vmem:[%s5142 + $0x90] sm:$0xff]
        %v5162 = vld [vmem:[%s5142 + $0x98] sm:$0xff]
        %v5163 = vld [vmem:[%s5142 + $0xa0] sm:$0xff]
        %v5164 = vld [vmem:[%s5142 + $0xa8] sm:$0xff]
        %v5165 = vld [vmem:[%s5142 + $0xb0] sm:$0xff]
        %v5166 = vld [vmem:[%s5142 + $0xb8] sm:$0xff]
        %v5167 = vld [vmem:[%s5142 + $0xc0] sm:$0xff]
        %v5168 = vld [vmem:[%s5142 + $0xc8] sm:$0xff]
        %v5169 = vld [vmem:[%s5142 + $0xd0] sm:$0xff]
        %v5170 = vld [vmem:[%s5142 + $0xd8] sm:$0xff]
        %v5171 = vld [vmem:[%s5142 + $0xe0] sm:$0xff]
        %v5172 = vld [vmem:[%s5142 + $0xe8] sm:$0xff]
        %v5173 = vld [vmem:[%s5142 + $0xf0] sm:$0xff]
        %v5174 = vld [vmem:[%s5142 + $0xf8] sm:$0xff]
        %v5175 = vld [vmem:[%s5142 + $0x100] sm:$0xff]
        %v5176 = vld [vmem:[%s5142 + $0x108] sm:$0xff]
        %v5177 = vld [vmem:[%s5142 + $0x110] sm:$0xff]
        %v5178 = vld [vmem:[%s5142 + $0x118] sm:$0xff]
        %v5179 = vld [vmem:[%s5142 + $0x120] sm:$0xff]
        %v5180 = vld [vmem:[%s5142 + $0x128] sm:$0xff]
        %v5181 = vld [vmem:[%s5142 + $0x130] sm:$0xff]
        %v5182 = vld [vmem:[%s5142 + $0x138] sm:$0xff]
        %v5183 = vld [vmem:[%s5142 + $0x140] sm:$0xff]
        %v5184 = vld [vmem:[%s5142 + $0x148] sm:$0xff]
        %v5185 = vld [vmem:[%s5142 + $0x150] sm:$0xff]
        %v5186 = vld [vmem:[%s5142 + $0x158] sm:$0xff]
        %v5187 = vld [vmem:[%s5142 + $0x160] sm:$0xff]
        %v5188 = vld [vmem:[%s5142 + $0x168] sm:$0xff]
        %v5189 = vld [vmem:[%s5142 + $0x170] sm:$0xff]
        %v5190 = vld [vmem:[%s5142 + $0x178] sm:$0xff]
        %v5191 = vld [vmem:[%s5142 + $0x180] sm:$0xff]
        %v5192 = vld [vmem:[%s5142 + $0x188] sm:$0xff]
        %v5193 = vld [vmem:[%s5142 + $0x190] sm:$0xff]
        %v5194 = vld [vmem:[%s5142 + $0x198] sm:$0xff]
        %v5195 = vld [vmem:[%s5142 + $0x1a0] sm:$0xff]
        %v5196 = vld [vmem:[%s5142 + $0x1a8] sm:$0xff]
        %v5197 = vld [vmem:[%s5142 + $0x1b0] sm:$0xff]
        %v5198 = vld [vmem:[%s5142 + $0x1b8] sm:$0xff]
        %v5199 = vld [vmem:[%s5142 + $0x1c0] sm:$0xff]
        %v5200 = vld [vmem:[%s5142 + $0x1c8] sm:$0xff]
        %v5201 = vld [vmem:[%s5142 + $0x1d0] sm:$0xff]
        %v5202 = vld [vmem:[%s5142 + $0x1d8] sm:$0xff]
        %v5203 = vld [vmem:[%s5142 + $0x1e0] sm:$0xff]
        %v5204 = vld [vmem:[%s5142 + $0x1e8] sm:$0xff]
        %v5205 = vld [vmem:[%s5142 + $0x1f0] sm:$0xff]
        %v5206 = vld [vmem:[%s5142 + $0x1f8] sm:$0xff]
        %s5207 = scalar_lea.vmem %s57, 1
        %v5208 = vld [vmem:[%s5207] ss:$2 sm:$0xf]
        %v5210 = vperm.slane %v5208, 0
        %v5211 = vperm.slane %v5208, 1
        %v5212 = vperm.slane %v5208, 2
        %v5213 = vperm.slane %v5208, 3
        %5218 = vmatpush.msra.mxu0 %v5203
        %5219 = vmatpush.msra.mxu0 %v5199
        %5220 = vmatpush.msra.mxu0 %v5195
        %5221 = vmatpush.msra.mxu0 %v5191
        %5222 = vmatpush.msra.mxu0 %v5187
        %5223 = vmatpush.msra.mxu0 %v5183
        %5224 = vmatpush.msra.mxu0 %v5179
        %5225 = vmatpush.msra.mxu0 %v5175
        %5226 = vmatpush.msra.mxu0 %v5171
        %5227 = vmatpush.msra.mxu0 %v5167
        %5228 = vmatpush.msra.mxu0 %v5163
        %5229 = vmatpush.msra.mxu0 %v5159
        %5230 = vmatpush.msra.mxu0 %v5155
        %5231 = vmatpush.msra.mxu0 %v5151
        %5232 = vmatpush.msra.mxu0 %v5147
        %5233 = vmatpush.msra.mxu0 %v5143
        %5234 = vmatmul.f32.gmra.mxu0 %v5138
        %v5235 = vpop.f32.mrf.mxu0
        %v5236 = vadd.f32 %v5210, %v5235
        %5237 = vmatmul.f32.gmra.mxu0 %v5139
        %v5238 = vpop.f32.mrf.mxu0
        %v5239 = vadd.f32 %v5210, %v5238
        %5240 = vmatmul.f32.gmra.mxu0 %v5140
        %v5241 = vpop.f32.mrf.mxu0
        %v5242 = vadd.f32 %v5210, %v5241
        %5243 = vmatmul.f32.gmra.mxu0 %v5141
        %v5244 = vpop.f32.mrf.mxu0
        %v5245 = vadd.f32 %v5210, %v5244
        %5246 = vdwg.mxu0
        %5247 = vmatpush.msra.mxu0 %v5204
        %5248 = vmatpush.msra.mxu0 %v5200
        %5249 = vmatpush.msra.mxu0 %v5196
        %5250 = vmatpush.msra.mxu0 %v5192
        %5251 = vmatpush.msra.mxu0 %v5188
        %5252 = vmatpush.msra.mxu0 %v5184
        %5253 = vmatpush.msra.mxu0 %v5180
        %5254 = vmatpush.msra.mxu0 %v5176
        %5255 = vmatpush.msra.mxu0 %v5172
        %5256 = vmatpush.msra.mxu0 %v5168
        %5257 = vmatpush.msra.mxu0 %v5164
        %5258 = vmatpush.msra.mxu0 %v5160
        %5259 = vmatpush.msra.mxu0 %v5156
        %5260 = vmatpush.msra.mxu0 %v5152
        %5261 = vmatpush.msra.mxu0 %v5148
        %5262 = vmatpush.msra.mxu0 %v5144
        %5263 = vmatmul.f32.gmra.mxu0 %v5138
        %v5264 = vpop.f32.mrf.mxu0
        %v5265 = vadd.f32 %v5211, %v5264
        %5266 = vmatmul.f32.gmra.mxu0 %v5139
        %v5267 = vpop.f32.mrf.mxu0
        %v5268 = vadd.f32 %v5211, %v5267
        %5269 = vmatmul.f32.gmra.mxu0 %v5140
        %v5270 = vpop.f32.mrf.mxu0
        %v5271 = vadd.f32 %v5211, %v5270
        %5272 = vmatmul.f32.gmra.mxu0 %v5141
        %v5273 = vpop.f32.mrf.mxu0
        %v5274 = vadd.f32 %v5211, %v5273
        %5275 = vdwg.mxu0
        %5276 = vmatpush.msra.mxu0 %v5205
        %5277 = vmatpush.msra.mxu0 %v5201
        %5278 = vmatpush.msra.mxu0 %v5197
        %5279 = vmatpush.msra.mxu0 %v5193
        %5280 = vmatpush.msra.mxu0 %v5189
        %5281 = vmatpush.msra.mxu0 %v5185
        %5282 = vmatpush.msra.mxu0 %v5181
        %5283 = vmatpush.msra.mxu0 %v5177
        %5284 = vmatpush.msra.mxu0 %v5173
        %5285 = vmatpush.msra.mxu0 %v5169
        %5286 = vmatpush.msra.mxu0 %v5165
        %5287 = vmatpush.msra.mxu0 %v5161
        %5288 = vmatpush.msra.mxu0 %v5157
        %5289 = vmatpush.msra.mxu0 %v5153
        %5290 = vmatpush.msra.mxu0 %v5149
        %5291 = vmatpush.msra.mxu0 %v5145
        %5292 = vmatmul.f32.gmra.mxu0 %v5138
        %v5293 = vpop.f32.mrf.mxu0
        %v5294 = vadd.f32 %v5212, %v5293
        %5295 = vmatmul.f32.gmra.mxu0 %v5139
        %v5296 = vpop.f32.mrf.mxu0
        %v5297 = vadd.f32 %v5212, %v5296
        %5298 = vmatmul.f32.gmra.mxu0 %v5140
        %v5299 = vpop.f32.mrf.mxu0
        %v5300 = vadd.f32 %v5212, %v5299
        %5301 = vmatmul.f32.gmra.mxu0 %v5141
        %v5302 = vpop.f32.mrf.mxu0
        %v5303 = vadd.f32 %v5212, %v5302
        %5304 = vdwg.mxu0
        %5305 = vmatpush.msra.mxu0 %v5206
        %5306 = vmatpush.msra.mxu0 %v5202
        %5307 = vmatpush.msra.mxu0 %v5198
        %5308 = vmatpush.msra.mxu0 %v5194
        %5309 = vmatpush.msra.mxu0 %v5190
        %5310 = vmatpush.msra.mxu0 %v5186
        %5311 = vmatpush.msra.mxu0 %v5182
        %5312 = vmatpush.msra.mxu0 %v5178
        %5313 = vmatpush.msra.mxu0 %v5174
        %5314 = vmatpush.msra.mxu0 %v5170
        %5315 = vmatpush.msra.mxu0 %v5166
        %5316 = vmatpush.msra.mxu0 %v5162
        %5317 = vmatpush.msra.mxu0 %v5158
        %5318 = vmatpush.msra.mxu0 %v5154
        %5319 = vmatpush.msra.mxu0 %v5150
        %5320 = vmatpush.msra.mxu0 %v5146
        %5321 = vmatmul.f32.gmra.mxu0 %v5138
        %v5322 = vpop.f32.mrf.mxu0
        %v5323 = vadd.f32 %v5213, %v5322
        %5324 = vmatmul.f32.gmra.mxu0 %v5139
        %v5325 = vpop.f32.mrf.mxu0
        %v5326 = vadd.f32 %v5213, %v5325
        %5327 = vmatmul.f32.gmra.mxu0 %v5140
        %v5328 = vpop.f32.mrf.mxu0
        %v5329 = vadd.f32 %v5213, %v5328
        %5330 = vmatmul.f32.gmra.mxu0 %v5141
        %v5331 = vpop.f32.mrf.mxu0
        %v5332 = vadd.f32 %v5213, %v5331
        %5333 = vdwg.mxu0
        %v5334 = vmul.f32 %v5236, 1.702
        %v5335 = vmul.f32 %v5265, 1.702
        %v5336 = vmul.f32 %v5294, 1.702
        %v5337 = vmul.f32 %v5323, 1.702
        %v5338 = vmul.f32 %v5239, 1.702
        %v5339 = vmul.f32 %v5268, 1.702
        %v5340 = vmul.f32 %v5297, 1.702
        %v5341 = vmul.f32 %v5326, 1.702
        %v5342 = vmul.f32 %v5242, 1.702
        %v5343 = vmul.f32 %v5271, 1.702
        %v5344 = vmul.f32 %v5300, 1.702
        %v5345 = vmul.f32 %v5329, 1.702
        %v5346 = vmul.f32 %v5245, 1.702
        %v5347 = vmul.f32 %v5274, 1.702
        %v5348 = vmul.f32 %v5303, 1.702
        %v5349 = vmul.f32 %v5332, 1.702
        %v5350 = vxor.u32 %v5334, 2147483648
        %v5351 = vxor.u32 %v5335, 2147483648
        %v5352 = vxor.u32 %v5336, 2147483648
        %v5353 = vxor.u32 %v5337, 2147483648
        %v5354 = vxor.u32 %v5338, 2147483648
        %v5355 = vxor.u32 %v5339, 2147483648
        %v5356 = vxor.u32 %v5340, 2147483648
        %v5357 = vxor.u32 %v5341, 2147483648
        %v5358 = vxor.u32 %v5342, 2147483648
        %v5359 = vxor.u32 %v5343, 2147483648
        %v5360 = vxor.u32 %v5344, 2147483648
        %v5361 = vxor.u32 %v5345, 2147483648
        %v5362 = vxor.u32 %v5346, 2147483648
        %v5363 = vxor.u32 %v5347, 2147483648
        %v5364 = vxor.u32 %v5348, 2147483648
        %v5365 = vxor.u32 %v5349, 2147483648
        %v5366 = vmul.f32 %v5350, 1.442695
        %v5367 = vpow.pop %v5366
        %v5368 = vmul.f32 %v5351, 1.442695
        %v5369 = vpow.pop %v5368
        %v5370 = vmul.f32 %v5352, 1.442695
        %v5371 = vpow.pop %v5370
        %v5372 = vmul.f32 %v5353, 1.442695
        %v5373 = vpow.pop %v5372
        %v5374 = vmul.f32 %v5354, 1.442695
        %v5375 = vpow.pop %v5374
        %v5376 = vmul.f32 %v5355, 1.442695
        %v5377 = vpow.pop %v5376
        %v5378 = vmul.f32 %v5356, 1.442695
        %v5379 = vpow.pop %v5378
        %v5380 = vmul.f32 %v5357, 1.442695
        %v5381 = vpow.pop %v5380
        %v5382 = vmul.f32 %v5358, 1.442695
        %v5383 = vpow.pop %v5382
        %v5384 = vmul.f32 %v5359, 1.442695
        %v5385 = vpow.pop %v5384
        %v5386 = vmul.f32 %v5360, 1.442695
        %v5387 = vpow.pop %v5386
        %v5388 = vmul.f32 %v5361, 1.442695
        %v5389 = vpow.pop %v5388
        %v5390 = vmul.f32 %v5362, 1.442695
        %v5391 = vpow.pop %v5390
        %v5392 = vmul.f32 %v5363, 1.442695
        %v5393 = vpow.pop %v5392
        %v5394 = vmul.f32 %v5364, 1.442695
        %v5395 = vpow.pop %v5394
        %v5396 = vmul.f32 %v5365, 1.442695
        %v5397 = vpow.pop %v5396
        %v5398 = vadd.f32 %v5367, 1.0
        %v5399 = vadd.f32 %v5369, 1.0
        %v5400 = vadd.f32 %v5371, 1.0
        %v5401 = vadd.f32 %v5373, 1.0
        %v5402 = vadd.f32 %v5375, 1.0
        %v5403 = vadd.f32 %v5377, 1.0
        %v5404 = vadd.f32 %v5379, 1.0
        %v5405 = vadd.f32 %v5381, 1.0
        %v5406 = vadd.f32 %v5383, 1.0
        %v5407 = vadd.f32 %v5385, 1.0
        %v5408 = vadd.f32 %v5387, 1.0
        %v5409 = vadd.f32 %v5389, 1.0
        %v5410 = vadd.f32 %v5391, 1.0
        %v5411 = vadd.f32 %v5393, 1.0
        %v5412 = vadd.f32 %v5395, 1.0
        %v5413 = vadd.f32 %v5397, 1.0
        %v5414 = vrcp.pop %v5398
        %v5415 = vmul.f32 %v5398, %v5414
        %v5416 = vsub.f32 1.0, %v5415
        %v5417 = vmul.f32 %v5414, %v5416
        %v5418 = vadd.f32 %v5414, %v5417
        %vm5419 = vweird.f32 %v5398
        %vm5420 = vweird.f32 %v5414
        %vm5421 = vmor %vm5419, %vm5420
        %v5422 = vsel %vm5421, %v5414, %v5418
        %v5423 = vand.u32 2147483647, %v5398
        %vm5424 = vcmp.eq.f32.partialorder %v5423, 8.507059e+37
        %v5425 = vand.u32 %v5398, 2147483648
        %v5426 = vor.u32 1.1754944e-38, %v5425
        %v5427 = vsel %vm5424, %v5426, %v5422
        %v5428 = vmul.f32 1.0, %v5427
        %v5429 = vrcp.pop %v5399
        %v5430 = vmul.f32 %v5399, %v5429
        %v5431 = vsub.f32 1.0, %v5430
        %v5432 = vmul.f32 %v5429, %v5431
        %v5433 = vadd.f32 %v5429, %v5432
        %vm5434 = vweird.f32 %v5399
        %vm5435 = vweird.f32 %v5429
        %vm5436 = vmor %vm5434, %vm5435
        %v5437 = vsel %vm5436, %v5429, %v5433
        %v5438 = vand.u32 2147483647, %v5399
        %vm5439 = vcmp.eq.f32.partialorder %v5438, 8.507059e+37
        %v5440 = vand.u32 %v5399, 2147483648
        %v5441 = vor.u32 1.1754944e-38, %v5440
        %v5442 = vsel %vm5439, %v5441, %v5437
        %v5443 = vmul.f32 1.0, %v5442
        %v5444 = vrcp.pop %v5400
        %v5445 = vmul.f32 %v5400, %v5444
        %v5446 = vsub.f32 1.0, %v5445
        %v5447 = vmul.f32 %v5444, %v5446
        %v5448 = vadd.f32 %v5444, %v5447
        %vm5449 = vweird.f32 %v5400
        %vm5450 = vweird.f32 %v5444
        %vm5451 = vmor %vm5449, %vm5450
        %v5452 = vsel %vm5451, %v5444, %v5448
        %v5453 = vand.u32 2147483647, %v5400
        %vm5454 = vcmp.eq.f32.partialorder %v5453, 8.507059e+37
        %v5455 = vand.u32 %v5400, 2147483648
        %v5456 = vor.u32 1.1754944e-38, %v5455
        %v5457 = vsel %vm5454, %v5456, %v5452
        %v5458 = vmul.f32 1.0, %v5457
        %v5459 = vrcp.pop %v5401
        %v5460 = vmul.f32 %v5401, %v5459
        %v5461 = vsub.f32 1.0, %v5460
        %v5462 = vmul.f32 %v5459, %v5461
        %v5463 = vadd.f32 %v5459, %v5462
        %vm5464 = vweird.f32 %v5401
        %vm5465 = vweird.f32 %v5459
        %vm5466 = vmor %vm5464, %vm5465
        %v5467 = vsel %vm5466, %v5459, %v5463
        %v5468 = vand.u32 2147483647, %v5401
        %vm5469 = vcmp.eq.f32.partialorder %v5468, 8.507059e+37
        %v5470 = vand.u32 %v5401, 2147483648
        %v5471 = vor.u32 1.1754944e-38, %v5470
        %v5472 = vsel %vm5469, %v5471, %v5467
        %v5473 = vmul.f32 1.0, %v5472
        %v5474 = vrcp.pop %v5402
        %v5475 = vmul.f32 %v5402, %v5474
        %v5476 = vsub.f32 1.0, %v5475
        %v5477 = vmul.f32 %v5474, %v5476
        %v5478 = vadd.f32 %v5474, %v5477
        %vm5479 = vweird.f32 %v5402
        %vm5480 = vweird.f32 %v5474
        %vm5481 = vmor %vm5479, %vm5480
        %v5482 = vsel %vm5481, %v5474, %v5478
        %v5483 = vand.u32 2147483647, %v5402
        %vm5484 = vcmp.eq.f32.partialorder %v5483, 8.507059e+37
        %v5485 = vand.u32 %v5402, 2147483648
        %v5486 = vor.u32 1.1754944e-38, %v5485
        %v5487 = vsel %vm5484, %v5486, %v5482
        %v5488 = vmul.f32 1.0, %v5487
        %v5489 = vrcp.pop %v5403
        %v5490 = vmul.f32 %v5403, %v5489
        %v5491 = vsub.f32 1.0, %v5490
        %v5492 = vmul.f32 %v5489, %v5491
        %v5493 = vadd.f32 %v5489, %v5492
        %vm5494 = vweird.f32 %v5403
        %vm5495 = vweird.f32 %v5489
        %vm5496 = vmor %vm5494, %vm5495
        %v5497 = vsel %vm5496, %v5489, %v5493
        %v5498 = vand.u32 2147483647, %v5403
        %vm5499 = vcmp.eq.f32.partialorder %v5498, 8.507059e+37
        %v5500 = vand.u32 %v5403, 2147483648
        %v5501 = vor.u32 1.1754944e-38, %v5500
        %v5502 = vsel %vm5499, %v5501, %v5497
        %v5503 = vmul.f32 1.0, %v5502
        %v5504 = vrcp.pop %v5404
        %v5505 = vmul.f32 %v5404, %v5504
        %v5506 = vsub.f32 1.0, %v5505
        %v5507 = vmul.f32 %v5504, %v5506
        %v5508 = vadd.f32 %v5504, %v5507
        %vm5509 = vweird.f32 %v5404
        %vm5510 = vweird.f32 %v5504
        %vm5511 = vmor %vm5509, %vm5510
        %v5512 = vsel %vm5511, %v5504, %v5508
        %v5513 = vand.u32 2147483647, %v5404
        %vm5514 = vcmp.eq.f32.partialorder %v5513, 8.507059e+37
        %v5515 = vand.u32 %v5404, 2147483648
        %v5516 = vor.u32 1.1754944e-38, %v5515
        %v5517 = vsel %vm5514, %v5516, %v5512
        %v5518 = vmul.f32 1.0, %v5517
        %v5519 = vrcp.pop %v5405
        %v5520 = vmul.f32 %v5405, %v5519
        %v5521 = vsub.f32 1.0, %v5520
        %v5522 = vmul.f32 %v5519, %v5521
        %v5523 = vadd.f32 %v5519, %v5522
        %vm5524 = vweird.f32 %v5405
        %vm5525 = vweird.f32 %v5519
        %vm5526 = vmor %vm5524, %vm5525
        %v5527 = vsel %vm5526, %v5519, %v5523
        %v5528 = vand.u32 2147483647, %v5405
        %vm5529 = vcmp.eq.f32.partialorder %v5528, 8.507059e+37
        %v5530 = vand.u32 %v5405, 2147483648
        %v5531 = vor.u32 1.1754944e-38, %v5530
        %v5532 = vsel %vm5529, %v5531, %v5527
        %v5533 = vmul.f32 1.0, %v5532
        %v5534 = vrcp.pop %v5406
        %v5535 = vmul.f32 %v5406, %v5534
        %v5536 = vsub.f32 1.0, %v5535
        %v5537 = vmul.f32 %v5534, %v5536
        %v5538 = vadd.f32 %v5534, %v5537
        %vm5539 = vweird.f32 %v5406
        %vm5540 = vweird.f32 %v5534
        %vm5541 = vmor %vm5539, %vm5540
        %v5542 = vsel %vm5541, %v5534, %v5538
        %v5543 = vand.u32 2147483647, %v5406
        %vm5544 = vcmp.eq.f32.partialorder %v5543, 8.507059e+37
        %v5545 = vand.u32 %v5406, 2147483648
        %v5546 = vor.u32 1.1754944e-38, %v5545
        %v5547 = vsel %vm5544, %v5546, %v5542
        %v5548 = vmul.f32 1.0, %v5547
        %v5549 = vrcp.pop %v5407
        %v5550 = vmul.f32 %v5407, %v5549
        %v5551 = vsub.f32 1.0, %v5550
        %v5552 = vmul.f32 %v5549, %v5551
        %v5553 = vadd.f32 %v5549, %v5552
        %vm5554 = vweird.f32 %v5407
        %vm5555 = vweird.f32 %v5549
        %vm5556 = vmor %vm5554, %vm5555
        %v5557 = vsel %vm5556, %v5549, %v5553
        %v5558 = vand.u32 2147483647, %v5407
        %vm5559 = vcmp.eq.f32.partialorder %v5558, 8.507059e+37
        %v5560 = vand.u32 %v5407, 2147483648
        %v5561 = vor.u32 1.1754944e-38, %v5560
        %v5562 = vsel %vm5559, %v5561, %v5557
        %v5563 = vmul.f32 1.0, %v5562
        %v5564 = vrcp.pop %v5408
        %v5565 = vmul.f32 %v5408, %v5564
        %v5566 = vsub.f32 1.0, %v5565
        %v5567 = vmul.f32 %v5564, %v5566
        %v5568 = vadd.f32 %v5564, %v5567
        %vm5569 = vweird.f32 %v5408
        %vm5570 = vweird.f32 %v5564
        %vm5571 = vmor %vm5569, %vm5570
        %v5572 = vsel %vm5571, %v5564, %v5568
        %v5573 = vand.u32 2147483647, %v5408
        %vm5574 = vcmp.eq.f32.partialorder %v5573, 8.507059e+37
        %v5575 = vand.u32 %v5408, 2147483648
        %v5576 = vor.u32 1.1754944e-38, %v5575
        %v5577 = vsel %vm5574, %v5576, %v5572
        %v5578 = vmul.f32 1.0, %v5577
        %v5579 = vrcp.pop %v5409
        %v5580 = vmul.f32 %v5409, %v5579
        %v5581 = vsub.f32 1.0, %v5580
        %v5582 = vmul.f32 %v5579, %v5581
        %v5583 = vadd.f32 %v5579, %v5582
        %vm5584 = vweird.f32 %v5409
        %vm5585 = vweird.f32 %v5579
        %vm5586 = vmor %vm5584, %vm5585
        %v5587 = vsel %vm5586, %v5579, %v5583
        %v5588 = vand.u32 2147483647, %v5409
        %vm5589 = vcmp.eq.f32.partialorder %v5588, 8.507059e+37
        %v5590 = vand.u32 %v5409, 2147483648
        %v5591 = vor.u32 1.1754944e-38, %v5590
        %v5592 = vsel %vm5589, %v5591, %v5587
        %v5593 = vmul.f32 1.0, %v5592
        %v5594 = vrcp.pop %v5410
        %v5595 = vmul.f32 %v5410, %v5594
        %v5596 = vsub.f32 1.0, %v5595
        %v5597 = vmul.f32 %v5594, %v5596
        %v5598 = vadd.f32 %v5594, %v5597
        %vm5599 = vweird.f32 %v5410
        %vm5600 = vweird.f32 %v5594
        %vm5601 = vmor %vm5599, %vm5600
        %v5602 = vsel %vm5601, %v5594, %v5598
        %v5603 = vand.u32 2147483647, %v5410
        %vm5604 = vcmp.eq.f32.partialorder %v5603, 8.507059e+37
        %v5605 = vand.u32 %v5410, 2147483648
        %v5606 = vor.u32 1.1754944e-38, %v5605
        %v5607 = vsel %vm5604, %v5606, %v5602
        %v5608 = vmul.f32 1.0, %v5607
        %v5609 = vrcp.pop %v5411
        %v5610 = vmul.f32 %v5411, %v5609
        %v5611 = vsub.f32 1.0, %v5610
        %v5612 = vmul.f32 %v5609, %v5611
        %v5613 = vadd.f32 %v5609, %v5612
        %vm5614 = vweird.f32 %v5411
        %vm5615 = vweird.f32 %v5609
        %vm5616 = vmor %vm5614, %vm5615
        %v5617 = vsel %vm5616, %v5609, %v5613
        %v5618 = vand.u32 2147483647, %v5411
        %vm5619 = vcmp.eq.f32.partialorder %v5618, 8.507059e+37
        %v5620 = vand.u32 %v5411, 2147483648
        %v5621 = vor.u32 1.1754944e-38, %v5620
        %v5622 = vsel %vm5619, %v5621, %v5617
        %v5623 = vmul.f32 1.0, %v5622
        %v5624 = vrcp.pop %v5412
        %v5625 = vmul.f32 %v5412, %v5624
        %v5626 = vsub.f32 1.0, %v5625
        %v5627 = vmul.f32 %v5624, %v5626
        %v5628 = vadd.f32 %v5624, %v5627
        %vm5629 = vweird.f32 %v5412
        %vm5630 = vweird.f32 %v5624
        %vm5631 = vmor %vm5629, %vm5630
        %v5632 = vsel %vm5631, %v5624, %v5628
        %v5633 = vand.u32 2147483647, %v5412
        %vm5634 = vcmp.eq.f32.partialorder %v5633, 8.507059e+37
        %v5635 = vand.u32 %v5412, 2147483648
        %v5636 = vor.u32 1.1754944e-38, %v5635
        %v5637 = vsel %vm5634, %v5636, %v5632
        %v5638 = vmul.f32 1.0, %v5637
        %v5639 = vrcp.pop %v5413
        %v5640 = vmul.f32 %v5413, %v5639
        %v5641 = vsub.f32 1.0, %v5640
        %v5642 = vmul.f32 %v5639, %v5641
        %v5643 = vadd.f32 %v5639, %v5642
        %vm5644 = vweird.f32 %v5413
        %vm5645 = vweird.f32 %v5639
        %vm5646 = vmor %vm5644, %vm5645
        %v5647 = vsel %vm5646, %v5639, %v5643
        %v5648 = vand.u32 2147483647, %v5413
        %vm5649 = vcmp.eq.f32.partialorder %v5648, 8.507059e+37
        %v5650 = vand.u32 %v5413, 2147483648
        %v5651 = vor.u32 1.1754944e-38, %v5650
        %v5652 = vsel %vm5649, %v5651, %v5647
        %v5653 = vmul.f32 1.0, %v5652
        %v5654 = vmul.f32 %v5236, %v5428
        %v5655 = vmul.f32 %v5265, %v5443
        %v5656 = vmul.f32 %v5294, %v5458
        %v5657 = vmul.f32 %v5323, %v5473
        %v5658 = vmul.f32 %v5239, %v5488
        %v5659 = vmul.f32 %v5268, %v5503
        %v5660 = vmul.f32 %v5297, %v5518
        %v5661 = vmul.f32 %v5326, %v5533
        %v5662 = vmul.f32 %v5242, %v5548
        %v5663 = vmul.f32 %v5271, %v5563
        %v5664 = vmul.f32 %v5300, %v5578
        %v5665 = vmul.f32 %v5329, %v5593
        %v5666 = vmul.f32 %v5245, %v5608
        %v5667 = vmul.f32 %v5274, %v5623
        %v5668 = vmul.f32 %v5303, %v5638
        %v5669 = vmul.f32 %v5332, %v5653
        %s5670 = scalar_lea.vmem [#allocation26], 512
        %v5671 = vld [vmem:[%s5670] sm:$0xff]
        %v5672 = vld [vmem:[%s5670 + $0x8] sm:$0xff]
        %v5673 = vld [vmem:[%s5670 + $0x10] sm:$0xff]
        %v5674 = vld [vmem:[%s5670 + $0x18] sm:$0xff]
        %v5675 = vld [vmem:[%s5670 + $0x20] sm:$0xff]
        %v5676 = vld [vmem:[%s5670 + $0x28] sm:$0xff]
        %v5677 = vld [vmem:[%s5670 + $0x30] sm:$0xff]
        %v5678 = vld [vmem:[%s5670 + $0x38] sm:$0xff]
        %v5679 = vld [vmem:[%s5670 + $0x40] sm:$0xff]
        %v5680 = vld [vmem:[%s5670 + $0x48] sm:$0xff]
        %v5681 = vld [vmem:[%s5670 + $0x50] sm:$0xff]
        %v5682 = vld [vmem:[%s5670 + $0x58] sm:$0xff]
        %v5683 = vld [vmem:[%s5670 + $0x60] sm:$0xff]
        %v5684 = vld [vmem:[%s5670 + $0x68] sm:$0xff]
        %v5685 = vld [vmem:[%s5670 + $0x70] sm:$0xff]
        %v5686 = vld [vmem:[%s5670 + $0x78] sm:$0xff]
        %v5687 = vld [vmem:[%s5670 + $0x80] sm:$0xff]
        %v5688 = vld [vmem:[%s5670 + $0x88] sm:$0xff]
        %v5689 = vld [vmem:[%s5670 + $0x90] sm:$0xff]
        %v5690 = vld [vmem:[%s5670 + $0x98] sm:$0xff]
        %v5691 = vld [vmem:[%s5670 + $0xa0] sm:$0xff]
        %v5692 = vld [vmem:[%s5670 + $0xa8] sm:$0xff]
        %v5693 = vld [vmem:[%s5670 + $0xb0] sm:$0xff]
        %v5694 = vld [vmem:[%s5670 + $0xb8] sm:$0xff]
        %v5695 = vld [vmem:[%s5670 + $0xc0] sm:$0xff]
        %v5696 = vld [vmem:[%s5670 + $0xc8] sm:$0xff]
        %v5697 = vld [vmem:[%s5670 + $0xd0] sm:$0xff]
        %v5698 = vld [vmem:[%s5670 + $0xd8] sm:$0xff]
        %v5699 = vld [vmem:[%s5670 + $0xe0] sm:$0xff]
        %v5700 = vld [vmem:[%s5670 + $0xe8] sm:$0xff]
        %v5701 = vld [vmem:[%s5670 + $0xf0] sm:$0xff]
        %v5702 = vld [vmem:[%s5670 + $0xf8] sm:$0xff]
        %v5703 = vld [vmem:[%s5670 + $0x100] sm:$0xff]
        %v5704 = vld [vmem:[%s5670 + $0x108] sm:$0xff]
        %v5705 = vld [vmem:[%s5670 + $0x110] sm:$0xff]
        %v5706 = vld [vmem:[%s5670 + $0x118] sm:$0xff]
        %v5707 = vld [vmem:[%s5670 + $0x120] sm:$0xff]
        %v5708 = vld [vmem:[%s5670 + $0x128] sm:$0xff]
        %v5709 = vld [vmem:[%s5670 + $0x130] sm:$0xff]
        %v5710 = vld [vmem:[%s5670 + $0x138] sm:$0xff]
        %v5711 = vld [vmem:[%s5670 + $0x140] sm:$0xff]
        %v5712 = vld [vmem:[%s5670 + $0x148] sm:$0xff]
        %v5713 = vld [vmem:[%s5670 + $0x150] sm:$0xff]
        %v5714 = vld [vmem:[%s5670 + $0x158] sm:$0xff]
        %v5715 = vld [vmem:[%s5670 + $0x160] sm:$0xff]
        %v5716 = vld [vmem:[%s5670 + $0x168] sm:$0xff]
        %v5717 = vld [vmem:[%s5670 + $0x170] sm:$0xff]
        %v5718 = vld [vmem:[%s5670 + $0x178] sm:$0xff]
        %v5719 = vld [vmem:[%s5670 + $0x180] sm:$0xff]
        %v5720 = vld [vmem:[%s5670 + $0x188] sm:$0xff]
        %v5721 = vld [vmem:[%s5670 + $0x190] sm:$0xff]
        %v5722 = vld [vmem:[%s5670 + $0x198] sm:$0xff]
        %v5723 = vld [vmem:[%s5670 + $0x1a0] sm:$0xff]
        %v5724 = vld [vmem:[%s5670 + $0x1a8] sm:$0xff]
        %v5725 = vld [vmem:[%s5670 + $0x1b0] sm:$0xff]
        %v5726 = vld [vmem:[%s5670 + $0x1b8] sm:$0xff]
        %v5727 = vld [vmem:[%s5670 + $0x1c0] sm:$0xff]
        %v5728 = vld [vmem:[%s5670 + $0x1c8] sm:$0xff]
        %v5729 = vld [vmem:[%s5670 + $0x1d0] sm:$0xff]
        %v5730 = vld [vmem:[%s5670 + $0x1d8] sm:$0xff]
        %v5731 = vld [vmem:[%s5670 + $0x1e0] sm:$0xff]
        %v5732 = vld [vmem:[%s5670 + $0x1e8] sm:$0xff]
        %v5733 = vld [vmem:[%s5670 + $0x1f0] sm:$0xff]
        %v5734 = vld [vmem:[%s5670 + $0x1f8] sm:$0xff]
        %5735 = vmatpush.msra.mxu0 %v5686
        %5736 = vmatpush.msra.mxu0 %v5685
        %5737 = vmatpush.msra.mxu0 %v5684
        %5738 = vmatpush.msra.mxu0 %v5683
        %5739 = vmatpush.msra.mxu0 %v5682
        %5740 = vmatpush.msra.mxu0 %v5681
        %5741 = vmatpush.msra.mxu0 %v5680
        %5742 = vmatpush.msra.mxu0 %v5679
        %5743 = vmatpush.msra.mxu0 %v5678
        %5744 = vmatpush.msra.mxu0 %v5677
        %5745 = vmatpush.msra.mxu0 %v5676
        %5746 = vmatpush.msra.mxu0 %v5675
        %5747 = vmatpush.msra.mxu0 %v5674
        %5748 = vmatpush.msra.mxu0 %v5673
        %5749 = vmatpush.msra.mxu0 %v5672
        %5750 = vmatpush.msra.mxu0 %v5671
        %5751 = vmatmul.f32.gmra.mxu0 %v5654
        %v5752 = vpop.f32.mrf.mxu0
        %v5753 = vadd.f32 0.0, %v5752
        %5754 = vmatmul.f32.gmra.mxu0 %v5658
        %v5755 = vpop.f32.mrf.mxu0
        %v5756 = vadd.f32 0.0, %v5755
        %5757 = vmatmul.f32.gmra.mxu0 %v5662
        %v5758 = vpop.f32.mrf.mxu0
        %5759 = vmatmul.f32.gmra.mxu0 %v5666
        %v5760 = vpop.f32.mrf.mxu0
        %5761 = vdwg.mxu0
        %5762 = vmatpush.msra.mxu0 %v5702
        %5763 = vmatpush.msra.mxu0 %v5701
        %5764 = vmatpush.msra.mxu0 %v5700
        %5765 = vmatpush.msra.mxu0 %v5699
        %5766 = vmatpush.msra.mxu0 %v5698
        %5767 = vmatpush.msra.mxu0 %v5697
        %5768 = vmatpush.msra.mxu0 %v5696
        %5769 = vmatpush.msra.mxu0 %v5695
        %5770 = vmatpush.msra.mxu0 %v5694
        %5771 = vmatpush.msra.mxu0 %v5693
        %5772 = vmatpush.msra.mxu0 %v5692
        %5773 = vmatpush.msra.mxu0 %v5691
        %5774 = vmatpush.msra.mxu0 %v5690
        %5775 = vmatpush.msra.mxu0 %v5689
        %5776 = vmatpush.msra.mxu0 %v5688
        %5777 = vmatpush.msra.mxu0 %v5687
        %5778 = vmatmul.f32.gmra.mxu0 %v5655
        %v5779 = vpop.f32.mrf.mxu0
        %v5780 = vadd.f32 %v5753, %v5779
        %5781 = vmatmul.f32.gmra.mxu0 %v5659
        %v5782 = vpop.f32.mrf.mxu0
        %v5783 = vadd.f32 %v5756, %v5782
        %5784 = vmatmul.f32.gmra.mxu0 %v5663
        %v5785 = vpop.f32.mrf.mxu0
        %5786 = vmatmul.f32.gmra.mxu0 %v5667
        %v5787 = vpop.f32.mrf.mxu0
        %5788 = vdwg.mxu0
        %5789 = vmatpush.msra.mxu0 %v5718
        %5790 = vmatpush.msra.mxu0 %v5717
        %5791 = vmatpush.msra.mxu0 %v5716
        %5792 = vmatpush.msra.mxu0 %v5715
        %5793 = vmatpush.msra.mxu0 %v5714
        %5794 = vmatpush.msra.mxu0 %v5713
        %5795 = vmatpush.msra.mxu0 %v5712
        %5796 = vmatpush.msra.mxu0 %v5711
        %5797 = vmatpush.msra.mxu0 %v5710
        %5798 = vmatpush.msra.mxu0 %v5709
        %5799 = vmatpush.msra.mxu0 %v5708
        %5800 = vmatpush.msra.mxu0 %v5707
        %5801 = vmatpush.msra.mxu0 %v5706
        %5802 = vmatpush.msra.mxu0 %v5705
        %5803 = vmatpush.msra.mxu0 %v5704
        %5804 = vmatpush.msra.mxu0 %v5703
        %5805 = vmatmul.f32.gmra.mxu0 %v5656
        %v5806 = vpop.f32.mrf.mxu0
        %v5807 = vadd.f32 %v5780, %v5806
        %5808 = vmatmul.f32.gmra.mxu0 %v5660
        %v5809 = vpop.f32.mrf.mxu0
        %v5810 = vadd.f32 %v5783, %v5809
        %5811 = vmatmul.f32.gmra.mxu0 %v5664
        %v5812 = vpop.f32.mrf.mxu0
        %5813 = vmatmul.f32.gmra.mxu0 %v5668
        %v5814 = vpop.f32.mrf.mxu0
        %5815 = vdwg.mxu0
        %5816 = vmatpush.msra.mxu0 %v5734
        %5817 = vmatpush.msra.mxu0 %v5733
        %5818 = vmatpush.msra.mxu0 %v5732
        %5819 = vmatpush.msra.mxu0 %v5731
        %5820 = vmatpush.msra.mxu0 %v5730
        %5821 = vmatpush.msra.mxu0 %v5729
        %5822 = vmatpush.msra.mxu0 %v5728
        %5823 = vmatpush.msra.mxu0 %v5727
        %5824 = vmatpush.msra.mxu0 %v5726
        %5825 = vmatpush.msra.mxu0 %v5725
        %5826 = vmatpush.msra.mxu0 %v5724
        %5827 = vmatpush.msra.mxu0 %v5723
        %5828 = vmatpush.msra.mxu0 %v5722
        %5829 = vmatpush.msra.mxu0 %v5721
        %5830 = vmatpush.msra.mxu0 %v5720
        %5831 = vmatpush.msra.mxu0 %v5719
        %5832 = vmatmul.f32.gmra.mxu0 %v5657
        %v5833 = vpop.f32.mrf.mxu0
        %v5834 = vadd.f32 %v5807, %v5833
        %5835 = vmatmul.f32.gmra.mxu0 %v5661
        %v5836 = vpop.f32.mrf.mxu0
        %v5837 = vadd.f32 %v5810, %v5836
        %5838 = vmatmul.f32.gmra.mxu0 %v5665
        %v5839 = vpop.f32.mrf.mxu0
        %5840 = vmatmul.f32.gmra.mxu0 %v5669
        %v5841 = vpop.f32.mrf.mxu0
        %5842 = vdwg.mxu0
        %v5843 = vadd.f32 %v5046, %v5834
        %v5844 = vadd.f32 %v5047, %v5837
        %v5845 = vld [vmem:[%s61 + $0x1] sm:$0x1]
        %v5846 = vperm.slane %v5845, 0
        %v5847 = vadd.f32 %v5843, %v5846
        %v5848 = vadd.f32 %v5844, %v5846
        %v5849 = vld [vmem:[%s1295] sm:$0xff]
        %v5850 = vld [vmem:[%s1295 + $0x8] sm:$0xff]
        %v5851 = vld [vmem:[%s1295 + $0x10] sm:$0xff]
        %v5852 = vld [vmem:[%s1295 + $0x18] sm:$0xff]
        %v5853 = vmul.f32 %v5849, %v5849
        %v5854 = vmul.f32 %v5850, %v5850
        %v5855 = vmul.f32 %v5851, %v5851
        %v5856 = vmul.f32 %v5852, %v5852
        %v5857 = vsel %vm1654, %v5853, 0.0
        %5858 = vadd.xlane.f32.xlu0 %v5857
        %v5859 = vpop.xlane.xlu0 %5858
        %v5860 = vsel %vm1654, %v5854, 0.0
        %5861 = vadd.xlane.f32.xlu0 %v5860
        %v5862 = vpop.xlane.xlu0 %5861
        %v5863 = vsel %vm1654, %v5855, 0.0
        %5864 = vadd.xlane.f32.xlu0 %v5863
        %v5865 = vpop.xlane.xlu0 %5864
        %v5866 = vsel %vm1654, %v5856, 0.0
        %5867 = vadd.xlane.f32.xlu0 %v5866
        %v5868 = vpop.xlane.xlu0 %5867
        %v5869 = vmul.f32 %v1707, %v1707
        %v5870 = vsel %vm1654, %v5869, 0.0
        %5871 = vadd.xlane.f32.xlu0 %v5870
        %v5872 = vpop.xlane.xlu0 %5871
        %v5874 = vperm.slane %v5872, %v2066
        %vm5875 = vcmask 1042434
        %v5876 = vsel %vm5875, %v5874, %v5874
        %vm5877 = vcmask 1043459
        %v5878 = vsel %vm5877, %v5874, %v5876
        %vm5879 = vcmask 1044484
        %v5880 = vsel %vm5879, %v5874, %v5878
        %vm5881 = vcmask 1045509
        %v5882 = vsel %vm5881, %v5874, %v5880
        %vm5883 = vcmask 1046534
        %v5884 = vsel %vm5883, %v5874, %v5882
        %vm5885 = vcmask 1047559
        %v5886 = vsel %vm5885, %v5874, %v5884
        %v5888 = vadd.f32 %v5859, %v5886
        %v5889 = vadd.f32 %v5862, %v5886
        %v5890 = vadd.f32 %v5865, %v5886
        %v5891 = vadd.f32 %v5868, %v5886
        %v5893 = vsel %vm1654, %v5849, 0
        %v5896 = vsel %vm1654, %v5850, 0
        %v5899 = vsel %vm1654, %v5851, 0
        %v5902 = vsel %vm1654, %v5852, 0
        %5904 = vmatpush.xpose.msra.mxu0 0.0
        %5905 = vmatpush.xpose.msra.mxu0 0.0
        %5906 = vmatpush.xpose.msra.mxu0 0.0
        %5907 = vmatpush.xpose.msra.mxu0 0.0
        %5908 = vmatpush.xpose.msra.mxu0 0.0
        %5909 = vmatpush.xpose.msra.mxu0 0.0
        %5910 = vmatpush.xpose.msra.mxu0 0.0
        %5911 = vmatpush.xpose.msra.mxu0 0.0
        %5912 = vmatpush.xpose.msra.mxu0 0.0
        %5913 = vmatpush.xpose.msra.mxu0 0.0
        %5914 = vmatpush.xpose.msra.mxu0 0.0
        %5915 = vmatpush.xpose.msra.mxu0 0.0
        %5916 = vmatpush.xpose.msra.mxu0 0.0
        %5917 = vmatpush.xpose.msra.mxu0 0.0
        %5918 = vmatpush.xpose.msra.mxu0 0.0
        %5919 = vmatpush.xpose.msra.mxu0 %v1714
        %5920 = vmatmul.f32.gmra.mxu0 %v5893
        %v5921 = vpop.f32.mrf.mxu0
        %v5922 = vadd.f32 0.0, %v5921
        %5923 = vmatmul.f32.gmra.mxu0 %v5896
        %v5924 = vpop.f32.mrf.mxu0
        %v5925 = vadd.f32 0.0, %v5924
        %5926 = vmatmul.f32.gmra.mxu0 %v5899
        %v5927 = vpop.f32.mrf.mxu0
        %v5928 = vadd.f32 0.0, %v5927
        %5929 = vmatmul.f32.gmra.mxu0 %v5902
        %v5930 = vpop.f32.mrf.mxu0
        %v5931 = vadd.f32 0.0, %v5930
        %5932 = vdwg.mxu0
        %v5933 = vmul.f32 %v5922, 2.0
        %v5934 = vmul.f32 %v5925, 2.0
        %v5935 = vmul.f32 %v5928, 2.0
        %v5936 = vmul.f32 %v5931, 2.0
        %v5937 = vsub.f32 %v5888, %v5933
        %v5938 = vsub.f32 %v5889, %v5934
        %v5939 = vsub.f32 %v5890, %v5935
        %v5940 = vsub.f32 %v5891, %v5936
        %vm5941 = vcmask 64512
        %v5942 = vsel %vm5941, %v5937, inf
        %5943 = vmin.xlane.f32.xlu0 %v5942
        %v5944 = vpop.xlane.xlu0 %5943
        %v5945 = vsel %vm5941, %v5938, inf
        %5946 = vmin.xlane.f32.xlu0 %v5945
        %v5947 = vpop.xlane.xlu0 %5946
        %v5948 = vsel %vm5941, %v5939, inf
        %5949 = vmin.xlane.f32.xlu0 %v5948
        %v5950 = vpop.xlane.xlu0 %5949
        %v5951 = vsel %vm5941, %v5940, inf
        %5952 = vmin.xlane.f32.xlu0 %v5951
        %v5953 = vpop.xlane.xlu0 %5952
        %vm5954 = vcmp.le.f32.partialorder %v5937, %v5944
        %vm5955 = vcmp.le.f32.partialorder %v5938, %v5947
        %vm5956 = vcmp.le.f32.partialorder %v5939, %v5950
        %vm5957 = vcmp.le.f32.partialorder %v5940, %v5953
        %v5958 = vsel %vm5954, 1e+10, %v5937
        %v5959 = vsel %vm5955, 1e+10, %v5938
        %v5960 = vsel %vm5956, 1e+10, %v5939
        %v5961 = vsel %vm5957, 1e+10, %v5940
        %v5962 = vsel %vm5941, %v5958, inf
        %5963 = vmin.xlane.f32.xlu0 %v5962
        %v5964 = vpop.xlane.xlu0 %5963
        %v5965 = vsel %vm5941, %v5959, inf
        %5966 = vmin.xlane.f32.xlu0 %v5965
        %v5967 = vpop.xlane.xlu0 %5966
        %v5968 = vsel %vm5941, %v5960, inf
        %5969 = vmin.xlane.f32.xlu0 %v5968
        %v5970 = vpop.xlane.xlu0 %5969
        %v5971 = vsel %vm5941, %v5961, inf
        %5972 = vmin.xlane.f32.xlu0 %v5971
        %v5973 = vpop.xlane.xlu0 %5972
        %vm5974 = vcmp.le.f32.partialorder %v5958, %v5964
        %vm5975 = vcmp.le.f32.partialorder %v5959, %v5967
        %vm5976 = vcmp.le.f32.partialorder %v5960, %v5970
        %vm5977 = vcmp.le.f32.partialorder %v5961, %v5973
        %v5978 = vsel %vm5974, 1e+10, %v5958
        %v5979 = vsel %vm5975, 1e+10, %v5959
        %v5980 = vsel %vm5976, 1e+10, %v5960
        %v5981 = vsel %vm5977, 1e+10, %v5961
        %v5982 = vsel %vm5941, %v5978, inf
        %5983 = vmin.xlane.f32.xlu0 %v5982
        %v5984 = vpop.xlane.xlu0 %5983
        %v5985 = vsel %vm5941, %v5979, inf
        %5986 = vmin.xlane.f32.xlu0 %v5985
        %v5987 = vpop.xlane.xlu0 %5986
        %v5988 = vsel %vm5941, %v5980, inf
        %5989 = vmin.xlane.f32.xlu0 %v5988
        %v5990 = vpop.xlane.xlu0 %5989
        %v5991 = vsel %vm5941, %v5981, inf
        %5992 = vmin.xlane.f32.xlu0 %v5991
        %v5993 = vpop.xlane.xlu0 %5992
        %vm5994 = vcmp.le.f32.partialorder %v5937, %v5984
        %vm5995 = vcmp.le.f32.partialorder %v5938, %v5987
        %vm5996 = vcmp.le.f32.partialorder %v5939, %v5990
        %vm5997 = vcmp.le.f32.partialorder %v5940, %v5993
        %v5998 = vsel %vm5994, 1, 0
        %v5999 = vsel %vm5995, 1, 0
        %v6000 = vsel %vm5996, 1, 0
        %v6001 = vsel %vm5997, 1, 0
        %v6002 = vcvt.s32.f32 %v5998
        %v6003 = vcvt.s32.f32 %v5999
        %v6004 = vcvt.s32.f32 %v6000
        %v6005 = vcvt.s32.f32 %v6001
        %v6006 = vadd.f32 %v5937, 1e-08
        %v6007 = vadd.f32 %v5938, 1e-08
        %v6008 = vadd.f32 %v5939, 1e-08
        %v6009 = vadd.f32 %v5940, 1e-08
        %v6010 = vrcp.pop %v6006
        %v6011 = vrcp.pop %v6007
        %v6012 = vrcp.pop %v6008
        %v6013 = vrcp.pop %v6009
        %v6014 = vmul.f32 %v6002, %v6010
        %v6015 = vmul.f32 %v6003, %v6011
        %v6016 = vmul.f32 %v6004, %v6012
        %v6017 = vmul.f32 %v6005, %v6013
        %v6018 = vsel %vm5941, %v6014, 0.0
        %6019 = vadd.xlane.f32.xlu0 %v6018
        %v6020 = vpop.xlane.xlu0 %6019
        %v6021 = vsel %vm5941, %v6015, 0.0
        %6022 = vadd.xlane.f32.xlu0 %v6021
        %v6023 = vpop.xlane.xlu0 %6022
        %v6024 = vsel %vm5941, %v6016, 0.0
        %6025 = vadd.xlane.f32.xlu0 %v6024
        %v6026 = vpop.xlane.xlu0 %6025
        %v6027 = vsel %vm5941, %v6017, 0.0
        %6028 = vadd.xlane.f32.xlu0 %v6027
        %v6029 = vpop.xlane.xlu0 %6028
        %v6030 = vrcp.pop %v6020
        %v6031 = vrcp.pop %v6023
        %v6032 = vrcp.pop %v6026
        %v6033 = vrcp.pop %v6029
        %v6034 = vmul.f32 %v6014, %v6030
        %v6035 = vmul.f32 %v6015, %v6031
        %v6036 = vmul.f32 %v6016, %v6032
        %v6037 = vmul.f32 %v6017, %v6033
        %vm6040 = vcmask 1046528
        %v6041 = vrot.slane %v5847, 1
        %v6042 = vrot.slane %v5848, 1
        %v6043 = vsel %vm6040, %v6041, %v6042
        %v6046 = vsel %vm5941, %v6034, 0
        %v6049 = vsel %vm5941, %v6035, 0
        %v6052 = vsel %vm5941, %v6036, 0
        %v6055 = vsel %vm5941, %v6037, 0
        %6057 = vmatpush.msra.mxu0 0.0
        %6058 = vmatpush.msra.mxu0 0.0
        %6059 = vmatpush.msra.mxu0 0.0
        %6060 = vmatpush.msra.mxu0 0.0
        %6061 = vmatpush.msra.mxu0 0.0
        %6062 = vmatpush.msra.mxu0 0.0
        %6063 = vmatpush.msra.mxu0 0.0
        %6064 = vmatpush.msra.mxu0 0.0
        %6065 = vmatpush.msra.mxu0 0.0
        %6066 = vmatpush.msra.mxu0 0.0
        %6067 = vmatpush.msra.mxu0 0.0
        %6068 = vmatpush.msra.mxu0 0.0
        %6069 = vmatpush.msra.mxu0 0.0
        %6070 = vmatpush.msra.mxu0 0.0
        %6071 = vmatpush.msra.mxu0 0.0
        %6072 = vmatpush.msra.mxu0 %v6043
        %6073 = vmatmul.f32.gmra.mxu0 %v6046
        %v6074 = vpop.f32.mrf.mxu0
        %v6075 = vadd.f32 0.0, %v6074
        %6076 = vmatmul.f32.gmra.mxu0 %v6049
        %v6077 = vpop.f32.mrf.mxu0
        %v6078 = vadd.f32 0.0, %v6077
        %6079 = vmatmul.f32.gmra.mxu0 %v6052
        %v6080 = vpop.f32.mrf.mxu0
        %v6081 = vadd.f32 0.0, %v6080
        %6082 = vmatmul.f32.gmra.mxu0 %v6055
        %v6083 = vpop.f32.mrf.mxu0
        %v6084 = vadd.f32 0.0, %v6083
        %6085 = vdwg.mxu0
        %v6086 = vld [vmem:[%s63] sm:$0xff]
        %v6087 = vld [vmem:[%s63 + $0x8] sm:$0xff]
        %v6088 = vld [vmem:[%s63 + $0x10] sm:$0xff]
        %v6089 = vld [vmem:[%s63 + $0x18] sm:$0xff]
        %v6090 = vld [vmem:[%s63 + $0x20] sm:$0xff]
        %v6091 = vld [vmem:[%s63 + $0x28] sm:$0xff]
        %v6092 = vld [vmem:[%s63 + $0x30] sm:$0xff]
        %v6093 = vld [vmem:[%s63 + $0x38] sm:$0xff]
        %v6094 = vld [vmem:[%s63 + $0x40] sm:$0xff]
        %v6095 = vld [vmem:[%s63 + $0x48] sm:$0xff]
        %v6096 = vld [vmem:[%s63 + $0x50] sm:$0xff]
        %v6097 = vld [vmem:[%s63 + $0x58] sm:$0xff]
        %v6098 = vld [vmem:[%s63 + $0x60] sm:$0xff]
        %v6099 = vld [vmem:[%s63 + $0x68] sm:$0xff]
        %v6100 = vld [vmem:[%s63 + $0x70] sm:$0xff]
        %v6101 = vld [vmem:[%s63 + $0x78] sm:$0xff]
        %v6102 = vld [vmem:[%s65] sm:$0x1]
        %v6104 = vperm.slane %v6102, 0
        %6106 = vmatpush.msra.mxu0 %v6101
        %6107 = vmatpush.msra.mxu0 %v6100
        %6108 = vmatpush.msra.mxu0 %v6099
        %6109 = vmatpush.msra.mxu0 %v6098
        %6110 = vmatpush.msra.mxu0 %v6097
        %6111 = vmatpush.msra.mxu0 %v6096
        %6112 = vmatpush.msra.mxu0 %v6095
        %6113 = vmatpush.msra.mxu0 %v6094
        %6114 = vmatpush.msra.mxu0 %v6093
        %6115 = vmatpush.msra.mxu0 %v6092
        %6116 = vmatpush.msra.mxu0 %v6091
        %6117 = vmatpush.msra.mxu0 %v6090
        %6118 = vmatpush.msra.mxu0 %v6089
        %6119 = vmatpush.msra.mxu0 %v6088
        %6120 = vmatpush.msra.mxu0 %v6087
        %6121 = vmatpush.msra.mxu0 %v6086
        %6122 = vmatmul.f32.gmra.mxu0 %v6075
        %v6123 = vpop.f32.mrf.mxu0
        %v6124 = vadd.f32 %v6104, %v6123
        %6125 = vmatmul.f32.gmra.mxu0 %v6078
        %v6126 = vpop.f32.mrf.mxu0
        %v6127 = vadd.f32 %v6104, %v6126
        %6128 = vmatmul.f32.gmra.mxu0 %v6081
        %v6129 = vpop.f32.mrf.mxu0
        %v6130 = vadd.f32 %v6104, %v6129
        %6131 = vmatmul.f32.gmra.mxu0 %v6084
        %v6132 = vpop.f32.mrf.mxu0
        %v6133 = vadd.f32 %v6104, %v6132
        %6134 = vdwg.mxu0
        %v6135 = vmax.f32 %v6124, 0.0
        %v6136 = vmax.f32 %v6127, 0.0
        %v6137 = vmax.f32 %v6130, 0.0
        %v6138 = vmax.f32 %v6133, 0.0
        %v6139 = vld [vmem:[%s1308] sm:$0xff]
        %v6140 = vld [vmem:[%s1308 + $0x8] sm:$0xff]
        %v6141 = vld [vmem:[%s1308 + $0x10] sm:$0xff]
        %v6142 = vld [vmem:[%s1308 + $0x18] sm:$0xff]
        %v6143 = vadd.f32 %v6135, %v6139
        %v6144 = vadd.f32 %v6136, %v6140
        %v6145 = vadd.f32 %v6137, %v6141
        %v6146 = vadd.f32 %v6138, %v6142
        %6147 = vst.msk [vmem:[%s1313] sm:$0xff] %vm1321, %v6143
        %6148 = vst.msk [vmem:[%s1313 + $0x8] sm:$0xff] %vm1321, %v6144
        %6149 = vst.msk [vmem:[%s1313 + $0x10] sm:$0xff] %vm1321, %v6145
        %6150 = vst.msk [vmem:[%s1313 + $0x18] sm:$0xff] %vm1321, %v6146
        %p6151 = scmp.lt.s32.totalorder %s87, 1
        %s6152 = scalar_select %p6151, %s87, 1
        %s6153 = smul.addr %s6152, 4
        %s6154 = smul.addr %s6153, 8
        %s6155 = scalar_lea.vmem %s67, %s6154
        // Predicated region
        $region217: #{tpu_custom_call.1} parent=151 // pred_check
          %p6156 = pneg %p818
        $region218: #{tpu_custom_call.1} parent=151 // pred_check_branch
          %6158 = sbr.rel (%p6156) target = $region220
        $region219: #{tpu_custom_call.1} parent=151 // pred_region
          _
        $region220: #{tpu_custom_call.1} parent=151 // pred_fallthru
          _
      $region152: #{tpu_custom_call.1} parent=5 // pred_fallthru
        _
      %p6159 = scmp.le.s32.totalorder 2, %s82
      // Predicated region
      $region221: #{tpu_custom_call.1} parent=5 // pred_check
        %p6160 = pneg %p6159
      $region222: #{tpu_custom_call.1} parent=5 // pred_check_branch
        %6162 = sbr.rel (%p6160) target = $region224
      $region223: #{tpu_custom_call.1} parent=5 // pred_region
        %s6163 = ssub.s32 %s82, 2
        // Predicated region
        $region225: #{tpu_custom_call.1} parent=223 // pred_check
          %p6164 = pneg %p824
        $region226: #{tpu_custom_call.1} parent=223 // pred_check_branch
          %6166 = sbr.rel (%p6164) target = $region228
        $region227: #{tpu_custom_call.1} parent=223 // pred_region
          %p6167 = scmp.lt.s32.totalorder %s88, 1
          %s6168 = scalar_select %p6167, %s88, 1
          %s6169 = smul.addr %s6168, 4
          %s6170 = smul.addr %s6169, 8
          %s6171 = scalar_lea.vmem %s67, %s6170
        $region228: #{tpu_custom_call.1} parent=223 // pred_fallthru
          _
      $region224: #{tpu_custom_call.1} parent=5 // pred_fallthru
        _
    $region6: #{tpu_custom_call.1} parent=1 // loop_footer
      %s86 = sadd.s32 1, %s82
    $region7: #{tpu_custom_call.1} parent=1 // loop_footer_branch
      %81 = sbr.rel target = $region3
    $region8: #{tpu_custom_call.1} parent=1 // loop_exit
      _
    %6172 = vsyncpa [#allocation4], 1
    %s6173 = scalar_lea.sflag [#allocation4], 1
    %6174 = vsyncpa %s6173, 1
    %6175 = vsyncpa [#allocation6], 1
    %6176 = vsyncpa [#allocation9], 1
    %6177 = vsyncpa [#allocation12], 1
    %6178 = vsyncpa [#allocation15], 1
    %6179 = vsyncpa [#allocation18], 1
    %6180 = vsyncpa [#allocation21], 1
    %6181 = vsyncpa [#allocation24], 1
    %6182 = vsyncpa [#allocation27], 1

</llo_original>
